<compile_context>
chip_gen: v7x
topology: tpu7x:2x2x1
jax: 0.10.0
libtpu: 0.0.40
codegen_flags: <defaults>
</compile_context>

<pallas_src>
import jax
import jax.numpy as jnp
from jax.experimental import pallas as pl
from jax.experimental.pallas import tpu as pltpu


VMEM_LIMIT_BYTES = 32 * 1024 * 1024   # well above actual per-call usage (<2 MiB)


def _round_up(x, m):
    return ((x + m - 1) // m) * m


# ---------------------------------------------------------------------------
# Pallas kernels
# ---------------------------------------------------------------------------
def conv_bn_relu_kernel(p_ref, w_ref, scale_ref, bias_ref, o_ref):
    """Fused im2col-matmul + folded BatchNorm + ReLU (one M-tile per grid step).

    p_ref:     [TM, K]     bf16 im2col patches tile (K = 9*Cin)
    w_ref:     [K, Cout]   bf16 conv weights (VMEM resident across the grid)
    scale_ref: [1, Cout]   f32  gamma / sqrt(running_var + eps)
    bias_ref:  [1, Cout]   f32  (conv_bias - running_mean) * scale + beta
    o_ref:     [TM, Cout]  bf16
    """
    acc = jnp.dot(p_ref[...], w_ref[...], preferred_element_type=jnp.float32)
    out = jnp.maximum(acc * scale_ref[...] + bias_ref[...], 0.0)
    o_ref[...] = out.astype(o_ref.dtype)


def fc_softmax_kernel(x_ref, w1_ref, b1_ref, w2_ref, b2_ref, w3_ref, b3_ref,
                      o_ref):
    """Fused MLP head: Linear->ReLU->(Dropout=id)->Linear->ReLU->Linear->Softmax.

    All hidden/output dims are padded to 128 lanes; padded logit columns carry
    bias = -1e30 so exp() underflows to 0 and the softmax is exact over the
    real 10 classes.  bf16 matmul operands, f32 accumulation/softmax.
    """
    h1 = jnp.dot(x_ref[...], w1_ref[...], preferred_element_type=jnp.float32)
    h1 = jnp.maximum(h1 + b1_ref[...], 0.0)
    h2 = jnp.dot(h1.astype(jnp.bfloat16), w2_ref[...],
                 preferred_element_type=jnp.float32)
    h2 = jnp.maximum(h2 + b2_ref[...], 0.0)
    z = jnp.dot(h2.astype(jnp.bfloat16), w3_ref[...],
                preferred_element_type=jnp.float32) + b3_ref[...]
    z = z - jnp.max(z, axis=-1, keepdims=True)
    e = jnp.exp(z)
    o_ref[...] = e / jnp.sum(e, axis=-1, keepdims=True)


# ---------------------------------------------------------------------------
# Wrappers (glue: padding, im2col, pooling, tiling)
# ---------------------------------------------------------------------------
def conv_bn_relu(x_nhwc, fp, tile_m=512):
    """3x3 conv (stride 1, pad 1) + folded BatchNorm + ReLU.

    x_nhwc: [B, H, W, Cin] bf16
    fp:     dict(wmat=[9*Cin, Cout] bf16, scale=[1,Cout] f32, bias=[1,Cout] f32)
    """
    B, H, W, Cin = x_nhwc.shape
    K, Cout = fp["wmat"].shape

    xp = jnp.pad(x_nhwc, ((0, 0), (1, 1), (1, 1), (0, 0)))
    # im2col (XLA glue, bf16): patch channel ordering is (dy, dx, cin), matching
    # the (kh, kw, cin, cout) weight reshape done in prepare_params.
    cols = [xp[:, dy:dy + H, dx:dx + W, :]
            for dy in range(3) for dx in range(3)]
    patches = jnp.concatenate(cols, axis=-1).reshape(B * H * W, 9 * Cin)

    M = B * H * W
    tm = min(tile_m, _round_up(M, 8))
    Mp = _round_up(M, tm)
    if Mp != M:
        patches = jnp.pad(patches, ((0, Mp - M), (0, 0)))

    flops = 2 * Mp * K * Cout
    bytes_accessed = Mp * K * 2 + K * Cout * 2 + Mp * Cout * 2 + 8 * Cout

    out = pl.pallas_call(
        conv_bn_relu_kernel,
        out_shape=jax.ShapeDtypeStruct((Mp, Cout), jnp.bfloat16),
        grid=(Mp // tm,),
        in_specs=[
            pl.BlockSpec((tm, K), lambda i: (i, 0)),      # streamed patch tiles
            pl.BlockSpec((K, Cout), lambda i: (0, 0)),    # VMEM-resident weights
            pl.BlockSpec((1, Cout), lambda i: (0, 0)),
            pl.BlockSpec((1, Cout), lambda i: (0, 0)),
        ],
        out_specs=pl.BlockSpec((tm, Cout), lambda i: (i, 0)),
        compiler_params=pltpu.CompilerParams(
            dimension_semantics=("parallel",),
            vmem_limit_bytes=VMEM_LIMIT_BYTES),
        cost_estimate=pl.CostEstimate(
            flops=flops, transcendentals=0, bytes_accessed=bytes_accessed),
    )(patches, fp["wmat"], fp["scale"], fp["bias"])

    if Mp != M:
        out = out[:M]
    return out.reshape(B, H, W, Cout)


def maxpool_2x2(x_nhwc):
    # Tiny 2x2 window reduction kept as XLA glue between Pallas calls.
    B, H, W, C = x_nhwc.shape
    return jnp.max(x_nhwc.reshape(B, H // 2, 2, W // 2, 2, C), axis=(2, 4))


def fc_head(x_flat, fc, tile_b=256):
    """Fused, lane-dense MLP head. Returns f32 probabilities [B, 10]."""
    B, D = x_flat.shape
    w1, b1, w2, b2, w3, b3 = fc
    H1P, H2P, OP = w1.shape[1], w2.shape[1], w3.shape[1]

    x = x_flat.astype(jnp.bfloat16)
    tb = min(tile_b, _round_up(B, 8))
    Bp = _round_up(B, tb)
    if Bp != B:
        x = jnp.pad(x, ((0, Bp - B), (0, 0)))

    flops = 2 * Bp * (D * H1P + H1P * H2P + H2P * OP)
    bytes_accessed = (Bp * D * 2 + D * H1P * 2 + H1P * H2P * 2 + H2P * OP * 2
                      + Bp * OP * 4)

    out = pl.pallas_call(
        fc_softmax_kernel,
        out_shape=jax.ShapeDtypeStruct((Bp, OP), jnp.float32),
        grid=(Bp // tb,),
        in_specs=[
            pl.BlockSpec((tb, D), lambda i: (i, 0)),      # streamed batch tiles
            pl.BlockSpec((D, H1P), lambda i: (0, 0)),     # resident weights
            pl.BlockSpec((1, H1P), lambda i: (0, 0)),
            pl.BlockSpec((H1P, H2P), lambda i: (0, 0)),
            pl.BlockSpec((1, H2P), lambda i: (0, 0)),
            pl.BlockSpec((H2P, OP), lambda i: (0, 0)),
            pl.BlockSpec((1, OP), lambda i: (0, 0)),
        ],
        out_specs=pl.BlockSpec((tb, OP), lambda i: (i, 0)),
        compiler_params=pltpu.CompilerParams(
            dimension_semantics=("parallel",),
            vmem_limit_bytes=VMEM_LIMIT_BYTES),
        cost_estimate=pl.CostEstimate(
            flops=flops, transcendentals=Bp * OP, bytes_accessed=bytes_accessed),
    )(x, w1, b1, w2, b2, w3, b3)

    return out[:B, :10]


# ---------------------------------------------------------------------------
# Parameter construction (deterministic, synthetic; PyTorch-equivalent layout)
# ---------------------------------------------------------------------------
def init_params(key, hid1, hid2):
    def conv_p(k, cout, cin):
        kw, kb = jax.random.split(k)
        return dict(
            w=jax.random.normal(kw, (cout, cin, 3, 3), jnp.float32) * 0.05,
            b=jax.random.normal(kb, (cout,), jnp.float32) * 0.05,
            gamma=jnp.ones((cout,), jnp.float32),
            beta=jnp.zeros((cout,), jnp.float32),
            run_mean=jnp.zeros((cout,), jnp.float32),
            run_var=jnp.ones((cout,), jnp.float32),
        )

    def lin_p(k, din, dout):
        kw, kb = jax.random.split(k)
        # stored already transposed to [din, dout] for x @ W
        return (jax.random.normal(kw, (din, dout), jnp.float32) * 0.05,
                jax.random.normal(kb, (1, dout), jnp.float32) * 0.05)

    keys = jax.random.split(key, 7)
    params = dict(
        c11=conv_p(keys[0], 32, 1),
        c12=conv_p(keys[1], 32, 32),
        c21=conv_p(keys[2], 64, 32),
        c22=conv_p(keys[3], 64, 64),
    )
    w1, b1 = lin_p(keys[4], 64 * 7 * 7, hid1)
    w2, b2 = lin_p(keys[5], hid1, hid2)
    w3, b3 = lin_p(keys[6], hid2, 10)
    params["fc"] = (w1, b1, w2, b2, w3, b3)
    return params


def _fold_conv_bn(cp, eps=1e-5):
    """One-time: reshape conv weight for matmul (bf16) and fold BN into scale/bias."""
    w, b = cp["w"], cp["b"]
    gamma, beta = cp["gamma"], cp["beta"]
    mean, var = cp["run_mean"], cp["run_var"]
    cout, cin = w.shape[0], w.shape[1]
    # [Cout, Cin, kh, kw] -> [kh, kw, Cin, Cout] -> [9*Cin, Cout]
    wmat = jnp.transpose(w, (2, 3, 1, 0)).reshape(9 * cin, cout)
    inv_std = 1.0 / jnp.sqrt(var + eps)
    scale = (gamma * inv_std).reshape(1, cout).astype(jnp.float32)
    bias = ((b - mean) * gamma * inv_std + beta).reshape(1, cout)
    return dict(wmat=wmat.astype(jnp.bfloat16),
                scale=scale,
                bias=bias.astype(jnp.float32))


def _prep_fc(fc, C=64, Hs=7, Ws=7):
    """One-time: fold (C,H,W) flatten order into w1, pad all dims to 128 lanes."""
    w1, b1, w2, b2, w3, b3 = fc
    din, hid1 = w1.shape
    hid2 = w2.shape[1]
    # Row permutation: PyTorch flattens NCHW as (C, H, W); our runtime feature
    # map is NHWC flattened as (H, W, C).  Permute w1's rows so no runtime
    # transpose of the feature map is needed.
    w1_hwc = w1.reshape(C, Hs, Ws, hid1).transpose(1, 2, 0, 3).reshape(din, hid1)

    h1p = _round_up(hid1, 128)
    h2p = _round_up(hid2, 128)
    op = 128  # 10 classes padded to a full lane width

    w1p = jnp.zeros((din, h1p), jnp.bfloat16).at[:, :hid1].set(
        w1_hwc.astype(jnp.bfloat16))
    b1p = jnp.zeros((1, h1p), jnp.float32).at[:, :hid1].set(b1)
    w2p = jnp.zeros((h1p, h2p), jnp.bfloat16).at[:hid1, :hid2].set(
        w2.astype(jnp.bfloat16))
    b2p = jnp.zeros((1, h2p), jnp.float32).at[:, :hid2].set(b2)
    w3p = jnp.zeros((h2p, op), jnp.bfloat16).at[:hid2, :10].set(
        w3.astype(jnp.bfloat16))
    # Padded logit columns get a huge negative bias so softmax ignores them.
    b3p = jnp.full((1, op), -1e30, jnp.float32).at[:, :10].set(b3)
    return (w1p, b1p, w2p, b2p, w3p, b3p)


def prepare_params(p):
    """One-time folding of PyTorch-layout params into kernel-ready operands."""
    return dict(
        c11=_fold_conv_bn(p["c11"]),
        c12=_fold_conv_bn(p["c12"]),
        c21=_fold_conv_bn(p["c21"]),
        c22=_fold_conv_bn(p["c22"]),
        fc=_prep_fc(p["fc"]),
    )


# ---------------------------------------------------------------------------
# Full forward pass
# ---------------------------------------------------------------------------
@jax.jit
def net_forward(x_nchw, params):
    # NCHW -> NHWC for internal compute; bf16 activations through the trunk.
    x = jnp.transpose(x_nchw, (0, 2, 3, 1)).astype(jnp.bfloat16)

    # conv_block1
    x = conv_bn_relu(x, params["c11"])
    x = conv_bn_relu(x, params["c12"])
    x = maxpool_2x2(x)                      # [B, 14, 14, 32]

    # conv_block2
    x = conv_bn_relu(x, params["c21"])
    x = conv_bn_relu(x, params["c22"])
    x = maxpool_2x2(x)                      # [B, 7, 7, 64]

    # Flatten in NHWC (H, W, C) order; the PyTorch (C, H, W) view order was
    # folded into w1's rows at prepare_params time, so no runtime transpose.
    B = x.shape[0]
    x_flat = x.reshape(B, 7 * 7 * 64)

    # fc_block (Dropout is identity in inference mode)
    return fc_head(x_flat, params["fc"])


if __name__ == "__main__":
    key = jax.random.PRNGKey(0)
    k_x, k_p = jax.random.split(key)

    hid1, hid2 = 64, 32
    B = 2
    x = jax.random.normal(k_x, (B, 1, 28, 28), jnp.float32)   # NCHW like PyTorch
    raw_params = init_params(k_p, hid1, hid2)
    params = prepare_params(raw_params)

    out = net_forward(x, params)
    out = jax.block_until_ready(out)

    assert out.shape == (B, 10)
    # softmax rows must sum to 1
    assert bool(jnp.allclose(jnp.sum(out, axis=1), 1.0, atol=1e-5))
    print("KERNEL_OK")
</pallas_src>

<mosaic_0001>
module attributes {stable_mosaic.version = 11 : i64} {
  func.func @conv_bn_relu_kernel(%arg0: i32, %arg1: memref<512x9xbf16, #tpu.memory_space<vmem>>, %arg2: memref<9x32xbf16, #tpu.memory_space<vmem>>, %arg3: memref<1x32xf32, #tpu.memory_space<vmem>>, %arg4: memref<1x32xf32, #tpu.memory_space<vmem>>, %arg5: memref<512x32xbf16, #tpu.memory_space<vmem>>) attributes {dimension_semantics = [#tpu.dimension_semantics<parallel>], iteration_bounds = array<i64: 4>, scalar_prefetch = 0 : i64, scratch_operands = 0 : i64, tpu.core_type = #tpu.core_type<tc>, window_params = [{transform_indices = @transform_0, window_bounds = array<i64: 512, 9>}, {pipeline_mode = #tpu.pipeline_mode<synchronous>, transform_indices = @transform_1, window_bounds = array<i64: 9, 32>}, {pipeline_mode = #tpu.pipeline_mode<synchronous>, transform_indices = @transform_2, window_bounds = array<i64: 1, 32>}, {pipeline_mode = #tpu.pipeline_mode<synchronous>, transform_indices = @transform_3, window_bounds = array<i64: 1, 32>}, {transform_indices = @transform_4, window_bounds = array<i64: 512, 32>}]} {
    %c0 = arith.constant 0 : index
    %c0_0 = arith.constant 0 : index
    %0 = vector.load %arg1[%c0, %c0_0] : memref<512x9xbf16, #tpu.memory_space<vmem>>, vector<512x9xbf16>
    %c0_1 = arith.constant 0 : index
    %c0_2 = arith.constant 0 : index
    %1 = vector.load %arg2[%c0_1, %c0_2] : memref<9x32xbf16, #tpu.memory_space<vmem>>, vector<9x32xbf16>
    %cst = arith.constant dense<0.000000e+00> : vector<512x32xf32>
    %2 = tpu.matmul %0, %1, %cst {dimension_numbers = #tpu.dot_dimension_numbers<[1], [0], [0], [1], [0, 0, 1, 1], [], []>} : vector<512x9xbf16>, vector<9x32xbf16>, vector<512x32xf32> -> vector<512x32xf32>
    %c0_3 = arith.constant 0 : index
    %c0_4 = arith.constant 0 : index
    %3 = vector.load %arg3[%c0_3, %c0_4] : memref<1x32xf32, #tpu.memory_space<vmem>>, vector<1x32xf32>
    %4 = vector.broadcast %3 : vector<1x32xf32> to vector<512x32xf32>
    %5 = arith.mulf %2, %4 : vector<512x32xf32>
    %c0_5 = arith.constant 0 : index
    %c0_6 = arith.constant 0 : index
    %6 = vector.load %arg4[%c0_5, %c0_6] : memref<1x32xf32, #tpu.memory_space<vmem>>, vector<1x32xf32>
    %7 = vector.broadcast %6 : vector<1x32xf32> to vector<512x32xf32>
    %8 = arith.addf %5, %7 : vector<512x32xf32>
    %cst_7 = arith.constant 0.000000e+00 : f32
    %9 = vector.broadcast %cst_7 : f32 to vector<512x32xf32>
    %10 = arith.maximumf %8, %9 : vector<512x32xf32>
    %11 = arith.truncf %10 : vector<512x32xf32> to vector<512x32xbf16>
    %c0_8 = arith.constant 0 : index
    %c0_9 = arith.constant 0 : index
    %12 = vector.load %arg5[%c0_8, %c0_9] : memref<512x32xbf16, #tpu.memory_space<vmem>>, vector<512x32xbf16>
    tpu.vector_store %arg5[%c0_8, %c0_9], %11 {strides = array<i32>} : memref<512x32xbf16, #tpu.memory_space<vmem>>, vector<512x32xbf16>,
    return
  }
  func.func @transform_0(%arg0: i32) -> (i32, i32) {
    %c0_i32 = arith.constant 0 : i32
    %c0_i32_0 = arith.constant 0 : i32
    return %arg0, %c0_i32 : i32, i32
  }
  func.func @transform_1(%arg0: i32) -> (i32, i32) {
    %c0_i32 = arith.constant 0 : i32
    %c0_i32_0 = arith.constant 0 : i32
    %c0_i32_1 = arith.constant 0 : i32
    return %c0_i32, %c0_i32_0 : i32, i32
  }
  func.func @transform_2(%arg0: i32) -> (i32, i32) {
    %c0_i32 = arith.constant 0 : i32
    %c0_i32_0 = arith.constant 0 : i32
    %c0_i32_1 = arith.constant 0 : i32
    return %c0_i32, %c0_i32_0 : i32, i32
  }
  func.func @transform_3(%arg0: i32) -> (i32, i32) {
    %c0_i32 = arith.constant 0 : i32
    %c0_i32_0 = arith.constant 0 : i32
    %c0_i32_1 = arith.constant 0 : i32
    return %c0_i32, %c0_i32_0 : i32, i32
  }
  func.func @transform_4(%arg0: i32) -> (i32, i32) {
    %c0_i32 = arith.constant 0 : i32
    %c0_i32_0 = arith.constant 0 : i32
    return %arg0, %c0_i32 : i32, i32
  }
}

module attributes {stable_mosaic.version = 11 : i64} {
  func.func @conv_bn_relu_kernel(%arg0: i32, %arg1: memref<512x288xbf16, #tpu.memory_space<vmem>>, %arg2: memref<288x32xbf16, #tpu.memory_space<vmem>>, %arg3: memref<1x32xf32, #tpu.memory_space<vmem>>, %arg4: memref<1x32xf32, #tpu.memory_space<vmem>>, %arg5: memref<512x32xbf16, #tpu.memory_space<vmem>>) attributes {dimension_semantics = [#tpu.dimension_semantics<parallel>], iteration_bounds = array<i64: 4>, scalar_prefetch = 0 : i64, scratch_operands = 0 : i64, tpu.core_type = #tpu.core_type<tc>, window_params = [{transform_indices = @transform_0, window_bounds = array<i64: 512, 288>}, {pipeline_mode = #tpu.pipeline_mode<synchronous>, transform_indices = @transform_1, window_bounds = array<i64: 288, 32>}, {pipeline_mode = #tpu.pipeline_mode<synchronous>, transform_indices = @transform_2, window_bounds = array<i64: 1, 32>}, {pipeline_mode = #tpu.pipeline_mode<synchronous>, transform_indices = @transform_3, window_bounds = array<i64: 1, 32>}, {transform_indices = @transform_4, window_bounds = array<i64: 512, 32>}]} {
    %c0 = arith.constant 0 : index
    %c0_0 = arith.constant 0 : index
    %0 = vector.load %arg1[%c0, %c0_0] : memref<512x288xbf16, #tpu.memory_space<vmem>>, vector<512x288xbf16>
    %c0_1 = arith.constant 0 : index
    %c0_2 = arith.constant 0 : index
    %1 = vector.load %arg2[%c0_1, %c0_2] : memref<288x32xbf16, #tpu.memory_space<vmem>>, vector<288x32xbf16>
    %cst = arith.constant dense<0.000000e+00> : vector<512x32xf32>
    %2 = tpu.matmul %0, %1, %cst {dimension_numbers = #tpu.dot_dimension_numbers<[1], [0], [0], [1], [0, 0, 1, 1], [], []>} : vector<512x288xbf16>, vector<288x32xbf16>, vector<512x32xf32> -> vector<512x32xf32>
    %c0_3 = arith.constant 0 : index
    %c0_4 = arith.constant 0 : index
    %3 = vector.load %arg3[%c0_3, %c0_4] : memref<1x32xf32, #tpu.memory_space<vmem>>, vector<1x32xf32>
    %4 = vector.broadcast %3 : vector<1x32xf32> to vector<512x32xf32>
    %5 = arith.mulf %2, %4 : vector<512x32xf32>
    %c0_5 = arith.constant 0 : index
    %c0_6 = arith.constant 0 : index
    %6 = vector.load %arg4[%c0_5, %c0_6] : memref<1x32xf32, #tpu.memory_space<vmem>>, vector<1x32xf32>
    %7 = vector.broadcast %6 : vector<1x32xf32> to vector<512x32xf32>
    %8 = arith.addf %5, %7 : vector<512x32xf32>
    %cst_7 = arith.constant 0.000000e+00 : f32
    %9 = vector.broadcast %cst_7 : f32 to vector<512x32xf32>
    %10 = arith.maximumf %8, %9 : vector<512x32xf32>
    %11 = arith.truncf %10 : vector<512x32xf32> to vector<512x32xbf16>
    %c0_8 = arith.constant 0 : index
    %c0_9 = arith.constant 0 : index
    %12 = vector.load %arg5[%c0_8, %c0_9] : memref<512x32xbf16, #tpu.memory_space<vmem>>, vector<512x32xbf16>
    tpu.vector_store %arg5[%c0_8, %c0_9], %11 {strides = array<i32>} : memref<512x32xbf16, #tpu.memory_space<vmem>>, vector<512x32xbf16>,
    return
  }
  func.func @transform_0(%arg0: i32) -> (i32, i32) {
    %c0_i32 = arith.constant 0 : i32
    %c0_i32_0 = arith.constant 0 : i32
    return %arg0, %c0_i32 : i32, i32
  }
  func.func @transform_1(%arg0: i32) -> (i32, i32) {
    %c0_i32 = arith.constant 0 : i32
    %c0_i32_0 = arith.constant 0 : i32
    %c0_i32_1 = arith.constant 0 : i32
    return %c0_i32, %c0_i32_0 : i32, i32
  }
  func.func @transform_2(%arg0: i32) -> (i32, i32) {
    %c0_i32 = arith.constant 0 : i32
    %c0_i32_0 = arith.constant 0 : i32
    %c0_i32_1 = arith.constant 0 : i32
    return %c0_i32, %c0_i32_0 : i32, i32
  }
  func.func @transform_3(%arg0: i32) -> (i32, i32) {
    %c0_i32 = arith.constant 0 : i32
    %c0_i32_0 = arith.constant 0 : i32
    %c0_i32_1 = arith.constant 0 : i32
    return %c0_i32, %c0_i32_0 : i32, i32
  }
  func.func @transform_4(%arg0: i32) -> (i32, i32) {
    %c0_i32 = arith.constant 0 : i32
    %c0_i32_0 = arith.constant 0 : i32
    return %arg0, %c0_i32 : i32, i32
  }
}

module attributes {stable_mosaic.version = 11 : i64} {
  func.func @conv_bn_relu_kernel(%arg0: i32, %arg1: memref<392x288xbf16, #tpu.memory_space<vmem>>, %arg2: memref<288x64xbf16, #tpu.memory_space<vmem>>, %arg3: memref<1x64xf32, #tpu.memory_space<vmem>>, %arg4: memref<1x64xf32, #tpu.memory_space<vmem>>, %arg5: memref<392x64xbf16, #tpu.memory_space<vmem>>) attributes {dimension_semantics = [#tpu.dimension_semantics<parallel>], iteration_bounds = array<i64: 1>, scalar_prefetch = 0 : i64, scratch_operands = 0 : i64, tpu.core_type = #tpu.core_type<tc>, window_params = [{transform_indices = @transform_0, window_bounds = array<i64: 392, 288>}, {pipeline_mode = #tpu.pipeline_mode<synchronous>, transform_indices = @transform_1, window_bounds = array<i64: 288, 64>}, {pipeline_mode = #tpu.pipeline_mode<synchronous>, transform_indices = @transform_2, window_bounds = array<i64: 1, 64>}, {pipeline_mode = #tpu.pipeline_mode<synchronous>, transform_indices = @transform_3, window_bounds = array<i64: 1, 64>}, {transform_indices = @transform_4, window_bounds = array<i64: 392, 64>}]} {
    %c0 = arith.constant 0 : index
    %c0_0 = arith.constant 0 : index
    %0 = vector.load %arg1[%c0, %c0_0] : memref<392x288xbf16, #tpu.memory_space<vmem>>, vector<392x288xbf16>
    %c0_1 = arith.constant 0 : index
    %c0_2 = arith.constant 0 : index
    %1 = vector.load %arg2[%c0_1, %c0_2] : memref<288x64xbf16, #tpu.memory_space<vmem>>, vector<288x64xbf16>
    %cst = arith.constant dense<0.000000e+00> : vector<392x64xf32>
    %2 = tpu.matmul %0, %1, %cst {dimension_numbers = #tpu.dot_dimension_numbers<[1], [0], [0], [1], [0, 0, 1, 1], [], []>} : vector<392x288xbf16>, vector<288x64xbf16>, vector<392x64xf32> -> vector<392x64xf32>
    %c0_3 = arith.constant 0 : index
    %c0_4 = arith.constant 0 : index
    %3 = vector.load %arg3[%c0_3, %c0_4] : memref<1x64xf32, #tpu.memory_space<vmem>>, vector<1x64xf32>
    %4 = vector.broadcast %3 : vector<1x64xf32> to vector<392x64xf32>
    %5 = arith.mulf %2, %4 : vector<392x64xf32>
    %c0_5 = arith.constant 0 : index
    %c0_6 = arith.constant 0 : index
    %6 = vector.load %arg4[%c0_5, %c0_6] : memref<1x64xf32, #tpu.memory_space<vmem>>, vector<1x64xf32>
    %7 = vector.broadcast %6 : vector<1x64xf32> to vector<392x64xf32>
    %8 = arith.addf %5, %7 : vector<392x64xf32>
    %cst_7 = arith.constant 0.000000e+00 : f32
    %9 = vector.broadcast %cst_7 : f32 to vector<392x64xf32>
    %10 = arith.maximumf %8, %9 : vector<392x64xf32>
    %11 = arith.truncf %10 : vector<392x64xf32> to vector<392x64xbf16>
    %c0_8 = arith.constant 0 : index
    %c0_9 = arith.constant 0 : index
    %12 = vector.load %arg5[%c0_8, %c0_9] : memref<392x64xbf16, #tpu.memory_space<vmem>>, vector<392x64xbf16>
    tpu.vector_store %arg5[%c0_8, %c0_9], %11 {strides = array<i32>} : memref<392x64xbf16, #tpu.memory_space<vmem>>, vector<392x64xbf16>,
    return
  }
  func.func @transform_0(%arg0: i32) -> (i32, i32) {
    %c0_i32 = arith.constant 0 : i32
    %c0_i32_0 = arith.constant 0 : i32
    return %arg0, %c0_i32 : i32, i32
  }
  func.func @transform_1(%arg0: i32) -> (i32, i32) {
    %c0_i32 = arith.constant 0 : i32
    %c0_i32_0 = arith.constant 0 : i32
    %c0_i32_1 = arith.constant 0 : i32
    return %c0_i32, %c0_i32_0 : i32, i32
  }
  func.func @transform_2(%arg0: i32) -> (i32, i32) {
    %c0_i32 = arith.constant 0 : i32
    %c0_i32_0 = arith.constant 0 : i32
    %c0_i32_1 = arith.constant 0 : i32
    return %c0_i32, %c0_i32_0 : i32, i32
  }
  func.func @transform_3(%arg0: i32) -> (i32, i32) {
    %c0_i32 = arith.constant 0 : i32
    %c0_i32_0 = arith.constant 0 : i32
    %c0_i32_1 = arith.constant 0 : i32
    return %c0_i32, %c0_i32_0 : i32, i32
  }
  func.func @transform_4(%arg0: i32) -> (i32, i32) {
    %c0_i32 = arith.constant 0 : i32
    %c0_i32_0 = arith.constant 0 : i32
    return %arg0, %c0_i32 : i32, i32
  }
}

module attributes {stable_mosaic.version = 11 : i64} {
  func.func @conv_bn_relu_kernel(%arg0: i32, %arg1: memref<392x576xbf16, #tpu.memory_space<vmem>>, %arg2: memref<576x64xbf16, #tpu.memory_space<vmem>>, %arg3: memref<1x64xf32, #tpu.memory_space<vmem>>, %arg4: memref<1x64xf32, #tpu.memory_space<vmem>>, %arg5: memref<392x64xbf16, #tpu.memory_space<vmem>>) attributes {dimension_semantics = [#tpu.dimension_semantics<parallel>], iteration_bounds = array<i64: 1>, scalar_prefetch = 0 : i64, scratch_operands = 0 : i64, tpu.core_type = #tpu.core_type<tc>, window_params = [{transform_indices = @transform_0, window_bounds = array<i64: 392, 576>}, {pipeline_mode = #tpu.pipeline_mode<synchronous>, transform_indices = @transform_1, window_bounds = array<i64: 576, 64>}, {pipeline_mode = #tpu.pipeline_mode<synchronous>, transform_indices = @transform_2, window_bounds = array<i64: 1, 64>}, {pipeline_mode = #tpu.pipeline_mode<synchronous>, transform_indices = @transform_3, window_bounds = array<i64: 1, 64>}, {transform_indices = @transform_4, window_bounds = array<i64: 392, 64>}]} {
    %c0 = arith.constant 0 : index
    %c0_0 = arith.constant 0 : index
    %0 = vector.load %arg1[%c0, %c0_0] : memref<392x576xbf16, #tpu.memory_space<vmem>>, vector<392x576xbf16>
    %c0_1 = arith.constant 0 : index
    %c0_2 = arith.constant 0 : index
    %1 = vector.load %arg2[%c0_1, %c0_2] : memref<576x64xbf16, #tpu.memory_space<vmem>>, vector<576x64xbf16>
    %cst = arith.constant dense<0.000000e+00> : vector<392x64xf32>
    %2 = tpu.matmul %0, %1, %cst {dimension_numbers = #tpu.dot_dimension_numbers<[1], [0], [0], [1], [0, 0, 1, 1], [], []>} : vector<392x576xbf16>, vector<576x64xbf16>, vector<392x64xf32> -> vector<392x64xf32>
    %c0_3 = arith.constant 0 : index
    %c0_4 = arith.constant 0 : index
    %3 = vector.load %arg3[%c0_3, %c0_4] : memref<1x64xf32, #tpu.memory_space<vmem>>, vector<1x64xf32>
    %4 = vector.broadcast %3 : vector<1x64xf32> to vector<392x64xf32>
    %5 = arith.mulf %2, %4 : vector<392x64xf32>
    %c0_5 = arith.constant 0 : index
    %c0_6 = arith.constant 0 : index
    %6 = vector.load %arg4[%c0_5, %c0_6] : memref<1x64xf32, #tpu.memory_space<vmem>>, vector<1x64xf32>
    %7 = vector.broadcast %6 : vector<1x64xf32> to vector<392x64xf32>
    %8 = arith.addf %5, %7 : vector<392x64xf32>
    %cst_7 = arith.constant 0.000000e+00 : f32
    %9 = vector.broadcast %cst_7 : f32 to vector<392x64xf32>
    %10 = arith.maximumf %8, %9 : vector<392x64xf32>
    %11 = arith.truncf %10 : vector<392x64xf32> to vector<392x64xbf16>
    %c0_8 = arith.constant 0 : index
    %c0_9 = arith.constant 0 : index
    %12 = vector.load %arg5[%c0_8, %c0_9] : memref<392x64xbf16, #tpu.memory_space<vmem>>, vector<392x64xbf16>
    tpu.vector_store %arg5[%c0_8, %c0_9], %11 {strides = array<i32>} : memref<392x64xbf16, #tpu.memory_space<vmem>>, vector<392x64xbf16>,
    return
  }
  func.func @transform_0(%arg0: i32) -> (i32, i32) {
    %c0_i32 = arith.constant 0 : i32
    %c0_i32_0 = arith.constant 0 : i32
    return %arg0, %c0_i32 : i32, i32
  }
  func.func @transform_1(%arg0: i32) -> (i32, i32) {
    %c0_i32 = arith.constant 0 : i32
    %c0_i32_0 = arith.constant 0 : i32
    %c0_i32_1 = arith.constant 0 : i32
    return %c0_i32, %c0_i32_0 : i32, i32
  }
  func.func @transform_2(%arg0: i32) -> (i32, i32) {
    %c0_i32 = arith.constant 0 : i32
    %c0_i32_0 = arith.constant 0 : i32
    %c0_i32_1 = arith.constant 0 : i32
    return %c0_i32, %c0_i32_0 : i32, i32
  }
  func.func @transform_3(%arg0: i32) -> (i32, i32) {
    %c0_i32 = arith.constant 0 : i32
    %c0_i32_0 = arith.constant 0 : i32
    %c0_i32_1 = arith.constant 0 : i32
    return %c0_i32, %c0_i32_0 : i32, i32
  }
  func.func @transform_4(%arg0: i32) -> (i32, i32) {
    %c0_i32 = arith.constant 0 : i32
    %c0_i32_0 = arith.constant 0 : i32
    return %arg0, %c0_i32 : i32, i32
  }
}

module attributes {stable_mosaic.version = 11 : i64} {
  func.func @fc_softmax_kernel(%arg0: i32, %arg1: memref<8x3136xbf16, #tpu.memory_space<vmem>>, %arg2: memref<3136x128xbf16, #tpu.memory_space<vmem>>, %arg3: memref<1x128xf32, #tpu.memory_space<vmem>>, %arg4: memref<128x128xbf16, #tpu.memory_space<vmem>>, %arg5: memref<1x128xf32, #tpu.memory_space<vmem>>, %arg6: memref<128x128xbf16, #tpu.memory_space<vmem>>, %arg7: memref<1x128xf32, #tpu.memory_space<vmem>>, %arg8: memref<8x128xf32, #tpu.memory_space<vmem>>) attributes {dimension_semantics = [#tpu.dimension_semantics<parallel>], iteration_bounds = array<i64: 1>, scalar_prefetch = 0 : i64, scratch_operands = 0 : i64, tpu.core_type = #tpu.core_type<tc>, window_params = [{transform_indices = @transform_0, window_bounds = array<i64: 8, 3136>}, {pipeline_mode = #tpu.pipeline_mode<synchronous>, transform_indices = @transform_1, window_bounds = array<i64: 3136, 128>}, {pipeline_mode = #tpu.pipeline_mode<synchronous>, transform_indices = @transform_2, window_bounds = array<i64: 1, 128>}, {pipeline_mode = #tpu.pipeline_mode<synchronous>, transform_indices = @transform_3, window_bounds = array<i64: 128, 128>}, {pipeline_mode = #tpu.pipeline_mode<synchronous>, transform_indices = @transform_4, window_bounds = array<i64: 1, 128>}, {pipeline_mode = #tpu.pipeline_mode<synchronous>, transform_indices = @transform_5, window_bounds = array<i64: 128, 128>}, {pipeline_mode = #tpu.pipeline_mode<synchronous>, transform_indices = @transform_6, window_bounds = array<i64: 1, 128>}, {transform_indices = @transform_7, window_bounds = array<i64: 8, 128>}]} {
    %c0 = arith.constant 0 : index
    %c0_0 = arith.constant 0 : index
    %0 = vector.load %arg1[%c0, %c0_0] : memref<8x3136xbf16, #tpu.memory_space<vmem>>, vector<8x3136xbf16>
    %c0_1 = arith.constant 0 : index
    %c0_2 = arith.constant 0 : index
    %1 = vector.load %arg2[%c0_1, %c0_2] : memref<3136x128xbf16, #tpu.memory_space<vmem>>, vector<3136x128xbf16>
    %cst = arith.constant dense<0.000000e+00> : vector<8x128xf32>
    %2 = tpu.matmul %0, %1, %cst {dimension_numbers = #tpu.dot_dimension_numbers<[1], [0], [0], [1], [0, 0, 1, 1], [], []>} : vector<8x3136xbf16>, vector<3136x128xbf16>, vector<8x128xf32> -> vector<8x128xf32>
    %c0_3 = arith.constant 0 : index
    %c0_4 = arith.constant 0 : index
    %3 = vector.load %arg3[%c0_3, %c0_4] : memref<1x128xf32, #tpu.memory_space<vmem>>, vector<1x128xf32>
    %4 = vector.broadcast %3 : vector<1x128xf32> to vector<8x128xf32>
    %5 = arith.addf %2, %4 : vector<8x128xf32>
    %cst_5 = arith.constant 0.000000e+00 : f32
    %6 = vector.broadcast %cst_5 : f32 to vector<8x128xf32>
    %7 = arith.maximumf %5, %6 : vector<8x128xf32>
    %8 = arith.truncf %7 : vector<8x128xf32> to vector<8x128xbf16>
    %c0_6 = arith.constant 0 : index
    %c0_7 = arith.constant 0 : index
    %9 = vector.load %arg4[%c0_6, %c0_7] : memref<128x128xbf16, #tpu.memory_space<vmem>>, vector<128x128xbf16>
    %cst_8 = arith.constant dense<0.000000e+00> : vector<8x128xf32>
    %10 = tpu.matmul %8, %9, %cst_8 {dimension_numbers = #tpu.dot_dimension_numbers<[1], [0], [0], [1], [0, 0, 1, 1], [], []>} : vector<8x128xbf16>, vector<128x128xbf16>, vector<8x128xf32> -> vector<8x128xf32>
    %c0_9 = arith.constant 0 : index
    %c0_10 = arith.constant 0 : index
    %11 = vector.load %arg5[%c0_9, %c0_10] : memref<1x128xf32, #tpu.memory_space<vmem>>, vector<1x128xf32>
    %12 = vector.broadcast %11 : vector<1x128xf32> to vector<8x128xf32>
    %13 = arith.addf %10, %12 : vector<8x128xf32>
    %cst_11 = arith.constant 0.000000e+00 : f32
    %14 = vector.broadcast %cst_11 : f32 to vector<8x128xf32>
    %15 = arith.maximumf %13, %14 : vector<8x128xf32>
    %16 = arith.truncf %15 : vector<8x128xf32> to vector<8x128xbf16>
    %c0_12 = arith.constant 0 : index
    %c0_13 = arith.constant 0 : index
    %17 = vector.load %arg6[%c0_12, %c0_13] : memref<128x128xbf16, #tpu.memory_space<vmem>>, vector<128x128xbf16>
    %cst_14 = arith.constant dense<0.000000e+00> : vector<8x128xf32>
    %18 = tpu.matmul %16, %17, %cst_14 {dimension_numbers = #tpu.dot_dimension_numbers<[1], [0], [0], [1], [0, 0, 1, 1], [], []>} : vector<8x128xbf16>, vector<128x128xbf16>, vector<8x128xf32> -> vector<8x128xf32>
    %c0_15 = arith.constant 0 : index
    %c0_16 = arith.constant 0 : index
    %19 = vector.load %arg7[%c0_15, %c0_16] : memref<1x128xf32, #tpu.memory_space<vmem>>, vector<1x128xf32>
    %20 = vector.broadcast %19 : vector<1x128xf32> to vector<8x128xf32>
    %21 = arith.addf %18, %20 : vector<8x128xf32>
    %cst_17 = arith.constant dense<0xFF800000> : vector<8xf32>
    %22 = vector.multi_reduction <maximumf>, %21, %cst_17 [1] : vector<8x128xf32> to vector<8xf32>
    %23 = vector.shape_cast %22 : vector<8xf32> to vector<8x1xf32>
    %24 = vector.broadcast %23 : vector<8x1xf32> to vector<8x128xf32>
    %25 = arith.subf %21, %24 : vector<8x128xf32>
    %26 = math.exp %25 : vector<8x128xf32>
    %cst_18 = arith.constant dense<0.000000e+00> : vector<8xf32>
    %27 = vector.multi_reduction <add>, %26, %cst_18 [1] : vector<8x128xf32> to vector<8xf32>
    %28 = vector.shape_cast %27 : vector<8xf32> to vector<8x1xf32>
    %29 = vector.broadcast %28 : vector<8x1xf32> to vector<8x128xf32>
    %30 = arith.divf %26, %29 : vector<8x128xf32>
    %c0_19 = arith.constant 0 : index
    %c0_20 = arith.constant 0 : index
    %31 = vector.load %arg8[%c0_19, %c0_20] : memref<8x128xf32, #tpu.memory_space<vmem>>, vector<8x128xf32>
    tpu.vector_store %arg8[%c0_19, %c0_20], %30 {strides = array<i32>} : memref<8x128xf32, #tpu.memory_space<vmem>>, vector<8x128xf32>,
    return
  }
  func.func @transform_0(%arg0: i32) -> (i32, i32) {
    %c0_i32 = arith.constant 0 : i32
    %c0_i32_0 = arith.constant 0 : i32
    return %arg0, %c0_i32 : i32, i32
  }
  func.func @transform_1(%arg0: i32) -> (i32, i32) {
    %c0_i32 = arith.constant 0 : i32
    %c0_i32_0 = arith.constant 0 : i32
    %c0_i32_1 = arith.constant 0 : i32
    return %c0_i32, %c0_i32_0 : i32, i32
  }
  func.func @transform_2(%arg0: i32) -> (i32, i32) {
    %c0_i32 = arith.constant 0 : i32
    %c0_i32_0 = arith.constant 0 : i32
    %c0_i32_1 = arith.constant 0 : i32
    return %c0_i32, %c0_i32_0 : i32, i32
  }
  func.func @transform_3(%arg0: i32) -> (i32, i32) {
    %c0_i32 = arith.constant 0 : i32
    %c0_i32_0 = arith.constant 0 : i32
    %c0_i32_1 = arith.constant 0 : i32
    return %c0_i32, %c0_i32_0 : i32, i32
  }
  func.func @transform_4(%arg0: i32) -> (i32, i32) {
    %c0_i32 = arith.constant 0 : i32
    %c0_i32_0 = arith.constant 0 : i32
    %c0_i32_1 = arith.constant 0 : i32
    return %c0_i32, %c0_i32_0 : i32, i32
  }
  func.func @transform_5(%arg0: i32) -> (i32, i32) {
    %c0_i32 = arith.constant 0 : i32
    %c0_i32_0 = arith.constant 0 : i32
    %c0_i32_1 = arith.constant 0 : i32
    return %c0_i32, %c0_i32_0 : i32, i32
  }
  func.func @transform_6(%arg0: i32) -> (i32, i32) {
    %c0_i32 = arith.constant 0 : i32
    %c0_i32_0 = arith.constant 0 : i32
    %c0_i32_1 = arith.constant 0 : i32
    return %c0_i32, %c0_i32_0 : i32, i32
  }
  func.func @transform_7(%arg0: i32) -> (i32, i32) {
    %c0_i32 = arith.constant 0 : i32
    %c0_i32_0 = arith.constant 0 : i32
    return %arg0, %c0_i32 : i32, i32
  }
}

</mosaic_0001>

<llo_original>
// kernel: net_forward.5
$region0: #{net_forward.5}
  #allocation0 [shape = 'u32[]', space=smem, size = 0x4, offset = 0x4, fixed_abs, tag = 'smem constant byte address 0x4 - core index']
  #allocation1 [shape = 'u32[144,128]{1,0:T(1,128)}', space=vmem, size = 0x12000, scoped, tag = 'internal scratch']
  %s0 = inlined_call_operand.vmem [shape: bf16[2048,9], index: 0, kind: input, shape index: {}]
  %s1 = inlined_call_operand.vmem [shape: bf16[9,32], index: 1, kind: input, shape index: {}]
  %s2 = inlined_call_operand.vmem [shape: f32[1,32], index: 2, kind: input, shape index: {}]
  %s3 = inlined_call_operand.vmem [shape: f32[1,32], index: 3, kind: input, shape index: {}]
  %s4 = inlined_call_operand.vmem [shape: bf16[2048,32], index: 4, kind: output, shape index: {}]
  %s5 = sld [smem:[#allocation0]]
  $region49: #{net_forward.5} parent=0
    _
  %s7 = ssub.s32 1, %s5
  %s8 = scalar_select 0, %s7, %s5
  loop: start=0, step=1, limit=6
  $region2: #{net_forward.5} parent=0 // loop_pre_header
    _
  $region3: #{net_forward.5} parent=0 // loop_header
    %s10 = sphi 0, %s14
    %p11 = scmp.ge.s32.totalorder %s10, 6
    %s20 = sphi 0, %s22
    %s23 = sphi 0, %s20
    %s24 = sphi 0, %s23
    %s40 = sphi 0, %s24
    %s44 = sphi 0, %s44
    %s46 = sphi 0, %s44
    %s47 = sphi 0, %s46
    %s61 = sphi 0, %s47
    %s65 = sphi 0, %s65
    %s67 = sphi 0, %s65
    %s68 = sphi 0, %s67
    %s82 = sphi 0, %s68
    %s86 = sphi 0, %s86
    %s88 = sphi 0, %s86
    %s89 = sphi 0, %s88
    %s103 = sphi 0, %s89
    %s109 = sphi 0, %s111
    %s112 = sphi 0, %s109
    %s113 = sphi 0, %s112
    %s129 = sphi 0, %s113
  $region4: #{net_forward.5} parent=0 // loop_header_branch
    %13 = sbr.rel (%p11) target = $region8
  $region5: #{net_forward.5} parent=0 // loop_body
    %s15 = ssub.s32 %s10, 1
    %s16 = ssub.s32 %s10, 2
    %s17 = sadd.s32 %s10, 1
    %s18 = ssub.s32 %s10, %s17
    %p19 = scmp.eq.s32.totalorder %s18, 0
    %s21 = sadd.s32 %s20, 1
    %s22 = scalar_select %p19, %s20, %s21
    %p25 = pneg %p19
    %p26 = scmp.eq.s32.totalorder %s10, 3
    %p27 = por %p25, %p26
    %p28 = scmp.ne.s32.totalorder %s20, %s23
    %p29 = scmp.eq.s32.totalorder %s10, 0
    %p30 = por %p28, %p29
    %p31 = scmp.ne.s32.totalorder %s20, %s23
    %p32 = scmp.eq.s32.totalorder %s15, 3
    %p33 = por %p31, %p32
    %p34 = scmp.ne.s32.totalorder %s23, %s24
    %p35 = scmp.eq.s32.totalorder %s15, 0
    %p36 = por %p34, %p35
    %p37 = scmp.ne.s32.totalorder %s23, %s24
    %p38 = scmp.eq.s32.totalorder %s16, 3
    %p39 = por %p37, %p38
    %p41 = scmp.ne.s32.totalorder %s24, %s40
    %p42 = scmp.eq.s32.totalorder %s16, 0
    %p43 = por %p41, %p42
    %s45 = sadd.s32 %s44, 1
    %p48 = scmp.eq.s32.totalorder %s10, 3
    %p49 = scmp.ne.s32.totalorder %s44, %s46
    %p50 = scmp.eq.s32.totalorder %s10, 0
    %p51 = por %p49, %p50
    %p52 = scmp.ne.s32.totalorder %s44, %s46
    %p53 = scmp.eq.s32.totalorder %s15, 3
    %p54 = por %p52, %p53
    %p55 = scmp.ne.s32.totalorder %s46, %s47
    %p56 = scmp.eq.s32.totalorder %s15, 0
    %p57 = por %p55, %p56
    %p58 = scmp.ne.s32.totalorder %s46, %s47
    %p59 = scmp.eq.s32.totalorder %s16, 3
    %p60 = por %p58, %p59
    %p62 = scmp.ne.s32.totalorder %s47, %s61
    %p63 = scmp.eq.s32.totalorder %s16, 0
    %p64 = por %p62, %p63
    %s66 = sadd.s32 %s65, 1
    %p69 = scmp.eq.s32.totalorder %s10, 3
    %p70 = scmp.ne.s32.totalorder %s65, %s67
    %p71 = scmp.eq.s32.totalorder %s10, 0
    %p72 = por %p70, %p71
    %p73 = scmp.ne.s32.totalorder %s65, %s67
    %p74 = scmp.eq.s32.totalorder %s15, 3
    %p75 = por %p73, %p74
    %p76 = scmp.ne.s32.totalorder %s67, %s68
    %p77 = scmp.eq.s32.totalorder %s15, 0
    %p78 = por %p76, %p77
    %p79 = scmp.ne.s32.totalorder %s67, %s68
    %p80 = scmp.eq.s32.totalorder %s16, 3
    %p81 = por %p79, %p80
    %p83 = scmp.ne.s32.totalorder %s68, %s82
    %p84 = scmp.eq.s32.totalorder %s16, 0
    %p85 = por %p83, %p84
    %s87 = sadd.s32 %s86, 1
    %p90 = scmp.eq.s32.totalorder %s10, 3
    %p91 = scmp.ne.s32.totalorder %s86, %s88
    %p92 = scmp.eq.s32.totalorder %s10, 0
    %p93 = por %p91, %p92
    %p94 = scmp.ne.s32.totalorder %s86, %s88
    %p95 = scmp.eq.s32.totalorder %s15, 3
    %p96 = por %p94, %p95
    %p97 = scmp.ne.s32.totalorder %s88, %s89
    %p98 = scmp.eq.s32.totalorder %s15, 0
    %p99 = por %p97, %p98
    %p100 = scmp.ne.s32.totalorder %s88, %s89
    %p101 = scmp.eq.s32.totalorder %s16, 3
    %p102 = por %p100, %p101
    %p104 = scmp.ne.s32.totalorder %s89, %s103
    %p105 = scmp.eq.s32.totalorder %s16, 0
    %p106 = por %p104, %p105
    %s107 = ssub.s32 %s10, %s17
    %p108 = scmp.eq.s32.totalorder %s107, 0
    %s110 = sadd.s32 %s109, 1
    %s111 = scalar_select %p108, %s109, %s110
    %p114 = pneg %p108
    %p115 = scmp.eq.s32.totalorder %s10, 3
    %p116 = por %p114, %p115
    %p117 = scmp.ne.s32.totalorder %s109, %s112
    %p118 = scmp.eq.s32.totalorder %s10, 0
    %p119 = por %p117, %p118
    %p120 = scmp.ne.s32.totalorder %s109, %s112
    %p121 = scmp.eq.s32.totalorder %s15, 3
    %p122 = por %p120, %p121
    %p123 = scmp.ne.s32.totalorder %s112, %s113
    %p124 = scmp.eq.s32.totalorder %s15, 0
    %p125 = por %p123, %p124
    %p126 = scmp.ne.s32.totalorder %s112, %s113
    %p127 = scmp.eq.s32.totalorder %s16, 3
    %p128 = por %p126, %p127
    %p130 = scmp.ne.s32.totalorder %s113, %s129
    %p131 = scmp.eq.s32.totalorder %s16, 0
    %p132 = por %p130, %p131
    %p133 = scmp.le.s32.totalorder 1, %s10
    %p134 = scmp.lt.s32.totalorder %s10, 5
    %p135 = pnand %p133, %p134
    %p136 = pneg %p135
    // Predicated region
    $region9: #{net_forward.5} parent=5 // pred_check
      _
    $region10: #{net_forward.5} parent=5 // pred_check_branch
      %138 = sbr.rel (%p135) target = $region12
    $region11: #{net_forward.5} parent=5 // pred_region
      %s139 = ssub.s32 %s10, 1
      // Predicated region
      $region13: #{net_forward.5} parent=11 // pred_check
        %p140 = pneg %p57
      $region14: #{net_forward.5} parent=11 // pred_check_branch
        %142 = sbr.rel (%p140) target = $region16
      $region15: #{net_forward.5} parent=11 // pred_region
        _
      $region16: #{net_forward.5} parent=11 // pred_fallthru
        _
      // Predicated region
      $region17: #{net_forward.5} parent=11 // pred_check
        %p143 = pneg %p78
      $region18: #{net_forward.5} parent=11 // pred_check_branch
        %145 = sbr.rel (%p143) target = $region20
      $region19: #{net_forward.5} parent=11 // pred_region
        _
      $region20: #{net_forward.5} parent=11 // pred_fallthru
        _
      // Predicated region
      $region21: #{net_forward.5} parent=11 // pred_check
        %p146 = pneg %p99
      $region22: #{net_forward.5} parent=11 // pred_check_branch
        %148 = sbr.rel (%p146) target = $region24
      $region23: #{net_forward.5} parent=11 // pred_region
        _
      $region24: #{net_forward.5} parent=11 // pred_fallthru
        _
    $region12: #{net_forward.5} parent=5 // pred_fallthru
      _
    %p149 = scmp.lt.s32.totalorder %s10, 4
    // Predicated region
    $region25: #{net_forward.5} parent=5 // pred_check
      %p150 = pneg %p149
    $region26: #{net_forward.5} parent=5 // pred_check_branch
      %152 = sbr.rel (%p150) target = $region28
    $region27: #{net_forward.5} parent=5 // pred_region
      // Predicated region
      $region29: #{net_forward.5} parent=27 // pred_check
        %p153 = pneg %p30
      $region30: #{net_forward.5} parent=27 // pred_check_branch
        %155 = sbr.rel (%p153) target = $region32
      $region31: #{net_forward.5} parent=27 // pred_region
        %s156 = smul.u32 64, %s10
        %p157 = scmp.lt.s32.totalorder %s156, 255
        %s158 = scalar_select %p157, %s156, 255
        %s159 = smul.addr %s158, 4
        %s160 = scalar_lea.vmem %s0, %s159
        %s161 = smul.u32 64, %s10
      $region32: #{net_forward.5} parent=27 // pred_fallthru
        _
    $region28: #{net_forward.5} parent=5 // pred_fallthru
      _
    %p162 = scmp.le.s32.totalorder 1, %s10
    %p163 = scmp.lt.s32.totalorder %s10, 5
    %p164 = pnand %p162, %p163
    %p165 = pneg %p164
    // Predicated region
    $region33: #{net_forward.5} parent=5 // pred_check
      _
    $region34: #{net_forward.5} parent=5 // pred_check_branch
      %167 = sbr.rel (%p164) target = $region36
    $region35: #{net_forward.5} parent=5 // pred_region
      %s168 = ssub.s32 %s10, 1
      %s169 = smul.u32 64, %s15
      %p170 = scmp.lt.s32.totalorder %s169, 255
      %s171 = scalar_select %p170, %s169, 255
      %s172 = smul.addr %s171, 4
      %s173 = scalar_lea.vmem %s0, %s172
      %p174 = pneg %p36
      %p175 = pneg %p33
      %p176 = pneg %p57
      %p177 = pneg %p54
      %p178 = pneg %p78
      %p179 = pneg %p75
      %p180 = pneg %p99
      %p181 = pneg %p96
      %p182 = pneg %p125
      %p183 = pneg %p122
      %s184 = smul.u32 64, %s15
      %p185 = scmp.lt.s32.totalorder %s184, 255
      %s186 = scalar_select %p185, %s184, 255
      %s187 = smul.addr %s186, 4
      %s188 = scalar_lea.vmem %s4, %s187
      %s189 = smul.u32 64, %s15
      %p190 = scmp.lt.s32.totalorder %s189, 255
      %s191 = scalar_select %p190, %s189, 255
      %s192 = smul.addr %s191, 4
      %s193 = scalar_lea.vmem %s0, %s192
      %s194 = smul.u32 64, %s15
      %s195 = smul.u32 64, %s15
      %p196 = scmp.lt.s32.totalorder %s195, 255
      %s197 = scalar_select %p196, %s195, 255
      %s198 = smul.addr %s197, 4
      %s199 = scalar_lea.vmem %s4, %s198
      %s200 = smul.u32 64, %s15
      %v202 = vld [vmem:[%s193] sm:$0xf]
      %v203 = vld [vmem:[%s193 + $0x4] sm:$0xf]
      %v204 = vld [vmem:[%s193 + $0x8] sm:$0xf]
      %v205 = vld [vmem:[%s193 + $0xc] sm:$0xf]
      %v206 = vld [vmem:[%s193 + $0x10] sm:$0xf]
      %v207 = vld [vmem:[%s193 + $0x14] sm:$0xf]
      %v208 = vld [vmem:[%s193 + $0x18] sm:$0xf]
      %v209 = vld [vmem:[%s193 + $0x1c] sm:$0xf]
      %v210 = vld [vmem:[%s193 + $0x20] sm:$0xf]
      %v211 = vld [vmem:[%s193 + $0x24] sm:$0xf]
      %v212 = vld [vmem:[%s193 + $0x28] sm:$0xf]
      %v213 = vld [vmem:[%s193 + $0x2c] sm:$0xf]
      %v214 = vld [vmem:[%s193 + $0x30] sm:$0xf]
      %v215 = vld [vmem:[%s193 + $0x34] sm:$0xf]
      %v216 = vld [vmem:[%s193 + $0x38] sm:$0xf]
      %v217 = vld [vmem:[%s193 + $0x3c] sm:$0xf]
      %v218 = vld [vmem:[%s193 + $0x40] sm:$0xf]
      %v219 = vld [vmem:[%s193 + $0x44] sm:$0xf]
      %v220 = vld [vmem:[%s193 + $0x48] sm:$0xf]
      %v221 = vld [vmem:[%s193 + $0x4c] sm:$0xf]
      %v222 = vld [vmem:[%s193 + $0x50] sm:$0xf]
      %v223 = vld [vmem:[%s193 + $0x54] sm:$0xf]
      %v224 = vld [vmem:[%s193 + $0x58] sm:$0xf]
      %v225 = vld [vmem:[%s193 + $0x5c] sm:$0xf]
      %v226 = vld [vmem:[%s193 + $0x60] sm:$0xf]
      %v227 = vld [vmem:[%s193 + $0x64] sm:$0xf]
      %v228 = vld [vmem:[%s193 + $0x68] sm:$0xf]
      %v229 = vld [vmem:[%s193 + $0x6c] sm:$0xf]
      %v230 = vld [vmem:[%s193 + $0x70] sm:$0xf]
      %v231 = vld [vmem:[%s193 + $0x74] sm:$0xf]
      %v232 = vld [vmem:[%s193 + $0x78] sm:$0xf]
      %v233 = vld [vmem:[%s193 + $0x7c] sm:$0xf]
      %v234 = vld [vmem:[%s193 + $0x80] sm:$0xf]
      %v235 = vld [vmem:[%s193 + $0x84] sm:$0xf]
      %v236 = vld [vmem:[%s193 + $0x88] sm:$0xf]
      %v237 = vld [vmem:[%s193 + $0x8c] sm:$0xf]
      %v238 = vld [vmem:[%s193 + $0x90] sm:$0xf]
      %v239 = vld [vmem:[%s193 + $0x94] sm:$0xf]
      %v240 = vld [vmem:[%s193 + $0x98] sm:$0xf]
      %v241 = vld [vmem:[%s193 + $0x9c] sm:$0xf]
      %v242 = vld [vmem:[%s193 + $0xa0] sm:$0xf]
      %v243 = vld [vmem:[%s193 + $0xa4] sm:$0xf]
      %v244 = vld [vmem:[%s193 + $0xa8] sm:$0xf]
      %v245 = vld [vmem:[%s193 + $0xac] sm:$0xf]
      %v246 = vld [vmem:[%s193 + $0xb0] sm:$0xf]
      %v247 = vld [vmem:[%s193 + $0xb4] sm:$0xf]
      %v248 = vld [vmem:[%s193 + $0xb8] sm:$0xf]
      %v249 = vld [vmem:[%s193 + $0xbc] sm:$0xf]
      %v250 = vld [vmem:[%s193 + $0xc0] sm:$0xf]
      %v251 = vld [vmem:[%s193 + $0xc4] sm:$0xf]
      %v252 = vld [vmem:[%s193 + $0xc8] sm:$0xf]
      %v253 = vld [vmem:[%s193 + $0xcc] sm:$0xf]
      %v254 = vld [vmem:[%s193 + $0xd0] sm:$0xf]
      %v255 = vld [vmem:[%s193 + $0xd4] sm:$0xf]
      %v256 = vld [vmem:[%s193 + $0xd8] sm:$0xf]
      %v257 = vld [vmem:[%s193 + $0xdc] sm:$0xf]
      %v258 = vld [vmem:[%s193 + $0xe0] sm:$0xf]
      %v259 = vld [vmem:[%s193 + $0xe4] sm:$0xf]
      %v260 = vld [vmem:[%s193 + $0xe8] sm:$0xf]
      %v261 = vld [vmem:[%s193 + $0xec] sm:$0xf]
      %v262 = vld [vmem:[%s193 + $0xf0] sm:$0xf]
      %v263 = vld [vmem:[%s193 + $0xf4] sm:$0xf]
      %v264 = vld [vmem:[%s193 + $0xf8] sm:$0xf]
      %v265 = vld [vmem:[%s193 + $0xfc] sm:$0xf]
      %v266 = vld [vmem:[%s1] sm:$0xf]
      %v267 = vld [vmem:[%s1 + $0x4] sm:$0x1]
      %v332 = vunpack.c.l.b16 %v202
      %v333 = vunpack.c.l.b16 %v203
      %v334 = vunpack.c.l.b16 %v204
      %v335 = vunpack.c.l.b16 %v205
      %v336 = vunpack.c.l.b16 %v206
      %v337 = vunpack.c.l.b16 %v207
      %v338 = vunpack.c.l.b16 %v208
      %v339 = vunpack.c.l.b16 %v209
      %v340 = vunpack.c.l.b16 %v210
      %v341 = vunpack.c.l.b16 %v211
      %v342 = vunpack.c.l.b16 %v212
      %v343 = vunpack.c.l.b16 %v213
      %v344 = vunpack.c.l.b16 %v214
      %v345 = vunpack.c.l.b16 %v215
      %v346 = vunpack.c.l.b16 %v216
      %v347 = vunpack.c.l.b16 %v217
      %v348 = vunpack.c.l.b16 %v218
      %v349 = vunpack.c.l.b16 %v219
      %v350 = vunpack.c.l.b16 %v220
      %v351 = vunpack.c.l.b16 %v221
      %v352 = vunpack.c.l.b16 %v222
      %v353 = vunpack.c.l.b16 %v223
      %v354 = vunpack.c.l.b16 %v224
      %v355 = vunpack.c.l.b16 %v225
      %v356 = vunpack.c.l.b16 %v226
      %v357 = vunpack.c.l.b16 %v227
      %v358 = vunpack.c.l.b16 %v228
      %v359 = vunpack.c.l.b16 %v229
      %v360 = vunpack.c.l.b16 %v230
      %v361 = vunpack.c.l.b16 %v231
      %v362 = vunpack.c.l.b16 %v232
      %v363 = vunpack.c.l.b16 %v233
      %v364 = vunpack.c.l.b16 %v234
      %v365 = vunpack.c.l.b16 %v235
      %v366 = vunpack.c.l.b16 %v236
      %v367 = vunpack.c.l.b16 %v237
      %v368 = vunpack.c.l.b16 %v238
      %v369 = vunpack.c.l.b16 %v239
      %v370 = vunpack.c.l.b16 %v240
      %v371 = vunpack.c.l.b16 %v241
      %v372 = vunpack.c.l.b16 %v242
      %v373 = vunpack.c.l.b16 %v243
      %v374 = vunpack.c.l.b16 %v244
      %v375 = vunpack.c.l.b16 %v245
      %v376 = vunpack.c.l.b16 %v246
      %v377 = vunpack.c.l.b16 %v247
      %v378 = vunpack.c.l.b16 %v248
      %v379 = vunpack.c.l.b16 %v249
      %v380 = vunpack.c.l.b16 %v250
      %v381 = vunpack.c.l.b16 %v251
      %v382 = vunpack.c.l.b16 %v252
      %v383 = vunpack.c.l.b16 %v253
      %v384 = vunpack.c.l.b16 %v254
      %v385 = vunpack.c.l.b16 %v255
      %v386 = vunpack.c.l.b16 %v256
      %v387 = vunpack.c.l.b16 %v257
      %v388 = vunpack.c.l.b16 %v258
      %v389 = vunpack.c.l.b16 %v259
      %v390 = vunpack.c.l.b16 %v260
      %v391 = vunpack.c.l.b16 %v261
      %v392 = vunpack.c.l.b16 %v262
      %v393 = vunpack.c.l.b16 %v263
      %v394 = vunpack.c.l.b16 %v264
      %v395 = vunpack.c.l.b16 %v265
      %v396 = vpack.c.b16 %v333, %v332
      %v397 = vpack.c.b16 %v335, %v334
      %v398 = vpack.c.b16 %v337, %v336
      %v399 = vpack.c.b16 %v339, %v338
      %v400 = vpack.c.b16 %v341, %v340
      %v401 = vpack.c.b16 %v343, %v342
      %v402 = vpack.c.b16 %v345, %v344
      %v403 = vpack.c.b16 %v347, %v346
      %v404 = vpack.c.b16 %v349, %v348
      %v405 = vpack.c.b16 %v351, %v350
      %v406 = vpack.c.b16 %v353, %v352
      %v407 = vpack.c.b16 %v355, %v354
      %v408 = vpack.c.b16 %v357, %v356
      %v409 = vpack.c.b16 %v359, %v358
      %v410 = vpack.c.b16 %v361, %v360
      %v411 = vpack.c.b16 %v363, %v362
      %v412 = vpack.c.b16 %v365, %v364
      %v413 = vpack.c.b16 %v367, %v366
      %v414 = vpack.c.b16 %v369, %v368
      %v415 = vpack.c.b16 %v371, %v370
      %v416 = vpack.c.b16 %v373, %v372
      %v417 = vpack.c.b16 %v375, %v374
      %v418 = vpack.c.b16 %v377, %v376
      %v419 = vpack.c.b16 %v379, %v378
      %v420 = vpack.c.b16 %v381, %v380
      %v421 = vpack.c.b16 %v383, %v382
      %v422 = vpack.c.b16 %v385, %v384
      %v423 = vpack.c.b16 %v387, %v386
      %v424 = vpack.c.b16 %v389, %v388
      %v425 = vpack.c.b16 %v391, %v390
      %v426 = vpack.c.b16 %v393, %v392
      %v427 = vpack.c.b16 %v395, %v394
      %v430 = vunpack.c.l.b16 %v266
      %v431 = vunpack.c.l.b16 %v267
      %v432 = vpack.c.b16 %v431, %v430
      %vm433 = vcmask 72704
      %v435 = vsel %vm433, %v396, 0
      %v438 = vsel %vm433, %v397, 0
      %v441 = vsel %vm433, %v398, 0
      %v444 = vsel %vm433, %v399, 0
      %v447 = vsel %vm433, %v400, 0
      %v450 = vsel %vm433, %v401, 0
      %v453 = vsel %vm433, %v402, 0
      %v456 = vsel %vm433, %v403, 0
      %v459 = vsel %vm433, %v404, 0
      %v462 = vsel %vm433, %v405, 0
      %v465 = vsel %vm433, %v406, 0
      %v468 = vsel %vm433, %v407, 0
      %v471 = vsel %vm433, %v408, 0
      %v474 = vsel %vm433, %v409, 0
      %v477 = vsel %vm433, %v410, 0
      %v480 = vsel %vm433, %v411, 0
      %v483 = vsel %vm433, %v412, 0
      %v486 = vsel %vm433, %v413, 0
      %v489 = vsel %vm433, %v414, 0
      %v492 = vsel %vm433, %v415, 0
      %v495 = vsel %vm433, %v416, 0
      %v498 = vsel %vm433, %v417, 0
      %v501 = vsel %vm433, %v418, 0
      %v504 = vsel %vm433, %v419, 0
      %v507 = vsel %vm433, %v420, 0
      %v510 = vsel %vm433, %v421, 0
      %v513 = vsel %vm433, %v422, 0
      %v516 = vsel %vm433, %v423, 0
      %v519 = vsel %vm433, %v424, 0
      %v522 = vsel %vm433, %v425, 0
      %v525 = vsel %vm433, %v426, 0
      %v528 = vsel %vm433, %v427, 0
      %vm530 = vcmask 1043456
      %vm531 = vcmask 1044480
      %v532 = vsel %vm530, 4294967295, 65535
      %v533 = vsel %vm531, %v532, 0
      %v535 = vand.u32 %v432, %v533
      %537 = vmatprep.subr.bf16.mxu0 0
      %538 = vmatpush1.bf16.msra.mxu0 %v535
      %539 = vmatprep.subr.bf16.mxu0 0
      %540 = vmatpush1.bf16.msra.mxu0 0
      %541 = vmatprep.subr.bf16.mxu0 0
      %542 = vmatpush1.bf16.msra.mxu0 0
      %543 = vmatprep.subr.bf16.mxu0 0
      %544 = vmatpush1.bf16.msra.mxu0 0
      %545 = vmatprep.subr.bf16.mxu0 0
      %546 = vmatpush1.bf16.msra.mxu0 0
      %547 = vmatprep.subr.bf16.mxu0 0
      %548 = vmatpush1.bf16.msra.mxu0 0
      %549 = vmatprep.subr.bf16.mxu0 0
      %550 = vmatpush1.bf16.msra.mxu0 0
      %551 = vmatprep.subr.bf16.mxu0 0
      %552 = vmatpush1.bf16.msra.mxu0 0
      %553 = vmatprep.subr.bf16.mxu0 0
      %554 = vmatpush1.bf16.msra.mxu0 0
      %555 = vmatprep.subr.bf16.mxu0 0
      %556 = vmatpush1.bf16.msra.mxu0 0
      %557 = vmatprep.subr.bf16.mxu0 0
      %558 = vmatpush1.bf16.msra.mxu0 0
      %559 = vmatprep.subr.bf16.mxu0 0
      %560 = vmatpush1.bf16.msra.mxu0 0
      %561 = vmatprep.subr.bf16.mxu0 0
      %562 = vmatpush1.bf16.msra.mxu0 0
      %563 = vmatprep.subr.bf16.mxu0 0
      %564 = vmatpush1.bf16.msra.mxu0 0
      %565 = vmatprep.subr.bf16.mxu0 0
      %566 = vmatpush1.bf16.msra.mxu0 0
      %567 = vmatprep.subr.bf16.mxu0 0
      %568 = vmatpush1.bf16.msra.mxu0 0
      %569 = vmatprep.mubr.bf16.mxu0 0
      %570 = vmatmul.mubr.bf16.gmra.mrb[0].mxu0 %v435
      %v571 = vpop.f32.mrb[0].mxu0
      %v572 = vadd.f32 0.0, %v571
      %v573 = vpop.f32.mrb[0].mxu0
      %v574 = vpop.f32.mrb[0].mxu0
      %v575 = vadd.f32 0.0, %v574
      %v576 = vpop.f32.mrb[0].mxu0
      %577 = vmatprep.mubr.bf16.mxu0 0
      %578 = vmatmul.mubr.bf16.gmra.mrb[0].mxu0 %v438
      %v579 = vpop.f32.mrb[0].mxu0
      %v580 = vadd.f32 0.0, %v579
      %v581 = vpop.f32.mrb[0].mxu0
      %v582 = vpop.f32.mrb[0].mxu0
      %v583 = vadd.f32 0.0, %v582
      %v584 = vpop.f32.mrb[0].mxu0
      %585 = vmatprep.mubr.bf16.mxu0 0
      %586 = vmatmul.mubr.bf16.gmra.mrb[0].mxu0 %v441
      %v587 = vpop.f32.mrb[0].mxu0
      %v588 = vadd.f32 0.0, %v587
      %v589 = vpop.f32.mrb[0].mxu0
      %v590 = vpop.f32.mrb[0].mxu0
      %v591 = vadd.f32 0.0, %v590
      %v592 = vpop.f32.mrb[0].mxu0
      %593 = vmatprep.mubr.bf16.mxu0 0
      %594 = vmatmul.mubr.bf16.gmra.mrb[0].mxu0 %v444
      %v595 = vpop.f32.mrb[0].mxu0
      %v596 = vadd.f32 0.0, %v595
      %v597 = vpop.f32.mrb[0].mxu0
      %v598 = vpop.f32.mrb[0].mxu0
      %v599 = vadd.f32 0.0, %v598
      %v600 = vpop.f32.mrb[0].mxu0
      %601 = vmatprep.mubr.bf16.mxu0 0
      %602 = vmatmul.mubr.bf16.gmra.mrb[0].mxu0 %v447
      %v603 = vpop.f32.mrb[0].mxu0
      %v604 = vadd.f32 0.0, %v603
      %v605 = vpop.f32.mrb[0].mxu0
      %v606 = vpop.f32.mrb[0].mxu0
      %v607 = vadd.f32 0.0, %v606
      %v608 = vpop.f32.mrb[0].mxu0
      %609 = vmatprep.mubr.bf16.mxu0 0
      %610 = vmatmul.mubr.bf16.gmra.mrb[0].mxu0 %v450
      %v611 = vpop.f32.mrb[0].mxu0
      %v612 = vadd.f32 0.0, %v611
      %v613 = vpop.f32.mrb[0].mxu0
      %v614 = vpop.f32.mrb[0].mxu0
      %v615 = vadd.f32 0.0, %v614
      %v616 = vpop.f32.mrb[0].mxu0
      %617 = vmatprep.mubr.bf16.mxu0 0
      %618 = vmatmul.mubr.bf16.gmra.mrb[0].mxu0 %v453
      %v619 = vpop.f32.mrb[0].mxu0
      %v620 = vadd.f32 0.0, %v619
      %v621 = vpop.f32.mrb[0].mxu0
      %v622 = vpop.f32.mrb[0].mxu0
      %v623 = vadd.f32 0.0, %v622
      %v624 = vpop.f32.mrb[0].mxu0
      %625 = vmatprep.mubr.bf16.mxu0 0
      %626 = vmatmul.mubr.bf16.gmra.mrb[0].mxu0 %v456
      %v627 = vpop.f32.mrb[0].mxu0
      %v628 = vadd.f32 0.0, %v627
      %v629 = vpop.f32.mrb[0].mxu0
      %v630 = vpop.f32.mrb[0].mxu0
      %v631 = vadd.f32 0.0, %v630
      %v632 = vpop.f32.mrb[0].mxu0
      %633 = vmatprep.mubr.bf16.mxu0 0
      %634 = vmatmul.mubr.bf16.gmra.mrb[0].mxu0 %v459
      %v635 = vpop.f32.mrb[0].mxu0
      %v636 = vadd.f32 0.0, %v635
      %v637 = vpop.f32.mrb[0].mxu0
      %v638 = vpop.f32.mrb[0].mxu0
      %v639 = vadd.f32 0.0, %v638
      %v640 = vpop.f32.mrb[0].mxu0
      %641 = vmatprep.mubr.bf16.mxu0 0
      %642 = vmatmul.mubr.bf16.gmra.mrb[0].mxu0 %v462
      %v643 = vpop.f32.mrb[0].mxu0
      %v644 = vadd.f32 0.0, %v643
      %v645 = vpop.f32.mrb[0].mxu0
      %v646 = vpop.f32.mrb[0].mxu0
      %v647 = vadd.f32 0.0, %v646
      %v648 = vpop.f32.mrb[0].mxu0
      %649 = vmatprep.mubr.bf16.mxu0 0
      %650 = vmatmul.mubr.bf16.gmra.mrb[0].mxu0 %v465
      %v651 = vpop.f32.mrb[0].mxu0
      %v652 = vadd.f32 0.0, %v651
      %v653 = vpop.f32.mrb[0].mxu0
      %v654 = vpop.f32.mrb[0].mxu0
      %v655 = vadd.f32 0.0, %v654
      %v656 = vpop.f32.mrb[0].mxu0
      %657 = vmatprep.mubr.bf16.mxu0 0
      %658 = vmatmul.mubr.bf16.gmra.mrb[0].mxu0 %v468
      %v659 = vpop.f32.mrb[0].mxu0
      %v660 = vadd.f32 0.0, %v659
      %v661 = vpop.f32.mrb[0].mxu0
      %v662 = vpop.f32.mrb[0].mxu0
      %v663 = vadd.f32 0.0, %v662
      %v664 = vpop.f32.mrb[0].mxu0
      %665 = vmatprep.mubr.bf16.mxu0 0
      %666 = vmatmul.mubr.bf16.gmra.mrb[0].mxu0 %v471
      %v667 = vpop.f32.mrb[0].mxu0
      %v668 = vadd.f32 0.0, %v667
      %v669 = vpop.f32.mrb[0].mxu0
      %v670 = vpop.f32.mrb[0].mxu0
      %v671 = vadd.f32 0.0, %v670
      %v672 = vpop.f32.mrb[0].mxu0
      %673 = vmatprep.mubr.bf16.mxu0 0
      %674 = vmatmul.mubr.bf16.gmra.mrb[0].mxu0 %v474
      %v675 = vpop.f32.mrb[0].mxu0
      %v676 = vadd.f32 0.0, %v675
      %v677 = vpop.f32.mrb[0].mxu0
      %v678 = vpop.f32.mrb[0].mxu0
      %v679 = vadd.f32 0.0, %v678
      %v680 = vpop.f32.mrb[0].mxu0
      %681 = vmatprep.mubr.bf16.mxu0 0
      %682 = vmatmul.mubr.bf16.gmra.mrb[0].mxu0 %v477
      %v683 = vpop.f32.mrb[0].mxu0
      %v684 = vadd.f32 0.0, %v683
      %v685 = vpop.f32.mrb[0].mxu0
      %v686 = vpop.f32.mrb[0].mxu0
      %v687 = vadd.f32 0.0, %v686
      %v688 = vpop.f32.mrb[0].mxu0
      %689 = vmatprep.mubr.bf16.mxu0 0
      %690 = vmatmul.mubr.bf16.gmra.mrb[0].mxu0 %v480
      %v691 = vpop.f32.mrb[0].mxu0
      %v692 = vadd.f32 0.0, %v691
      %v693 = vpop.f32.mrb[0].mxu0
      %v694 = vpop.f32.mrb[0].mxu0
      %v695 = vadd.f32 0.0, %v694
      %v696 = vpop.f32.mrb[0].mxu0
      %697 = vmatprep.mubr.bf16.mxu0 0
      %698 = vmatmul.mubr.bf16.gmra.mrb[0].mxu0 %v483
      %v699 = vpop.f32.mrb[0].mxu0
      %v700 = vadd.f32 0.0, %v699
      %v701 = vpop.f32.mrb[0].mxu0
      %v702 = vpop.f32.mrb[0].mxu0
      %v703 = vadd.f32 0.0, %v702
      %v704 = vpop.f32.mrb[0].mxu0
      %705 = vmatprep.mubr.bf16.mxu0 0
      %706 = vmatmul.mubr.bf16.gmra.mrb[0].mxu0 %v486
      %v707 = vpop.f32.mrb[0].mxu0
      %v708 = vadd.f32 0.0, %v707
      %v709 = vpop.f32.mrb[0].mxu0
      %v710 = vpop.f32.mrb[0].mxu0
      %v711 = vadd.f32 0.0, %v710
      %v712 = vpop.f32.mrb[0].mxu0
      %713 = vmatprep.mubr.bf16.mxu0 0
      %714 = vmatmul.mubr.bf16.gmra.mrb[0].mxu0 %v489
      %v715 = vpop.f32.mrb[0].mxu0
      %v716 = vadd.f32 0.0, %v715
      %v717 = vpop.f32.mrb[0].mxu0
      %v718 = vpop.f32.mrb[0].mxu0
      %v719 = vadd.f32 0.0, %v718
      %v720 = vpop.f32.mrb[0].mxu0
      %721 = vmatprep.mubr.bf16.mxu0 0
      %722 = vmatmul.mubr.bf16.gmra.mrb[0].mxu0 %v492
      %v723 = vpop.f32.mrb[0].mxu0
      %v724 = vadd.f32 0.0, %v723
      %v725 = vpop.f32.mrb[0].mxu0
      %v726 = vpop.f32.mrb[0].mxu0
      %v727 = vadd.f32 0.0, %v726
      %v728 = vpop.f32.mrb[0].mxu0
      %729 = vmatprep.mubr.bf16.mxu0 0
      %730 = vmatmul.mubr.bf16.gmra.mrb[0].mxu0 %v495
      %v731 = vpop.f32.mrb[0].mxu0
      %v732 = vadd.f32 0.0, %v731
      %v733 = vpop.f32.mrb[0].mxu0
      %v734 = vpop.f32.mrb[0].mxu0
      %v735 = vadd.f32 0.0, %v734
      %v736 = vpop.f32.mrb[0].mxu0
      %737 = vmatprep.mubr.bf16.mxu0 0
      %738 = vmatmul.mubr.bf16.gmra.mrb[0].mxu0 %v498
      %v739 = vpop.f32.mrb[0].mxu0
      %v740 = vadd.f32 0.0, %v739
      %v741 = vpop.f32.mrb[0].mxu0
      %v742 = vpop.f32.mrb[0].mxu0
      %v743 = vadd.f32 0.0, %v742
      %v744 = vpop.f32.mrb[0].mxu0
      %745 = vmatprep.mubr.bf16.mxu0 0
      %746 = vmatmul.mubr.bf16.gmra.mrb[0].mxu0 %v501
      %v747 = vpop.f32.mrb[0].mxu0
      %v748 = vadd.f32 0.0, %v747
      %v749 = vpop.f32.mrb[0].mxu0
      %v750 = vpop.f32.mrb[0].mxu0
      %v751 = vadd.f32 0.0, %v750
      %v752 = vpop.f32.mrb[0].mxu0
      %753 = vmatprep.mubr.bf16.mxu0 0
      %754 = vmatmul.mubr.bf16.gmra.mrb[0].mxu0 %v504
      %v755 = vpop.f32.mrb[0].mxu0
      %v756 = vadd.f32 0.0, %v755
      %v757 = vpop.f32.mrb[0].mxu0
      %v758 = vpop.f32.mrb[0].mxu0
      %v759 = vadd.f32 0.0, %v758
      %v760 = vpop.f32.mrb[0].mxu0
      %761 = vmatprep.mubr.bf16.mxu0 0
      %762 = vmatmul.mubr.bf16.gmra.mrb[0].mxu0 %v507
      %v763 = vpop.f32.mrb[0].mxu0
      %v764 = vadd.f32 0.0, %v763
      %v765 = vpop.f32.mrb[0].mxu0
      %v766 = vpop.f32.mrb[0].mxu0
      %v767 = vadd.f32 0.0, %v766
      %v768 = vpop.f32.mrb[0].mxu0
      %769 = vmatprep.mubr.bf16.mxu0 0
      %770 = vmatmul.mubr.bf16.gmra.mrb[0].mxu0 %v510
      %v771 = vpop.f32.mrb[0].mxu0
      %v772 = vadd.f32 0.0, %v771
      %v773 = vpop.f32.mrb[0].mxu0
      %v774 = vpop.f32.mrb[0].mxu0
      %v775 = vadd.f32 0.0, %v774
      %v776 = vpop.f32.mrb[0].mxu0
      %777 = vmatprep.mubr.bf16.mxu0 0
      %778 = vmatmul.mubr.bf16.gmra.mrb[0].mxu0 %v513
      %v779 = vpop.f32.mrb[0].mxu0
      %v780 = vadd.f32 0.0, %v779
      %v781 = vpop.f32.mrb[0].mxu0
      %v782 = vpop.f32.mrb[0].mxu0
      %v783 = vadd.f32 0.0, %v782
      %v784 = vpop.f32.mrb[0].mxu0
      %785 = vmatprep.mubr.bf16.mxu0 0
      %786 = vmatmul.mubr.bf16.gmra.mrb[0].mxu0 %v516
      %v787 = vpop.f32.mrb[0].mxu0
      %v788 = vadd.f32 0.0, %v787
      %v789 = vpop.f32.mrb[0].mxu0
      %v790 = vpop.f32.mrb[0].mxu0
      %v791 = vadd.f32 0.0, %v790
      %v792 = vpop.f32.mrb[0].mxu0
      %793 = vmatprep.mubr.bf16.mxu0 0
      %794 = vmatmul.mubr.bf16.gmra.mrb[0].mxu0 %v519
      %v795 = vpop.f32.mrb[0].mxu0
      %v796 = vadd.f32 0.0, %v795
      %v797 = vpop.f32.mrb[0].mxu0
      %v798 = vpop.f32.mrb[0].mxu0
      %v799 = vadd.f32 0.0, %v798
      %v800 = vpop.f32.mrb[0].mxu0
      %801 = vmatprep.mubr.bf16.mxu0 0
      %802 = vmatmul.mubr.bf16.gmra.mrb[0].mxu0 %v522
      %v803 = vpop.f32.mrb[0].mxu0
      %v804 = vadd.f32 0.0, %v803
      %v805 = vpop.f32.mrb[0].mxu0
      %v806 = vpop.f32.mrb[0].mxu0
      %v807 = vadd.f32 0.0, %v806
      %v808 = vpop.f32.mrb[0].mxu0
      %809 = vmatprep.mubr.bf16.mxu0 0
      %810 = vmatmul.mubr.bf16.gmra.mrb[0].mxu0 %v525
      %v811 = vpop.f32.mrb[0].mxu0
      %v812 = vadd.f32 0.0, %v811
      %v813 = vpop.f32.mrb[0].mxu0
      %v814 = vpop.f32.mrb[0].mxu0
      %v815 = vadd.f32 0.0, %v814
      %v816 = vpop.f32.mrb[0].mxu0
      %817 = vmatprep.mubr.bf16.mxu0 0
      %818 = vmatmul.mubr.bf16.gmra.mrb[0].mxu0 %v528
      %v819 = vpop.f32.mrb[0].mxu0
      %v820 = vadd.f32 0.0, %v819
      %v821 = vpop.f32.mrb[0].mxu0
      %v822 = vpop.f32.mrb[0].mxu0
      %v823 = vadd.f32 0.0, %v822
      %v824 = vpop.f32.mrb[0].mxu0
      %825 = vdwg.mxu0
      %v826 = vld [vmem:[%s2] sm:$0x1]
      %v828 = vlaneseq
      %v829 = vshrl.u32 %v828, 7
      %v830 = vsub.s32 0, %v829
      %v831 = vrot.slane %v826, %v830
      %v833 = vmul.f32 %v572, %v831
      %v834 = vmul.f32 %v575, %v831
      %v835 = vmul.f32 %v580, %v831
      %v836 = vmul.f32 %v583, %v831
      %v837 = vmul.f32 %v588, %v831
      %v838 = vmul.f32 %v591, %v831
      %v839 = vmul.f32 %v596, %v831
      %v840 = vmul.f32 %v599, %v831
      %v841 = vmul.f32 %v604, %v831
      %v842 = vmul.f32 %v607, %v831
      %v843 = vmul.f32 %v612, %v831
      %v844 = vmul.f32 %v615, %v831
      %v845 = vmul.f32 %v620, %v831
      %v846 = vmul.f32 %v623, %v831
      %v847 = vmul.f32 %v628, %v831
      %v848 = vmul.f32 %v631, %v831
      %v849 = vmul.f32 %v636, %v831
      %v850 = vmul.f32 %v639, %v831
      %v851 = vmul.f32 %v644, %v831
      %v852 = vmul.f32 %v647, %v831
      %v853 = vmul.f32 %v652, %v831
      %v854 = vmul.f32 %v655, %v831
      %v855 = vmul.f32 %v660, %v831
      %v856 = vmul.f32 %v663, %v831
      %v857 = vmul.f32 %v668, %v831
      %v858 = vmul.f32 %v671, %v831
      %v859 = vmul.f32 %v676, %v831
      %v860 = vmul.f32 %v679, %v831
      %v861 = vmul.f32 %v684, %v831
      %v862 = vmul.f32 %v687, %v831
      %v863 = vmul.f32 %v692, %v831
      %v864 = vmul.f32 %v695, %v831
      %v865 = vmul.f32 %v700, %v831
      %v866 = vmul.f32 %v703, %v831
      %v867 = vmul.f32 %v708, %v831
      %v868 = vmul.f32 %v711, %v831
      %v869 = vmul.f32 %v716, %v831
      %v870 = vmul.f32 %v719, %v831
      %v871 = vmul.f32 %v724, %v831
      %v872 = vmul.f32 %v727, %v831
      %v873 = vmul.f32 %v732, %v831
      %v874 = vmul.f32 %v735, %v831
      %v875 = vmul.f32 %v740, %v831
      %v876 = vmul.f32 %v743, %v831
      %v877 = vmul.f32 %v748, %v831
      %v878 = vmul.f32 %v751, %v831
      %v879 = vmul.f32 %v756, %v831
      %v880 = vmul.f32 %v759, %v831
      %v881 = vmul.f32 %v764, %v831
      %v882 = vmul.f32 %v767, %v831
      %v883 = vmul.f32 %v772, %v831
      %v884 = vmul.f32 %v775, %v831
      %v885 = vmul.f32 %v780, %v831
      %v886 = vmul.f32 %v783, %v831
      %v887 = vmul.f32 %v788, %v831
      %v888 = vmul.f32 %v791, %v831
      %v889 = vmul.f32 %v796, %v831
      %v890 = vmul.f32 %v799, %v831
      %v891 = vmul.f32 %v804, %v831
      %v892 = vmul.f32 %v807, %v831
      %v893 = vmul.f32 %v812, %v831
      %v894 = vmul.f32 %v815, %v831
      %v895 = vmul.f32 %v820, %v831
      %v896 = vmul.f32 %v823, %v831
      %v897 = vld [vmem:[%s3] sm:$0x1]
      %v899 = vlaneseq
      %v900 = vshrl.u32 %v899, 7
      %v901 = vsub.s32 0, %v900
      %v902 = vrot.slane %v897, %v901
      %v904 = vadd.f32 %v833, %v902
      %v905 = vadd.f32 %v834, %v902
      %v906 = vadd.f32 %v835, %v902
      %v907 = vadd.f32 %v836, %v902
      %v908 = vadd.f32 %v837, %v902
      %v909 = vadd.f32 %v838, %v902
      %v910 = vadd.f32 %v839, %v902
      %v911 = vadd.f32 %v840, %v902
      %v912 = vadd.f32 %v841, %v902
      %v913 = vadd.f32 %v842, %v902
      %v914 = vadd.f32 %v843, %v902
      %v915 = vadd.f32 %v844, %v902
      %v916 = vadd.f32 %v845, %v902
      %v917 = vadd.f32 %v846, %v902
      %v918 = vadd.f32 %v847, %v902
      %v919 = vadd.f32 %v848, %v902
      %v920 = vadd.f32 %v849, %v902
      %v921 = vadd.f32 %v850, %v902
      %v922 = vadd.f32 %v851, %v902
      %v923 = vadd.f32 %v852, %v902
      %v924 = vadd.f32 %v853, %v902
      %v925 = vadd.f32 %v854, %v902
      %v926 = vadd.f32 %v855, %v902
      %v927 = vadd.f32 %v856, %v902
      %v928 = vadd.f32 %v857, %v902
      %v929 = vadd.f32 %v858, %v902
      %v930 = vadd.f32 %v859, %v902
      %v931 = vadd.f32 %v860, %v902
      %v932 = vadd.f32 %v861, %v902
      %v933 = vadd.f32 %v862, %v902
      %v934 = vadd.f32 %v863, %v902
      %v935 = vadd.f32 %v864, %v902
      %v936 = vadd.f32 %v865, %v902
      %v937 = vadd.f32 %v866, %v902
      %v938 = vadd.f32 %v867, %v902
      %v939 = vadd.f32 %v868, %v902
      %v940 = vadd.f32 %v869, %v902
      %v941 = vadd.f32 %v870, %v902
      %v942 = vadd.f32 %v871, %v902
      %v943 = vadd.f32 %v872, %v902
      %v944 = vadd.f32 %v873, %v902
      %v945 = vadd.f32 %v874, %v902
      %v946 = vadd.f32 %v875, %v902
      %v947 = vadd.f32 %v876, %v902
      %v948 = vadd.f32 %v877, %v902
      %v949 = vadd.f32 %v878, %v902
      %v950 = vadd.f32 %v879, %v902
      %v951 = vadd.f32 %v880, %v902
      %v952 = vadd.f32 %v881, %v902
      %v953 = vadd.f32 %v882, %v902
      %v954 = vadd.f32 %v883, %v902
      %v955 = vadd.f32 %v884, %v902
      %v956 = vadd.f32 %v885, %v902
      %v957 = vadd.f32 %v886, %v902
      %v958 = vadd.f32 %v887, %v902
      %v959 = vadd.f32 %v888, %v902
      %v960 = vadd.f32 %v889, %v902
      %v961 = vadd.f32 %v890, %v902
      %v962 = vadd.f32 %v891, %v902
      %v963 = vadd.f32 %v892, %v902
      %v964 = vadd.f32 %v893, %v902
      %v965 = vadd.f32 %v894, %v902
      %v966 = vadd.f32 %v895, %v902
      %v967 = vadd.f32 %v896, %v902
      %v968 = vmax.f32 %v904, 0.0
      %v969 = vmax.f32 %v905, 0.0
      %v970 = vmax.f32 %v906, 0.0
      %v971 = vmax.f32 %v907, 0.0
      %v972 = vmax.f32 %v908, 0.0
      %v973 = vmax.f32 %v909, 0.0
      %v974 = vmax.f32 %v910, 0.0
      %v975 = vmax.f32 %v911, 0.0
      %v976 = vmax.f32 %v912, 0.0
      %v977 = vmax.f32 %v913, 0.0
      %v978 = vmax.f32 %v914, 0.0
      %v979 = vmax.f32 %v915, 0.0
      %v980 = vmax.f32 %v916, 0.0
      %v981 = vmax.f32 %v917, 0.0
      %v982 = vmax.f32 %v918, 0.0
      %v983 = vmax.f32 %v919, 0.0
      %v984 = vmax.f32 %v920, 0.0
      %v985 = vmax.f32 %v921, 0.0
      %v986 = vmax.f32 %v922, 0.0
      %v987 = vmax.f32 %v923, 0.0
      %v988 = vmax.f32 %v924, 0.0
      %v989 = vmax.f32 %v925, 0.0
      %v990 = vmax.f32 %v926, 0.0
      %v991 = vmax.f32 %v927, 0.0
      %v992 = vmax.f32 %v928, 0.0
      %v993 = vmax.f32 %v929, 0.0
      %v994 = vmax.f32 %v930, 0.0
      %v995 = vmax.f32 %v931, 0.0
      %v996 = vmax.f32 %v932, 0.0
      %v997 = vmax.f32 %v933, 0.0
      %v998 = vmax.f32 %v934, 0.0
      %v999 = vmax.f32 %v935, 0.0
      %v1000 = vmax.f32 %v936, 0.0
      %v1001 = vmax.f32 %v937, 0.0
      %v1002 = vmax.f32 %v938, 0.0
      %v1003 = vmax.f32 %v939, 0.0
      %v1004 = vmax.f32 %v940, 0.0
      %v1005 = vmax.f32 %v941, 0.0
      %v1006 = vmax.f32 %v942, 0.0
      %v1007 = vmax.f32 %v943, 0.0
      %v1008 = vmax.f32 %v944, 0.0
      %v1009 = vmax.f32 %v945, 0.0
      %v1010 = vmax.f32 %v946, 0.0
      %v1011 = vmax.f32 %v947, 0.0
      %v1012 = vmax.f32 %v948, 0.0
      %v1013 = vmax.f32 %v949, 0.0
      %v1014 = vmax.f32 %v950, 0.0
      %v1015 = vmax.f32 %v951, 0.0
      %v1016 = vmax.f32 %v952, 0.0
      %v1017 = vmax.f32 %v953, 0.0
      %v1018 = vmax.f32 %v954, 0.0
      %v1019 = vmax.f32 %v955, 0.0
      %v1020 = vmax.f32 %v956, 0.0
      %v1021 = vmax.f32 %v957, 0.0
      %v1022 = vmax.f32 %v958, 0.0
      %v1023 = vmax.f32 %v959, 0.0
      %v1024 = vmax.f32 %v960, 0.0
      %v1025 = vmax.f32 %v961, 0.0
      %v1026 = vmax.f32 %v962, 0.0
      %v1027 = vmax.f32 %v963, 0.0
      %v1028 = vmax.f32 %v964, 0.0
      %v1029 = vmax.f32 %v965, 0.0
      %v1030 = vmax.f32 %v966, 0.0
      %v1031 = vmax.f32 %v967, 0.0
      %v1032 = vpack.c.bf16 %v969, %v968
      %v1033 = vpack.c.bf16 %v971, %v970
      %v1034 = vpack.c.bf16 %v973, %v972
      %v1035 = vpack.c.bf16 %v975, %v974
      %v1036 = vpack.c.bf16 %v977, %v976
      %v1037 = vpack.c.bf16 %v979, %v978
      %v1038 = vpack.c.bf16 %v981, %v980
      %v1039 = vpack.c.bf16 %v983, %v982
      %v1040 = vpack.c.bf16 %v985, %v984
      %v1041 = vpack.c.bf16 %v987, %v986
      %v1042 = vpack.c.bf16 %v989, %v988
      %v1043 = vpack.c.bf16 %v991, %v990
      %v1044 = vpack.c.bf16 %v993, %v992
      %v1045 = vpack.c.bf16 %v995, %v994
      %v1046 = vpack.c.bf16 %v997, %v996
      %v1047 = vpack.c.bf16 %v999, %v998
      %v1048 = vpack.c.bf16 %v1001, %v1000
      %v1049 = vpack.c.bf16 %v1003, %v1002
      %v1050 = vpack.c.bf16 %v1005, %v1004
      %v1051 = vpack.c.bf16 %v1007, %v1006
      %v1052 = vpack.c.bf16 %v1009, %v1008
      %v1053 = vpack.c.bf16 %v1011, %v1010
      %v1054 = vpack.c.bf16 %v1013, %v1012
      %v1055 = vpack.c.bf16 %v1015, %v1014
      %v1056 = vpack.c.bf16 %v1017, %v1016
      %v1057 = vpack.c.bf16 %v1019, %v1018
      %v1058 = vpack.c.bf16 %v1021, %v1020
      %v1059 = vpack.c.bf16 %v1023, %v1022
      %v1060 = vpack.c.bf16 %v1025, %v1024
      %v1061 = vpack.c.bf16 %v1027, %v1026
      %v1062 = vpack.c.bf16 %v1029, %v1028
      %v1063 = vpack.c.bf16 %v1031, %v1030
      %v1096 = vunpack.c.l.b16 %v1032
      %v1097 = vunpack.c.h.b16 %v1032
      %v1098 = vunpack.c.l.b16 %v1033
      %v1099 = vunpack.c.h.b16 %v1033
      %v1100 = vunpack.c.l.b16 %v1034
      %v1101 = vunpack.c.h.b16 %v1034
      %v1102 = vunpack.c.l.b16 %v1035
      %v1103 = vunpack.c.h.b16 %v1035
      %v1104 = vunpack.c.l.b16 %v1036
      %v1105 = vunpack.c.h.b16 %v1036
      %v1106 = vunpack.c.l.b16 %v1037
      %v1107 = vunpack.c.h.b16 %v1037
      %v1108 = vunpack.c.l.b16 %v1038
      %v1109 = vunpack.c.h.b16 %v1038
      %v1110 = vunpack.c.l.b16 %v1039
      %v1111 = vunpack.c.h.b16 %v1039
      %v1112 = vunpack.c.l.b16 %v1040
      %v1113 = vunpack.c.h.b16 %v1040
      %v1114 = vunpack.c.l.b16 %v1041
      %v1115 = vunpack.c.h.b16 %v1041
      %v1116 = vunpack.c.l.b16 %v1042
      %v1117 = vunpack.c.h.b16 %v1042
      %v1118 = vunpack.c.l.b16 %v1043
      %v1119 = vunpack.c.h.b16 %v1043
      %v1120 = vunpack.c.l.b16 %v1044
      %v1121 = vunpack.c.h.b16 %v1044
      %v1122 = vunpack.c.l.b16 %v1045
      %v1123 = vunpack.c.h.b16 %v1045
      %v1124 = vunpack.c.l.b16 %v1046
      %v1125 = vunpack.c.h.b16 %v1046
      %v1126 = vunpack.c.l.b16 %v1047
      %v1127 = vunpack.c.h.b16 %v1047
      %v1128 = vunpack.c.l.b16 %v1048
      %v1129 = vunpack.c.h.b16 %v1048
      %v1130 = vunpack.c.l.b16 %v1049
      %v1131 = vunpack.c.h.b16 %v1049
      %v1132 = vunpack.c.l.b16 %v1050
      %v1133 = vunpack.c.h.b16 %v1050
      %v1134 = vunpack.c.l.b16 %v1051
      %v1135 = vunpack.c.h.b16 %v1051
      %v1136 = vunpack.c.l.b16 %v1052
      %v1137 = vunpack.c.h.b16 %v1052
      %v1138 = vunpack.c.l.b16 %v1053
      %v1139 = vunpack.c.h.b16 %v1053
      %v1140 = vunpack.c.l.b16 %v1054
      %v1141 = vunpack.c.h.b16 %v1054
      %v1142 = vunpack.c.l.b16 %v1055
      %v1143 = vunpack.c.h.b16 %v1055
      %v1144 = vunpack.c.l.b16 %v1056
      %v1145 = vunpack.c.h.b16 %v1056
      %v1146 = vunpack.c.l.b16 %v1057
      %v1147 = vunpack.c.h.b16 %v1057
      %v1148 = vunpack.c.l.b16 %v1058
      %v1149 = vunpack.c.h.b16 %v1058
      %v1150 = vunpack.c.l.b16 %v1059
      %v1151 = vunpack.c.h.b16 %v1059
      %v1152 = vunpack.c.l.b16 %v1060
      %v1153 = vunpack.c.h.b16 %v1060
      %v1154 = vunpack.c.l.b16 %v1061
      %v1155 = vunpack.c.h.b16 %v1061
      %v1156 = vunpack.c.l.b16 %v1062
      %v1157 = vunpack.c.h.b16 %v1062
      %v1158 = vunpack.c.l.b16 %v1063
      %v1159 = vunpack.c.h.b16 %v1063
      %v1160 = vpack.c.b16 %v1096, %v1096
      %v1161 = vpack.c.b16 %v1097, %v1097
      %v1162 = vpack.c.b16 %v1098, %v1098
      %v1163 = vpack.c.b16 %v1099, %v1099
      %v1164 = vpack.c.b16 %v1100, %v1100
      %v1165 = vpack.c.b16 %v1101, %v1101
      %v1166 = vpack.c.b16 %v1102, %v1102
      %v1167 = vpack.c.b16 %v1103, %v1103
      %v1168 = vpack.c.b16 %v1104, %v1104
      %v1169 = vpack.c.b16 %v1105, %v1105
      %v1170 = vpack.c.b16 %v1106, %v1106
      %v1171 = vpack.c.b16 %v1107, %v1107
      %v1172 = vpack.c.b16 %v1108, %v1108
      %v1173 = vpack.c.b16 %v1109, %v1109
      %v1174 = vpack.c.b16 %v1110, %v1110
      %v1175 = vpack.c.b16 %v1111, %v1111
      %v1176 = vpack.c.b16 %v1112, %v1112
      %v1177 = vpack.c.b16 %v1113, %v1113
      %v1178 = vpack.c.b16 %v1114, %v1114
      %v1179 = vpack.c.b16 %v1115, %v1115
      %v1180 = vpack.c.b16 %v1116, %v1116
      %v1181 = vpack.c.b16 %v1117, %v1117
      %v1182 = vpack.c.b16 %v1118, %v1118
      %v1183 = vpack.c.b16 %v1119, %v1119
      %v1184 = vpack.c.b16 %v1120, %v1120
      %v1185 = vpack.c.b16 %v1121, %v1121
      %v1186 = vpack.c.b16 %v1122, %v1122
      %v1187 = vpack.c.b16 %v1123, %v1123
      %v1188 = vpack.c.b16 %v1124, %v1124
      %v1189 = vpack.c.b16 %v1125, %v1125
      %v1190 = vpack.c.b16 %v1126, %v1126
      %v1191 = vpack.c.b16 %v1127, %v1127
      %v1192 = vpack.c.b16 %v1128, %v1128
      %v1193 = vpack.c.b16 %v1129, %v1129
      %v1194 = vpack.c.b16 %v1130, %v1130
      %v1195 = vpack.c.b16 %v1131, %v1131
      %v1196 = vpack.c.b16 %v1132, %v1132
      %v1197 = vpack.c.b16 %v1133, %v1133
      %v1198 = vpack.c.b16 %v1134, %v1134
      %v1199 = vpack.c.b16 %v1135, %v1135
      %v1200 = vpack.c.b16 %v1136, %v1136
      %v1201 = vpack.c.b16 %v1137, %v1137
      %v1202 = vpack.c.b16 %v1138, %v1138
      %v1203 = vpack.c.b16 %v1139, %v1139
      %v1204 = vpack.c.b16 %v1140, %v1140
      %v1205 = vpack.c.b16 %v1141, %v1141
      %v1206 = vpack.c.b16 %v1142, %v1142
      %v1207 = vpack.c.b16 %v1143, %v1143
      %v1208 = vpack.c.b16 %v1144, %v1144
      %v1209 = vpack.c.b16 %v1145, %v1145
      %v1210 = vpack.c.b16 %v1146, %v1146
      %v1211 = vpack.c.b16 %v1147, %v1147
      %v1212 = vpack.c.b16 %v1148, %v1148
      %v1213 = vpack.c.b16 %v1149, %v1149
      %v1214 = vpack.c.b16 %v1150, %v1150
      %v1215 = vpack.c.b16 %v1151, %v1151
      %v1216 = vpack.c.b16 %v1152, %v1152
      %v1217 = vpack.c.b16 %v1153, %v1153
      %v1218 = vpack.c.b16 %v1154, %v1154
      %v1219 = vpack.c.b16 %v1155, %v1155
      %v1220 = vpack.c.b16 %v1156, %v1156
      %v1221 = vpack.c.b16 %v1157, %v1157
      %v1222 = vpack.c.b16 %v1158, %v1158
      %v1223 = vpack.c.b16 %v1159, %v1159
      %vm1288 = vcmask 257024
      %1289 = vst.msk [vmem:[%s199] sm:$0xf] %vm1288, %v1160
      %1290 = vst.msk [vmem:[%s199 + $0x4] sm:$0xf] %vm1288, %v1161
      %1291 = vst.msk [vmem:[%s199 + $0x8] sm:$0xf] %vm1288, %v1162
      %1292 = vst.msk [vmem:[%s199 + $0xc] sm:$0xf] %vm1288, %v1163
      %1293 = vst.msk [vmem:[%s199 + $0x10] sm:$0xf] %vm1288, %v1164
      %1294 = vst.msk [vmem:[%s199 + $0x14] sm:$0xf] %vm1288, %v1165
      %1295 = vst.msk [vmem:[%s199 + $0x18] sm:$0xf] %vm1288, %v1166
      %1296 = vst.msk [vmem:[%s199 + $0x1c] sm:$0xf] %vm1288, %v1167
      %1297 = vst.msk [vmem:[%s199 + $0x20] sm:$0xf] %vm1288, %v1168
      %1298 = vst.msk [vmem:[%s199 + $0x24] sm:$0xf] %vm1288, %v1169
      %1299 = vst.msk [vmem:[%s199 + $0x28] sm:$0xf] %vm1288, %v1170
      %1300 = vst.msk [vmem:[%s199 + $0x2c] sm:$0xf] %vm1288, %v1171
      %1301 = vst.msk [vmem:[%s199 + $0x30] sm:$0xf] %vm1288, %v1172
      %1302 = vst.msk [vmem:[%s199 + $0x34] sm:$0xf] %vm1288, %v1173
      %1303 = vst.msk [vmem:[%s199 + $0x38] sm:$0xf] %vm1288, %v1174
      %1304 = vst.msk [vmem:[%s199 + $0x3c] sm:$0xf] %vm1288, %v1175
      %1305 = vst.msk [vmem:[%s199 + $0x40] sm:$0xf] %vm1288, %v1176
      %1306 = vst.msk [vmem:[%s199 + $0x44] sm:$0xf] %vm1288, %v1177
      %1307 = vst.msk [vmem:[%s199 + $0x48] sm:$0xf] %vm1288, %v1178
      %1308 = vst.msk [vmem:[%s199 + $0x4c] sm:$0xf] %vm1288, %v1179
      %1309 = vst.msk [vmem:[%s199 + $0x50] sm:$0xf] %vm1288, %v1180
      %1310 = vst.msk [vmem:[%s199 + $0x54] sm:$0xf] %vm1288, %v1181
      %1311 = vst.msk [vmem:[%s199 + $0x58] sm:$0xf] %vm1288, %v1182
      %1312 = vst.msk [vmem:[%s199 + $0x5c] sm:$0xf] %vm1288, %v1183
      %1313 = vst.msk [vmem:[%s199 + $0x60] sm:$0xf] %vm1288, %v1184
      %1314 = vst.msk [vmem:[%s199 + $0x64] sm:$0xf] %vm1288, %v1185
      %1315 = vst.msk [vmem:[%s199 + $0x68] sm:$0xf] %vm1288, %v1186
      %1316 = vst.msk [vmem:[%s199 + $0x6c] sm:$0xf] %vm1288, %v1187
      %1317 = vst.msk [vmem:[%s199 + $0x70] sm:$0xf] %vm1288, %v1188
      %1318 = vst.msk [vmem:[%s199 + $0x74] sm:$0xf] %vm1288, %v1189
      %1319 = vst.msk [vmem:[%s199 + $0x78] sm:$0xf] %vm1288, %v1190
      %1320 = vst.msk [vmem:[%s199 + $0x7c] sm:$0xf] %vm1288, %v1191
      %1321 = vst.msk [vmem:[%s199 + $0x80] sm:$0xf] %vm1288, %v1192
      %1322 = vst.msk [vmem:[%s199 + $0x84] sm:$0xf] %vm1288, %v1193
      %1323 = vst.msk [vmem:[%s199 + $0x88] sm:$0xf] %vm1288, %v1194
      %1324 = vst.msk [vmem:[%s199 + $0x8c] sm:$0xf] %vm1288, %v1195
      %1325 = vst.msk [vmem:[%s199 + $0x90] sm:$0xf] %vm1288, %v1196
      %1326 = vst.msk [vmem:[%s199 + $0x94] sm:$0xf] %vm1288, %v1197
      %1327 = vst.msk [vmem:[%s199 + $0x98] sm:$0xf] %vm1288, %v1198
      %1328 = vst.msk [vmem:[%s199 + $0x9c] sm:$0xf] %vm1288, %v1199
      %1329 = vst.msk [vmem:[%s199 + $0xa0] sm:$0xf] %vm1288, %v1200
      %1330 = vst.msk [vmem:[%s199 + $0xa4] sm:$0xf] %vm1288, %v1201
      %1331 = vst.msk [vmem:[%s199 + $0xa8] sm:$0xf] %vm1288, %v1202
      %1332 = vst.msk [vmem:[%s199 + $0xac] sm:$0xf] %vm1288, %v1203
      %1333 = vst.msk [vmem:[%s199 + $0xb0] sm:$0xf] %vm1288, %v1204
      %1334 = vst.msk [vmem:[%s199 + $0xb4] sm:$0xf] %vm1288, %v1205
      %1335 = vst.msk [vmem:[%s199 + $0xb8] sm:$0xf] %vm1288, %v1206
      %1336 = vst.msk [vmem:[%s199 + $0xbc] sm:$0xf] %vm1288, %v1207
      %1337 = vst.msk [vmem:[%s199 + $0xc0] sm:$0xf] %vm1288, %v1208
      %1338 = vst.msk [vmem:[%s199 + $0xc4] sm:$0xf] %vm1288, %v1209
      %1339 = vst.msk [vmem:[%s199 + $0xc8] sm:$0xf] %vm1288, %v1210
      %1340 = vst.msk [vmem:[%s199 + $0xcc] sm:$0xf] %vm1288, %v1211
      %1341 = vst.msk [vmem:[%s199 + $0xd0] sm:$0xf] %vm1288, %v1212
      %1342 = vst.msk [vmem:[%s199 + $0xd4] sm:$0xf] %vm1288, %v1213
      %1343 = vst.msk [vmem:[%s199 + $0xd8] sm:$0xf] %vm1288, %v1214
      %1344 = vst.msk [vmem:[%s199 + $0xdc] sm:$0xf] %vm1288, %v1215
      %1345 = vst.msk [vmem:[%s199 + $0xe0] sm:$0xf] %vm1288, %v1216
      %1346 = vst.msk [vmem:[%s199 + $0xe4] sm:$0xf] %vm1288, %v1217
      %1347 = vst.msk [vmem:[%s199 + $0xe8] sm:$0xf] %vm1288, %v1218
      %1348 = vst.msk [vmem:[%s199 + $0xec] sm:$0xf] %vm1288, %v1219
      %1349 = vst.msk [vmem:[%s199 + $0xf0] sm:$0xf] %vm1288, %v1220
      %1350 = vst.msk [vmem:[%s199 + $0xf4] sm:$0xf] %vm1288, %v1221
      %1351 = vst.msk [vmem:[%s199 + $0xf8] sm:$0xf] %vm1288, %v1222
      %1352 = vst.msk [vmem:[%s199 + $0xfc] sm:$0xf] %vm1288, %v1223
      %s1353 = smul.u32 64, %s15
      %p1354 = scmp.lt.s32.totalorder %s1353, 255
      %s1355 = scalar_select %p1354, %s1353, 255
      %s1356 = smul.addr %s1355, 4
      %s1357 = scalar_lea.vmem %s4, %s1356
      // Predicated region
      $region37: #{net_forward.5} parent=35 // pred_check
        %p1358 = pneg %p122
      $region38: #{net_forward.5} parent=35 // pred_check_branch
        %1360 = sbr.rel (%p1358) target = $region40
      $region39: #{net_forward.5} parent=35 // pred_region
        %s1361 = smul.u32 64, %s15
      $region40: #{net_forward.5} parent=35 // pred_fallthru
        _
    $region36: #{net_forward.5} parent=5 // pred_fallthru
      _
    %p1362 = scmp.le.s32.totalorder 2, %s10
    // Predicated region
    $region41: #{net_forward.5} parent=5 // pred_check
      %p1363 = pneg %p1362
    $region42: #{net_forward.5} parent=5 // pred_check_branch
      %1365 = sbr.rel (%p1363) target = $region44
    $region43: #{net_forward.5} parent=5 // pred_region
      %s1366 = ssub.s32 %s10, 2
      // Predicated region
      $region45: #{net_forward.5} parent=43 // pred_check
        %p1367 = pneg %p128
      $region46: #{net_forward.5} parent=43 // pred_check_branch
        %1369 = sbr.rel (%p1367) target = $region48
      $region47: #{net_forward.5} parent=43 // pred_region
        %s1370 = smul.u32 64, %s16
        %p1371 = scmp.lt.s32.totalorder %s1370, 255
        %s1372 = scalar_select %p1371, %s1370, 255
        %s1373 = smul.addr %s1372, 4
        %s1374 = scalar_lea.vmem %s4, %s1373
      $region48: #{net_forward.5} parent=43 // pred_fallthru
        _
    $region44: #{net_forward.5} parent=5 // pred_fallthru
      _
  $region6: #{net_forward.5} parent=0 // loop_footer
    %s14 = sadd.s32 1, %s10
  $region7: #{net_forward.5} parent=0 // loop_footer_branch
    %9 = sbr.rel target = $region3
  $region8: #{net_forward.5} parent=0 // loop_exit
    _

// kernel: net_forward.6
$region0: #{net_forward.6}
  #allocation0 [shape = 'u32[]', space=smem, size = 0x4, offset = 0x4, fixed_abs, tag = 'smem constant byte address 0x4 - core index']
  #allocation1 [shape = 'u32[144,128]{1,0:T(1,128)}', space=vmem, size = 0x12000, scoped, tag = 'internal scratch']
  %s0 = inlined_call_operand.vmem [shape: bf16[2048,288], index: 0, kind: input, shape index: {}]
  %s1 = inlined_call_operand.vmem [shape: bf16[288,32], index: 1, kind: input, shape index: {}]
  %s2 = inlined_call_operand.vmem [shape: f32[1,32], index: 2, kind: input, shape index: {}]
  %s3 = inlined_call_operand.vmem [shape: f32[1,32], index: 3, kind: input, shape index: {}]
  %s4 = inlined_call_operand.vmem [shape: bf16[2048,32], index: 4, kind: output, shape index: {}]
  %s5 = sld [smem:[#allocation0]]
  $region49: #{net_forward.6} parent=0
    _
  %s7 = ssub.s32 1, %s5
  %s8 = scalar_select 0, %s7, %s5
  loop: start=0, step=1, limit=6
  $region2: #{net_forward.6} parent=0 // loop_pre_header
    _
  $region3: #{net_forward.6} parent=0 // loop_header
    %s10 = sphi 0, %s14
    %p11 = scmp.ge.s32.totalorder %s10, 6
    %s20 = sphi 0, %s22
    %s23 = sphi 0, %s20
    %s24 = sphi 0, %s23
    %s40 = sphi 0, %s24
    %s44 = sphi 0, %s44
    %s46 = sphi 0, %s44
    %s47 = sphi 0, %s46
    %s61 = sphi 0, %s47
    %s65 = sphi 0, %s65
    %s67 = sphi 0, %s65
    %s68 = sphi 0, %s67
    %s82 = sphi 0, %s68
    %s86 = sphi 0, %s86
    %s88 = sphi 0, %s86
    %s89 = sphi 0, %s88
    %s103 = sphi 0, %s89
    %s109 = sphi 0, %s111
    %s112 = sphi 0, %s109
    %s113 = sphi 0, %s112
    %s129 = sphi 0, %s113
  $region4: #{net_forward.6} parent=0 // loop_header_branch
    %13 = sbr.rel (%p11) target = $region8
  $region5: #{net_forward.6} parent=0 // loop_body
    %s15 = ssub.s32 %s10, 1
    %s16 = ssub.s32 %s10, 2
    %s17 = sadd.s32 %s10, 1
    %s18 = ssub.s32 %s10, %s17
    %p19 = scmp.eq.s32.totalorder %s18, 0
    %s21 = sadd.s32 %s20, 1
    %s22 = scalar_select %p19, %s20, %s21
    %p25 = pneg %p19
    %p26 = scmp.eq.s32.totalorder %s10, 3
    %p27 = por %p25, %p26
    %p28 = scmp.ne.s32.totalorder %s20, %s23
    %p29 = scmp.eq.s32.totalorder %s10, 0
    %p30 = por %p28, %p29
    %p31 = scmp.ne.s32.totalorder %s20, %s23
    %p32 = scmp.eq.s32.totalorder %s15, 3
    %p33 = por %p31, %p32
    %p34 = scmp.ne.s32.totalorder %s23, %s24
    %p35 = scmp.eq.s32.totalorder %s15, 0
    %p36 = por %p34, %p35
    %p37 = scmp.ne.s32.totalorder %s23, %s24
    %p38 = scmp.eq.s32.totalorder %s16, 3
    %p39 = por %p37, %p38
    %p41 = scmp.ne.s32.totalorder %s24, %s40
    %p42 = scmp.eq.s32.totalorder %s16, 0
    %p43 = por %p41, %p42
    %s45 = sadd.s32 %s44, 1
    %p48 = scmp.eq.s32.totalorder %s10, 3
    %p49 = scmp.ne.s32.totalorder %s44, %s46
    %p50 = scmp.eq.s32.totalorder %s10, 0
    %p51 = por %p49, %p50
    %p52 = scmp.ne.s32.totalorder %s44, %s46
    %p53 = scmp.eq.s32.totalorder %s15, 3
    %p54 = por %p52, %p53
    %p55 = scmp.ne.s32.totalorder %s46, %s47
    %p56 = scmp.eq.s32.totalorder %s15, 0
    %p57 = por %p55, %p56
    %p58 = scmp.ne.s32.totalorder %s46, %s47
    %p59 = scmp.eq.s32.totalorder %s16, 3
    %p60 = por %p58, %p59
    %p62 = scmp.ne.s32.totalorder %s47, %s61
    %p63 = scmp.eq.s32.totalorder %s16, 0
    %p64 = por %p62, %p63
    %s66 = sadd.s32 %s65, 1
    %p69 = scmp.eq.s32.totalorder %s10, 3
    %p70 = scmp.ne.s32.totalorder %s65, %s67
    %p71 = scmp.eq.s32.totalorder %s10, 0
    %p72 = por %p70, %p71
    %p73 = scmp.ne.s32.totalorder %s65, %s67
    %p74 = scmp.eq.s32.totalorder %s15, 3
    %p75 = por %p73, %p74
    %p76 = scmp.ne.s32.totalorder %s67, %s68
    %p77 = scmp.eq.s32.totalorder %s15, 0
    %p78 = por %p76, %p77
    %p79 = scmp.ne.s32.totalorder %s67, %s68
    %p80 = scmp.eq.s32.totalorder %s16, 3
    %p81 = por %p79, %p80
    %p83 = scmp.ne.s32.totalorder %s68, %s82
    %p84 = scmp.eq.s32.totalorder %s16, 0
    %p85 = por %p83, %p84
    %s87 = sadd.s32 %s86, 1
    %p90 = scmp.eq.s32.totalorder %s10, 3
    %p91 = scmp.ne.s32.totalorder %s86, %s88
    %p92 = scmp.eq.s32.totalorder %s10, 0
    %p93 = por %p91, %p92
    %p94 = scmp.ne.s32.totalorder %s86, %s88
    %p95 = scmp.eq.s32.totalorder %s15, 3
    %p96 = por %p94, %p95
    %p97 = scmp.ne.s32.totalorder %s88, %s89
    %p98 = scmp.eq.s32.totalorder %s15, 0
    %p99 = por %p97, %p98
    %p100 = scmp.ne.s32.totalorder %s88, %s89
    %p101 = scmp.eq.s32.totalorder %s16, 3
    %p102 = por %p100, %p101
    %p104 = scmp.ne.s32.totalorder %s89, %s103
    %p105 = scmp.eq.s32.totalorder %s16, 0
    %p106 = por %p104, %p105
    %s107 = ssub.s32 %s10, %s17
    %p108 = scmp.eq.s32.totalorder %s107, 0
    %s110 = sadd.s32 %s109, 1
    %s111 = scalar_select %p108, %s109, %s110
    %p114 = pneg %p108
    %p115 = scmp.eq.s32.totalorder %s10, 3
    %p116 = por %p114, %p115
    %p117 = scmp.ne.s32.totalorder %s109, %s112
    %p118 = scmp.eq.s32.totalorder %s10, 0
    %p119 = por %p117, %p118
    %p120 = scmp.ne.s32.totalorder %s109, %s112
    %p121 = scmp.eq.s32.totalorder %s15, 3
    %p122 = por %p120, %p121
    %p123 = scmp.ne.s32.totalorder %s112, %s113
    %p124 = scmp.eq.s32.totalorder %s15, 0
    %p125 = por %p123, %p124
    %p126 = scmp.ne.s32.totalorder %s112, %s113
    %p127 = scmp.eq.s32.totalorder %s16, 3
    %p128 = por %p126, %p127
    %p130 = scmp.ne.s32.totalorder %s113, %s129
    %p131 = scmp.eq.s32.totalorder %s16, 0
    %p132 = por %p130, %p131
    %p133 = scmp.le.s32.totalorder 1, %s10
    %p134 = scmp.lt.s32.totalorder %s10, 5
    %p135 = pnand %p133, %p134
    %p136 = pneg %p135
    // Predicated region
    $region9: #{net_forward.6} parent=5 // pred_check
      _
    $region10: #{net_forward.6} parent=5 // pred_check_branch
      %138 = sbr.rel (%p135) target = $region12
    $region11: #{net_forward.6} parent=5 // pred_region
      %s139 = ssub.s32 %s10, 1
      // Predicated region
      $region13: #{net_forward.6} parent=11 // pred_check
        %p140 = pneg %p57
      $region14: #{net_forward.6} parent=11 // pred_check_branch
        %142 = sbr.rel (%p140) target = $region16
      $region15: #{net_forward.6} parent=11 // pred_region
        _
      $region16: #{net_forward.6} parent=11 // pred_fallthru
        _
      // Predicated region
      $region17: #{net_forward.6} parent=11 // pred_check
        %p143 = pneg %p78
      $region18: #{net_forward.6} parent=11 // pred_check_branch
        %145 = sbr.rel (%p143) target = $region20
      $region19: #{net_forward.6} parent=11 // pred_region
        _
      $region20: #{net_forward.6} parent=11 // pred_fallthru
        _
      // Predicated region
      $region21: #{net_forward.6} parent=11 // pred_check
        %p146 = pneg %p99
      $region22: #{net_forward.6} parent=11 // pred_check_branch
        %148 = sbr.rel (%p146) target = $region24
      $region23: #{net_forward.6} parent=11 // pred_region
        _
      $region24: #{net_forward.6} parent=11 // pred_fallthru
        _
    $region12: #{net_forward.6} parent=5 // pred_fallthru
      _
    %p149 = scmp.lt.s32.totalorder %s10, 4
    // Predicated region
    $region25: #{net_forward.6} parent=5 // pred_check
      %p150 = pneg %p149
    $region26: #{net_forward.6} parent=5 // pred_check_branch
      %152 = sbr.rel (%p150) target = $region28
    $region27: #{net_forward.6} parent=5 // pred_region
      // Predicated region
      $region29: #{net_forward.6} parent=27 // pred_check
        %p153 = pneg %p30
      $region30: #{net_forward.6} parent=27 // pred_check_branch
        %155 = sbr.rel (%p153) target = $region32
      $region31: #{net_forward.6} parent=27 // pred_region
        %s156 = smul.u32 64, %s10
        %p157 = scmp.lt.s32.totalorder %s156, 255
        %s158 = scalar_select %p157, %s156, 255
        %s159 = smul.addr %s158, 3
        %s160 = smul.addr %s159, 4
        %s161 = scalar_lea.vmem %s0, %s160
        %s162 = smul.u32 64, %s10
      $region32: #{net_forward.6} parent=27 // pred_fallthru
        _
    $region28: #{net_forward.6} parent=5 // pred_fallthru
      _
    %p163 = scmp.le.s32.totalorder 1, %s10
    %p164 = scmp.lt.s32.totalorder %s10, 5
    %p165 = pnand %p163, %p164
    %p166 = pneg %p165
    // Predicated region
    $region33: #{net_forward.6} parent=5 // pred_check
      _
    $region34: #{net_forward.6} parent=5 // pred_check_branch
      %168 = sbr.rel (%p165) target = $region36
    $region35: #{net_forward.6} parent=5 // pred_region
      %s169 = ssub.s32 %s10, 1
      %s170 = smul.u32 64, %s15
      %p171 = scmp.lt.s32.totalorder %s170, 255
      %s172 = scalar_select %p171, %s170, 255
      %s173 = smul.addr %s172, 3
      %s174 = smul.addr %s173, 4
      %s175 = scalar_lea.vmem %s0, %s174
      %p176 = pneg %p36
      %p177 = pneg %p33
      %p178 = pneg %p57
      %p179 = pneg %p54
      %p180 = pneg %p78
      %p181 = pneg %p75
      %p182 = pneg %p99
      %p183 = pneg %p96
      %p184 = pneg %p125
      %p185 = pneg %p122
      %s186 = smul.u32 64, %s15
      %p187 = scmp.lt.s32.totalorder %s186, 255
      %s188 = scalar_select %p187, %s186, 255
      %s189 = smul.addr %s188, 4
      %s190 = scalar_lea.vmem %s4, %s189
      %s191 = smul.u32 64, %s15
      %p192 = scmp.lt.s32.totalorder %s191, 255
      %s193 = scalar_select %p192, %s191, 255
      %s194 = smul.addr %s193, 3
      %s195 = smul.addr %s194, 4
      %s196 = scalar_lea.vmem %s0, %s195
      %s197 = smul.u32 64, %s15
      %s198 = smul.u32 64, %s15
      %p199 = scmp.lt.s32.totalorder %s198, 255
      %s200 = scalar_select %p199, %s198, 255
      %s201 = smul.addr %s200, 4
      %s202 = scalar_lea.vmem %s4, %s201
      %s203 = smul.u32 64, %s15
      %v205 = vld [vmem:[%s196] sm:$0xff]
      %v206 = vld [vmem:[%s196 + $0x8] sm:$0xf]
      %v207 = vld [vmem:[%s196 + $0xc] sm:$0xff]
      %v208 = vld [vmem:[%s196 + $0x14] sm:$0xf]
      %v209 = vld [vmem:[%s196 + $0x18] sm:$0xff]
      %v210 = vld [vmem:[%s196 + $0x20] sm:$0xf]
      %v211 = vld [vmem:[%s196 + $0x24] sm:$0xff]
      %v212 = vld [vmem:[%s196 + $0x2c] sm:$0xf]
      %v213 = vld [vmem:[%s196 + $0x30] sm:$0xff]
      %v214 = vld [vmem:[%s196 + $0x38] sm:$0xf]
      %v215 = vld [vmem:[%s196 + $0x3c] sm:$0xff]
      %v216 = vld [vmem:[%s196 + $0x44] sm:$0xf]
      %v217 = vld [vmem:[%s196 + $0x48] sm:$0xff]
      %v218 = vld [vmem:[%s196 + $0x50] sm:$0xf]
      %v219 = vld [vmem:[%s196 + $0x54] sm:$0xff]
      %v220 = vld [vmem:[%s196 + $0x5c] sm:$0xf]
      %v221 = vld [vmem:[%s196 + $0x60] sm:$0xff]
      %v222 = vld [vmem:[%s196 + $0x68] sm:$0xf]
      %v223 = vld [vmem:[%s196 + $0x6c] sm:$0xff]
      %v224 = vld [vmem:[%s196 + $0x74] sm:$0xf]
      %v225 = vld [vmem:[%s196 + $0x78] sm:$0xff]
      %v226 = vld [vmem:[%s196 + $0x80] sm:$0xf]
      %v227 = vld [vmem:[%s196 + $0x84] sm:$0xff]
      %v228 = vld [vmem:[%s196 + $0x8c] sm:$0xf]
      %v229 = vld [vmem:[%s196 + $0x90] sm:$0xff]
      %v230 = vld [vmem:[%s196 + $0x98] sm:$0xf]
      %v231 = vld [vmem:[%s196 + $0x9c] sm:$0xff]
      %v232 = vld [vmem:[%s196 + $0xa4] sm:$0xf]
      %v233 = vld [vmem:[%s196 + $0xa8] sm:$0xff]
      %v234 = vld [vmem:[%s196 + $0xb0] sm:$0xf]
      %v235 = vld [vmem:[%s196 + $0xb4] sm:$0xff]
      %v236 = vld [vmem:[%s196 + $0xbc] sm:$0xf]
      %v237 = vld [vmem:[%s196 + $0xc0] sm:$0xff]
      %v238 = vld [vmem:[%s196 + $0xc8] sm:$0xf]
      %v239 = vld [vmem:[%s196 + $0xcc] sm:$0xff]
      %v240 = vld [vmem:[%s196 + $0xd4] sm:$0xf]
      %v241 = vld [vmem:[%s196 + $0xd8] sm:$0xff]
      %v242 = vld [vmem:[%s196 + $0xe0] sm:$0xf]
      %v243 = vld [vmem:[%s196 + $0xe4] sm:$0xff]
      %v244 = vld [vmem:[%s196 + $0xec] sm:$0xf]
      %v245 = vld [vmem:[%s196 + $0xf0] sm:$0xff]
      %v246 = vld [vmem:[%s196 + $0xf8] sm:$0xf]
      %v247 = vld [vmem:[%s196 + $0xfc] sm:$0xff]
      %v248 = vld [vmem:[%s196 + $0x104] sm:$0xf]
      %v249 = vld [vmem:[%s196 + $0x108] sm:$0xff]
      %v250 = vld [vmem:[%s196 + $0x110] sm:$0xf]
      %v251 = vld [vmem:[%s196 + $0x114] sm:$0xff]
      %v252 = vld [vmem:[%s196 + $0x11c] sm:$0xf]
      %v253 = vld [vmem:[%s196 + $0x120] sm:$0xff]
      %v254 = vld [vmem:[%s196 + $0x128] sm:$0xf]
      %v255 = vld [vmem:[%s196 + $0x12c] sm:$0xff]
      %v256 = vld [vmem:[%s196 + $0x134] sm:$0xf]
      %v257 = vld [vmem:[%s196 + $0x138] sm:$0xff]
      %v258 = vld [vmem:[%s196 + $0x140] sm:$0xf]
      %v259 = vld [vmem:[%s196 + $0x144] sm:$0xff]
      %v260 = vld [vmem:[%s196 + $0x14c] sm:$0xf]
      %v261 = vld [vmem:[%s196 + $0x150] sm:$0xff]
      %v262 = vld [vmem:[%s196 + $0x158] sm:$0xf]
      %v263 = vld [vmem:[%s196 + $0x15c] sm:$0xff]
      %v264 = vld [vmem:[%s196 + $0x164] sm:$0xf]
      %v265 = vld [vmem:[%s196 + $0x168] sm:$0xff]
      %v266 = vld [vmem:[%s196 + $0x170] sm:$0xf]
      %v267 = vld [vmem:[%s196 + $0x174] sm:$0xff]
      %v268 = vld [vmem:[%s196 + $0x17c] sm:$0xf]
      %v269 = vld [vmem:[%s196 + $0x180] sm:$0xff]
      %v270 = vld [vmem:[%s196 + $0x188] sm:$0xf]
      %v271 = vld [vmem:[%s196 + $0x18c] sm:$0xff]
      %v272 = vld [vmem:[%s196 + $0x194] sm:$0xf]
      %v273 = vld [vmem:[%s196 + $0x198] sm:$0xff]
      %v274 = vld [vmem:[%s196 + $0x1a0] sm:$0xf]
      %v275 = vld [vmem:[%s196 + $0x1a4] sm:$0xff]
      %v276 = vld [vmem:[%s196 + $0x1ac] sm:$0xf]
      %v277 = vld [vmem:[%s196 + $0x1b0] sm:$0xff]
      %v278 = vld [vmem:[%s196 + $0x1b8] sm:$0xf]
      %v279 = vld [vmem:[%s196 + $0x1bc] sm:$0xff]
      %v280 = vld [vmem:[%s196 + $0x1c4] sm:$0xf]
      %v281 = vld [vmem:[%s196 + $0x1c8] sm:$0xff]
      %v282 = vld [vmem:[%s196 + $0x1d0] sm:$0xf]
      %v283 = vld [vmem:[%s196 + $0x1d4] sm:$0xff]
      %v284 = vld [vmem:[%s196 + $0x1dc] sm:$0xf]
      %v285 = vld [vmem:[%s196 + $0x1e0] sm:$0xff]
      %v286 = vld [vmem:[%s196 + $0x1e8] sm:$0xf]
      %v287 = vld [vmem:[%s196 + $0x1ec] sm:$0xff]
      %v288 = vld [vmem:[%s196 + $0x1f4] sm:$0xf]
      %v289 = vld [vmem:[%s196 + $0x1f8] sm:$0xff]
      %v290 = vld [vmem:[%s196 + $0x200] sm:$0xf]
      %v291 = vld [vmem:[%s196 + $0x204] sm:$0xff]
      %v292 = vld [vmem:[%s196 + $0x20c] sm:$0xf]
      %v293 = vld [vmem:[%s196 + $0x210] sm:$0xff]
      %v294 = vld [vmem:[%s196 + $0x218] sm:$0xf]
      %v295 = vld [vmem:[%s196 + $0x21c] sm:$0xff]
      %v296 = vld [vmem:[%s196 + $0x224] sm:$0xf]
      %v297 = vld [vmem:[%s196 + $0x228] sm:$0xff]
      %v298 = vld [vmem:[%s196 + $0x230] sm:$0xf]
      %v299 = vld [vmem:[%s196 + $0x234] sm:$0xff]
      %v300 = vld [vmem:[%s196 + $0x23c] sm:$0xf]
      %v301 = vld [vmem:[%s196 + $0x240] sm:$0xff]
      %v302 = vld [vmem:[%s196 + $0x248] sm:$0xf]
      %v303 = vld [vmem:[%s196 + $0x24c] sm:$0xff]
      %v304 = vld [vmem:[%s196 + $0x254] sm:$0xf]
      %v305 = vld [vmem:[%s196 + $0x258] sm:$0xff]
      %v306 = vld [vmem:[%s196 + $0x260] sm:$0xf]
      %v307 = vld [vmem:[%s196 + $0x264] sm:$0xff]
      %v308 = vld [vmem:[%s196 + $0x26c] sm:$0xf]
      %v309 = vld [vmem:[%s196 + $0x270] sm:$0xff]
      %v310 = vld [vmem:[%s196 + $0x278] sm:$0xf]
      %v311 = vld [vmem:[%s196 + $0x27c] sm:$0xff]
      %v312 = vld [vmem:[%s196 + $0x284] sm:$0xf]
      %v313 = vld [vmem:[%s196 + $0x288] sm:$0xff]
      %v314 = vld [vmem:[%s196 + $0x290] sm:$0xf]
      %v315 = vld [vmem:[%s196 + $0x294] sm:$0xff]
      %v316 = vld [vmem:[%s196 + $0x29c] sm:$0xf]
      %v317 = vld [vmem:[%s196 + $0x2a0] sm:$0xff]
      %v318 = vld [vmem:[%s196 + $0x2a8] sm:$0xf]
      %v319 = vld [vmem:[%s196 + $0x2ac] sm:$0xff]
      %v320 = vld [vmem:[%s196 + $0x2b4] sm:$0xf]
      %v321 = vld [vmem:[%s196 + $0x2b8] sm:$0xff]
      %v322 = vld [vmem:[%s196 + $0x2c0] sm:$0xf]
      %v323 = vld [vmem:[%s196 + $0x2c4] sm:$0xff]
      %v324 = vld [vmem:[%s196 + $0x2cc] sm:$0xf]
      %v325 = vld [vmem:[%s196 + $0x2d0] sm:$0xff]
      %v326 = vld [vmem:[%s196 + $0x2d8] sm:$0xf]
      %v327 = vld [vmem:[%s196 + $0x2dc] sm:$0xff]
      %v328 = vld [vmem:[%s196 + $0x2e4] sm:$0xf]
      %v329 = vld [vmem:[%s196 + $0x2e8] sm:$0xff]
      %v330 = vld [vmem:[%s196 + $0x2f0] sm:$0xf]
      %v331 = vld [vmem:[%s196 + $0x2f4] sm:$0xff]
      %v332 = vld [vmem:[%s196 + $0x2fc] sm:$0xf]
      %v333 = vld [vmem:[%s1] sm:$0xf]
      %v334 = vld [vmem:[%s1 + $0x4] sm:$0xf]
      %v335 = vld [vmem:[%s1 + $0x8] sm:$0xf]
      %v336 = vld [vmem:[%s1 + $0xc] sm:$0xf]
      %v337 = vld [vmem:[%s1 + $0x10] sm:$0xf]
      %v338 = vld [vmem:[%s1 + $0x14] sm:$0xf]
      %v339 = vld [vmem:[%s1 + $0x18] sm:$0xf]
      %v340 = vld [vmem:[%s1 + $0x1c] sm:$0xf]
      %v341 = vld [vmem:[%s1 + $0x20] sm:$0xf]
      %v342 = vld [vmem:[%s1 + $0x24] sm:$0xf]
      %v343 = vld [vmem:[%s1 + $0x28] sm:$0xf]
      %v344 = vld [vmem:[%s1 + $0x2c] sm:$0xf]
      %v345 = vld [vmem:[%s1 + $0x30] sm:$0xf]
      %v346 = vld [vmem:[%s1 + $0x34] sm:$0xf]
      %v347 = vld [vmem:[%s1 + $0x38] sm:$0xf]
      %v348 = vld [vmem:[%s1 + $0x3c] sm:$0xf]
      %v349 = vld [vmem:[%s1 + $0x40] sm:$0xf]
      %v350 = vld [vmem:[%s1 + $0x44] sm:$0xf]
      %v351 = vld [vmem:[%s1 + $0x48] sm:$0xf]
      %v352 = vld [vmem:[%s1 + $0x4c] sm:$0xf]
      %v353 = vld [vmem:[%s1 + $0x50] sm:$0xf]
      %v354 = vld [vmem:[%s1 + $0x54] sm:$0xf]
      %v355 = vld [vmem:[%s1 + $0x58] sm:$0xf]
      %v356 = vld [vmem:[%s1 + $0x5c] sm:$0xf]
      %v357 = vld [vmem:[%s1 + $0x60] sm:$0xf]
      %v358 = vld [vmem:[%s1 + $0x64] sm:$0xf]
      %v359 = vld [vmem:[%s1 + $0x68] sm:$0xf]
      %v360 = vld [vmem:[%s1 + $0x6c] sm:$0xf]
      %v361 = vld [vmem:[%s1 + $0x70] sm:$0xf]
      %v362 = vld [vmem:[%s1 + $0x74] sm:$0xf]
      %v363 = vld [vmem:[%s1 + $0x78] sm:$0xf]
      %v364 = vld [vmem:[%s1 + $0x7c] sm:$0xf]
      %v365 = vld [vmem:[%s1 + $0x80] sm:$0xf]
      %v366 = vld [vmem:[%s1 + $0x84] sm:$0xf]
      %v367 = vld [vmem:[%s1 + $0x88] sm:$0xf]
      %v368 = vld [vmem:[%s1 + $0x8c] sm:$0xf]
      %v497 = vunpack.c.l.b16 %v205
      %v498 = vunpack.c.h.b16 %v205
      %v499 = vunpack.c.l.b16 %v206
      %v500 = vunpack.c.l.b16 %v207
      %v501 = vunpack.c.h.b16 %v207
      %v502 = vunpack.c.l.b16 %v208
      %v503 = vunpack.c.l.b16 %v209
      %v504 = vunpack.c.h.b16 %v209
      %v505 = vunpack.c.l.b16 %v210
      %v506 = vunpack.c.l.b16 %v211
      %v507 = vunpack.c.h.b16 %v211
      %v508 = vunpack.c.l.b16 %v212
      %v509 = vunpack.c.l.b16 %v213
      %v510 = vunpack.c.h.b16 %v213
      %v511 = vunpack.c.l.b16 %v214
      %v512 = vunpack.c.l.b16 %v215
      %v513 = vunpack.c.h.b16 %v215
      %v514 = vunpack.c.l.b16 %v216
      %v515 = vunpack.c.l.b16 %v217
      %v516 = vunpack.c.h.b16 %v217
      %v517 = vunpack.c.l.b16 %v218
      %v518 = vunpack.c.l.b16 %v219
      %v519 = vunpack.c.h.b16 %v219
      %v520 = vunpack.c.l.b16 %v220
      %v521 = vunpack.c.l.b16 %v221
      %v522 = vunpack.c.h.b16 %v221
      %v523 = vunpack.c.l.b16 %v222
      %v524 = vunpack.c.l.b16 %v223
      %v525 = vunpack.c.h.b16 %v223
      %v526 = vunpack.c.l.b16 %v224
      %v527 = vunpack.c.l.b16 %v225
      %v528 = vunpack.c.h.b16 %v225
      %v529 = vunpack.c.l.b16 %v226
      %v530 = vunpack.c.l.b16 %v227
      %v531 = vunpack.c.h.b16 %v227
      %v532 = vunpack.c.l.b16 %v228
      %v533 = vunpack.c.l.b16 %v229
      %v534 = vunpack.c.h.b16 %v229
      %v535 = vunpack.c.l.b16 %v230
      %v536 = vunpack.c.l.b16 %v231
      %v537 = vunpack.c.h.b16 %v231
      %v538 = vunpack.c.l.b16 %v232
      %v539 = vunpack.c.l.b16 %v233
      %v540 = vunpack.c.h.b16 %v233
      %v541 = vunpack.c.l.b16 %v234
      %v542 = vunpack.c.l.b16 %v235
      %v543 = vunpack.c.h.b16 %v235
      %v544 = vunpack.c.l.b16 %v236
      %v545 = vunpack.c.l.b16 %v237
      %v546 = vunpack.c.h.b16 %v237
      %v547 = vunpack.c.l.b16 %v238
      %v548 = vunpack.c.l.b16 %v239
      %v549 = vunpack.c.h.b16 %v239
      %v550 = vunpack.c.l.b16 %v240
      %v551 = vunpack.c.l.b16 %v241
      %v552 = vunpack.c.h.b16 %v241
      %v553 = vunpack.c.l.b16 %v242
      %v554 = vunpack.c.l.b16 %v243
      %v555 = vunpack.c.h.b16 %v243
      %v556 = vunpack.c.l.b16 %v244
      %v557 = vunpack.c.l.b16 %v245
      %v558 = vunpack.c.h.b16 %v245
      %v559 = vunpack.c.l.b16 %v246
      %v560 = vunpack.c.l.b16 %v247
      %v561 = vunpack.c.h.b16 %v247
      %v562 = vunpack.c.l.b16 %v248
      %v563 = vunpack.c.l.b16 %v249
      %v564 = vunpack.c.h.b16 %v249
      %v565 = vunpack.c.l.b16 %v250
      %v566 = vunpack.c.l.b16 %v251
      %v567 = vunpack.c.h.b16 %v251
      %v568 = vunpack.c.l.b16 %v252
      %v569 = vunpack.c.l.b16 %v253
      %v570 = vunpack.c.h.b16 %v253
      %v571 = vunpack.c.l.b16 %v254
      %v572 = vunpack.c.l.b16 %v255
      %v573 = vunpack.c.h.b16 %v255
      %v574 = vunpack.c.l.b16 %v256
      %v575 = vunpack.c.l.b16 %v257
      %v576 = vunpack.c.h.b16 %v257
      %v577 = vunpack.c.l.b16 %v258
      %v578 = vunpack.c.l.b16 %v259
      %v579 = vunpack.c.h.b16 %v259
      %v580 = vunpack.c.l.b16 %v260
      %v581 = vunpack.c.l.b16 %v261
      %v582 = vunpack.c.h.b16 %v261
      %v583 = vunpack.c.l.b16 %v262
      %v584 = vunpack.c.l.b16 %v263
      %v585 = vunpack.c.h.b16 %v263
      %v586 = vunpack.c.l.b16 %v264
      %v587 = vunpack.c.l.b16 %v265
      %v588 = vunpack.c.h.b16 %v265
      %v589 = vunpack.c.l.b16 %v266
      %v590 = vunpack.c.l.b16 %v267
      %v591 = vunpack.c.h.b16 %v267
      %v592 = vunpack.c.l.b16 %v268
      %v593 = vunpack.c.l.b16 %v269
      %v594 = vunpack.c.h.b16 %v269
      %v595 = vunpack.c.l.b16 %v270
      %v596 = vunpack.c.l.b16 %v271
      %v597 = vunpack.c.h.b16 %v271
      %v598 = vunpack.c.l.b16 %v272
      %v599 = vunpack.c.l.b16 %v273
      %v600 = vunpack.c.h.b16 %v273
      %v601 = vunpack.c.l.b16 %v274
      %v602 = vunpack.c.l.b16 %v275
      %v603 = vunpack.c.h.b16 %v275
      %v604 = vunpack.c.l.b16 %v276
      %v605 = vunpack.c.l.b16 %v277
      %v606 = vunpack.c.h.b16 %v277
      %v607 = vunpack.c.l.b16 %v278
      %v608 = vunpack.c.l.b16 %v279
      %v609 = vunpack.c.h.b16 %v279
      %v610 = vunpack.c.l.b16 %v280
      %v611 = vunpack.c.l.b16 %v281
      %v612 = vunpack.c.h.b16 %v281
      %v613 = vunpack.c.l.b16 %v282
      %v614 = vunpack.c.l.b16 %v283
      %v615 = vunpack.c.h.b16 %v283
      %v616 = vunpack.c.l.b16 %v284
      %v617 = vunpack.c.l.b16 %v285
      %v618 = vunpack.c.h.b16 %v285
      %v619 = vunpack.c.l.b16 %v286
      %v620 = vunpack.c.l.b16 %v287
      %v621 = vunpack.c.h.b16 %v287
      %v622 = vunpack.c.l.b16 %v288
      %v623 = vunpack.c.l.b16 %v289
      %v624 = vunpack.c.h.b16 %v289
      %v625 = vunpack.c.l.b16 %v290
      %v626 = vunpack.c.l.b16 %v291
      %v627 = vunpack.c.h.b16 %v291
      %v628 = vunpack.c.l.b16 %v292
      %v629 = vunpack.c.l.b16 %v293
      %v630 = vunpack.c.h.b16 %v293
      %v631 = vunpack.c.l.b16 %v294
      %v632 = vunpack.c.l.b16 %v295
      %v633 = vunpack.c.h.b16 %v295
      %v634 = vunpack.c.l.b16 %v296
      %v635 = vunpack.c.l.b16 %v297
      %v636 = vunpack.c.h.b16 %v297
      %v637 = vunpack.c.l.b16 %v298
      %v638 = vunpack.c.l.b16 %v299
      %v639 = vunpack.c.h.b16 %v299
      %v640 = vunpack.c.l.b16 %v300
      %v641 = vunpack.c.l.b16 %v301
      %v642 = vunpack.c.h.b16 %v301
      %v643 = vunpack.c.l.b16 %v302
      %v644 = vunpack.c.l.b16 %v303
      %v645 = vunpack.c.h.b16 %v303
      %v646 = vunpack.c.l.b16 %v304
      %v647 = vunpack.c.l.b16 %v305
      %v648 = vunpack.c.h.b16 %v305
      %v649 = vunpack.c.l.b16 %v306
      %v650 = vunpack.c.l.b16 %v307
      %v651 = vunpack.c.h.b16 %v307
      %v652 = vunpack.c.l.b16 %v308
      %v653 = vunpack.c.l.b16 %v309
      %v654 = vunpack.c.h.b16 %v309
      %v655 = vunpack.c.l.b16 %v310
      %v656 = vunpack.c.l.b16 %v311
      %v657 = vunpack.c.h.b16 %v311
      %v658 = vunpack.c.l.b16 %v312
      %v659 = vunpack.c.l.b16 %v313
      %v660 = vunpack.c.h.b16 %v313
      %v661 = vunpack.c.l.b16 %v314
      %v662 = vunpack.c.l.b16 %v315
      %v663 = vunpack.c.h.b16 %v315
      %v664 = vunpack.c.l.b16 %v316
      %v665 = vunpack.c.l.b16 %v317
      %v666 = vunpack.c.h.b16 %v317
      %v667 = vunpack.c.l.b16 %v318
      %v668 = vunpack.c.l.b16 %v319
      %v669 = vunpack.c.h.b16 %v319
      %v670 = vunpack.c.l.b16 %v320
      %v671 = vunpack.c.l.b16 %v321
      %v672 = vunpack.c.h.b16 %v321
      %v673 = vunpack.c.l.b16 %v322
      %v674 = vunpack.c.l.b16 %v323
      %v675 = vunpack.c.h.b16 %v323
      %v676 = vunpack.c.l.b16 %v324
      %v677 = vunpack.c.l.b16 %v325
      %v678 = vunpack.c.h.b16 %v325
      %v679 = vunpack.c.l.b16 %v326
      %v680 = vunpack.c.l.b16 %v327
      %v681 = vunpack.c.h.b16 %v327
      %v682 = vunpack.c.l.b16 %v328
      %v683 = vunpack.c.l.b16 %v329
      %v684 = vunpack.c.h.b16 %v329
      %v685 = vunpack.c.l.b16 %v330
      %v686 = vunpack.c.l.b16 %v331
      %v687 = vunpack.c.h.b16 %v331
      %v688 = vunpack.c.l.b16 %v332
      %v689 = vpack.c.b16 %v500, %v497
      %v690 = vpack.c.b16 %v501, %v498
      %v691 = vpack.c.b16 %v502, %v499
      %v692 = vpack.c.b16 %v506, %v503
      %v693 = vpack.c.b16 %v507, %v504
      %v694 = vpack.c.b16 %v508, %v505
      %v695 = vpack.c.b16 %v512, %v509
      %v696 = vpack.c.b16 %v513, %v510
      %v697 = vpack.c.b16 %v514, %v511
      %v698 = vpack.c.b16 %v518, %v515
      %v699 = vpack.c.b16 %v519, %v516
      %v700 = vpack.c.b16 %v520, %v517
      %v701 = vpack.c.b16 %v524, %v521
      %v702 = vpack.c.b16 %v525, %v522
      %v703 = vpack.c.b16 %v526, %v523
      %v704 = vpack.c.b16 %v530, %v527
      %v705 = vpack.c.b16 %v531, %v528
      %v706 = vpack.c.b16 %v532, %v529
      %v707 = vpack.c.b16 %v536, %v533
      %v708 = vpack.c.b16 %v537, %v534
      %v709 = vpack.c.b16 %v538, %v535
      %v710 = vpack.c.b16 %v542, %v539
      %v711 = vpack.c.b16 %v543, %v540
      %v712 = vpack.c.b16 %v544, %v541
      %v713 = vpack.c.b16 %v548, %v545
      %v714 = vpack.c.b16 %v549, %v546
      %v715 = vpack.c.b16 %v550, %v547
      %v716 = vpack.c.b16 %v554, %v551
      %v717 = vpack.c.b16 %v555, %v552
      %v718 = vpack.c.b16 %v556, %v553
      %v719 = vpack.c.b16 %v560, %v557
      %v720 = vpack.c.b16 %v561, %v558
      %v721 = vpack.c.b16 %v562, %v559
      %v722 = vpack.c.b16 %v566, %v563
      %v723 = vpack.c.b16 %v567, %v564
      %v724 = vpack.c.b16 %v568, %v565
      %v725 = vpack.c.b16 %v572, %v569
      %v726 = vpack.c.b16 %v573, %v570
      %v727 = vpack.c.b16 %v574, %v571
      %v728 = vpack.c.b16 %v578, %v575
      %v729 = vpack.c.b16 %v579, %v576
      %v730 = vpack.c.b16 %v580, %v577
      %v731 = vpack.c.b16 %v584, %v581
      %v732 = vpack.c.b16 %v585, %v582
      %v733 = vpack.c.b16 %v586, %v583
      %v734 = vpack.c.b16 %v590, %v587
      %v735 = vpack.c.b16 %v591, %v588
      %v736 = vpack.c.b16 %v592, %v589
      %v737 = vpack.c.b16 %v596, %v593
      %v738 = vpack.c.b16 %v597, %v594
      %v739 = vpack.c.b16 %v598, %v595
      %v740 = vpack.c.b16 %v602, %v599
      %v741 = vpack.c.b16 %v603, %v600
      %v742 = vpack.c.b16 %v604, %v601
      %v743 = vpack.c.b16 %v608, %v605
      %v744 = vpack.c.b16 %v609, %v606
      %v745 = vpack.c.b16 %v610, %v607
      %v746 = vpack.c.b16 %v614, %v611
      %v747 = vpack.c.b16 %v615, %v612
      %v748 = vpack.c.b16 %v616, %v613
      %v749 = vpack.c.b16 %v620, %v617
      %v750 = vpack.c.b16 %v621, %v618
      %v751 = vpack.c.b16 %v622, %v619
      %v752 = vpack.c.b16 %v626, %v623
      %v753 = vpack.c.b16 %v627, %v624
      %v754 = vpack.c.b16 %v628, %v625
      %v755 = vpack.c.b16 %v632, %v629
      %v756 = vpack.c.b16 %v633, %v630
      %v757 = vpack.c.b16 %v634, %v631
      %v758 = vpack.c.b16 %v638, %v635
      %v759 = vpack.c.b16 %v639, %v636
      %v760 = vpack.c.b16 %v640, %v637
      %v761 = vpack.c.b16 %v644, %v641
      %v762 = vpack.c.b16 %v645, %v642
      %v763 = vpack.c.b16 %v646, %v643
      %v764 = vpack.c.b16 %v650, %v647
      %v765 = vpack.c.b16 %v651, %v648
      %v766 = vpack.c.b16 %v652, %v649
      %v767 = vpack.c.b16 %v656, %v653
      %v768 = vpack.c.b16 %v657, %v654
      %v769 = vpack.c.b16 %v658, %v655
      %v770 = vpack.c.b16 %v662, %v659
      %v771 = vpack.c.b16 %v663, %v660
      %v772 = vpack.c.b16 %v664, %v661
      %v773 = vpack.c.b16 %v668, %v665
      %v774 = vpack.c.b16 %v669, %v666
      %v775 = vpack.c.b16 %v670, %v667
      %v776 = vpack.c.b16 %v674, %v671
      %v777 = vpack.c.b16 %v675, %v672
      %v778 = vpack.c.b16 %v676, %v673
      %v779 = vpack.c.b16 %v680, %v677
      %v780 = vpack.c.b16 %v681, %v678
      %v781 = vpack.c.b16 %v682, %v679
      %v782 = vpack.c.b16 %v686, %v683
      %v783 = vpack.c.b16 %v687, %v684
      %v784 = vpack.c.b16 %v688, %v685
      %v885 = vunpack.c.l.b16 %v333
      %v886 = vunpack.c.l.b16 %v334
      %v887 = vunpack.c.l.b16 %v335
      %v888 = vunpack.c.l.b16 %v336
      %v889 = vunpack.c.l.b16 %v337
      %v890 = vunpack.c.l.b16 %v338
      %v891 = vunpack.c.l.b16 %v339
      %v892 = vunpack.c.l.b16 %v340
      %v893 = vunpack.c.l.b16 %v341
      %v894 = vunpack.c.l.b16 %v342
      %v895 = vunpack.c.l.b16 %v343
      %v896 = vunpack.c.l.b16 %v344
      %v897 = vunpack.c.l.b16 %v345
      %v898 = vunpack.c.l.b16 %v346
      %v899 = vunpack.c.l.b16 %v347
      %v900 = vunpack.c.l.b16 %v348
      %v901 = vunpack.c.l.b16 %v349
      %v902 = vunpack.c.l.b16 %v350
      %v903 = vunpack.c.l.b16 %v351
      %v904 = vunpack.c.l.b16 %v352
      %v905 = vunpack.c.l.b16 %v353
      %v906 = vunpack.c.l.b16 %v354
      %v907 = vunpack.c.l.b16 %v355
      %v908 = vunpack.c.l.b16 %v356
      %v909 = vunpack.c.l.b16 %v357
      %v910 = vunpack.c.l.b16 %v358
      %v911 = vunpack.c.l.b16 %v359
      %v912 = vunpack.c.l.b16 %v360
      %v913 = vunpack.c.l.b16 %v361
      %v914 = vunpack.c.l.b16 %v362
      %v915 = vunpack.c.l.b16 %v363
      %v916 = vunpack.c.l.b16 %v364
      %v917 = vunpack.c.l.b16 %v365
      %v918 = vunpack.c.l.b16 %v366
      %v919 = vunpack.c.l.b16 %v367
      %v920 = vunpack.c.l.b16 %v368
      %v921 = vpack.c.b16 %v886, %v885
      %v922 = vpack.c.b16 %v888, %v887
      %v923 = vpack.c.b16 %v890, %v889
      %v924 = vpack.c.b16 %v892, %v891
      %v925 = vpack.c.b16 %v894, %v893
      %v926 = vpack.c.b16 %v896, %v895
      %v927 = vpack.c.b16 %v898, %v897
      %v928 = vpack.c.b16 %v900, %v899
      %v929 = vpack.c.b16 %v902, %v901
      %v930 = vpack.c.b16 %v904, %v903
      %v931 = vpack.c.b16 %v906, %v905
      %v932 = vpack.c.b16 %v908, %v907
      %v933 = vpack.c.b16 %v910, %v909
      %v934 = vpack.c.b16 %v912, %v911
      %v935 = vpack.c.b16 %v914, %v913
      %v936 = vpack.c.b16 %v916, %v915
      %v937 = vpack.c.b16 %v918, %v917
      %v938 = vpack.c.b16 %v920, %v919
      %vm957 = vcmask 261120
      %v959 = vsel %vm957, %v691, 0
      %v962 = vsel %vm957, %v694, 0
      %v965 = vsel %vm957, %v697, 0
      %v968 = vsel %vm957, %v700, 0
      %v971 = vsel %vm957, %v703, 0
      %v974 = vsel %vm957, %v706, 0
      %v977 = vsel %vm957, %v709, 0
      %v980 = vsel %vm957, %v712, 0
      %v983 = vsel %vm957, %v715, 0
      %v986 = vsel %vm957, %v718, 0
      %v989 = vsel %vm957, %v721, 0
      %v992 = vsel %vm957, %v724, 0
      %v995 = vsel %vm957, %v727, 0
      %v998 = vsel %vm957, %v730, 0
      %v1001 = vsel %vm957, %v733, 0
      %v1004 = vsel %vm957, %v736, 0
      %v1007 = vsel %vm957, %v739, 0
      %v1010 = vsel %vm957, %v742, 0
      %v1013 = vsel %vm957, %v745, 0
      %v1016 = vsel %vm957, %v748, 0
      %v1019 = vsel %vm957, %v751, 0
      %v1022 = vsel %vm957, %v754, 0
      %v1025 = vsel %vm957, %v757, 0
      %v1028 = vsel %vm957, %v760, 0
      %v1031 = vsel %vm957, %v763, 0
      %v1034 = vsel %vm957, %v766, 0
      %v1037 = vsel %vm957, %v769, 0
      %v1040 = vsel %vm957, %v772, 0
      %v1043 = vsel %vm957, %v775, 0
      %v1046 = vsel %vm957, %v778, 0
      %v1049 = vsel %vm957, %v781, 0
      %v1052 = vsel %vm957, %v784, 0
      %1054 = vmatprep.subr.bf16.mxu0 0
      %1055 = vmatpush1.bf16.msra.mxu0 %v921
      %1056 = vmatprep.subr.bf16.mxu0 0
      %1057 = vmatpush1.bf16.msra.mxu0 %v922
      %1058 = vmatprep.subr.bf16.mxu0 0
      %1059 = vmatpush1.bf16.msra.mxu0 %v923
      %1060 = vmatprep.subr.bf16.mxu0 0
      %1061 = vmatpush1.bf16.msra.mxu0 %v924
      %1062 = vmatprep.subr.bf16.mxu0 0
      %1063 = vmatpush1.bf16.msra.mxu0 %v925
      %1064 = vmatprep.subr.bf16.mxu0 0
      %1065 = vmatpush1.bf16.msra.mxu0 %v926
      %1066 = vmatprep.subr.bf16.mxu0 0
      %1067 = vmatpush1.bf16.msra.mxu0 %v927
      %1068 = vmatprep.subr.bf16.mxu0 0
      %1069 = vmatpush1.bf16.msra.mxu0 %v928
      %1070 = vmatprep.subr.bf16.mxu0 0
      %1071 = vmatpush1.bf16.msra.mxu0 %v929
      %1072 = vmatprep.subr.bf16.mxu0 0
      %1073 = vmatpush1.bf16.msra.mxu0 %v930
      %1074 = vmatprep.subr.bf16.mxu0 0
      %1075 = vmatpush1.bf16.msra.mxu0 %v931
      %1076 = vmatprep.subr.bf16.mxu0 0
      %1077 = vmatpush1.bf16.msra.mxu0 %v932
      %1078 = vmatprep.subr.bf16.mxu0 0
      %1079 = vmatpush1.bf16.msra.mxu0 %v933
      %1080 = vmatprep.subr.bf16.mxu0 0
      %1081 = vmatpush1.bf16.msra.mxu0 %v934
      %1082 = vmatprep.subr.bf16.mxu0 0
      %1083 = vmatpush1.bf16.msra.mxu0 %v935
      %1084 = vmatprep.subr.bf16.mxu0 0
      %1085 = vmatpush1.bf16.msra.mxu0 %v936
      %1086 = vmatprep.mubr.bf16.mxu0 %v690
      %1087 = vmatmul.mubr.bf16.gmra.mrb[0].mxu0 %v689
      %v1088 = vpop.f32.mrb[0].mxu0
      %v1089 = vadd.f32 0.0, %v1088
      %v1090 = vpop.f32.mrb[0].mxu0
      %v1091 = vpop.f32.mrb[0].mxu0
      %v1092 = vadd.f32 0.0, %v1091
      %v1093 = vpop.f32.mrb[0].mxu0
      %1094 = vmatprep.mubr.bf16.mxu0 %v693
      %1095 = vmatmul.mubr.bf16.gmra.mrb[0].mxu0 %v692
      %v1096 = vpop.f32.mrb[0].mxu0
      %v1097 = vadd.f32 0.0, %v1096
      %v1098 = vpop.f32.mrb[0].mxu0
      %v1099 = vpop.f32.mrb[0].mxu0
      %v1100 = vadd.f32 0.0, %v1099
      %v1101 = vpop.f32.mrb[0].mxu0
      %1102 = vmatprep.mubr.bf16.mxu0 %v696
      %1103 = vmatmul.mubr.bf16.gmra.mrb[0].mxu0 %v695
      %v1104 = vpop.f32.mrb[0].mxu0
      %v1105 = vadd.f32 0.0, %v1104
      %v1106 = vpop.f32.mrb[0].mxu0
      %v1107 = vpop.f32.mrb[0].mxu0
      %v1108 = vadd.f32 0.0, %v1107
      %v1109 = vpop.f32.mrb[0].mxu0
      %1110 = vmatprep.mubr.bf16.mxu0 %v699
      %1111 = vmatmul.mubr.bf16.gmra.mrb[0].mxu0 %v698
      %v1112 = vpop.f32.mrb[0].mxu0
      %v1113 = vadd.f32 0.0, %v1112
      %v1114 = vpop.f32.mrb[0].mxu0
      %v1115 = vpop.f32.mrb[0].mxu0
      %v1116 = vadd.f32 0.0, %v1115
      %v1117 = vpop.f32.mrb[0].mxu0
      %1118 = vmatprep.mubr.bf16.mxu0 %v702
      %1119 = vmatmul.mubr.bf16.gmra.mrb[0].mxu0 %v701
      %v1120 = vpop.f32.mrb[0].mxu0
      %v1121 = vadd.f32 0.0, %v1120
      %v1122 = vpop.f32.mrb[0].mxu0
      %v1123 = vpop.f32.mrb[0].mxu0
      %v1124 = vadd.f32 0.0, %v1123
      %v1125 = vpop.f32.mrb[0].mxu0
      %1126 = vmatprep.mubr.bf16.mxu0 %v705
      %1127 = vmatmul.mubr.bf16.gmra.mrb[0].mxu0 %v704
      %v1128 = vpop.f32.mrb[0].mxu0
      %v1129 = vadd.f32 0.0, %v1128
      %v1130 = vpop.f32.mrb[0].mxu0
      %v1131 = vpop.f32.mrb[0].mxu0
      %v1132 = vadd.f32 0.0, %v1131
      %v1133 = vpop.f32.mrb[0].mxu0
      %1134 = vmatprep.mubr.bf16.mxu0 %v708
      %1135 = vmatmul.mubr.bf16.gmra.mrb[0].mxu0 %v707
      %v1136 = vpop.f32.mrb[0].mxu0
      %v1137 = vadd.f32 0.0, %v1136
      %v1138 = vpop.f32.mrb[0].mxu0
      %v1139 = vpop.f32.mrb[0].mxu0
      %v1140 = vadd.f32 0.0, %v1139
      %v1141 = vpop.f32.mrb[0].mxu0
      %1142 = vmatprep.mubr.bf16.mxu0 %v711
      %1143 = vmatmul.mubr.bf16.gmra.mrb[0].mxu0 %v710
      %v1144 = vpop.f32.mrb[0].mxu0
      %v1145 = vadd.f32 0.0, %v1144
      %v1146 = vpop.f32.mrb[0].mxu0
      %v1147 = vpop.f32.mrb[0].mxu0
      %v1148 = vadd.f32 0.0, %v1147
      %v1149 = vpop.f32.mrb[0].mxu0
      %1150 = vmatprep.mubr.bf16.mxu0 %v714
      %1151 = vmatmul.mubr.bf16.gmra.mrb[0].mxu0 %v713
      %v1152 = vpop.f32.mrb[0].mxu0
      %v1153 = vadd.f32 0.0, %v1152
      %v1154 = vpop.f32.mrb[0].mxu0
      %v1155 = vpop.f32.mrb[0].mxu0
      %v1156 = vadd.f32 0.0, %v1155
      %v1157 = vpop.f32.mrb[0].mxu0
      %1158 = vmatprep.mubr.bf16.mxu0 %v717
      %1159 = vmatmul.mubr.bf16.gmra.mrb[0].mxu0 %v716
      %v1160 = vpop.f32.mrb[0].mxu0
      %v1161 = vadd.f32 0.0, %v1160
      %v1162 = vpop.f32.mrb[0].mxu0
      %v1163 = vpop.f32.mrb[0].mxu0
      %v1164 = vadd.f32 0.0, %v1163
      %v1165 = vpop.f32.mrb[0].mxu0
      %1166 = vmatprep.mubr.bf16.mxu0 %v720
      %1167 = vmatmul.mubr.bf16.gmra.mrb[0].mxu0 %v719
      %v1168 = vpop.f32.mrb[0].mxu0
      %v1169 = vadd.f32 0.0, %v1168
      %v1170 = vpop.f32.mrb[0].mxu0
      %v1171 = vpop.f32.mrb[0].mxu0
      %v1172 = vadd.f32 0.0, %v1171
      %v1173 = vpop.f32.mrb[0].mxu0
      %1174 = vmatprep.mubr.bf16.mxu0 %v723
      %1175 = vmatmul.mubr.bf16.gmra.mrb[0].mxu0 %v722
      %v1176 = vpop.f32.mrb[0].mxu0
      %v1177 = vadd.f32 0.0, %v1176
      %v1178 = vpop.f32.mrb[0].mxu0
      %v1179 = vpop.f32.mrb[0].mxu0
      %v1180 = vadd.f32 0.0, %v1179
      %v1181 = vpop.f32.mrb[0].mxu0
      %1182 = vmatprep.mubr.bf16.mxu0 %v726
      %1183 = vmatmul.mubr.bf16.gmra.mrb[0].mxu0 %v725
      %v1184 = vpop.f32.mrb[0].mxu0
      %v1185 = vadd.f32 0.0, %v1184
      %v1186 = vpop.f32.mrb[0].mxu0
      %v1187 = vpop.f32.mrb[0].mxu0
      %v1188 = vadd.f32 0.0, %v1187
      %v1189 = vpop.f32.mrb[0].mxu0
      %1190 = vmatprep.mubr.bf16.mxu0 %v729
      %1191 = vmatmul.mubr.bf16.gmra.mrb[0].mxu0 %v728
      %v1192 = vpop.f32.mrb[0].mxu0
      %v1193 = vadd.f32 0.0, %v1192
      %v1194 = vpop.f32.mrb[0].mxu0
      %v1195 = vpop.f32.mrb[0].mxu0
      %v1196 = vadd.f32 0.0, %v1195
      %v1197 = vpop.f32.mrb[0].mxu0
      %1198 = vmatprep.mubr.bf16.mxu0 %v732
      %1199 = vmatmul.mubr.bf16.gmra.mrb[0].mxu0 %v731
      %v1200 = vpop.f32.mrb[0].mxu0
      %v1201 = vadd.f32 0.0, %v1200
      %v1202 = vpop.f32.mrb[0].mxu0
      %v1203 = vpop.f32.mrb[0].mxu0
      %v1204 = vadd.f32 0.0, %v1203
      %v1205 = vpop.f32.mrb[0].mxu0
      %1206 = vmatprep.mubr.bf16.mxu0 %v735
      %1207 = vmatmul.mubr.bf16.gmra.mrb[0].mxu0 %v734
      %v1208 = vpop.f32.mrb[0].mxu0
      %v1209 = vadd.f32 0.0, %v1208
      %v1210 = vpop.f32.mrb[0].mxu0
      %v1211 = vpop.f32.mrb[0].mxu0
      %v1212 = vadd.f32 0.0, %v1211
      %v1213 = vpop.f32.mrb[0].mxu0
      %1214 = vmatprep.mubr.bf16.mxu0 %v738
      %1215 = vmatmul.mubr.bf16.gmra.mrb[0].mxu0 %v737
      %v1216 = vpop.f32.mrb[0].mxu0
      %v1217 = vadd.f32 0.0, %v1216
      %v1218 = vpop.f32.mrb[0].mxu0
      %v1219 = vpop.f32.mrb[0].mxu0
      %v1220 = vadd.f32 0.0, %v1219
      %v1221 = vpop.f32.mrb[0].mxu0
      %1222 = vmatprep.mubr.bf16.mxu0 %v741
      %1223 = vmatmul.mubr.bf16.gmra.mrb[0].mxu0 %v740
      %v1224 = vpop.f32.mrb[0].mxu0
      %v1225 = vadd.f32 0.0, %v1224
      %v1226 = vpop.f32.mrb[0].mxu0
      %v1227 = vpop.f32.mrb[0].mxu0
      %v1228 = vadd.f32 0.0, %v1227
      %v1229 = vpop.f32.mrb[0].mxu0
      %1230 = vmatprep.mubr.bf16.mxu0 %v744
      %1231 = vmatmul.mubr.bf16.gmra.mrb[0].mxu0 %v743
      %v1232 = vpop.f32.mrb[0].mxu0
      %v1233 = vadd.f32 0.0, %v1232
      %v1234 = vpop.f32.mrb[0].mxu0
      %v1235 = vpop.f32.mrb[0].mxu0
      %v1236 = vadd.f32 0.0, %v1235
      %v1237 = vpop.f32.mrb[0].mxu0
      %1238 = vmatprep.mubr.bf16.mxu0 %v747
      %1239 = vmatmul.mubr.bf16.gmra.mrb[0].mxu0 %v746
      %v1240 = vpop.f32.mrb[0].mxu0
      %v1241 = vadd.f32 0.0, %v1240
      %v1242 = vpop.f32.mrb[0].mxu0
      %v1243 = vpop.f32.mrb[0].mxu0
      %v1244 = vadd.f32 0.0, %v1243
      %v1245 = vpop.f32.mrb[0].mxu0
      %1246 = vmatprep.mubr.bf16.mxu0 %v750
      %1247 = vmatmul.mubr.bf16.gmra.mrb[0].mxu0 %v749
      %v1248 = vpop.f32.mrb[0].mxu0
      %v1249 = vadd.f32 0.0, %v1248
      %v1250 = vpop.f32.mrb[0].mxu0
      %v1251 = vpop.f32.mrb[0].mxu0
      %v1252 = vadd.f32 0.0, %v1251
      %v1253 = vpop.f32.mrb[0].mxu0
      %1254 = vmatprep.mubr.bf16.mxu0 %v753
      %1255 = vmatmul.mubr.bf16.gmra.mrb[0].mxu0 %v752
      %v1256 = vpop.f32.mrb[0].mxu0
      %v1257 = vadd.f32 0.0, %v1256
      %v1258 = vpop.f32.mrb[0].mxu0
      %v1259 = vpop.f32.mrb[0].mxu0
      %v1260 = vadd.f32 0.0, %v1259
      %v1261 = vpop.f32.mrb[0].mxu0
      %1262 = vmatprep.mubr.bf16.mxu0 %v756
      %1263 = vmatmul.mubr.bf16.gmra.mrb[0].mxu0 %v755
      %v1264 = vpop.f32.mrb[0].mxu0
      %v1265 = vadd.f32 0.0, %v1264
      %v1266 = vpop.f32.mrb[0].mxu0
      %v1267 = vpop.f32.mrb[0].mxu0
      %v1268 = vadd.f32 0.0, %v1267
      %v1269 = vpop.f32.mrb[0].mxu0
      %1270 = vmatprep.mubr.bf16.mxu0 %v759
      %1271 = vmatmul.mubr.bf16.gmra.mrb[0].mxu0 %v758
      %v1272 = vpop.f32.mrb[0].mxu0
      %v1273 = vadd.f32 0.0, %v1272
      %v1274 = vpop.f32.mrb[0].mxu0
      %v1275 = vpop.f32.mrb[0].mxu0
      %v1276 = vadd.f32 0.0, %v1275
      %v1277 = vpop.f32.mrb[0].mxu0
      %1278 = vmatprep.mubr.bf16.mxu0 %v762
      %1279 = vmatmul.mubr.bf16.gmra.mrb[0].mxu0 %v761
      %v1280 = vpop.f32.mrb[0].mxu0
      %v1281 = vadd.f32 0.0, %v1280
      %v1282 = vpop.f32.mrb[0].mxu0
      %v1283 = vpop.f32.mrb[0].mxu0
      %v1284 = vadd.f32 0.0, %v1283
      %v1285 = vpop.f32.mrb[0].mxu0
      %1286 = vmatprep.mubr.bf16.mxu0 %v765
      %1287 = vmatmul.mubr.bf16.gmra.mrb[0].mxu0 %v764
      %v1288 = vpop.f32.mrb[0].mxu0
      %v1289 = vadd.f32 0.0, %v1288
      %v1290 = vpop.f32.mrb[0].mxu0
      %v1291 = vpop.f32.mrb[0].mxu0
      %v1292 = vadd.f32 0.0, %v1291
      %v1293 = vpop.f32.mrb[0].mxu0
      %1294 = vmatprep.mubr.bf16.mxu0 %v768
      %1295 = vmatmul.mubr.bf16.gmra.mrb[0].mxu0 %v767
      %v1296 = vpop.f32.mrb[0].mxu0
      %v1297 = vadd.f32 0.0, %v1296
      %v1298 = vpop.f32.mrb[0].mxu0
      %v1299 = vpop.f32.mrb[0].mxu0
      %v1300 = vadd.f32 0.0, %v1299
      %v1301 = vpop.f32.mrb[0].mxu0
      %1302 = vmatprep.mubr.bf16.mxu0 %v771
      %1303 = vmatmul.mubr.bf16.gmra.mrb[0].mxu0 %v770
      %v1304 = vpop.f32.mrb[0].mxu0
      %v1305 = vadd.f32 0.0, %v1304
      %v1306 = vpop.f32.mrb[0].mxu0
      %v1307 = vpop.f32.mrb[0].mxu0
      %v1308 = vadd.f32 0.0, %v1307
      %v1309 = vpop.f32.mrb[0].mxu0
      %1310 = vmatprep.mubr.bf16.mxu0 %v774
      %1311 = vmatmul.mubr.bf16.gmra.mrb[0].mxu0 %v773
      %v1312 = vpop.f32.mrb[0].mxu0
      %v1313 = vadd.f32 0.0, %v1312
      %v1314 = vpop.f32.mrb[0].mxu0
      %v1315 = vpop.f32.mrb[0].mxu0
      %v1316 = vadd.f32 0.0, %v1315
      %v1317 = vpop.f32.mrb[0].mxu0
      %1318 = vmatprep.mubr.bf16.mxu0 %v777
      %1319 = vmatmul.mubr.bf16.gmra.mrb[0].mxu0 %v776
      %v1320 = vpop.f32.mrb[0].mxu0
      %v1321 = vadd.f32 0.0, %v1320
      %v1322 = vpop.f32.mrb[0].mxu0
      %v1323 = vpop.f32.mrb[0].mxu0
      %v1324 = vadd.f32 0.0, %v1323
      %v1325 = vpop.f32.mrb[0].mxu0
      %1326 = vmatprep.mubr.bf16.mxu0 %v780
      %1327 = vmatmul.mubr.bf16.gmra.mrb[0].mxu0 %v779
      %v1328 = vpop.f32.mrb[0].mxu0
      %v1329 = vadd.f32 0.0, %v1328
      %v1330 = vpop.f32.mrb[0].mxu0
      %v1331 = vpop.f32.mrb[0].mxu0
      %v1332 = vadd.f32 0.0, %v1331
      %v1333 = vpop.f32.mrb[0].mxu0
      %1334 = vmatprep.mubr.bf16.mxu0 %v783
      %1335 = vmatmul.mubr.bf16.gmra.mrb[0].mxu0 %v782
      %v1336 = vpop.f32.mrb[0].mxu0
      %v1337 = vadd.f32 0.0, %v1336
      %v1338 = vpop.f32.mrb[0].mxu0
      %v1339 = vpop.f32.mrb[0].mxu0
      %v1340 = vadd.f32 0.0, %v1339
      %v1341 = vpop.f32.mrb[0].mxu0
      %1342 = vdwg.mxu0
      %1343 = vmatprep.subr.bf16.mxu0 0
      %1344 = vmatpush1.bf16.msra.mxu0 %v937
      %1345 = vmatprep.subr.bf16.mxu0 0
      %1346 = vmatpush1.bf16.msra.mxu0 %v938
      %1347 = vmatprep.subr.bf16.mxu0 0
      %1348 = vmatpush1.bf16.msra.mxu0 0
      %1349 = vmatprep.subr.bf16.mxu0 0
      %1350 = vmatpush1.bf16.msra.mxu0 0
      %1351 = vmatprep.subr.bf16.mxu0 0
      %1352 = vmatpush1.bf16.msra.mxu0 0
      %1353 = vmatprep.subr.bf16.mxu0 0
      %1354 = vmatpush1.bf16.msra.mxu0 0
      %1355 = vmatprep.subr.bf16.mxu0 0
      %1356 = vmatpush1.bf16.msra.mxu0 0
      %1357 = vmatprep.subr.bf16.mxu0 0
      %1358 = vmatpush1.bf16.msra.mxu0 0
      %1359 = vmatprep.subr.bf16.mxu0 0
      %1360 = vmatpush1.bf16.msra.mxu0 0
      %1361 = vmatprep.subr.bf16.mxu0 0
      %1362 = vmatpush1.bf16.msra.mxu0 0
      %1363 = vmatprep.subr.bf16.mxu0 0
      %1364 = vmatpush1.bf16.msra.mxu0 0
      %1365 = vmatprep.subr.bf16.mxu0 0
      %1366 = vmatpush1.bf16.msra.mxu0 0
      %1367 = vmatprep.subr.bf16.mxu0 0
      %1368 = vmatpush1.bf16.msra.mxu0 0
      %1369 = vmatprep.subr.bf16.mxu0 0
      %1370 = vmatpush1.bf16.msra.mxu0 0
      %1371 = vmatprep.subr.bf16.mxu0 0
      %1372 = vmatpush1.bf16.msra.mxu0 0
      %1373 = vmatprep.subr.bf16.mxu0 0
      %1374 = vmatpush1.bf16.msra.mxu0 0
      %1375 = vmatprep.mubr.bf16.mxu0 0
      %1376 = vmatmul.mubr.bf16.gmra.mrb[0].mxu0 %v959
      %v1377 = vpop.f32.mrb[0].mxu0
      %v1378 = vadd.f32 %v1089, %v1377
      %v1379 = vpop.f32.mrb[0].mxu0
      %v1380 = vpop.f32.mrb[0].mxu0
      %v1381 = vadd.f32 %v1092, %v1380
      %v1382 = vpop.f32.mrb[0].mxu0
      %1383 = vmatprep.mubr.bf16.mxu0 0
      %1384 = vmatmul.mubr.bf16.gmra.mrb[0].mxu0 %v962
      %v1385 = vpop.f32.mrb[0].mxu0
      %v1386 = vadd.f32 %v1097, %v1385
      %v1387 = vpop.f32.mrb[0].mxu0
      %v1388 = vpop.f32.mrb[0].mxu0
      %v1389 = vadd.f32 %v1100, %v1388
      %v1390 = vpop.f32.mrb[0].mxu0
      %1391 = vmatprep.mubr.bf16.mxu0 0
      %1392 = vmatmul.mubr.bf16.gmra.mrb[0].mxu0 %v965
      %v1393 = vpop.f32.mrb[0].mxu0
      %v1394 = vadd.f32 %v1105, %v1393
      %v1395 = vpop.f32.mrb[0].mxu0
      %v1396 = vpop.f32.mrb[0].mxu0
      %v1397 = vadd.f32 %v1108, %v1396
      %v1398 = vpop.f32.mrb[0].mxu0
      %1399 = vmatprep.mubr.bf16.mxu0 0
      %1400 = vmatmul.mubr.bf16.gmra.mrb[0].mxu0 %v968
      %v1401 = vpop.f32.mrb[0].mxu0
      %v1402 = vadd.f32 %v1113, %v1401
      %v1403 = vpop.f32.mrb[0].mxu0
      %v1404 = vpop.f32.mrb[0].mxu0
      %v1405 = vadd.f32 %v1116, %v1404
      %v1406 = vpop.f32.mrb[0].mxu0
      %1407 = vmatprep.mubr.bf16.mxu0 0
      %1408 = vmatmul.mubr.bf16.gmra.mrb[0].mxu0 %v971
      %v1409 = vpop.f32.mrb[0].mxu0
      %v1410 = vadd.f32 %v1121, %v1409
      %v1411 = vpop.f32.mrb[0].mxu0
      %v1412 = vpop.f32.mrb[0].mxu0
      %v1413 = vadd.f32 %v1124, %v1412
      %v1414 = vpop.f32.mrb[0].mxu0
      %1415 = vmatprep.mubr.bf16.mxu0 0
      %1416 = vmatmul.mubr.bf16.gmra.mrb[0].mxu0 %v974
      %v1417 = vpop.f32.mrb[0].mxu0
      %v1418 = vadd.f32 %v1129, %v1417
      %v1419 = vpop.f32.mrb[0].mxu0
      %v1420 = vpop.f32.mrb[0].mxu0
      %v1421 = vadd.f32 %v1132, %v1420
      %v1422 = vpop.f32.mrb[0].mxu0
      %1423 = vmatprep.mubr.bf16.mxu0 0
      %1424 = vmatmul.mubr.bf16.gmra.mrb[0].mxu0 %v977
      %v1425 = vpop.f32.mrb[0].mxu0
      %v1426 = vadd.f32 %v1137, %v1425
      %v1427 = vpop.f32.mrb[0].mxu0
      %v1428 = vpop.f32.mrb[0].mxu0
      %v1429 = vadd.f32 %v1140, %v1428
      %v1430 = vpop.f32.mrb[0].mxu0
      %1431 = vmatprep.mubr.bf16.mxu0 0
      %1432 = vmatmul.mubr.bf16.gmra.mrb[0].mxu0 %v980
      %v1433 = vpop.f32.mrb[0].mxu0
      %v1434 = vadd.f32 %v1145, %v1433
      %v1435 = vpop.f32.mrb[0].mxu0
      %v1436 = vpop.f32.mrb[0].mxu0
      %v1437 = vadd.f32 %v1148, %v1436
      %v1438 = vpop.f32.mrb[0].mxu0
      %1439 = vmatprep.mubr.bf16.mxu0 0
      %1440 = vmatmul.mubr.bf16.gmra.mrb[0].mxu0 %v983
      %v1441 = vpop.f32.mrb[0].mxu0
      %v1442 = vadd.f32 %v1153, %v1441
      %v1443 = vpop.f32.mrb[0].mxu0
      %v1444 = vpop.f32.mrb[0].mxu0
      %v1445 = vadd.f32 %v1156, %v1444
      %v1446 = vpop.f32.mrb[0].mxu0
      %1447 = vmatprep.mubr.bf16.mxu0 0
      %1448 = vmatmul.mubr.bf16.gmra.mrb[0].mxu0 %v986
      %v1449 = vpop.f32.mrb[0].mxu0
      %v1450 = vadd.f32 %v1161, %v1449
      %v1451 = vpop.f32.mrb[0].mxu0
      %v1452 = vpop.f32.mrb[0].mxu0
      %v1453 = vadd.f32 %v1164, %v1452
      %v1454 = vpop.f32.mrb[0].mxu0
      %1455 = vmatprep.mubr.bf16.mxu0 0
      %1456 = vmatmul.mubr.bf16.gmra.mrb[0].mxu0 %v989
      %v1457 = vpop.f32.mrb[0].mxu0
      %v1458 = vadd.f32 %v1169, %v1457
      %v1459 = vpop.f32.mrb[0].mxu0
      %v1460 = vpop.f32.mrb[0].mxu0
      %v1461 = vadd.f32 %v1172, %v1460
      %v1462 = vpop.f32.mrb[0].mxu0
      %1463 = vmatprep.mubr.bf16.mxu0 0
      %1464 = vmatmul.mubr.bf16.gmra.mrb[0].mxu0 %v992
      %v1465 = vpop.f32.mrb[0].mxu0
      %v1466 = vadd.f32 %v1177, %v1465
      %v1467 = vpop.f32.mrb[0].mxu0
      %v1468 = vpop.f32.mrb[0].mxu0
      %v1469 = vadd.f32 %v1180, %v1468
      %v1470 = vpop.f32.mrb[0].mxu0
      %1471 = vmatprep.mubr.bf16.mxu0 0
      %1472 = vmatmul.mubr.bf16.gmra.mrb[0].mxu0 %v995
      %v1473 = vpop.f32.mrb[0].mxu0
      %v1474 = vadd.f32 %v1185, %v1473
      %v1475 = vpop.f32.mrb[0].mxu0
      %v1476 = vpop.f32.mrb[0].mxu0
      %v1477 = vadd.f32 %v1188, %v1476
      %v1478 = vpop.f32.mrb[0].mxu0
      %1479 = vmatprep.mubr.bf16.mxu0 0
      %1480 = vmatmul.mubr.bf16.gmra.mrb[0].mxu0 %v998
      %v1481 = vpop.f32.mrb[0].mxu0
      %v1482 = vadd.f32 %v1193, %v1481
      %v1483 = vpop.f32.mrb[0].mxu0
      %v1484 = vpop.f32.mrb[0].mxu0
      %v1485 = vadd.f32 %v1196, %v1484
      %v1486 = vpop.f32.mrb[0].mxu0
      %1487 = vmatprep.mubr.bf16.mxu0 0
      %1488 = vmatmul.mubr.bf16.gmra.mrb[0].mxu0 %v1001
      %v1489 = vpop.f32.mrb[0].mxu0
      %v1490 = vadd.f32 %v1201, %v1489
      %v1491 = vpop.f32.mrb[0].mxu0
      %v1492 = vpop.f32.mrb[0].mxu0
      %v1493 = vadd.f32 %v1204, %v1492
      %v1494 = vpop.f32.mrb[0].mxu0
      %1495 = vmatprep.mubr.bf16.mxu0 0
      %1496 = vmatmul.mubr.bf16.gmra.mrb[0].mxu0 %v1004
      %v1497 = vpop.f32.mrb[0].mxu0
      %v1498 = vadd.f32 %v1209, %v1497
      %v1499 = vpop.f32.mrb[0].mxu0
      %v1500 = vpop.f32.mrb[0].mxu0
      %v1501 = vadd.f32 %v1212, %v1500
      %v1502 = vpop.f32.mrb[0].mxu0
      %1503 = vmatprep.mubr.bf16.mxu0 0
      %1504 = vmatmul.mubr.bf16.gmra.mrb[0].mxu0 %v1007
      %v1505 = vpop.f32.mrb[0].mxu0
      %v1506 = vadd.f32 %v1217, %v1505
      %v1507 = vpop.f32.mrb[0].mxu0
      %v1508 = vpop.f32.mrb[0].mxu0
      %v1509 = vadd.f32 %v1220, %v1508
      %v1510 = vpop.f32.mrb[0].mxu0
      %1511 = vmatprep.mubr.bf16.mxu0 0
      %1512 = vmatmul.mubr.bf16.gmra.mrb[0].mxu0 %v1010
      %v1513 = vpop.f32.mrb[0].mxu0
      %v1514 = vadd.f32 %v1225, %v1513
      %v1515 = vpop.f32.mrb[0].mxu0
      %v1516 = vpop.f32.mrb[0].mxu0
      %v1517 = vadd.f32 %v1228, %v1516
      %v1518 = vpop.f32.mrb[0].mxu0
      %1519 = vmatprep.mubr.bf16.mxu0 0
      %1520 = vmatmul.mubr.bf16.gmra.mrb[0].mxu0 %v1013
      %v1521 = vpop.f32.mrb[0].mxu0
      %v1522 = vadd.f32 %v1233, %v1521
      %v1523 = vpop.f32.mrb[0].mxu0
      %v1524 = vpop.f32.mrb[0].mxu0
      %v1525 = vadd.f32 %v1236, %v1524
      %v1526 = vpop.f32.mrb[0].mxu0
      %1527 = vmatprep.mubr.bf16.mxu0 0
      %1528 = vmatmul.mubr.bf16.gmra.mrb[0].mxu0 %v1016
      %v1529 = vpop.f32.mrb[0].mxu0
      %v1530 = vadd.f32 %v1241, %v1529
      %v1531 = vpop.f32.mrb[0].mxu0
      %v1532 = vpop.f32.mrb[0].mxu0
      %v1533 = vadd.f32 %v1244, %v1532
      %v1534 = vpop.f32.mrb[0].mxu0
      %1535 = vmatprep.mubr.bf16.mxu0 0
      %1536 = vmatmul.mubr.bf16.gmra.mrb[0].mxu0 %v1019
      %v1537 = vpop.f32.mrb[0].mxu0
      %v1538 = vadd.f32 %v1249, %v1537
      %v1539 = vpop.f32.mrb[0].mxu0
      %v1540 = vpop.f32.mrb[0].mxu0
      %v1541 = vadd.f32 %v1252, %v1540
      %v1542 = vpop.f32.mrb[0].mxu0
      %1543 = vmatprep.mubr.bf16.mxu0 0
      %1544 = vmatmul.mubr.bf16.gmra.mrb[0].mxu0 %v1022
      %v1545 = vpop.f32.mrb[0].mxu0
      %v1546 = vadd.f32 %v1257, %v1545
      %v1547 = vpop.f32.mrb[0].mxu0
      %v1548 = vpop.f32.mrb[0].mxu0
      %v1549 = vadd.f32 %v1260, %v1548
      %v1550 = vpop.f32.mrb[0].mxu0
      %1551 = vmatprep.mubr.bf16.mxu0 0
      %1552 = vmatmul.mubr.bf16.gmra.mrb[0].mxu0 %v1025
      %v1553 = vpop.f32.mrb[0].mxu0
      %v1554 = vadd.f32 %v1265, %v1553
      %v1555 = vpop.f32.mrb[0].mxu0
      %v1556 = vpop.f32.mrb[0].mxu0
      %v1557 = vadd.f32 %v1268, %v1556
      %v1558 = vpop.f32.mrb[0].mxu0
      %1559 = vmatprep.mubr.bf16.mxu0 0
      %1560 = vmatmul.mubr.bf16.gmra.mrb[0].mxu0 %v1028
      %v1561 = vpop.f32.mrb[0].mxu0
      %v1562 = vadd.f32 %v1273, %v1561
      %v1563 = vpop.f32.mrb[0].mxu0
      %v1564 = vpop.f32.mrb[0].mxu0
      %v1565 = vadd.f32 %v1276, %v1564
      %v1566 = vpop.f32.mrb[0].mxu0
      %1567 = vmatprep.mubr.bf16.mxu0 0
      %1568 = vmatmul.mubr.bf16.gmra.mrb[0].mxu0 %v1031
      %v1569 = vpop.f32.mrb[0].mxu0
      %v1570 = vadd.f32 %v1281, %v1569
      %v1571 = vpop.f32.mrb[0].mxu0
      %v1572 = vpop.f32.mrb[0].mxu0
      %v1573 = vadd.f32 %v1284, %v1572
      %v1574 = vpop.f32.mrb[0].mxu0
      %1575 = vmatprep.mubr.bf16.mxu0 0
      %1576 = vmatmul.mubr.bf16.gmra.mrb[0].mxu0 %v1034
      %v1577 = vpop.f32.mrb[0].mxu0
      %v1578 = vadd.f32 %v1289, %v1577
      %v1579 = vpop.f32.mrb[0].mxu0
      %v1580 = vpop.f32.mrb[0].mxu0
      %v1581 = vadd.f32 %v1292, %v1580
      %v1582 = vpop.f32.mrb[0].mxu0
      %1583 = vmatprep.mubr.bf16.mxu0 0
      %1584 = vmatmul.mubr.bf16.gmra.mrb[0].mxu0 %v1037
      %v1585 = vpop.f32.mrb[0].mxu0
      %v1586 = vadd.f32 %v1297, %v1585
      %v1587 = vpop.f32.mrb[0].mxu0
      %v1588 = vpop.f32.mrb[0].mxu0
      %v1589 = vadd.f32 %v1300, %v1588
      %v1590 = vpop.f32.mrb[0].mxu0
      %1591 = vmatprep.mubr.bf16.mxu0 0
      %1592 = vmatmul.mubr.bf16.gmra.mrb[0].mxu0 %v1040
      %v1593 = vpop.f32.mrb[0].mxu0
      %v1594 = vadd.f32 %v1305, %v1593
      %v1595 = vpop.f32.mrb[0].mxu0
      %v1596 = vpop.f32.mrb[0].mxu0
      %v1597 = vadd.f32 %v1308, %v1596
      %v1598 = vpop.f32.mrb[0].mxu0
      %1599 = vmatprep.mubr.bf16.mxu0 0
      %1600 = vmatmul.mubr.bf16.gmra.mrb[0].mxu0 %v1043
      %v1601 = vpop.f32.mrb[0].mxu0
      %v1602 = vadd.f32 %v1313, %v1601
      %v1603 = vpop.f32.mrb[0].mxu0
      %v1604 = vpop.f32.mrb[0].mxu0
      %v1605 = vadd.f32 %v1316, %v1604
      %v1606 = vpop.f32.mrb[0].mxu0
      %1607 = vmatprep.mubr.bf16.mxu0 0
      %1608 = vmatmul.mubr.bf16.gmra.mrb[0].mxu0 %v1046
      %v1609 = vpop.f32.mrb[0].mxu0
      %v1610 = vadd.f32 %v1321, %v1609
      %v1611 = vpop.f32.mrb[0].mxu0
      %v1612 = vpop.f32.mrb[0].mxu0
      %v1613 = vadd.f32 %v1324, %v1612
      %v1614 = vpop.f32.mrb[0].mxu0
      %1615 = vmatprep.mubr.bf16.mxu0 0
      %1616 = vmatmul.mubr.bf16.gmra.mrb[0].mxu0 %v1049
      %v1617 = vpop.f32.mrb[0].mxu0
      %v1618 = vadd.f32 %v1329, %v1617
      %v1619 = vpop.f32.mrb[0].mxu0
      %v1620 = vpop.f32.mrb[0].mxu0
      %v1621 = vadd.f32 %v1332, %v1620
      %v1622 = vpop.f32.mrb[0].mxu0
      %1623 = vmatprep.mubr.bf16.mxu0 0
      %1624 = vmatmul.mubr.bf16.gmra.mrb[0].mxu0 %v1052
      %v1625 = vpop.f32.mrb[0].mxu0
      %v1626 = vadd.f32 %v1337, %v1625
      %v1627 = vpop.f32.mrb[0].mxu0
      %v1628 = vpop.f32.mrb[0].mxu0
      %v1629 = vadd.f32 %v1340, %v1628
      %v1630 = vpop.f32.mrb[0].mxu0
      %1631 = vdwg.mxu0
      %v1632 = vld [vmem:[%s2] sm:$0x1]
      %v1634 = vlaneseq
      %v1635 = vshrl.u32 %v1634, 7
      %v1636 = vsub.s32 0, %v1635
      %v1637 = vrot.slane %v1632, %v1636
      %v1639 = vmul.f32 %v1378, %v1637
      %v1640 = vmul.f32 %v1381, %v1637
      %v1641 = vmul.f32 %v1386, %v1637
      %v1642 = vmul.f32 %v1389, %v1637
      %v1643 = vmul.f32 %v1394, %v1637
      %v1644 = vmul.f32 %v1397, %v1637
      %v1645 = vmul.f32 %v1402, %v1637
      %v1646 = vmul.f32 %v1405, %v1637
      %v1647 = vmul.f32 %v1410, %v1637
      %v1648 = vmul.f32 %v1413, %v1637
      %v1649 = vmul.f32 %v1418, %v1637
      %v1650 = vmul.f32 %v1421, %v1637
      %v1651 = vmul.f32 %v1426, %v1637
      %v1652 = vmul.f32 %v1429, %v1637
      %v1653 = vmul.f32 %v1434, %v1637
      %v1654 = vmul.f32 %v1437, %v1637
      %v1655 = vmul.f32 %v1442, %v1637
      %v1656 = vmul.f32 %v1445, %v1637
      %v1657 = vmul.f32 %v1450, %v1637
      %v1658 = vmul.f32 %v1453, %v1637
      %v1659 = vmul.f32 %v1458, %v1637
      %v1660 = vmul.f32 %v1461, %v1637
      %v1661 = vmul.f32 %v1466, %v1637
      %v1662 = vmul.f32 %v1469, %v1637
      %v1663 = vmul.f32 %v1474, %v1637
      %v1664 = vmul.f32 %v1477, %v1637
      %v1665 = vmul.f32 %v1482, %v1637
      %v1666 = vmul.f32 %v1485, %v1637
      %v1667 = vmul.f32 %v1490, %v1637
      %v1668 = vmul.f32 %v1493, %v1637
      %v1669 = vmul.f32 %v1498, %v1637
      %v1670 = vmul.f32 %v1501, %v1637
      %v1671 = vmul.f32 %v1506, %v1637
      %v1672 = vmul.f32 %v1509, %v1637
      %v1673 = vmul.f32 %v1514, %v1637
      %v1674 = vmul.f32 %v1517, %v1637
      %v1675 = vmul.f32 %v1522, %v1637
      %v1676 = vmul.f32 %v1525, %v1637
      %v1677 = vmul.f32 %v1530, %v1637
      %v1678 = vmul.f32 %v1533, %v1637
      %v1679 = vmul.f32 %v1538, %v1637
      %v1680 = vmul.f32 %v1541, %v1637
      %v1681 = vmul.f32 %v1546, %v1637
      %v1682 = vmul.f32 %v1549, %v1637
      %v1683 = vmul.f32 %v1554, %v1637
      %v1684 = vmul.f32 %v1557, %v1637
      %v1685 = vmul.f32 %v1562, %v1637
      %v1686 = vmul.f32 %v1565, %v1637
      %v1687 = vmul.f32 %v1570, %v1637
      %v1688 = vmul.f32 %v1573, %v1637
      %v1689 = vmul.f32 %v1578, %v1637
      %v1690 = vmul.f32 %v1581, %v1637
      %v1691 = vmul.f32 %v1586, %v1637
      %v1692 = vmul.f32 %v1589, %v1637
      %v1693 = vmul.f32 %v1594, %v1637
      %v1694 = vmul.f32 %v1597, %v1637
      %v1695 = vmul.f32 %v1602, %v1637
      %v1696 = vmul.f32 %v1605, %v1637
      %v1697 = vmul.f32 %v1610, %v1637
      %v1698 = vmul.f32 %v1613, %v1637
      %v1699 = vmul.f32 %v1618, %v1637
      %v1700 = vmul.f32 %v1621, %v1637
      %v1701 = vmul.f32 %v1626, %v1637
      %v1702 = vmul.f32 %v1629, %v1637
      %v1703 = vld [vmem:[%s3] sm:$0x1]
      %v1705 = vlaneseq
      %v1706 = vshrl.u32 %v1705, 7
      %v1707 = vsub.s32 0, %v1706
      %v1708 = vrot.slane %v1703, %v1707
      %v1710 = vadd.f32 %v1639, %v1708
      %v1711 = vadd.f32 %v1640, %v1708
      %v1712 = vadd.f32 %v1641, %v1708
      %v1713 = vadd.f32 %v1642, %v1708
      %v1714 = vadd.f32 %v1643, %v1708
      %v1715 = vadd.f32 %v1644, %v1708
      %v1716 = vadd.f32 %v1645, %v1708
      %v1717 = vadd.f32 %v1646, %v1708
      %v1718 = vadd.f32 %v1647, %v1708
      %v1719 = vadd.f32 %v1648, %v1708
      %v1720 = vadd.f32 %v1649, %v1708
      %v1721 = vadd.f32 %v1650, %v1708
      %v1722 = vadd.f32 %v1651, %v1708
      %v1723 = vadd.f32 %v1652, %v1708
      %v1724 = vadd.f32 %v1653, %v1708
      %v1725 = vadd.f32 %v1654, %v1708
      %v1726 = vadd.f32 %v1655, %v1708
      %v1727 = vadd.f32 %v1656, %v1708
      %v1728 = vadd.f32 %v1657, %v1708
      %v1729 = vadd.f32 %v1658, %v1708
      %v1730 = vadd.f32 %v1659, %v1708
      %v1731 = vadd.f32 %v1660, %v1708
      %v1732 = vadd.f32 %v1661, %v1708
      %v1733 = vadd.f32 %v1662, %v1708
      %v1734 = vadd.f32 %v1663, %v1708
      %v1735 = vadd.f32 %v1664, %v1708
      %v1736 = vadd.f32 %v1665, %v1708
      %v1737 = vadd.f32 %v1666, %v1708
      %v1738 = vadd.f32 %v1667, %v1708
      %v1739 = vadd.f32 %v1668, %v1708
      %v1740 = vadd.f32 %v1669, %v1708
      %v1741 = vadd.f32 %v1670, %v1708
      %v1742 = vadd.f32 %v1671, %v1708
      %v1743 = vadd.f32 %v1672, %v1708
      %v1744 = vadd.f32 %v1673, %v1708
      %v1745 = vadd.f32 %v1674, %v1708
      %v1746 = vadd.f32 %v1675, %v1708
      %v1747 = vadd.f32 %v1676, %v1708
      %v1748 = vadd.f32 %v1677, %v1708
      %v1749 = vadd.f32 %v1678, %v1708
      %v1750 = vadd.f32 %v1679, %v1708
      %v1751 = vadd.f32 %v1680, %v1708
      %v1752 = vadd.f32 %v1681, %v1708
      %v1753 = vadd.f32 %v1682, %v1708
      %v1754 = vadd.f32 %v1683, %v1708
      %v1755 = vadd.f32 %v1684, %v1708
      %v1756 = vadd.f32 %v1685, %v1708
      %v1757 = vadd.f32 %v1686, %v1708
      %v1758 = vadd.f32 %v1687, %v1708
      %v1759 = vadd.f32 %v1688, %v1708
      %v1760 = vadd.f32 %v1689, %v1708
      %v1761 = vadd.f32 %v1690, %v1708
      %v1762 = vadd.f32 %v1691, %v1708
      %v1763 = vadd.f32 %v1692, %v1708
      %v1764 = vadd.f32 %v1693, %v1708
      %v1765 = vadd.f32 %v1694, %v1708
      %v1766 = vadd.f32 %v1695, %v1708
      %v1767 = vadd.f32 %v1696, %v1708
      %v1768 = vadd.f32 %v1697, %v1708
      %v1769 = vadd.f32 %v1698, %v1708
      %v1770 = vadd.f32 %v1699, %v1708
      %v1771 = vadd.f32 %v1700, %v1708
      %v1772 = vadd.f32 %v1701, %v1708
      %v1773 = vadd.f32 %v1702, %v1708
      %v1774 = vmax.f32 %v1710, 0.0
      %v1775 = vmax.f32 %v1711, 0.0
      %v1776 = vmax.f32 %v1712, 0.0
      %v1777 = vmax.f32 %v1713, 0.0
      %v1778 = vmax.f32 %v1714, 0.0
      %v1779 = vmax.f32 %v1715, 0.0
      %v1780 = vmax.f32 %v1716, 0.0
      %v1781 = vmax.f32 %v1717, 0.0
      %v1782 = vmax.f32 %v1718, 0.0
      %v1783 = vmax.f32 %v1719, 0.0
      %v1784 = vmax.f32 %v1720, 0.0
      %v1785 = vmax.f32 %v1721, 0.0
      %v1786 = vmax.f32 %v1722, 0.0
      %v1787 = vmax.f32 %v1723, 0.0
      %v1788 = vmax.f32 %v1724, 0.0
      %v1789 = vmax.f32 %v1725, 0.0
      %v1790 = vmax.f32 %v1726, 0.0
      %v1791 = vmax.f32 %v1727, 0.0
      %v1792 = vmax.f32 %v1728, 0.0
      %v1793 = vmax.f32 %v1729, 0.0
      %v1794 = vmax.f32 %v1730, 0.0
      %v1795 = vmax.f32 %v1731, 0.0
      %v1796 = vmax.f32 %v1732, 0.0
      %v1797 = vmax.f32 %v1733, 0.0
      %v1798 = vmax.f32 %v1734, 0.0
      %v1799 = vmax.f32 %v1735, 0.0
      %v1800 = vmax.f32 %v1736, 0.0
      %v1801 = vmax.f32 %v1737, 0.0
      %v1802 = vmax.f32 %v1738, 0.0
      %v1803 = vmax.f32 %v1739, 0.0
      %v1804 = vmax.f32 %v1740, 0.0
      %v1805 = vmax.f32 %v1741, 0.0
      %v1806 = vmax.f32 %v1742, 0.0
      %v1807 = vmax.f32 %v1743, 0.0
      %v1808 = vmax.f32 %v1744, 0.0
      %v1809 = vmax.f32 %v1745, 0.0
      %v1810 = vmax.f32 %v1746, 0.0
      %v1811 = vmax.f32 %v1747, 0.0
      %v1812 = vmax.f32 %v1748, 0.0
      %v1813 = vmax.f32 %v1749, 0.0
      %v1814 = vmax.f32 %v1750, 0.0
      %v1815 = vmax.f32 %v1751, 0.0
      %v1816 = vmax.f32 %v1752, 0.0
      %v1817 = vmax.f32 %v1753, 0.0
      %v1818 = vmax.f32 %v1754, 0.0
      %v1819 = vmax.f32 %v1755, 0.0
      %v1820 = vmax.f32 %v1756, 0.0
      %v1821 = vmax.f32 %v1757, 0.0
      %v1822 = vmax.f32 %v1758, 0.0
      %v1823 = vmax.f32 %v1759, 0.0
      %v1824 = vmax.f32 %v1760, 0.0
      %v1825 = vmax.f32 %v1761, 0.0
      %v1826 = vmax.f32 %v1762, 0.0
      %v1827 = vmax.f32 %v1763, 0.0
      %v1828 = vmax.f32 %v1764, 0.0
      %v1829 = vmax.f32 %v1765, 0.0
      %v1830 = vmax.f32 %v1766, 0.0
      %v1831 = vmax.f32 %v1767, 0.0
      %v1832 = vmax.f32 %v1768, 0.0
      %v1833 = vmax.f32 %v1769, 0.0
      %v1834 = vmax.f32 %v1770, 0.0
      %v1835 = vmax.f32 %v1771, 0.0
      %v1836 = vmax.f32 %v1772, 0.0
      %v1837 = vmax.f32 %v1773, 0.0
      %v1838 = vpack.c.bf16 %v1775, %v1774
      %v1839 = vpack.c.bf16 %v1777, %v1776
      %v1840 = vpack.c.bf16 %v1779, %v1778
      %v1841 = vpack.c.bf16 %v1781, %v1780
      %v1842 = vpack.c.bf16 %v1783, %v1782
      %v1843 = vpack.c.bf16 %v1785, %v1784
      %v1844 = vpack.c.bf16 %v1787, %v1786
      %v1845 = vpack.c.bf16 %v1789, %v1788
      %v1846 = vpack.c.bf16 %v1791, %v1790
      %v1847 = vpack.c.bf16 %v1793, %v1792
      %v1848 = vpack.c.bf16 %v1795, %v1794
      %v1849 = vpack.c.bf16 %v1797, %v1796
      %v1850 = vpack.c.bf16 %v1799, %v1798
      %v1851 = vpack.c.bf16 %v1801, %v1800
      %v1852 = vpack.c.bf16 %v1803, %v1802
      %v1853 = vpack.c.bf16 %v1805, %v1804
      %v1854 = vpack.c.bf16 %v1807, %v1806
      %v1855 = vpack.c.bf16 %v1809, %v1808
      %v1856 = vpack.c.bf16 %v1811, %v1810
      %v1857 = vpack.c.bf16 %v1813, %v1812
      %v1858 = vpack.c.bf16 %v1815, %v1814
      %v1859 = vpack.c.bf16 %v1817, %v1816
      %v1860 = vpack.c.bf16 %v1819, %v1818
      %v1861 = vpack.c.bf16 %v1821, %v1820
      %v1862 = vpack.c.bf16 %v1823, %v1822
      %v1863 = vpack.c.bf16 %v1825, %v1824
      %v1864 = vpack.c.bf16 %v1827, %v1826
      %v1865 = vpack.c.bf16 %v1829, %v1828
      %v1866 = vpack.c.bf16 %v1831, %v1830
      %v1867 = vpack.c.bf16 %v1833, %v1832
      %v1868 = vpack.c.bf16 %v1835, %v1834
      %v1869 = vpack.c.bf16 %v1837, %v1836
      %v1902 = vunpack.c.l.b16 %v1838
      %v1903 = vunpack.c.h.b16 %v1838
      %v1904 = vunpack.c.l.b16 %v1839
      %v1905 = vunpack.c.h.b16 %v1839
      %v1906 = vunpack.c.l.b16 %v1840
      %v1907 = vunpack.c.h.b16 %v1840
      %v1908 = vunpack.c.l.b16 %v1841
      %v1909 = vunpack.c.h.b16 %v1841
      %v1910 = vunpack.c.l.b16 %v1842
      %v1911 = vunpack.c.h.b16 %v1842
      %v1912 = vunpack.c.l.b16 %v1843
      %v1913 = vunpack.c.h.b16 %v1843
      %v1914 = vunpack.c.l.b16 %v1844
      %v1915 = vunpack.c.h.b16 %v1844
      %v1916 = vunpack.c.l.b16 %v1845
      %v1917 = vunpack.c.h.b16 %v1845
      %v1918 = vunpack.c.l.b16 %v1846
      %v1919 = vunpack.c.h.b16 %v1846
      %v1920 = vunpack.c.l.b16 %v1847
      %v1921 = vunpack.c.h.b16 %v1847
      %v1922 = vunpack.c.l.b16 %v1848
      %v1923 = vunpack.c.h.b16 %v1848
      %v1924 = vunpack.c.l.b16 %v1849
      %v1925 = vunpack.c.h.b16 %v1849
      %v1926 = vunpack.c.l.b16 %v1850
      %v1927 = vunpack.c.h.b16 %v1850
      %v1928 = vunpack.c.l.b16 %v1851
      %v1929 = vunpack.c.h.b16 %v1851
      %v1930 = vunpack.c.l.b16 %v1852
      %v1931 = vunpack.c.h.b16 %v1852
      %v1932 = vunpack.c.l.b16 %v1853
      %v1933 = vunpack.c.h.b16 %v1853
      %v1934 = vunpack.c.l.b16 %v1854
      %v1935 = vunpack.c.h.b16 %v1854
      %v1936 = vunpack.c.l.b16 %v1855
      %v1937 = vunpack.c.h.b16 %v1855
      %v1938 = vunpack.c.l.b16 %v1856
      %v1939 = vunpack.c.h.b16 %v1856
      %v1940 = vunpack.c.l.b16 %v1857
      %v1941 = vunpack.c.h.b16 %v1857
      %v1942 = vunpack.c.l.b16 %v1858
      %v1943 = vunpack.c.h.b16 %v1858
      %v1944 = vunpack.c.l.b16 %v1859
      %v1945 = vunpack.c.h.b16 %v1859
      %v1946 = vunpack.c.l.b16 %v1860
      %v1947 = vunpack.c.h.b16 %v1860
      %v1948 = vunpack.c.l.b16 %v1861
      %v1949 = vunpack.c.h.b16 %v1861
      %v1950 = vunpack.c.l.b16 %v1862
      %v1951 = vunpack.c.h.b16 %v1862
      %v1952 = vunpack.c.l.b16 %v1863
      %v1953 = vunpack.c.h.b16 %v1863
      %v1954 = vunpack.c.l.b16 %v1864
      %v1955 = vunpack.c.h.b16 %v1864
      %v1956 = vunpack.c.l.b16 %v1865
      %v1957 = vunpack.c.h.b16 %v1865
      %v1958 = vunpack.c.l.b16 %v1866
      %v1959 = vunpack.c.h.b16 %v1866
      %v1960 = vunpack.c.l.b16 %v1867
      %v1961 = vunpack.c.h.b16 %v1867
      %v1962 = vunpack.c.l.b16 %v1868
      %v1963 = vunpack.c.h.b16 %v1868
      %v1964 = vunpack.c.l.b16 %v1869
      %v1965 = vunpack.c.h.b16 %v1869
      %v1966 = vpack.c.b16 %v1902, %v1902
      %v1967 = vpack.c.b16 %v1903, %v1903
      %v1968 = vpack.c.b16 %v1904, %v1904
      %v1969 = vpack.c.b16 %v1905, %v1905
      %v1970 = vpack.c.b16 %v1906, %v1906
      %v1971 = vpack.c.b16 %v1907, %v1907
      %v1972 = vpack.c.b16 %v1908, %v1908
      %v1973 = vpack.c.b16 %v1909, %v1909
      %v1974 = vpack.c.b16 %v1910, %v1910
      %v1975 = vpack.c.b16 %v1911, %v1911
      %v1976 = vpack.c.b16 %v1912, %v1912
      %v1977 = vpack.c.b16 %v1913, %v1913
      %v1978 = vpack.c.b16 %v1914, %v1914
      %v1979 = vpack.c.b16 %v1915, %v1915
      %v1980 = vpack.c.b16 %v1916, %v1916
      %v1981 = vpack.c.b16 %v1917, %v1917
      %v1982 = vpack.c.b16 %v1918, %v1918
      %v1983 = vpack.c.b16 %v1919, %v1919
      %v1984 = vpack.c.b16 %v1920, %v1920
      %v1985 = vpack.c.b16 %v1921, %v1921
      %v1986 = vpack.c.b16 %v1922, %v1922
      %v1987 = vpack.c.b16 %v1923, %v1923
      %v1988 = vpack.c.b16 %v1924, %v1924
      %v1989 = vpack.c.b16 %v1925, %v1925
      %v1990 = vpack.c.b16 %v1926, %v1926
      %v1991 = vpack.c.b16 %v1927, %v1927
      %v1992 = vpack.c.b16 %v1928, %v1928
      %v1993 = vpack.c.b16 %v1929, %v1929
      %v1994 = vpack.c.b16 %v1930, %v1930
      %v1995 = vpack.c.b16 %v1931, %v1931
      %v1996 = vpack.c.b16 %v1932, %v1932
      %v1997 = vpack.c.b16 %v1933, %v1933
      %v1998 = vpack.c.b16 %v1934, %v1934
      %v1999 = vpack.c.b16 %v1935, %v1935
      %v2000 = vpack.c.b16 %v1936, %v1936
      %v2001 = vpack.c.b16 %v1937, %v1937
      %v2002 = vpack.c.b16 %v1938, %v1938
      %v2003 = vpack.c.b16 %v1939, %v1939
      %v2004 = vpack.c.b16 %v1940, %v1940
      %v2005 = vpack.c.b16 %v1941, %v1941
      %v2006 = vpack.c.b16 %v1942, %v1942
      %v2007 = vpack.c.b16 %v1943, %v1943
      %v2008 = vpack.c.b16 %v1944, %v1944
      %v2009 = vpack.c.b16 %v1945, %v1945
      %v2010 = vpack.c.b16 %v1946, %v1946
      %v2011 = vpack.c.b16 %v1947, %v1947
      %v2012 = vpack.c.b16 %v1948, %v1948
      %v2013 = vpack.c.b16 %v1949, %v1949
      %v2014 = vpack.c.b16 %v1950, %v1950
      %v2015 = vpack.c.b16 %v1951, %v1951
      %v2016 = vpack.c.b16 %v1952, %v1952
      %v2017 = vpack.c.b16 %v1953, %v1953
      %v2018 = vpack.c.b16 %v1954, %v1954
      %v2019 = vpack.c.b16 %v1955, %v1955
      %v2020 = vpack.c.b16 %v1956, %v1956
      %v2021 = vpack.c.b16 %v1957, %v1957
      %v2022 = vpack.c.b16 %v1958, %v1958
      %v2023 = vpack.c.b16 %v1959, %v1959
      %v2024 = vpack.c.b16 %v1960, %v1960
      %v2025 = vpack.c.b16 %v1961, %v1961
      %v2026 = vpack.c.b16 %v1962, %v1962
      %v2027 = vpack.c.b16 %v1963, %v1963
      %v2028 = vpack.c.b16 %v1964, %v1964
      %v2029 = vpack.c.b16 %v1965, %v1965
      %vm2094 = vcmask 257024
      %2095 = vst.msk [vmem:[%s202] sm:$0xf] %vm2094, %v1966
      %2096 = vst.msk [vmem:[%s202 + $0x4] sm:$0xf] %vm2094, %v1967
      %2097 = vst.msk [vmem:[%s202 + $0x8] sm:$0xf] %vm2094, %v1968
      %2098 = vst.msk [vmem:[%s202 + $0xc] sm:$0xf] %vm2094, %v1969
      %2099 = vst.msk [vmem:[%s202 + $0x10] sm:$0xf] %vm2094, %v1970
      %2100 = vst.msk [vmem:[%s202 + $0x14] sm:$0xf] %vm2094, %v1971
      %2101 = vst.msk [vmem:[%s202 + $0x18] sm:$0xf] %vm2094, %v1972
      %2102 = vst.msk [vmem:[%s202 + $0x1c] sm:$0xf] %vm2094, %v1973
      %2103 = vst.msk [vmem:[%s202 + $0x20] sm:$0xf] %vm2094, %v1974
      %2104 = vst.msk [vmem:[%s202 + $0x24] sm:$0xf] %vm2094, %v1975
      %2105 = vst.msk [vmem:[%s202 + $0x28] sm:$0xf] %vm2094, %v1976
      %2106 = vst.msk [vmem:[%s202 + $0x2c] sm:$0xf] %vm2094, %v1977
      %2107 = vst.msk [vmem:[%s202 + $0x30] sm:$0xf] %vm2094, %v1978
      %2108 = vst.msk [vmem:[%s202 + $0x34] sm:$0xf] %vm2094, %v1979
      %2109 = vst.msk [vmem:[%s202 + $0x38] sm:$0xf] %vm2094, %v1980
      %2110 = vst.msk [vmem:[%s202 + $0x3c] sm:$0xf] %vm2094, %v1981
      %2111 = vst.msk [vmem:[%s202 + $0x40] sm:$0xf] %vm2094, %v1982
      %2112 = vst.msk [vmem:[%s202 + $0x44] sm:$0xf] %vm2094, %v1983
      %2113 = vst.msk [vmem:[%s202 + $0x48] sm:$0xf] %vm2094, %v1984
      %2114 = vst.msk [vmem:[%s202 + $0x4c] sm:$0xf] %vm2094, %v1985
      %2115 = vst.msk [vmem:[%s202 + $0x50] sm:$0xf] %vm2094, %v1986
      %2116 = vst.msk [vmem:[%s202 + $0x54] sm:$0xf] %vm2094, %v1987
      %2117 = vst.msk [vmem:[%s202 + $0x58] sm:$0xf] %vm2094, %v1988
      %2118 = vst.msk [vmem:[%s202 + $0x5c] sm:$0xf] %vm2094, %v1989
      %2119 = vst.msk [vmem:[%s202 + $0x60] sm:$0xf] %vm2094, %v1990
      %2120 = vst.msk [vmem:[%s202 + $0x64] sm:$0xf] %vm2094, %v1991
      %2121 = vst.msk [vmem:[%s202 + $0x68] sm:$0xf] %vm2094, %v1992
      %2122 = vst.msk [vmem:[%s202 + $0x6c] sm:$0xf] %vm2094, %v1993
      %2123 = vst.msk [vmem:[%s202 + $0x70] sm:$0xf] %vm2094, %v1994
      %2124 = vst.msk [vmem:[%s202 + $0x74] sm:$0xf] %vm2094, %v1995
      %2125 = vst.msk [vmem:[%s202 + $0x78] sm:$0xf] %vm2094, %v1996
      %2126 = vst.msk [vmem:[%s202 + $0x7c] sm:$0xf] %vm2094, %v1997
      %2127 = vst.msk [vmem:[%s202 + $0x80] sm:$0xf] %vm2094, %v1998
      %2128 = vst.msk [vmem:[%s202 + $0x84] sm:$0xf] %vm2094, %v1999
      %2129 = vst.msk [vmem:[%s202 + $0x88] sm:$0xf] %vm2094, %v2000
      %2130 = vst.msk [vmem:[%s202 + $0x8c] sm:$0xf] %vm2094, %v2001
      %2131 = vst.msk [vmem:[%s202 + $0x90] sm:$0xf] %vm2094, %v2002
      %2132 = vst.msk [vmem:[%s202 + $0x94] sm:$0xf] %vm2094, %v2003
      %2133 = vst.msk [vmem:[%s202 + $0x98] sm:$0xf] %vm2094, %v2004
      %2134 = vst.msk [vmem:[%s202 + $0x9c] sm:$0xf] %vm2094, %v2005
      %2135 = vst.msk [vmem:[%s202 + $0xa0] sm:$0xf] %vm2094, %v2006
      %2136 = vst.msk [vmem:[%s202 + $0xa4] sm:$0xf] %vm2094, %v2007
      %2137 = vst.msk [vmem:[%s202 + $0xa8] sm:$0xf] %vm2094, %v2008
      %2138 = vst.msk [vmem:[%s202 + $0xac] sm:$0xf] %vm2094, %v2009
      %2139 = vst.msk [vmem:[%s202 + $0xb0] sm:$0xf] %vm2094, %v2010
      %2140 = vst.msk [vmem:[%s202 + $0xb4] sm:$0xf] %vm2094, %v2011
      %2141 = vst.msk [vmem:[%s202 + $0xb8] sm:$0xf] %vm2094, %v2012
      %2142 = vst.msk [vmem:[%s202 + $0xbc] sm:$0xf] %vm2094, %v2013
      %2143 = vst.msk [vmem:[%s202 + $0xc0] sm:$0xf] %vm2094, %v2014
      %2144 = vst.msk [vmem:[%s202 + $0xc4] sm:$0xf] %vm2094, %v2015
      %2145 = vst.msk [vmem:[%s202 + $0xc8] sm:$0xf] %vm2094, %v2016
      %2146 = vst.msk [vmem:[%s202 + $0xcc] sm:$0xf] %vm2094, %v2017
      %2147 = vst.msk [vmem:[%s202 + $0xd0] sm:$0xf] %vm2094, %v2018
      %2148 = vst.msk [vmem:[%s202 + $0xd4] sm:$0xf] %vm2094, %v2019
      %2149 = vst.msk [vmem:[%s202 + $0xd8] sm:$0xf] %vm2094, %v2020
      %2150 = vst.msk [vmem:[%s202 + $0xdc] sm:$0xf] %vm2094, %v2021
      %2151 = vst.msk [vmem:[%s202 + $0xe0] sm:$0xf] %vm2094, %v2022
      %2152 = vst.msk [vmem:[%s202 + $0xe4] sm:$0xf] %vm2094, %v2023
      %2153 = vst.msk [vmem:[%s202 + $0xe8] sm:$0xf] %vm2094, %v2024
      %2154 = vst.msk [vmem:[%s202 + $0xec] sm:$0xf] %vm2094, %v2025
      %2155 = vst.msk [vmem:[%s202 + $0xf0] sm:$0xf] %vm2094, %v2026
      %2156 = vst.msk [vmem:[%s202 + $0xf4] sm:$0xf] %vm2094, %v2027
      %2157 = vst.msk [vmem:[%s202 + $0xf8] sm:$0xf] %vm2094, %v2028
      %2158 = vst.msk [vmem:[%s202 + $0xfc] sm:$0xf] %vm2094, %v2029
      %s2159 = smul.u32 64, %s15
      %p2160 = scmp.lt.s32.totalorder %s2159, 255
      %s2161 = scalar_select %p2160, %s2159, 255
      %s2162 = smul.addr %s2161, 4
      %s2163 = scalar_lea.vmem %s4, %s2162
      // Predicated region
      $region37: #{net_forward.6} parent=35 // pred_check
        %p2164 = pneg %p122
      $region38: #{net_forward.6} parent=35 // pred_check_branch
        %2166 = sbr.rel (%p2164) target = $region40
      $region39: #{net_forward.6} parent=35 // pred_region
        %s2167 = smul.u32 64, %s15
      $region40: #{net_forward.6} parent=35 // pred_fallthru
        _
    $region36: #{net_forward.6} parent=5 // pred_fallthru
      _
    %p2168 = scmp.le.s32.totalorder 2, %s10
    // Predicated region
    $region41: #{net_forward.6} parent=5 // pred_check
      %p2169 = pneg %p2168
    $region42: #{net_forward.6} parent=5 // pred_check_branch
      %2171 = sbr.rel (%p2169) target = $region44
    $region43: #{net_forward.6} parent=5 // pred_region
      %s2172 = ssub.s32 %s10, 2
      // Predicated region
      $region45: #{net_forward.6} parent=43 // pred_check
        %p2173 = pneg %p128
      $region46: #{net_forward.6} parent=43 // pred_check_branch
        %2175 = sbr.rel (%p2173) target = $region48
      $region47: #{net_forward.6} parent=43 // pred_region
        %s2176 = smul.u32 64, %s16
        %p2177 = scmp.lt.s32.totalorder %s2176, 255
        %s2178 = scalar_select %p2177, %s2176, 255
        %s2179 = smul.addr %s2178, 4
        %s2180 = scalar_lea.vmem %s4, %s2179
      $region48: #{net_forward.6} parent=43 // pred_fallthru
        _
    $region44: #{net_forward.6} parent=5 // pred_fallthru
      _
  $region6: #{net_forward.6} parent=0 // loop_footer
    %s14 = sadd.s32 1, %s10
  $region7: #{net_forward.6} parent=0 // loop_footer_branch
    %9 = sbr.rel target = $region3
  $region8: #{net_forward.6} parent=0 // loop_exit
    _

// kernel: net_forward.7
$region0: #{net_forward.7}
  #allocation0 [shape = 'u32[]', space=smem, size = 0x4, offset = 0x4, fixed_abs, tag = 'smem constant byte address 0x4 - core index']
  #allocation1 [shape = 'u32[144,128]{1,0:T(1,128)}', space=vmem, size = 0x12000, scoped, tag = 'internal scratch']
  %s0 = inlined_call_operand.vmem [shape: bf16[392,288], index: 0, kind: input, shape index: {}]
  %s1 = inlined_call_operand.vmem [shape: bf16[288,64], index: 1, kind: input, shape index: {}]
  %s2 = inlined_call_operand.vmem [shape: f32[1,64], index: 2, kind: input, shape index: {}]
  %s3 = inlined_call_operand.vmem [shape: f32[1,64], index: 3, kind: input, shape index: {}]
  %s4 = inlined_call_operand.vmem [shape: bf16[392,64], index: 4, kind: output, shape index: {}]
  %s5 = sld [smem:[#allocation0]]
  $region26: #{net_forward.7} parent=0
    _
  %s7 = ssub.s32 1, %s5
  %s8 = scalar_select 0, %s7, %s5
  // Predicated region
  $region2: #{net_forward.7} parent=0 // pred_check
    _
  $region3: #{net_forward.7} parent=0 // pred_check_branch
    %10 = sbr.rel (0) target = $region5
  $region4: #{net_forward.7} parent=0 // pred_region
    _
  $region5: #{net_forward.7} parent=0 // pred_fallthru
    _
  // Predicated region
  $region6: #{net_forward.7} parent=0 // pred_check
    _
  $region7: #{net_forward.7} parent=0 // pred_check_branch
    %12 = sbr.rel (0) target = $region9
  $region8: #{net_forward.7} parent=0 // pred_region
    _
  $region9: #{net_forward.7} parent=0 // pred_fallthru
    _
  // Predicated region
  $region10: #{net_forward.7} parent=0 // pred_check
    _
  $region11: #{net_forward.7} parent=0 // pred_check_branch
    %14 = sbr.rel (0) target = $region13
  $region12: #{net_forward.7} parent=0 // pred_region
    _
  $region13: #{net_forward.7} parent=0 // pred_fallthru
    _
  // Predicated region
  $region14: #{net_forward.7} parent=0 // pred_check
    _
  $region15: #{net_forward.7} parent=0 // pred_check_branch
    %16 = sbr.rel (0) target = $region17
  $region16: #{net_forward.7} parent=0 // pred_region
    _
  $region17: #{net_forward.7} parent=0 // pred_fallthru
    _
  %v18 = vld [vmem:[%s0] sm:$0xff]
  %v19 = vld [vmem:[%s0 + $0x8] sm:$0xf]
  %v20 = vld [vmem:[%s0 + $0xc] sm:$0xff]
  %v21 = vld [vmem:[%s0 + $0x14] sm:$0xf]
  %v22 = vld [vmem:[%s0 + $0x18] sm:$0xff]
  %v23 = vld [vmem:[%s0 + $0x20] sm:$0xf]
  %v24 = vld [vmem:[%s0 + $0x24] sm:$0xff]
  %v25 = vld [vmem:[%s0 + $0x2c] sm:$0xf]
  %v26 = vld [vmem:[%s0 + $0x30] sm:$0xff]
  %v27 = vld [vmem:[%s0 + $0x38] sm:$0xf]
  %v28 = vld [vmem:[%s0 + $0x3c] sm:$0xff]
  %v29 = vld [vmem:[%s0 + $0x44] sm:$0xf]
  %v30 = vld [vmem:[%s0 + $0x48] sm:$0xff]
  %v31 = vld [vmem:[%s0 + $0x50] sm:$0xf]
  %v32 = vld [vmem:[%s0 + $0x54] sm:$0xff]
  %v33 = vld [vmem:[%s0 + $0x5c] sm:$0xf]
  %v34 = vld [vmem:[%s0 + $0x60] sm:$0xff]
  %v35 = vld [vmem:[%s0 + $0x68] sm:$0xf]
  %v36 = vld [vmem:[%s0 + $0x6c] sm:$0xff]
  %v37 = vld [vmem:[%s0 + $0x74] sm:$0xf]
  %v38 = vld [vmem:[%s0 + $0x78] sm:$0xff]
  %v39 = vld [vmem:[%s0 + $0x80] sm:$0xf]
  %v40 = vld [vmem:[%s0 + $0x84] sm:$0xff]
  %v41 = vld [vmem:[%s0 + $0x8c] sm:$0xf]
  %v42 = vld [vmem:[%s0 + $0x90] sm:$0xff]
  %v43 = vld [vmem:[%s0 + $0x98] sm:$0xf]
  %v44 = vld [vmem:[%s0 + $0x9c] sm:$0xff]
  %v45 = vld [vmem:[%s0 + $0xa4] sm:$0xf]
  %v46 = vld [vmem:[%s0 + $0xa8] sm:$0xff]
  %v47 = vld [vmem:[%s0 + $0xb0] sm:$0xf]
  %v48 = vld [vmem:[%s0 + $0xb4] sm:$0xff]
  %v49 = vld [vmem:[%s0 + $0xbc] sm:$0xf]
  %v50 = vld [vmem:[%s0 + $0xc0] sm:$0xff]
  %v51 = vld [vmem:[%s0 + $0xc8] sm:$0xf]
  %v52 = vld [vmem:[%s0 + $0xcc] sm:$0xff]
  %v53 = vld [vmem:[%s0 + $0xd4] sm:$0xf]
  %v54 = vld [vmem:[%s0 + $0xd8] sm:$0xff]
  %v55 = vld [vmem:[%s0 + $0xe0] sm:$0xf]
  %v56 = vld [vmem:[%s0 + $0xe4] sm:$0xff]
  %v57 = vld [vmem:[%s0 + $0xec] sm:$0xf]
  %v58 = vld [vmem:[%s0 + $0xf0] sm:$0xff]
  %v59 = vld [vmem:[%s0 + $0xf8] sm:$0xf]
  %v60 = vld [vmem:[%s0 + $0xfc] sm:$0xff]
  %v61 = vld [vmem:[%s0 + $0x104] sm:$0xf]
  %v62 = vld [vmem:[%s0 + $0x108] sm:$0xff]
  %v63 = vld [vmem:[%s0 + $0x110] sm:$0xf]
  %v64 = vld [vmem:[%s0 + $0x114] sm:$0xff]
  %v65 = vld [vmem:[%s0 + $0x11c] sm:$0xf]
  %v66 = vld [vmem:[%s0 + $0x120] sm:$0xff]
  %v67 = vld [vmem:[%s0 + $0x128] sm:$0xf]
  %v68 = vld [vmem:[%s0 + $0x12c] sm:$0xff]
  %v69 = vld [vmem:[%s0 + $0x134] sm:$0xf]
  %v70 = vld [vmem:[%s0 + $0x138] sm:$0xff]
  %v71 = vld [vmem:[%s0 + $0x140] sm:$0xf]
  %v72 = vld [vmem:[%s0 + $0x144] sm:$0xff]
  %v73 = vld [vmem:[%s0 + $0x14c] sm:$0xf]
  %v74 = vld [vmem:[%s0 + $0x150] sm:$0xff]
  %v75 = vld [vmem:[%s0 + $0x158] sm:$0xf]
  %v76 = vld [vmem:[%s0 + $0x15c] sm:$0xff]
  %v77 = vld [vmem:[%s0 + $0x164] sm:$0xf]
  %v78 = vld [vmem:[%s0 + $0x168] sm:$0xff]
  %v79 = vld [vmem:[%s0 + $0x170] sm:$0xf]
  %v80 = vld [vmem:[%s0 + $0x174] sm:$0xff]
  %v81 = vld [vmem:[%s0 + $0x17c] sm:$0xf]
  %v82 = vld [vmem:[%s0 + $0x180] sm:$0xff]
  %v83 = vld [vmem:[%s0 + $0x188] sm:$0xf]
  %v84 = vld [vmem:[%s0 + $0x18c] sm:$0xff]
  %v85 = vld [vmem:[%s0 + $0x194] sm:$0xf]
  %v86 = vld [vmem:[%s0 + $0x198] sm:$0xff]
  %v87 = vld [vmem:[%s0 + $0x1a0] sm:$0xf]
  %v88 = vld [vmem:[%s0 + $0x1a4] sm:$0xff]
  %v89 = vld [vmem:[%s0 + $0x1ac] sm:$0xf]
  %v90 = vld [vmem:[%s0 + $0x1b0] sm:$0xff]
  %v91 = vld [vmem:[%s0 + $0x1b8] sm:$0xf]
  %v92 = vld [vmem:[%s0 + $0x1bc] sm:$0xff]
  %v93 = vld [vmem:[%s0 + $0x1c4] sm:$0xf]
  %v94 = vld [vmem:[%s0 + $0x1c8] sm:$0xff]
  %v95 = vld [vmem:[%s0 + $0x1d0] sm:$0xf]
  %v96 = vld [vmem:[%s0 + $0x1d4] sm:$0xff]
  %v97 = vld [vmem:[%s0 + $0x1dc] sm:$0xf]
  %v98 = vld [vmem:[%s0 + $0x1e0] sm:$0xff]
  %v99 = vld [vmem:[%s0 + $0x1e8] sm:$0xf]
  %v100 = vld [vmem:[%s0 + $0x1ec] sm:$0xff]
  %v101 = vld [vmem:[%s0 + $0x1f4] sm:$0xf]
  %v102 = vld [vmem:[%s0 + $0x1f8] sm:$0xff]
  %v103 = vld [vmem:[%s0 + $0x200] sm:$0xf]
  %v104 = vld [vmem:[%s0 + $0x204] sm:$0xff]
  %v105 = vld [vmem:[%s0 + $0x20c] sm:$0xf]
  %v106 = vld [vmem:[%s0 + $0x210] sm:$0xff]
  %v107 = vld [vmem:[%s0 + $0x218] sm:$0xf]
  %v108 = vld [vmem:[%s0 + $0x21c] sm:$0xff]
  %v109 = vld [vmem:[%s0 + $0x224] sm:$0xf]
  %v110 = vld [vmem:[%s0 + $0x228] sm:$0xff]
  %v111 = vld [vmem:[%s0 + $0x230] sm:$0xf]
  %v112 = vld [vmem:[%s0 + $0x234] sm:$0xff]
  %v113 = vld [vmem:[%s0 + $0x23c] sm:$0xf]
  %v114 = vld [vmem:[%s0 + $0x240] sm:$0xff]
  %v115 = vld [vmem:[%s0 + $0x248] sm:$0xf]
  %v116 = vld [vmem:[%s1] sm:$0xf]
  %v117 = vld [vmem:[%s1 + $0x4] sm:$0xf]
  %v118 = vld [vmem:[%s1 + $0x8] sm:$0xf]
  %v119 = vld [vmem:[%s1 + $0xc] sm:$0xf]
  %v120 = vld [vmem:[%s1 + $0x10] sm:$0xf]
  %v121 = vld [vmem:[%s1 + $0x14] sm:$0xf]
  %v122 = vld [vmem:[%s1 + $0x18] sm:$0xf]
  %v123 = vld [vmem:[%s1 + $0x1c] sm:$0xf]
  %v124 = vld [vmem:[%s1 + $0x20] sm:$0xf]
  %v125 = vld [vmem:[%s1 + $0x24] sm:$0xf]
  %v126 = vld [vmem:[%s1 + $0x28] sm:$0xf]
  %v127 = vld [vmem:[%s1 + $0x2c] sm:$0xf]
  %v128 = vld [vmem:[%s1 + $0x30] sm:$0xf]
  %v129 = vld [vmem:[%s1 + $0x34] sm:$0xf]
  %v130 = vld [vmem:[%s1 + $0x38] sm:$0xf]
  %v131 = vld [vmem:[%s1 + $0x3c] sm:$0xf]
  %v132 = vld [vmem:[%s1 + $0x40] sm:$0xf]
  %v133 = vld [vmem:[%s1 + $0x44] sm:$0xf]
  %v134 = vld [vmem:[%s1 + $0x48] sm:$0xf]
  %v135 = vld [vmem:[%s1 + $0x4c] sm:$0xf]
  %v136 = vld [vmem:[%s1 + $0x50] sm:$0xf]
  %v137 = vld [vmem:[%s1 + $0x54] sm:$0xf]
  %v138 = vld [vmem:[%s1 + $0x58] sm:$0xf]
  %v139 = vld [vmem:[%s1 + $0x5c] sm:$0xf]
  %v140 = vld [vmem:[%s1 + $0x60] sm:$0xf]
  %v141 = vld [vmem:[%s1 + $0x64] sm:$0xf]
  %v142 = vld [vmem:[%s1 + $0x68] sm:$0xf]
  %v143 = vld [vmem:[%s1 + $0x6c] sm:$0xf]
  %v144 = vld [vmem:[%s1 + $0x70] sm:$0xf]
  %v145 = vld [vmem:[%s1 + $0x74] sm:$0xf]
  %v146 = vld [vmem:[%s1 + $0x78] sm:$0xf]
  %v147 = vld [vmem:[%s1 + $0x7c] sm:$0xf]
  %v148 = vld [vmem:[%s1 + $0x80] sm:$0xf]
  %v149 = vld [vmem:[%s1 + $0x84] sm:$0xf]
  %v150 = vld [vmem:[%s1 + $0x88] sm:$0xf]
  %v151 = vld [vmem:[%s1 + $0x8c] sm:$0xf]
  %v250 = vunpack.c.l.b16 %v18
  %v251 = vunpack.c.h.b16 %v18
  %v252 = vunpack.c.l.b16 %v19
  %v253 = vunpack.c.l.b16 %v20
  %v254 = vunpack.c.h.b16 %v20
  %v255 = vunpack.c.l.b16 %v21
  %v256 = vunpack.c.l.b16 %v22
  %v257 = vunpack.c.h.b16 %v22
  %v258 = vunpack.c.l.b16 %v23
  %v259 = vunpack.c.l.b16 %v24
  %v260 = vunpack.c.h.b16 %v24
  %v261 = vunpack.c.l.b16 %v25
  %v262 = vunpack.c.l.b16 %v26
  %v263 = vunpack.c.h.b16 %v26
  %v264 = vunpack.c.l.b16 %v27
  %v265 = vunpack.c.l.b16 %v28
  %v266 = vunpack.c.h.b16 %v28
  %v267 = vunpack.c.l.b16 %v29
  %v268 = vunpack.c.l.b16 %v30
  %v269 = vunpack.c.h.b16 %v30
  %v270 = vunpack.c.l.b16 %v31
  %v271 = vunpack.c.l.b16 %v32
  %v272 = vunpack.c.h.b16 %v32
  %v273 = vunpack.c.l.b16 %v33
  %v274 = vunpack.c.l.b16 %v34
  %v275 = vunpack.c.h.b16 %v34
  %v276 = vunpack.c.l.b16 %v35
  %v277 = vunpack.c.l.b16 %v36
  %v278 = vunpack.c.h.b16 %v36
  %v279 = vunpack.c.l.b16 %v37
  %v280 = vunpack.c.l.b16 %v38
  %v281 = vunpack.c.h.b16 %v38
  %v282 = vunpack.c.l.b16 %v39
  %v283 = vunpack.c.l.b16 %v40
  %v284 = vunpack.c.h.b16 %v40
  %v285 = vunpack.c.l.b16 %v41
  %v286 = vunpack.c.l.b16 %v42
  %v287 = vunpack.c.h.b16 %v42
  %v288 = vunpack.c.l.b16 %v43
  %v289 = vunpack.c.l.b16 %v44
  %v290 = vunpack.c.h.b16 %v44
  %v291 = vunpack.c.l.b16 %v45
  %v292 = vunpack.c.l.b16 %v46
  %v293 = vunpack.c.h.b16 %v46
  %v294 = vunpack.c.l.b16 %v47
  %v295 = vunpack.c.l.b16 %v48
  %v296 = vunpack.c.h.b16 %v48
  %v297 = vunpack.c.l.b16 %v49
  %v298 = vunpack.c.l.b16 %v50
  %v299 = vunpack.c.h.b16 %v50
  %v300 = vunpack.c.l.b16 %v51
  %v301 = vunpack.c.l.b16 %v52
  %v302 = vunpack.c.h.b16 %v52
  %v303 = vunpack.c.l.b16 %v53
  %v304 = vunpack.c.l.b16 %v54
  %v305 = vunpack.c.h.b16 %v54
  %v306 = vunpack.c.l.b16 %v55
  %v307 = vunpack.c.l.b16 %v56
  %v308 = vunpack.c.h.b16 %v56
  %v309 = vunpack.c.l.b16 %v57
  %v310 = vunpack.c.l.b16 %v58
  %v311 = vunpack.c.h.b16 %v58
  %v312 = vunpack.c.l.b16 %v59
  %v313 = vunpack.c.l.b16 %v60
  %v314 = vunpack.c.h.b16 %v60
  %v315 = vunpack.c.l.b16 %v61
  %v316 = vunpack.c.l.b16 %v62
  %v317 = vunpack.c.h.b16 %v62
  %v318 = vunpack.c.l.b16 %v63
  %v319 = vunpack.c.l.b16 %v64
  %v320 = vunpack.c.h.b16 %v64
  %v321 = vunpack.c.l.b16 %v65
  %v322 = vunpack.c.l.b16 %v66
  %v323 = vunpack.c.h.b16 %v66
  %v324 = vunpack.c.l.b16 %v67
  %v325 = vunpack.c.l.b16 %v68
  %v326 = vunpack.c.h.b16 %v68
  %v327 = vunpack.c.l.b16 %v69
  %v328 = vunpack.c.l.b16 %v70
  %v329 = vunpack.c.h.b16 %v70
  %v330 = vunpack.c.l.b16 %v71
  %v331 = vunpack.c.l.b16 %v72
  %v332 = vunpack.c.h.b16 %v72
  %v333 = vunpack.c.l.b16 %v73
  %v334 = vunpack.c.l.b16 %v74
  %v335 = vunpack.c.h.b16 %v74
  %v336 = vunpack.c.l.b16 %v75
  %v337 = vunpack.c.l.b16 %v76
  %v338 = vunpack.c.h.b16 %v76
  %v339 = vunpack.c.l.b16 %v77
  %v340 = vunpack.c.l.b16 %v78
  %v341 = vunpack.c.h.b16 %v78
  %v342 = vunpack.c.l.b16 %v79
  %v343 = vunpack.c.l.b16 %v80
  %v344 = vunpack.c.h.b16 %v80
  %v345 = vunpack.c.l.b16 %v81
  %v346 = vunpack.c.l.b16 %v82
  %v347 = vunpack.c.h.b16 %v82
  %v348 = vunpack.c.l.b16 %v83
  %v349 = vunpack.c.l.b16 %v84
  %v350 = vunpack.c.h.b16 %v84
  %v351 = vunpack.c.l.b16 %v85
  %v352 = vunpack.c.l.b16 %v86
  %v353 = vunpack.c.h.b16 %v86
  %v354 = vunpack.c.l.b16 %v87
  %v355 = vunpack.c.l.b16 %v88
  %v356 = vunpack.c.h.b16 %v88
  %v357 = vunpack.c.l.b16 %v89
  %v358 = vunpack.c.l.b16 %v90
  %v359 = vunpack.c.h.b16 %v90
  %v360 = vunpack.c.l.b16 %v91
  %v361 = vunpack.c.l.b16 %v92
  %v362 = vunpack.c.h.b16 %v92
  %v363 = vunpack.c.l.b16 %v93
  %v364 = vunpack.c.l.b16 %v94
  %v365 = vunpack.c.h.b16 %v94
  %v366 = vunpack.c.l.b16 %v95
  %v367 = vunpack.c.l.b16 %v96
  %v368 = vunpack.c.h.b16 %v96
  %v369 = vunpack.c.l.b16 %v97
  %v370 = vunpack.c.l.b16 %v98
  %v371 = vunpack.c.h.b16 %v98
  %v372 = vunpack.c.l.b16 %v99
  %v373 = vunpack.c.l.b16 %v100
  %v374 = vunpack.c.h.b16 %v100
  %v375 = vunpack.c.l.b16 %v101
  %v376 = vunpack.c.l.b16 %v102
  %v377 = vunpack.c.h.b16 %v102
  %v378 = vunpack.c.l.b16 %v103
  %v379 = vunpack.c.l.b16 %v104
  %v380 = vunpack.c.h.b16 %v104
  %v381 = vunpack.c.l.b16 %v105
  %v382 = vunpack.c.l.b16 %v106
  %v383 = vunpack.c.h.b16 %v106
  %v384 = vunpack.c.l.b16 %v107
  %v385 = vunpack.c.l.b16 %v108
  %v386 = vunpack.c.h.b16 %v108
  %v387 = vunpack.c.l.b16 %v109
  %v388 = vunpack.c.l.b16 %v110
  %v389 = vunpack.c.h.b16 %v110
  %v390 = vunpack.c.l.b16 %v111
  %v391 = vunpack.c.l.b16 %v112
  %v392 = vunpack.c.h.b16 %v112
  %v393 = vunpack.c.l.b16 %v113
  %v394 = vunpack.c.l.b16 %v114
  %v395 = vunpack.c.h.b16 %v114
  %v396 = vunpack.c.l.b16 %v115
  %v397 = vpack.c.b16 %v253, %v250
  %v398 = vpack.c.b16 %v254, %v251
  %v399 = vpack.c.b16 %v255, %v252
  %v400 = vpack.c.b16 %v259, %v256
  %v401 = vpack.c.b16 %v260, %v257
  %v402 = vpack.c.b16 %v261, %v258
  %v403 = vpack.c.b16 %v265, %v262
  %v404 = vpack.c.b16 %v266, %v263
  %v405 = vpack.c.b16 %v267, %v264
  %v406 = vpack.c.b16 %v271, %v268
  %v407 = vpack.c.b16 %v272, %v269
  %v408 = vpack.c.b16 %v273, %v270
  %v409 = vpack.c.b16 %v277, %v274
  %v410 = vpack.c.b16 %v278, %v275
  %v411 = vpack.c.b16 %v279, %v276
  %v412 = vpack.c.b16 %v283, %v280
  %v413 = vpack.c.b16 %v284, %v281
  %v414 = vpack.c.b16 %v285, %v282
  %v415 = vpack.c.b16 %v289, %v286
  %v416 = vpack.c.b16 %v290, %v287
  %v417 = vpack.c.b16 %v291, %v288
  %v418 = vpack.c.b16 %v295, %v292
  %v419 = vpack.c.b16 %v296, %v293
  %v420 = vpack.c.b16 %v297, %v294
  %v421 = vpack.c.b16 %v301, %v298
  %v422 = vpack.c.b16 %v302, %v299
  %v423 = vpack.c.b16 %v303, %v300
  %v424 = vpack.c.b16 %v307, %v304
  %v425 = vpack.c.b16 %v308, %v305
  %v426 = vpack.c.b16 %v309, %v306
  %v427 = vpack.c.b16 %v313, %v310
  %v428 = vpack.c.b16 %v314, %v311
  %v429 = vpack.c.b16 %v315, %v312
  %v430 = vpack.c.b16 %v319, %v316
  %v431 = vpack.c.b16 %v320, %v317
  %v432 = vpack.c.b16 %v321, %v318
  %v433 = vpack.c.b16 %v325, %v322
  %v434 = vpack.c.b16 %v326, %v323
  %v435 = vpack.c.b16 %v327, %v324
  %v436 = vpack.c.b16 %v331, %v328
  %v437 = vpack.c.b16 %v332, %v329
  %v438 = vpack.c.b16 %v333, %v330
  %v439 = vpack.c.b16 %v337, %v334
  %v440 = vpack.c.b16 %v338, %v335
  %v441 = vpack.c.b16 %v339, %v336
  %v442 = vpack.c.b16 %v343, %v340
  %v443 = vpack.c.b16 %v344, %v341
  %v444 = vpack.c.b16 %v345, %v342
  %v445 = vpack.c.b16 %v349, %v346
  %v446 = vpack.c.b16 %v350, %v347
  %v447 = vpack.c.b16 %v351, %v348
  %v448 = vpack.c.b16 %v355, %v352
  %v449 = vpack.c.b16 %v356, %v353
  %v450 = vpack.c.b16 %v357, %v354
  %v451 = vpack.c.b16 %v361, %v358
  %v452 = vpack.c.b16 %v362, %v359
  %v453 = vpack.c.b16 %v363, %v360
  %v454 = vpack.c.b16 %v367, %v364
  %v455 = vpack.c.b16 %v368, %v365
  %v456 = vpack.c.b16 %v369, %v366
  %v457 = vpack.c.b16 %v373, %v370
  %v458 = vpack.c.b16 %v374, %v371
  %v459 = vpack.c.b16 %v375, %v372
  %v460 = vpack.c.b16 %v379, %v376
  %v461 = vpack.c.b16 %v380, %v377
  %v462 = vpack.c.b16 %v381, %v378
  %v463 = vpack.c.b16 %v385, %v382
  %v464 = vpack.c.b16 %v386, %v383
  %v465 = vpack.c.b16 %v387, %v384
  %v466 = vpack.c.b16 %v391, %v388
  %v467 = vpack.c.b16 %v392, %v389
  %v468 = vpack.c.b16 %v393, %v390
  %v469 = vpack.c.b16 %v394, %v394
  %v470 = vpack.c.b16 %v395, %v395
  %v471 = vpack.c.b16 %v396, %v396
  %v558 = vunpack.c.l.b16 %v116
  %v559 = vunpack.c.l.b16 %v117
  %v560 = vunpack.c.l.b16 %v118
  %v561 = vunpack.c.l.b16 %v119
  %v562 = vunpack.c.l.b16 %v120
  %v563 = vunpack.c.l.b16 %v121
  %v564 = vunpack.c.l.b16 %v122
  %v565 = vunpack.c.l.b16 %v123
  %v566 = vunpack.c.l.b16 %v124
  %v567 = vunpack.c.l.b16 %v125
  %v568 = vunpack.c.l.b16 %v126
  %v569 = vunpack.c.l.b16 %v127
  %v570 = vunpack.c.l.b16 %v128
  %v571 = vunpack.c.l.b16 %v129
  %v572 = vunpack.c.l.b16 %v130
  %v573 = vunpack.c.l.b16 %v131
  %v574 = vunpack.c.l.b16 %v132
  %v575 = vunpack.c.l.b16 %v133
  %v576 = vunpack.c.l.b16 %v134
  %v577 = vunpack.c.l.b16 %v135
  %v578 = vunpack.c.l.b16 %v136
  %v579 = vunpack.c.l.b16 %v137
  %v580 = vunpack.c.l.b16 %v138
  %v581 = vunpack.c.l.b16 %v139
  %v582 = vunpack.c.l.b16 %v140
  %v583 = vunpack.c.l.b16 %v141
  %v584 = vunpack.c.l.b16 %v142
  %v585 = vunpack.c.l.b16 %v143
  %v586 = vunpack.c.l.b16 %v144
  %v587 = vunpack.c.l.b16 %v145
  %v588 = vunpack.c.l.b16 %v146
  %v589 = vunpack.c.l.b16 %v147
  %v590 = vunpack.c.l.b16 %v148
  %v591 = vunpack.c.l.b16 %v149
  %v592 = vunpack.c.l.b16 %v150
  %v593 = vunpack.c.l.b16 %v151
  %v594 = vpack.c.b16 %v559, %v558
  %v595 = vpack.c.b16 %v561, %v560
  %v596 = vpack.c.b16 %v563, %v562
  %v597 = vpack.c.b16 %v565, %v564
  %v598 = vpack.c.b16 %v567, %v566
  %v599 = vpack.c.b16 %v569, %v568
  %v600 = vpack.c.b16 %v571, %v570
  %v601 = vpack.c.b16 %v573, %v572
  %v602 = vpack.c.b16 %v575, %v574
  %v603 = vpack.c.b16 %v577, %v576
  %v604 = vpack.c.b16 %v579, %v578
  %v605 = vpack.c.b16 %v581, %v580
  %v606 = vpack.c.b16 %v583, %v582
  %v607 = vpack.c.b16 %v585, %v584
  %v608 = vpack.c.b16 %v587, %v586
  %v609 = vpack.c.b16 %v589, %v588
  %v610 = vpack.c.b16 %v591, %v590
  %v611 = vpack.c.b16 %v593, %v592
  %vm630 = vcmask 261120
  %v632 = vsel %vm630, %v399, 0
  %v635 = vsel %vm630, %v402, 0
  %v638 = vsel %vm630, %v405, 0
  %v641 = vsel %vm630, %v408, 0
  %v644 = vsel %vm630, %v411, 0
  %v647 = vsel %vm630, %v414, 0
  %v650 = vsel %vm630, %v417, 0
  %v653 = vsel %vm630, %v420, 0
  %v656 = vsel %vm630, %v423, 0
  %v659 = vsel %vm630, %v426, 0
  %v662 = vsel %vm630, %v429, 0
  %v665 = vsel %vm630, %v432, 0
  %v668 = vsel %vm630, %v435, 0
  %v671 = vsel %vm630, %v438, 0
  %v674 = vsel %vm630, %v441, 0
  %v677 = vsel %vm630, %v444, 0
  %v680 = vsel %vm630, %v447, 0
  %v683 = vsel %vm630, %v450, 0
  %v686 = vsel %vm630, %v453, 0
  %v689 = vsel %vm630, %v456, 0
  %v692 = vsel %vm630, %v459, 0
  %v695 = vsel %vm630, %v462, 0
  %v698 = vsel %vm630, %v465, 0
  %v701 = vsel %vm630, %v468, 0
  %v704 = vsel %vm630, %v471, 0
  %706 = vmatprep.subr.bf16.mxu0 0
  %707 = vmatpush1.bf16.msra.mxu0 %v594
  %708 = vmatprep.subr.bf16.mxu0 0
  %709 = vmatpush1.bf16.msra.mxu0 %v595
  %710 = vmatprep.subr.bf16.mxu0 0
  %711 = vmatpush1.bf16.msra.mxu0 %v596
  %712 = vmatprep.subr.bf16.mxu0 0
  %713 = vmatpush1.bf16.msra.mxu0 %v597
  %714 = vmatprep.subr.bf16.mxu0 0
  %715 = vmatpush1.bf16.msra.mxu0 %v598
  %716 = vmatprep.subr.bf16.mxu0 0
  %717 = vmatpush1.bf16.msra.mxu0 %v599
  %718 = vmatprep.subr.bf16.mxu0 0
  %719 = vmatpush1.bf16.msra.mxu0 %v600
  %720 = vmatprep.subr.bf16.mxu0 0
  %721 = vmatpush1.bf16.msra.mxu0 %v601
  %722 = vmatprep.subr.bf16.mxu0 0
  %723 = vmatpush1.bf16.msra.mxu0 %v602
  %724 = vmatprep.subr.bf16.mxu0 0
  %725 = vmatpush1.bf16.msra.mxu0 %v603
  %726 = vmatprep.subr.bf16.mxu0 0
  %727 = vmatpush1.bf16.msra.mxu0 %v604
  %728 = vmatprep.subr.bf16.mxu0 0
  %729 = vmatpush1.bf16.msra.mxu0 %v605
  %730 = vmatprep.subr.bf16.mxu0 0
  %731 = vmatpush1.bf16.msra.mxu0 %v606
  %732 = vmatprep.subr.bf16.mxu0 0
  %733 = vmatpush1.bf16.msra.mxu0 %v607
  %734 = vmatprep.subr.bf16.mxu0 0
  %735 = vmatpush1.bf16.msra.mxu0 %v608
  %736 = vmatprep.subr.bf16.mxu0 0
  %737 = vmatpush1.bf16.msra.mxu0 %v609
  %738 = vmatprep.mubr.bf16.mxu0 %v398
  %739 = vmatmul.mubr.bf16.gmra.mrb[0].mxu0 %v397
  %v740 = vpop.f32.mrb[0].mxu0
  %v741 = vadd.f32 0.0, %v740
  %v742 = vpop.f32.mrb[0].mxu0
  %v743 = vpop.f32.mrb[0].mxu0
  %v744 = vadd.f32 0.0, %v743
  %v745 = vpop.f32.mrb[0].mxu0
  %746 = vmatprep.mubr.bf16.mxu0 %v401
  %747 = vmatmul.mubr.bf16.gmra.mrb[0].mxu0 %v400
  %v748 = vpop.f32.mrb[0].mxu0
  %v749 = vadd.f32 0.0, %v748
  %v750 = vpop.f32.mrb[0].mxu0
  %v751 = vpop.f32.mrb[0].mxu0
  %v752 = vadd.f32 0.0, %v751
  %v753 = vpop.f32.mrb[0].mxu0
  %754 = vmatprep.mubr.bf16.mxu0 %v404
  %755 = vmatmul.mubr.bf16.gmra.mrb[0].mxu0 %v403
  %v756 = vpop.f32.mrb[0].mxu0
  %v757 = vadd.f32 0.0, %v756
  %v758 = vpop.f32.mrb[0].mxu0
  %v759 = vpop.f32.mrb[0].mxu0
  %v760 = vadd.f32 0.0, %v759
  %v761 = vpop.f32.mrb[0].mxu0
  %762 = vmatprep.mubr.bf16.mxu0 %v407
  %763 = vmatmul.mubr.bf16.gmra.mrb[0].mxu0 %v406
  %v764 = vpop.f32.mrb[0].mxu0
  %v765 = vadd.f32 0.0, %v764
  %v766 = vpop.f32.mrb[0].mxu0
  %v767 = vpop.f32.mrb[0].mxu0
  %v768 = vadd.f32 0.0, %v767
  %v769 = vpop.f32.mrb[0].mxu0
  %770 = vmatprep.mubr.bf16.mxu0 %v410
  %771 = vmatmul.mubr.bf16.gmra.mrb[0].mxu0 %v409
  %v772 = vpop.f32.mrb[0].mxu0
  %v773 = vadd.f32 0.0, %v772
  %v774 = vpop.f32.mrb[0].mxu0
  %v775 = vpop.f32.mrb[0].mxu0
  %v776 = vadd.f32 0.0, %v775
  %v777 = vpop.f32.mrb[0].mxu0
  %778 = vmatprep.mubr.bf16.mxu0 %v413
  %779 = vmatmul.mubr.bf16.gmra.mrb[0].mxu0 %v412
  %v780 = vpop.f32.mrb[0].mxu0
  %v781 = vadd.f32 0.0, %v780
  %v782 = vpop.f32.mrb[0].mxu0
  %v783 = vpop.f32.mrb[0].mxu0
  %v784 = vadd.f32 0.0, %v783
  %v785 = vpop.f32.mrb[0].mxu0
  %786 = vmatprep.mubr.bf16.mxu0 %v416
  %787 = vmatmul.mubr.bf16.gmra.mrb[0].mxu0 %v415
  %v788 = vpop.f32.mrb[0].mxu0
  %v789 = vadd.f32 0.0, %v788
  %v790 = vpop.f32.mrb[0].mxu0
  %v791 = vpop.f32.mrb[0].mxu0
  %v792 = vadd.f32 0.0, %v791
  %v793 = vpop.f32.mrb[0].mxu0
  %794 = vmatprep.mubr.bf16.mxu0 %v419
  %795 = vmatmul.mubr.bf16.gmra.mrb[0].mxu0 %v418
  %v796 = vpop.f32.mrb[0].mxu0
  %v797 = vadd.f32 0.0, %v796
  %v798 = vpop.f32.mrb[0].mxu0
  %v799 = vpop.f32.mrb[0].mxu0
  %v800 = vadd.f32 0.0, %v799
  %v801 = vpop.f32.mrb[0].mxu0
  %802 = vmatprep.mubr.bf16.mxu0 %v422
  %803 = vmatmul.mubr.bf16.gmra.mrb[0].mxu0 %v421
  %v804 = vpop.f32.mrb[0].mxu0
  %v805 = vadd.f32 0.0, %v804
  %v806 = vpop.f32.mrb[0].mxu0
  %v807 = vpop.f32.mrb[0].mxu0
  %v808 = vadd.f32 0.0, %v807
  %v809 = vpop.f32.mrb[0].mxu0
  %810 = vmatprep.mubr.bf16.mxu0 %v425
  %811 = vmatmul.mubr.bf16.gmra.mrb[0].mxu0 %v424
  %v812 = vpop.f32.mrb[0].mxu0
  %v813 = vadd.f32 0.0, %v812
  %v814 = vpop.f32.mrb[0].mxu0
  %v815 = vpop.f32.mrb[0].mxu0
  %v816 = vadd.f32 0.0, %v815
  %v817 = vpop.f32.mrb[0].mxu0
  %818 = vmatprep.mubr.bf16.mxu0 %v428
  %819 = vmatmul.mubr.bf16.gmra.mrb[0].mxu0 %v427
  %v820 = vpop.f32.mrb[0].mxu0
  %v821 = vadd.f32 0.0, %v820
  %v822 = vpop.f32.mrb[0].mxu0
  %v823 = vpop.f32.mrb[0].mxu0
  %v824 = vadd.f32 0.0, %v823
  %v825 = vpop.f32.mrb[0].mxu0
  %826 = vmatprep.mubr.bf16.mxu0 %v431
  %827 = vmatmul.mubr.bf16.gmra.mrb[0].mxu0 %v430
  %v828 = vpop.f32.mrb[0].mxu0
  %v829 = vadd.f32 0.0, %v828
  %v830 = vpop.f32.mrb[0].mxu0
  %v831 = vpop.f32.mrb[0].mxu0
  %v832 = vadd.f32 0.0, %v831
  %v833 = vpop.f32.mrb[0].mxu0
  %834 = vmatprep.mubr.bf16.mxu0 %v434
  %835 = vmatmul.mubr.bf16.gmra.mrb[0].mxu0 %v433
  %v836 = vpop.f32.mrb[0].mxu0
  %v837 = vadd.f32 0.0, %v836
  %v838 = vpop.f32.mrb[0].mxu0
  %v839 = vpop.f32.mrb[0].mxu0
  %v840 = vadd.f32 0.0, %v839
  %v841 = vpop.f32.mrb[0].mxu0
  %842 = vmatprep.mubr.bf16.mxu0 %v437
  %843 = vmatmul.mubr.bf16.gmra.mrb[0].mxu0 %v436
  %v844 = vpop.f32.mrb[0].mxu0
  %v845 = vadd.f32 0.0, %v844
  %v846 = vpop.f32.mrb[0].mxu0
  %v847 = vpop.f32.mrb[0].mxu0
  %v848 = vadd.f32 0.0, %v847
  %v849 = vpop.f32.mrb[0].mxu0
  %850 = vmatprep.mubr.bf16.mxu0 %v440
  %851 = vmatmul.mubr.bf16.gmra.mrb[0].mxu0 %v439
  %v852 = vpop.f32.mrb[0].mxu0
  %v853 = vadd.f32 0.0, %v852
  %v854 = vpop.f32.mrb[0].mxu0
  %v855 = vpop.f32.mrb[0].mxu0
  %v856 = vadd.f32 0.0, %v855
  %v857 = vpop.f32.mrb[0].mxu0
  %858 = vmatprep.mubr.bf16.mxu0 %v443
  %859 = vmatmul.mubr.bf16.gmra.mrb[0].mxu0 %v442
  %v860 = vpop.f32.mrb[0].mxu0
  %v861 = vadd.f32 0.0, %v860
  %v862 = vpop.f32.mrb[0].mxu0
  %v863 = vpop.f32.mrb[0].mxu0
  %v864 = vadd.f32 0.0, %v863
  %v865 = vpop.f32.mrb[0].mxu0
  %866 = vmatprep.mubr.bf16.mxu0 %v446
  %867 = vmatmul.mubr.bf16.gmra.mrb[0].mxu0 %v445
  %v868 = vpop.f32.mrb[0].mxu0
  %v869 = vadd.f32 0.0, %v868
  %v870 = vpop.f32.mrb[0].mxu0
  %v871 = vpop.f32.mrb[0].mxu0
  %v872 = vadd.f32 0.0, %v871
  %v873 = vpop.f32.mrb[0].mxu0
  %874 = vmatprep.mubr.bf16.mxu0 %v449
  %875 = vmatmul.mubr.bf16.gmra.mrb[0].mxu0 %v448
  %v876 = vpop.f32.mrb[0].mxu0
  %v877 = vadd.f32 0.0, %v876
  %v878 = vpop.f32.mrb[0].mxu0
  %v879 = vpop.f32.mrb[0].mxu0
  %v880 = vadd.f32 0.0, %v879
  %v881 = vpop.f32.mrb[0].mxu0
  %882 = vmatprep.mubr.bf16.mxu0 %v452
  %883 = vmatmul.mubr.bf16.gmra.mrb[0].mxu0 %v451
  %v884 = vpop.f32.mrb[0].mxu0
  %v885 = vadd.f32 0.0, %v884
  %v886 = vpop.f32.mrb[0].mxu0
  %v887 = vpop.f32.mrb[0].mxu0
  %v888 = vadd.f32 0.0, %v887
  %v889 = vpop.f32.mrb[0].mxu0
  %890 = vmatprep.mubr.bf16.mxu0 %v455
  %891 = vmatmul.mubr.bf16.gmra.mrb[0].mxu0 %v454
  %v892 = vpop.f32.mrb[0].mxu0
  %v893 = vadd.f32 0.0, %v892
  %v894 = vpop.f32.mrb[0].mxu0
  %v895 = vpop.f32.mrb[0].mxu0
  %v896 = vadd.f32 0.0, %v895
  %v897 = vpop.f32.mrb[0].mxu0
  %898 = vmatprep.mubr.bf16.mxu0 %v458
  %899 = vmatmul.mubr.bf16.gmra.mrb[0].mxu0 %v457
  %v900 = vpop.f32.mrb[0].mxu0
  %v901 = vadd.f32 0.0, %v900
  %v902 = vpop.f32.mrb[0].mxu0
  %v903 = vpop.f32.mrb[0].mxu0
  %v904 = vadd.f32 0.0, %v903
  %v905 = vpop.f32.mrb[0].mxu0
  %906 = vmatprep.mubr.bf16.mxu0 %v461
  %907 = vmatmul.mubr.bf16.gmra.mrb[0].mxu0 %v460
  %v908 = vpop.f32.mrb[0].mxu0
  %v909 = vadd.f32 0.0, %v908
  %v910 = vpop.f32.mrb[0].mxu0
  %v911 = vpop.f32.mrb[0].mxu0
  %v912 = vadd.f32 0.0, %v911
  %v913 = vpop.f32.mrb[0].mxu0
  %914 = vmatprep.mubr.bf16.mxu0 %v464
  %915 = vmatmul.mubr.bf16.gmra.mrb[0].mxu0 %v463
  %v916 = vpop.f32.mrb[0].mxu0
  %v917 = vadd.f32 0.0, %v916
  %v918 = vpop.f32.mrb[0].mxu0
  %v919 = vpop.f32.mrb[0].mxu0
  %v920 = vadd.f32 0.0, %v919
  %v921 = vpop.f32.mrb[0].mxu0
  %922 = vmatprep.mubr.bf16.mxu0 %v467
  %923 = vmatmul.mubr.bf16.gmra.mrb[0].mxu0 %v466
  %v924 = vpop.f32.mrb[0].mxu0
  %v925 = vadd.f32 0.0, %v924
  %v926 = vpop.f32.mrb[0].mxu0
  %v927 = vpop.f32.mrb[0].mxu0
  %v928 = vadd.f32 0.0, %v927
  %v929 = vpop.f32.mrb[0].mxu0
  %930 = vmatprep.mubr.bf16.mxu0 %v470
  %931 = vmatmul.mubr.bf16.gmra.mrb[0].mxu0 %v469
  %v932 = vpop.f32.mrb[0].mxu0
  %v933 = vadd.f32 0.0, %v932
  %v934 = vpop.f32.mrb[0].mxu0
  %v935 = vpop.f32.mrb[0].mxu0
  %v936 = vpop.f32.mrb[0].mxu0
  %937 = vdwg.mxu0
  %938 = vmatprep.subr.bf16.mxu0 0
  %939 = vmatpush1.bf16.msra.mxu0 %v610
  %940 = vmatprep.subr.bf16.mxu0 0
  %941 = vmatpush1.bf16.msra.mxu0 %v611
  %942 = vmatprep.subr.bf16.mxu0 0
  %943 = vmatpush1.bf16.msra.mxu0 0
  %944 = vmatprep.subr.bf16.mxu0 0
  %945 = vmatpush1.bf16.msra.mxu0 0
  %946 = vmatprep.subr.bf16.mxu0 0
  %947 = vmatpush1.bf16.msra.mxu0 0
  %948 = vmatprep.subr.bf16.mxu0 0
  %949 = vmatpush1.bf16.msra.mxu0 0
  %950 = vmatprep.subr.bf16.mxu0 0
  %951 = vmatpush1.bf16.msra.mxu0 0
  %952 = vmatprep.subr.bf16.mxu0 0
  %953 = vmatpush1.bf16.msra.mxu0 0
  %954 = vmatprep.subr.bf16.mxu0 0
  %955 = vmatpush1.bf16.msra.mxu0 0
  %956 = vmatprep.subr.bf16.mxu0 0
  %957 = vmatpush1.bf16.msra.mxu0 0
  %958 = vmatprep.subr.bf16.mxu0 0
  %959 = vmatpush1.bf16.msra.mxu0 0
  %960 = vmatprep.subr.bf16.mxu0 0
  %961 = vmatpush1.bf16.msra.mxu0 0
  %962 = vmatprep.subr.bf16.mxu0 0
  %963 = vmatpush1.bf16.msra.mxu0 0
  %964 = vmatprep.subr.bf16.mxu0 0
  %965 = vmatpush1.bf16.msra.mxu0 0
  %966 = vmatprep.subr.bf16.mxu0 0
  %967 = vmatpush1.bf16.msra.mxu0 0
  %968 = vmatprep.subr.bf16.mxu0 0
  %969 = vmatpush1.bf16.msra.mxu0 0
  %970 = vmatprep.mubr.bf16.mxu0 0
  %971 = vmatmul.mubr.bf16.gmra.mrb[0].mxu0 %v632
  %v972 = vpop.f32.mrb[0].mxu0
  %v973 = vadd.f32 %v741, %v972
  %v974 = vpop.f32.mrb[0].mxu0
  %v975 = vpop.f32.mrb[0].mxu0
  %v976 = vadd.f32 %v744, %v975
  %v977 = vpop.f32.mrb[0].mxu0
  %978 = vmatprep.mubr.bf16.mxu0 0
  %979 = vmatmul.mubr.bf16.gmra.mrb[0].mxu0 %v635
  %v980 = vpop.f32.mrb[0].mxu0
  %v981 = vadd.f32 %v749, %v980
  %v982 = vpop.f32.mrb[0].mxu0
  %v983 = vpop.f32.mrb[0].mxu0
  %v984 = vadd.f32 %v752, %v983
  %v985 = vpop.f32.mrb[0].mxu0
  %986 = vmatprep.mubr.bf16.mxu0 0
  %987 = vmatmul.mubr.bf16.gmra.mrb[0].mxu0 %v638
  %v988 = vpop.f32.mrb[0].mxu0
  %v989 = vadd.f32 %v757, %v988
  %v990 = vpop.f32.mrb[0].mxu0
  %v991 = vpop.f32.mrb[0].mxu0
  %v992 = vadd.f32 %v760, %v991
  %v993 = vpop.f32.mrb[0].mxu0
  %994 = vmatprep.mubr.bf16.mxu0 0
  %995 = vmatmul.mubr.bf16.gmra.mrb[0].mxu0 %v641
  %v996 = vpop.f32.mrb[0].mxu0
  %v997 = vadd.f32 %v765, %v996
  %v998 = vpop.f32.mrb[0].mxu0
  %v999 = vpop.f32.mrb[0].mxu0
  %v1000 = vadd.f32 %v768, %v999
  %v1001 = vpop.f32.mrb[0].mxu0
  %1002 = vmatprep.mubr.bf16.mxu0 0
  %1003 = vmatmul.mubr.bf16.gmra.mrb[0].mxu0 %v644
  %v1004 = vpop.f32.mrb[0].mxu0
  %v1005 = vadd.f32 %v773, %v1004
  %v1006 = vpop.f32.mrb[0].mxu0
  %v1007 = vpop.f32.mrb[0].mxu0
  %v1008 = vadd.f32 %v776, %v1007
  %v1009 = vpop.f32.mrb[0].mxu0
  %1010 = vmatprep.mubr.bf16.mxu0 0
  %1011 = vmatmul.mubr.bf16.gmra.mrb[0].mxu0 %v647
  %v1012 = vpop.f32.mrb[0].mxu0
  %v1013 = vadd.f32 %v781, %v1012
  %v1014 = vpop.f32.mrb[0].mxu0
  %v1015 = vpop.f32.mrb[0].mxu0
  %v1016 = vadd.f32 %v784, %v1015
  %v1017 = vpop.f32.mrb[0].mxu0
  %1018 = vmatprep.mubr.bf16.mxu0 0
  %1019 = vmatmul.mubr.bf16.gmra.mrb[0].mxu0 %v650
  %v1020 = vpop.f32.mrb[0].mxu0
  %v1021 = vadd.f32 %v789, %v1020
  %v1022 = vpop.f32.mrb[0].mxu0
  %v1023 = vpop.f32.mrb[0].mxu0
  %v1024 = vadd.f32 %v792, %v1023
  %v1025 = vpop.f32.mrb[0].mxu0
  %1026 = vmatprep.mubr.bf16.mxu0 0
  %1027 = vmatmul.mubr.bf16.gmra.mrb[0].mxu0 %v653
  %v1028 = vpop.f32.mrb[0].mxu0
  %v1029 = vadd.f32 %v797, %v1028
  %v1030 = vpop.f32.mrb[0].mxu0
  %v1031 = vpop.f32.mrb[0].mxu0
  %v1032 = vadd.f32 %v800, %v1031
  %v1033 = vpop.f32.mrb[0].mxu0
  %1034 = vmatprep.mubr.bf16.mxu0 0
  %1035 = vmatmul.mubr.bf16.gmra.mrb[0].mxu0 %v656
  %v1036 = vpop.f32.mrb[0].mxu0
  %v1037 = vadd.f32 %v805, %v1036
  %v1038 = vpop.f32.mrb[0].mxu0
  %v1039 = vpop.f32.mrb[0].mxu0
  %v1040 = vadd.f32 %v808, %v1039
  %v1041 = vpop.f32.mrb[0].mxu0
  %1042 = vmatprep.mubr.bf16.mxu0 0
  %1043 = vmatmul.mubr.bf16.gmra.mrb[0].mxu0 %v659
  %v1044 = vpop.f32.mrb[0].mxu0
  %v1045 = vadd.f32 %v813, %v1044
  %v1046 = vpop.f32.mrb[0].mxu0
  %v1047 = vpop.f32.mrb[0].mxu0
  %v1048 = vadd.f32 %v816, %v1047
  %v1049 = vpop.f32.mrb[0].mxu0
  %1050 = vmatprep.mubr.bf16.mxu0 0
  %1051 = vmatmul.mubr.bf16.gmra.mrb[0].mxu0 %v662
  %v1052 = vpop.f32.mrb[0].mxu0
  %v1053 = vadd.f32 %v821, %v1052
  %v1054 = vpop.f32.mrb[0].mxu0
  %v1055 = vpop.f32.mrb[0].mxu0
  %v1056 = vadd.f32 %v824, %v1055
  %v1057 = vpop.f32.mrb[0].mxu0
  %1058 = vmatprep.mubr.bf16.mxu0 0
  %1059 = vmatmul.mubr.bf16.gmra.mrb[0].mxu0 %v665
  %v1060 = vpop.f32.mrb[0].mxu0
  %v1061 = vadd.f32 %v829, %v1060
  %v1062 = vpop.f32.mrb[0].mxu0
  %v1063 = vpop.f32.mrb[0].mxu0
  %v1064 = vadd.f32 %v832, %v1063
  %v1065 = vpop.f32.mrb[0].mxu0
  %1066 = vmatprep.mubr.bf16.mxu0 0
  %1067 = vmatmul.mubr.bf16.gmra.mrb[0].mxu0 %v668
  %v1068 = vpop.f32.mrb[0].mxu0
  %v1069 = vadd.f32 %v837, %v1068
  %v1070 = vpop.f32.mrb[0].mxu0
  %v1071 = vpop.f32.mrb[0].mxu0
  %v1072 = vadd.f32 %v840, %v1071
  %v1073 = vpop.f32.mrb[0].mxu0
  %1074 = vmatprep.mubr.bf16.mxu0 0
  %1075 = vmatmul.mubr.bf16.gmra.mrb[0].mxu0 %v671
  %v1076 = vpop.f32.mrb[0].mxu0
  %v1077 = vadd.f32 %v845, %v1076
  %v1078 = vpop.f32.mrb[0].mxu0
  %v1079 = vpop.f32.mrb[0].mxu0
  %v1080 = vadd.f32 %v848, %v1079
  %v1081 = vpop.f32.mrb[0].mxu0
  %1082 = vmatprep.mubr.bf16.mxu0 0
  %1083 = vmatmul.mubr.bf16.gmra.mrb[0].mxu0 %v674
  %v1084 = vpop.f32.mrb[0].mxu0
  %v1085 = vadd.f32 %v853, %v1084
  %v1086 = vpop.f32.mrb[0].mxu0
  %v1087 = vpop.f32.mrb[0].mxu0
  %v1088 = vadd.f32 %v856, %v1087
  %v1089 = vpop.f32.mrb[0].mxu0
  %1090 = vmatprep.mubr.bf16.mxu0 0
  %1091 = vmatmul.mubr.bf16.gmra.mrb[0].mxu0 %v677
  %v1092 = vpop.f32.mrb[0].mxu0
  %v1093 = vadd.f32 %v861, %v1092
  %v1094 = vpop.f32.mrb[0].mxu0
  %v1095 = vpop.f32.mrb[0].mxu0
  %v1096 = vadd.f32 %v864, %v1095
  %v1097 = vpop.f32.mrb[0].mxu0
  %1098 = vmatprep.mubr.bf16.mxu0 0
  %1099 = vmatmul.mubr.bf16.gmra.mrb[0].mxu0 %v680
  %v1100 = vpop.f32.mrb[0].mxu0
  %v1101 = vadd.f32 %v869, %v1100
  %v1102 = vpop.f32.mrb[0].mxu0
  %v1103 = vpop.f32.mrb[0].mxu0
  %v1104 = vadd.f32 %v872, %v1103
  %v1105 = vpop.f32.mrb[0].mxu0
  %1106 = vmatprep.mubr.bf16.mxu0 0
  %1107 = vmatmul.mubr.bf16.gmra.mrb[0].mxu0 %v683
  %v1108 = vpop.f32.mrb[0].mxu0
  %v1109 = vadd.f32 %v877, %v1108
  %v1110 = vpop.f32.mrb[0].mxu0
  %v1111 = vpop.f32.mrb[0].mxu0
  %v1112 = vadd.f32 %v880, %v1111
  %v1113 = vpop.f32.mrb[0].mxu0
  %1114 = vmatprep.mubr.bf16.mxu0 0
  %1115 = vmatmul.mubr.bf16.gmra.mrb[0].mxu0 %v686
  %v1116 = vpop.f32.mrb[0].mxu0
  %v1117 = vadd.f32 %v885, %v1116
  %v1118 = vpop.f32.mrb[0].mxu0
  %v1119 = vpop.f32.mrb[0].mxu0
  %v1120 = vadd.f32 %v888, %v1119
  %v1121 = vpop.f32.mrb[0].mxu0
  %1122 = vmatprep.mubr.bf16.mxu0 0
  %1123 = vmatmul.mubr.bf16.gmra.mrb[0].mxu0 %v689
  %v1124 = vpop.f32.mrb[0].mxu0
  %v1125 = vadd.f32 %v893, %v1124
  %v1126 = vpop.f32.mrb[0].mxu0
  %v1127 = vpop.f32.mrb[0].mxu0
  %v1128 = vadd.f32 %v896, %v1127
  %v1129 = vpop.f32.mrb[0].mxu0
  %1130 = vmatprep.mubr.bf16.mxu0 0
  %1131 = vmatmul.mubr.bf16.gmra.mrb[0].mxu0 %v692
  %v1132 = vpop.f32.mrb[0].mxu0
  %v1133 = vadd.f32 %v901, %v1132
  %v1134 = vpop.f32.mrb[0].mxu0
  %v1135 = vpop.f32.mrb[0].mxu0
  %v1136 = vadd.f32 %v904, %v1135
  %v1137 = vpop.f32.mrb[0].mxu0
  %1138 = vmatprep.mubr.bf16.mxu0 0
  %1139 = vmatmul.mubr.bf16.gmra.mrb[0].mxu0 %v695
  %v1140 = vpop.f32.mrb[0].mxu0
  %v1141 = vadd.f32 %v909, %v1140
  %v1142 = vpop.f32.mrb[0].mxu0
  %v1143 = vpop.f32.mrb[0].mxu0
  %v1144 = vadd.f32 %v912, %v1143
  %v1145 = vpop.f32.mrb[0].mxu0
  %1146 = vmatprep.mubr.bf16.mxu0 0
  %1147 = vmatmul.mubr.bf16.gmra.mrb[0].mxu0 %v698
  %v1148 = vpop.f32.mrb[0].mxu0
  %v1149 = vadd.f32 %v917, %v1148
  %v1150 = vpop.f32.mrb[0].mxu0
  %v1151 = vpop.f32.mrb[0].mxu0
  %v1152 = vadd.f32 %v920, %v1151
  %v1153 = vpop.f32.mrb[0].mxu0
  %1154 = vmatprep.mubr.bf16.mxu0 0
  %1155 = vmatmul.mubr.bf16.gmra.mrb[0].mxu0 %v701
  %v1156 = vpop.f32.mrb[0].mxu0
  %v1157 = vadd.f32 %v925, %v1156
  %v1158 = vpop.f32.mrb[0].mxu0
  %v1159 = vpop.f32.mrb[0].mxu0
  %v1160 = vadd.f32 %v928, %v1159
  %v1161 = vpop.f32.mrb[0].mxu0
  %1162 = vmatprep.mubr.bf16.mxu0 0
  %1163 = vmatmul.mubr.bf16.gmra.mrb[0].mxu0 %v704
  %v1164 = vpop.f32.mrb[0].mxu0
  %v1165 = vadd.f32 %v933, %v1164
  %v1166 = vpop.f32.mrb[0].mxu0
  %v1167 = vpop.f32.mrb[0].mxu0
  %v1168 = vpop.f32.mrb[0].mxu0
  %1169 = vdwg.mxu0
  %v1170 = vld [vmem:[%s2] sm:$0x1]
  %v1172 = vlaneseq
  %v1173 = vshrl.u32 %v1172, 7
  %v1174 = vsub.s32 0, %v1173
  %v1175 = vrot.slane %v1170, %v1174
  %v1177 = vmul.f32 %v973, %v1175
  %v1178 = vmul.f32 %v976, %v1175
  %v1179 = vmul.f32 %v981, %v1175
  %v1180 = vmul.f32 %v984, %v1175
  %v1181 = vmul.f32 %v989, %v1175
  %v1182 = vmul.f32 %v992, %v1175
  %v1183 = vmul.f32 %v997, %v1175
  %v1184 = vmul.f32 %v1000, %v1175
  %v1185 = vmul.f32 %v1005, %v1175
  %v1186 = vmul.f32 %v1008, %v1175
  %v1187 = vmul.f32 %v1013, %v1175
  %v1188 = vmul.f32 %v1016, %v1175
  %v1189 = vmul.f32 %v1021, %v1175
  %v1190 = vmul.f32 %v1024, %v1175
  %v1191 = vmul.f32 %v1029, %v1175
  %v1192 = vmul.f32 %v1032, %v1175
  %v1193 = vmul.f32 %v1037, %v1175
  %v1194 = vmul.f32 %v1040, %v1175
  %v1195 = vmul.f32 %v1045, %v1175
  %v1196 = vmul.f32 %v1048, %v1175
  %v1197 = vmul.f32 %v1053, %v1175
  %v1198 = vmul.f32 %v1056, %v1175
  %v1199 = vmul.f32 %v1061, %v1175
  %v1200 = vmul.f32 %v1064, %v1175
  %v1201 = vmul.f32 %v1069, %v1175
  %v1202 = vmul.f32 %v1072, %v1175
  %v1203 = vmul.f32 %v1077, %v1175
  %v1204 = vmul.f32 %v1080, %v1175
  %v1205 = vmul.f32 %v1085, %v1175
  %v1206 = vmul.f32 %v1088, %v1175
  %v1207 = vmul.f32 %v1093, %v1175
  %v1208 = vmul.f32 %v1096, %v1175
  %v1209 = vmul.f32 %v1101, %v1175
  %v1210 = vmul.f32 %v1104, %v1175
  %v1211 = vmul.f32 %v1109, %v1175
  %v1212 = vmul.f32 %v1112, %v1175
  %v1213 = vmul.f32 %v1117, %v1175
  %v1214 = vmul.f32 %v1120, %v1175
  %v1215 = vmul.f32 %v1125, %v1175
  %v1216 = vmul.f32 %v1128, %v1175
  %v1217 = vmul.f32 %v1133, %v1175
  %v1218 = vmul.f32 %v1136, %v1175
  %v1219 = vmul.f32 %v1141, %v1175
  %v1220 = vmul.f32 %v1144, %v1175
  %v1221 = vmul.f32 %v1149, %v1175
  %v1222 = vmul.f32 %v1152, %v1175
  %v1223 = vmul.f32 %v1157, %v1175
  %v1224 = vmul.f32 %v1160, %v1175
  %v1225 = vmul.f32 %v1165, %v1175
  %v1226 = vld [vmem:[%s3] sm:$0x1]
  %v1228 = vlaneseq
  %v1229 = vshrl.u32 %v1228, 7
  %v1230 = vsub.s32 0, %v1229
  %v1231 = vrot.slane %v1226, %v1230
  %v1233 = vadd.f32 %v1177, %v1231
  %v1234 = vadd.f32 %v1178, %v1231
  %v1235 = vadd.f32 %v1179, %v1231
  %v1236 = vadd.f32 %v1180, %v1231
  %v1237 = vadd.f32 %v1181, %v1231
  %v1238 = vadd.f32 %v1182, %v1231
  %v1239 = vadd.f32 %v1183, %v1231
  %v1240 = vadd.f32 %v1184, %v1231
  %v1241 = vadd.f32 %v1185, %v1231
  %v1242 = vadd.f32 %v1186, %v1231
  %v1243 = vadd.f32 %v1187, %v1231
  %v1244 = vadd.f32 %v1188, %v1231
  %v1245 = vadd.f32 %v1189, %v1231
  %v1246 = vadd.f32 %v1190, %v1231
  %v1247 = vadd.f32 %v1191, %v1231
  %v1248 = vadd.f32 %v1192, %v1231
  %v1249 = vadd.f32 %v1193, %v1231
  %v1250 = vadd.f32 %v1194, %v1231
  %v1251 = vadd.f32 %v1195, %v1231
  %v1252 = vadd.f32 %v1196, %v1231
  %v1253 = vadd.f32 %v1197, %v1231
  %v1254 = vadd.f32 %v1198, %v1231
  %v1255 = vadd.f32 %v1199, %v1231
  %v1256 = vadd.f32 %v1200, %v1231
  %v1257 = vadd.f32 %v1201, %v1231
  %v1258 = vadd.f32 %v1202, %v1231
  %v1259 = vadd.f32 %v1203, %v1231
  %v1260 = vadd.f32 %v1204, %v1231
  %v1261 = vadd.f32 %v1205, %v1231
  %v1262 = vadd.f32 %v1206, %v1231
  %v1263 = vadd.f32 %v1207, %v1231
  %v1264 = vadd.f32 %v1208, %v1231
  %v1265 = vadd.f32 %v1209, %v1231
  %v1266 = vadd.f32 %v1210, %v1231
  %v1267 = vadd.f32 %v1211, %v1231
  %v1268 = vadd.f32 %v1212, %v1231
  %v1269 = vadd.f32 %v1213, %v1231
  %v1270 = vadd.f32 %v1214, %v1231
  %v1271 = vadd.f32 %v1215, %v1231
  %v1272 = vadd.f32 %v1216, %v1231
  %v1273 = vadd.f32 %v1217, %v1231
  %v1274 = vadd.f32 %v1218, %v1231
  %v1275 = vadd.f32 %v1219, %v1231
  %v1276 = vadd.f32 %v1220, %v1231
  %v1277 = vadd.f32 %v1221, %v1231
  %v1278 = vadd.f32 %v1222, %v1231
  %v1279 = vadd.f32 %v1223, %v1231
  %v1280 = vadd.f32 %v1224, %v1231
  %v1281 = vadd.f32 %v1225, %v1231
  %v1282 = vmax.f32 %v1233, 0.0
  %v1283 = vmax.f32 %v1234, 0.0
  %v1284 = vmax.f32 %v1235, 0.0
  %v1285 = vmax.f32 %v1236, 0.0
  %v1286 = vmax.f32 %v1237, 0.0
  %v1287 = vmax.f32 %v1238, 0.0
  %v1288 = vmax.f32 %v1239, 0.0
  %v1289 = vmax.f32 %v1240, 0.0
  %v1290 = vmax.f32 %v1241, 0.0
  %v1291 = vmax.f32 %v1242, 0.0
  %v1292 = vmax.f32 %v1243, 0.0
  %v1293 = vmax.f32 %v1244, 0.0
  %v1294 = vmax.f32 %v1245, 0.0
  %v1295 = vmax.f32 %v1246, 0.0
  %v1296 = vmax.f32 %v1247, 0.0
  %v1297 = vmax.f32 %v1248, 0.0
  %v1298 = vmax.f32 %v1249, 0.0
  %v1299 = vmax.f32 %v1250, 0.0
  %v1300 = vmax.f32 %v1251, 0.0
  %v1301 = vmax.f32 %v1252, 0.0
  %v1302 = vmax.f32 %v1253, 0.0
  %v1303 = vmax.f32 %v1254, 0.0
  %v1304 = vmax.f32 %v1255, 0.0
  %v1305 = vmax.f32 %v1256, 0.0
  %v1306 = vmax.f32 %v1257, 0.0
  %v1307 = vmax.f32 %v1258, 0.0
  %v1308 = vmax.f32 %v1259, 0.0
  %v1309 = vmax.f32 %v1260, 0.0
  %v1310 = vmax.f32 %v1261, 0.0
  %v1311 = vmax.f32 %v1262, 0.0
  %v1312 = vmax.f32 %v1263, 0.0
  %v1313 = vmax.f32 %v1264, 0.0
  %v1314 = vmax.f32 %v1265, 0.0
  %v1315 = vmax.f32 %v1266, 0.0
  %v1316 = vmax.f32 %v1267, 0.0
  %v1317 = vmax.f32 %v1268, 0.0
  %v1318 = vmax.f32 %v1269, 0.0
  %v1319 = vmax.f32 %v1270, 0.0
  %v1320 = vmax.f32 %v1271, 0.0
  %v1321 = vmax.f32 %v1272, 0.0
  %v1322 = vmax.f32 %v1273, 0.0
  %v1323 = vmax.f32 %v1274, 0.0
  %v1324 = vmax.f32 %v1275, 0.0
  %v1325 = vmax.f32 %v1276, 0.0
  %v1326 = vmax.f32 %v1277, 0.0
  %v1327 = vmax.f32 %v1278, 0.0
  %v1328 = vmax.f32 %v1279, 0.0
  %v1329 = vmax.f32 %v1280, 0.0
  %v1330 = vmax.f32 %v1281, 0.0
  %v1331 = vpack.c.bf16 %v1283, %v1282
  %v1332 = vpack.c.bf16 %v1285, %v1284
  %v1333 = vpack.c.bf16 %v1287, %v1286
  %v1334 = vpack.c.bf16 %v1289, %v1288
  %v1335 = vpack.c.bf16 %v1291, %v1290
  %v1336 = vpack.c.bf16 %v1293, %v1292
  %v1337 = vpack.c.bf16 %v1295, %v1294
  %v1338 = vpack.c.bf16 %v1297, %v1296
  %v1339 = vpack.c.bf16 %v1299, %v1298
  %v1340 = vpack.c.bf16 %v1301, %v1300
  %v1341 = vpack.c.bf16 %v1303, %v1302
  %v1342 = vpack.c.bf16 %v1305, %v1304
  %v1343 = vpack.c.bf16 %v1307, %v1306
  %v1344 = vpack.c.bf16 %v1309, %v1308
  %v1345 = vpack.c.bf16 %v1311, %v1310
  %v1346 = vpack.c.bf16 %v1313, %v1312
  %v1347 = vpack.c.bf16 %v1315, %v1314
  %v1348 = vpack.c.bf16 %v1317, %v1316
  %v1349 = vpack.c.bf16 %v1319, %v1318
  %v1350 = vpack.c.bf16 %v1321, %v1320
  %v1351 = vpack.c.bf16 %v1323, %v1322
  %v1352 = vpack.c.bf16 %v1325, %v1324
  %v1353 = vpack.c.bf16 %v1327, %v1326
  %v1354 = vpack.c.bf16 %v1329, %v1328
  %v1355 = vpack.c.bf16 %v1330, %v1330
  %v1381 = vunpack.c.l.b16 %v1331
  %v1382 = vunpack.c.h.b16 %v1331
  %v1383 = vunpack.c.l.b16 %v1332
  %v1384 = vunpack.c.h.b16 %v1332
  %v1385 = vunpack.c.l.b16 %v1333
  %v1386 = vunpack.c.h.b16 %v1333
  %v1387 = vunpack.c.l.b16 %v1334
  %v1388 = vunpack.c.h.b16 %v1334
  %v1389 = vunpack.c.l.b16 %v1335
  %v1390 = vunpack.c.h.b16 %v1335
  %v1391 = vunpack.c.l.b16 %v1336
  %v1392 = vunpack.c.h.b16 %v1336
  %v1393 = vunpack.c.l.b16 %v1337
  %v1394 = vunpack.c.h.b16 %v1337
  %v1395 = vunpack.c.l.b16 %v1338
  %v1396 = vunpack.c.h.b16 %v1338
  %v1397 = vunpack.c.l.b16 %v1339
  %v1398 = vunpack.c.h.b16 %v1339
  %v1399 = vunpack.c.l.b16 %v1340
  %v1400 = vunpack.c.h.b16 %v1340
  %v1401 = vunpack.c.l.b16 %v1341
  %v1402 = vunpack.c.h.b16 %v1341
  %v1403 = vunpack.c.l.b16 %v1342
  %v1404 = vunpack.c.h.b16 %v1342
  %v1405 = vunpack.c.l.b16 %v1343
  %v1406 = vunpack.c.h.b16 %v1343
  %v1407 = vunpack.c.l.b16 %v1344
  %v1408 = vunpack.c.h.b16 %v1344
  %v1409 = vunpack.c.l.b16 %v1345
  %v1410 = vunpack.c.h.b16 %v1345
  %v1411 = vunpack.c.l.b16 %v1346
  %v1412 = vunpack.c.h.b16 %v1346
  %v1413 = vunpack.c.l.b16 %v1347
  %v1414 = vunpack.c.h.b16 %v1347
  %v1415 = vunpack.c.l.b16 %v1348
  %v1416 = vunpack.c.h.b16 %v1348
  %v1417 = vunpack.c.l.b16 %v1349
  %v1418 = vunpack.c.h.b16 %v1349
  %v1419 = vunpack.c.l.b16 %v1350
  %v1420 = vunpack.c.h.b16 %v1350
  %v1421 = vunpack.c.l.b16 %v1351
  %v1422 = vunpack.c.h.b16 %v1351
  %v1423 = vunpack.c.l.b16 %v1352
  %v1424 = vunpack.c.h.b16 %v1352
  %v1425 = vunpack.c.l.b16 %v1353
  %v1426 = vunpack.c.h.b16 %v1353
  %v1427 = vunpack.c.l.b16 %v1354
  %v1428 = vunpack.c.h.b16 %v1354
  %v1429 = vunpack.c.l.b16 %v1355
  %v1430 = vpack.c.b16 %v1381, %v1381
  %v1431 = vpack.c.b16 %v1382, %v1382
  %v1432 = vpack.c.b16 %v1383, %v1383
  %v1433 = vpack.c.b16 %v1384, %v1384
  %v1434 = vpack.c.b16 %v1385, %v1385
  %v1435 = vpack.c.b16 %v1386, %v1386
  %v1436 = vpack.c.b16 %v1387, %v1387
  %v1437 = vpack.c.b16 %v1388, %v1388
  %v1438 = vpack.c.b16 %v1389, %v1389
  %v1439 = vpack.c.b16 %v1390, %v1390
  %v1440 = vpack.c.b16 %v1391, %v1391
  %v1441 = vpack.c.b16 %v1392, %v1392
  %v1442 = vpack.c.b16 %v1393, %v1393
  %v1443 = vpack.c.b16 %v1394, %v1394
  %v1444 = vpack.c.b16 %v1395, %v1395
  %v1445 = vpack.c.b16 %v1396, %v1396
  %v1446 = vpack.c.b16 %v1397, %v1397
  %v1447 = vpack.c.b16 %v1398, %v1398
  %v1448 = vpack.c.b16 %v1399, %v1399
  %v1449 = vpack.c.b16 %v1400, %v1400
  %v1450 = vpack.c.b16 %v1401, %v1401
  %v1451 = vpack.c.b16 %v1402, %v1402
  %v1452 = vpack.c.b16 %v1403, %v1403
  %v1453 = vpack.c.b16 %v1404, %v1404
  %v1454 = vpack.c.b16 %v1405, %v1405
  %v1455 = vpack.c.b16 %v1406, %v1406
  %v1456 = vpack.c.b16 %v1407, %v1407
  %v1457 = vpack.c.b16 %v1408, %v1408
  %v1458 = vpack.c.b16 %v1409, %v1409
  %v1459 = vpack.c.b16 %v1410, %v1410
  %v1460 = vpack.c.b16 %v1411, %v1411
  %v1461 = vpack.c.b16 %v1412, %v1412
  %v1462 = vpack.c.b16 %v1413, %v1413
  %v1463 = vpack.c.b16 %v1414, %v1414
  %v1464 = vpack.c.b16 %v1415, %v1415
  %v1465 = vpack.c.b16 %v1416, %v1416
  %v1466 = vpack.c.b16 %v1417, %v1417
  %v1467 = vpack.c.b16 %v1418, %v1418
  %v1468 = vpack.c.b16 %v1419, %v1419
  %v1469 = vpack.c.b16 %v1420, %v1420
  %v1470 = vpack.c.b16 %v1421, %v1421
  %v1471 = vpack.c.b16 %v1422, %v1422
  %v1472 = vpack.c.b16 %v1423, %v1423
  %v1473 = vpack.c.b16 %v1424, %v1424
  %v1474 = vpack.c.b16 %v1425, %v1425
  %v1475 = vpack.c.b16 %v1426, %v1426
  %v1476 = vpack.c.b16 %v1427, %v1427
  %v1477 = vpack.c.b16 %v1428, %v1428
  %v1478 = vpack.c.b16 %v1429, %v1429
  %vm1528 = vcmask 519168
  %1529 = vst.msk [vmem:[%s4] sm:$0xf] %vm1528, %v1430
  %1530 = vst.msk [vmem:[%s4 + $0x4] sm:$0xf] %vm1528, %v1431
  %1531 = vst.msk [vmem:[%s4 + $0x8] sm:$0xf] %vm1528, %v1432
  %1532 = vst.msk [vmem:[%s4 + $0xc] sm:$0xf] %vm1528, %v1433
  %1533 = vst.msk [vmem:[%s4 + $0x10] sm:$0xf] %vm1528, %v1434
  %1534 = vst.msk [vmem:[%s4 + $0x14] sm:$0xf] %vm1528, %v1435
  %1535 = vst.msk [vmem:[%s4 + $0x18] sm:$0xf] %vm1528, %v1436
  %1536 = vst.msk [vmem:[%s4 + $0x1c] sm:$0xf] %vm1528, %v1437
  %1537 = vst.msk [vmem:[%s4 + $0x20] sm:$0xf] %vm1528, %v1438
  %1538 = vst.msk [vmem:[%s4 + $0x24] sm:$0xf] %vm1528, %v1439
  %1539 = vst.msk [vmem:[%s4 + $0x28] sm:$0xf] %vm1528, %v1440
  %1540 = vst.msk [vmem:[%s4 + $0x2c] sm:$0xf] %vm1528, %v1441
  %1541 = vst.msk [vmem:[%s4 + $0x30] sm:$0xf] %vm1528, %v1442
  %1542 = vst.msk [vmem:[%s4 + $0x34] sm:$0xf] %vm1528, %v1443
  %1543 = vst.msk [vmem:[%s4 + $0x38] sm:$0xf] %vm1528, %v1444
  %1544 = vst.msk [vmem:[%s4 + $0x3c] sm:$0xf] %vm1528, %v1445
  %1545 = vst.msk [vmem:[%s4 + $0x40] sm:$0xf] %vm1528, %v1446
  %1546 = vst.msk [vmem:[%s4 + $0x44] sm:$0xf] %vm1528, %v1447
  %1547 = vst.msk [vmem:[%s4 + $0x48] sm:$0xf] %vm1528, %v1448
  %1548 = vst.msk [vmem:[%s4 + $0x4c] sm:$0xf] %vm1528, %v1449
  %1549 = vst.msk [vmem:[%s4 + $0x50] sm:$0xf] %vm1528, %v1450
  %1550 = vst.msk [vmem:[%s4 + $0x54] sm:$0xf] %vm1528, %v1451
  %1551 = vst.msk [vmem:[%s4 + $0x58] sm:$0xf] %vm1528, %v1452
  %1552 = vst.msk [vmem:[%s4 + $0x5c] sm:$0xf] %vm1528, %v1453
  %1553 = vst.msk [vmem:[%s4 + $0x60] sm:$0xf] %vm1528, %v1454
  %1554 = vst.msk [vmem:[%s4 + $0x64] sm:$0xf] %vm1528, %v1455
  %1555 = vst.msk [vmem:[%s4 + $0x68] sm:$0xf] %vm1528, %v1456
  %1556 = vst.msk [vmem:[%s4 + $0x6c] sm:$0xf] %vm1528, %v1457
  %1557 = vst.msk [vmem:[%s4 + $0x70] sm:$0xf] %vm1528, %v1458
  %1558 = vst.msk [vmem:[%s4 + $0x74] sm:$0xf] %vm1528, %v1459
  %1559 = vst.msk [vmem:[%s4 + $0x78] sm:$0xf] %vm1528, %v1460
  %1560 = vst.msk [vmem:[%s4 + $0x7c] sm:$0xf] %vm1528, %v1461
  %1561 = vst.msk [vmem:[%s4 + $0x80] sm:$0xf] %vm1528, %v1462
  %1562 = vst.msk [vmem:[%s4 + $0x84] sm:$0xf] %vm1528, %v1463
  %1563 = vst.msk [vmem:[%s4 + $0x88] sm:$0xf] %vm1528, %v1464
  %1564 = vst.msk [vmem:[%s4 + $0x8c] sm:$0xf] %vm1528, %v1465
  %1565 = vst.msk [vmem:[%s4 + $0x90] sm:$0xf] %vm1528, %v1466
  %1566 = vst.msk [vmem:[%s4 + $0x94] sm:$0xf] %vm1528, %v1467
  %1567 = vst.msk [vmem:[%s4 + $0x98] sm:$0xf] %vm1528, %v1468
  %1568 = vst.msk [vmem:[%s4 + $0x9c] sm:$0xf] %vm1528, %v1469
  %1569 = vst.msk [vmem:[%s4 + $0xa0] sm:$0xf] %vm1528, %v1470
  %1570 = vst.msk [vmem:[%s4 + $0xa4] sm:$0xf] %vm1528, %v1471
  %1571 = vst.msk [vmem:[%s4 + $0xa8] sm:$0xf] %vm1528, %v1472
  %1572 = vst.msk [vmem:[%s4 + $0xac] sm:$0xf] %vm1528, %v1473
  %1573 = vst.msk [vmem:[%s4 + $0xb0] sm:$0xf] %vm1528, %v1474
  %1574 = vst.msk [vmem:[%s4 + $0xb4] sm:$0xf] %vm1528, %v1475
  %1575 = vst.msk [vmem:[%s4 + $0xb8] sm:$0xf] %vm1528, %v1476
  %1576 = vst.msk [vmem:[%s4 + $0xbc] sm:$0xf] %vm1528, %v1477
  %1577 = vst.msk [vmem:[%s4 + $0xc0] sm:$0xf] %vm1528, %v1478
  // Predicated region
  $region18: #{net_forward.7} parent=0 // pred_check
    _
  $region19: #{net_forward.7} parent=0 // pred_check_branch
    %1579 = sbr.rel (0) target = $region21
  $region20: #{net_forward.7} parent=0 // pred_region
    _
  $region21: #{net_forward.7} parent=0 // pred_fallthru
    _
  // Predicated region
  $region22: #{net_forward.7} parent=0 // pred_check
    _
  $region23: #{net_forward.7} parent=0 // pred_check_branch
    %1581 = sbr.rel (0) target = $region25
  $region24: #{net_forward.7} parent=0 // pred_region
    _
  $region25: #{net_forward.7} parent=0 // pred_fallthru
    _

// kernel: net_forward.8
$region0: #{net_forward.8}
  #allocation0 [shape = 'u32[]', space=smem, size = 0x4, offset = 0x4, fixed_abs, tag = 'smem constant byte address 0x4 - core index']
  #allocation1 [shape = 'u32[144,128]{1,0:T(1,128)}', space=vmem, size = 0x12000, scoped, tag = 'internal scratch']
  %s0 = inlined_call_operand.vmem [shape: bf16[392,576], index: 0, kind: input, shape index: {}]
  %s1 = inlined_call_operand.vmem [shape: bf16[576,64], index: 1, kind: input, shape index: {}]
  %s2 = inlined_call_operand.vmem [shape: f32[1,64], index: 2, kind: input, shape index: {}]
  %s3 = inlined_call_operand.vmem [shape: f32[1,64], index: 3, kind: input, shape index: {}]
  %s4 = inlined_call_operand.vmem [shape: bf16[392,64], index: 4, kind: output, shape index: {}]
  %s5 = sld [smem:[#allocation0]]
  $region26: #{net_forward.8} parent=0
    _
  %s7 = ssub.s32 1, %s5
  %s8 = scalar_select 0, %s7, %s5
  // Predicated region
  $region2: #{net_forward.8} parent=0 // pred_check
    _
  $region3: #{net_forward.8} parent=0 // pred_check_branch
    %10 = sbr.rel (0) target = $region5
  $region4: #{net_forward.8} parent=0 // pred_region
    _
  $region5: #{net_forward.8} parent=0 // pred_fallthru
    _
  // Predicated region
  $region6: #{net_forward.8} parent=0 // pred_check
    _
  $region7: #{net_forward.8} parent=0 // pred_check_branch
    %12 = sbr.rel (0) target = $region9
  $region8: #{net_forward.8} parent=0 // pred_region
    _
  $region9: #{net_forward.8} parent=0 // pred_fallthru
    _
  // Predicated region
  $region10: #{net_forward.8} parent=0 // pred_check
    _
  $region11: #{net_forward.8} parent=0 // pred_check_branch
    %14 = sbr.rel (0) target = $region13
  $region12: #{net_forward.8} parent=0 // pred_region
    _
  $region13: #{net_forward.8} parent=0 // pred_fallthru
    _
  // Predicated region
  $region14: #{net_forward.8} parent=0 // pred_check
    _
  $region15: #{net_forward.8} parent=0 // pred_check_branch
    %16 = sbr.rel (0) target = $region17
  $region16: #{net_forward.8} parent=0 // pred_region
    _
  $region17: #{net_forward.8} parent=0 // pred_fallthru
    _
  %v18 = vld [vmem:[%s0] sm:$0xff]
  %v19 = vld [vmem:[%s0 + $0x8] sm:$0xff]
  %v20 = vld [vmem:[%s0 + $0x10] sm:$0xf]
  %v21 = vld [vmem:[%s0 + $0x14] sm:$0xff]
  %v22 = vld [vmem:[%s0 + $0x1c] sm:$0xff]
  %v23 = vld [vmem:[%s0 + $0x24] sm:$0xf]
  %v24 = vld [vmem:[%s0 + $0x28] sm:$0xff]
  %v25 = vld [vmem:[%s0 + $0x30] sm:$0xff]
  %v26 = vld [vmem:[%s0 + $0x38] sm:$0xf]
  %v27 = vld [vmem:[%s0 + $0x3c] sm:$0xff]
  %v28 = vld [vmem:[%s0 + $0x44] sm:$0xff]
  %v29 = vld [vmem:[%s0 + $0x4c] sm:$0xf]
  %v30 = vld [vmem:[%s0 + $0x50] sm:$0xff]
  %v31 = vld [vmem:[%s0 + $0x58] sm:$0xff]
  %v32 = vld [vmem:[%s0 + $0x60] sm:$0xf]
  %v33 = vld [vmem:[%s0 + $0x64] sm:$0xff]
  %v34 = vld [vmem:[%s0 + $0x6c] sm:$0xff]
  %v35 = vld [vmem:[%s0 + $0x74] sm:$0xf]
  %v36 = vld [vmem:[%s0 + $0x78] sm:$0xff]
  %v37 = vld [vmem:[%s0 + $0x80] sm:$0xff]
  %v38 = vld [vmem:[%s0 + $0x88] sm:$0xf]
  %v39 = vld [vmem:[%s0 + $0x8c] sm:$0xff]
  %v40 = vld [vmem:[%s0 + $0x94] sm:$0xff]
  %v41 = vld [vmem:[%s0 + $0x9c] sm:$0xf]
  %v42 = vld [vmem:[%s0 + $0xa0] sm:$0xff]
  %v43 = vld [vmem:[%s0 + $0xa8] sm:$0xff]
  %v44 = vld [vmem:[%s0 + $0xb0] sm:$0xf]
  %v45 = vld [vmem:[%s0 + $0xb4] sm:$0xff]
  %v46 = vld [vmem:[%s0 + $0xbc] sm:$0xff]
  %v47 = vld [vmem:[%s0 + $0xc4] sm:$0xf]
  %v48 = vld [vmem:[%s0 + $0xc8] sm:$0xff]
  %v49 = vld [vmem:[%s0 + $0xd0] sm:$0xff]
  %v50 = vld [vmem:[%s0 + $0xd8] sm:$0xf]
  %v51 = vld [vmem:[%s0 + $0xdc] sm:$0xff]
  %v52 = vld [vmem:[%s0 + $0xe4] sm:$0xff]
  %v53 = vld [vmem:[%s0 + $0xec] sm:$0xf]
  %v54 = vld [vmem:[%s0 + $0xf0] sm:$0xff]
  %v55 = vld [vmem:[%s0 + $0xf8] sm:$0xff]
  %v56 = vld [vmem:[%s0 + $0x100] sm:$0xf]
  %v57 = vld [vmem:[%s0 + $0x104] sm:$0xff]
  %v58 = vld [vmem:[%s0 + $0x10c] sm:$0xff]
  %v59 = vld [vmem:[%s0 + $0x114] sm:$0xf]
  %v60 = vld [vmem:[%s0 + $0x118] sm:$0xff]
  %v61 = vld [vmem:[%s0 + $0x120] sm:$0xff]
  %v62 = vld [vmem:[%s0 + $0x128] sm:$0xf]
  %v63 = vld [vmem:[%s0 + $0x12c] sm:$0xff]
  %v64 = vld [vmem:[%s0 + $0x134] sm:$0xff]
  %v65 = vld [vmem:[%s0 + $0x13c] sm:$0xf]
  %v66 = vld [vmem:[%s0 + $0x140] sm:$0xff]
  %v67 = vld [vmem:[%s0 + $0x148] sm:$0xff]
  %v68 = vld [vmem:[%s0 + $0x150] sm:$0xf]
  %v69 = vld [vmem:[%s0 + $0x154] sm:$0xff]
  %v70 = vld [vmem:[%s0 + $0x15c] sm:$0xff]
  %v71 = vld [vmem:[%s0 + $0x164] sm:$0xf]
  %v72 = vld [vmem:[%s0 + $0x168] sm:$0xff]
  %v73 = vld [vmem:[%s0 + $0x170] sm:$0xff]
  %v74 = vld [vmem:[%s0 + $0x178] sm:$0xf]
  %v75 = vld [vmem:[%s0 + $0x17c] sm:$0xff]
  %v76 = vld [vmem:[%s0 + $0x184] sm:$0xff]
  %v77 = vld [vmem:[%s0 + $0x18c] sm:$0xf]
  %v78 = vld [vmem:[%s0 + $0x190] sm:$0xff]
  %v79 = vld [vmem:[%s0 + $0x198] sm:$0xff]
  %v80 = vld [vmem:[%s0 + $0x1a0] sm:$0xf]
  %v81 = vld [vmem:[%s0 + $0x1a4] sm:$0xff]
  %v82 = vld [vmem:[%s0 + $0x1ac] sm:$0xff]
  %v83 = vld [vmem:[%s0 + $0x1b4] sm:$0xf]
  %v84 = vld [vmem:[%s0 + $0x1b8] sm:$0xff]
  %v85 = vld [vmem:[%s0 + $0x1c0] sm:$0xff]
  %v86 = vld [vmem:[%s0 + $0x1c8] sm:$0xf]
  %v87 = vld [vmem:[%s0 + $0x1cc] sm:$0xff]
  %v88 = vld [vmem:[%s0 + $0x1d4] sm:$0xff]
  %v89 = vld [vmem:[%s0 + $0x1dc] sm:$0xf]
  %v90 = vld [vmem:[%s0 + $0x1e0] sm:$0xff]
  %v91 = vld [vmem:[%s0 + $0x1e8] sm:$0xff]
  %v92 = vld [vmem:[%s0 + $0x1f0] sm:$0xf]
  %v93 = vld [vmem:[%s0 + $0x1f4] sm:$0xff]
  %v94 = vld [vmem:[%s0 + $0x1fc] sm:$0xff]
  %v95 = vld [vmem:[%s0 + $0x204] sm:$0xf]
  %v96 = vld [vmem:[%s0 + $0x208] sm:$0xff]
  %v97 = vld [vmem:[%s0 + $0x210] sm:$0xff]
  %v98 = vld [vmem:[%s0 + $0x218] sm:$0xf]
  %v99 = vld [vmem:[%s0 + $0x21c] sm:$0xff]
  %v100 = vld [vmem:[%s0 + $0x224] sm:$0xff]
  %v101 = vld [vmem:[%s0 + $0x22c] sm:$0xf]
  %v102 = vld [vmem:[%s0 + $0x230] sm:$0xff]
  %v103 = vld [vmem:[%s0 + $0x238] sm:$0xff]
  %v104 = vld [vmem:[%s0 + $0x240] sm:$0xf]
  %v105 = vld [vmem:[%s0 + $0x244] sm:$0xff]
  %v106 = vld [vmem:[%s0 + $0x24c] sm:$0xff]
  %v107 = vld [vmem:[%s0 + $0x254] sm:$0xf]
  %v108 = vld [vmem:[%s0 + $0x258] sm:$0xff]
  %v109 = vld [vmem:[%s0 + $0x260] sm:$0xff]
  %v110 = vld [vmem:[%s0 + $0x268] sm:$0xf]
  %v111 = vld [vmem:[%s0 + $0x26c] sm:$0xff]
  %v112 = vld [vmem:[%s0 + $0x274] sm:$0xff]
  %v113 = vld [vmem:[%s0 + $0x27c] sm:$0xf]
  %v114 = vld [vmem:[%s0 + $0x280] sm:$0xff]
  %v115 = vld [vmem:[%s0 + $0x288] sm:$0xff]
  %v116 = vld [vmem:[%s0 + $0x290] sm:$0xf]
  %v117 = vld [vmem:[%s0 + $0x294] sm:$0xff]
  %v118 = vld [vmem:[%s0 + $0x29c] sm:$0xff]
  %v119 = vld [vmem:[%s0 + $0x2a4] sm:$0xf]
  %v120 = vld [vmem:[%s0 + $0x2a8] sm:$0xff]
  %v121 = vld [vmem:[%s0 + $0x2b0] sm:$0xff]
  %v122 = vld [vmem:[%s0 + $0x2b8] sm:$0xf]
  %v123 = vld [vmem:[%s0 + $0x2bc] sm:$0xff]
  %v124 = vld [vmem:[%s0 + $0x2c4] sm:$0xff]
  %v125 = vld [vmem:[%s0 + $0x2cc] sm:$0xf]
  %v126 = vld [vmem:[%s0 + $0x2d0] sm:$0xff]
  %v127 = vld [vmem:[%s0 + $0x2d8] sm:$0xff]
  %v128 = vld [vmem:[%s0 + $0x2e0] sm:$0xf]
  %v129 = vld [vmem:[%s0 + $0x2e4] sm:$0xff]
  %v130 = vld [vmem:[%s0 + $0x2ec] sm:$0xff]
  %v131 = vld [vmem:[%s0 + $0x2f4] sm:$0xf]
  %v132 = vld [vmem:[%s0 + $0x2f8] sm:$0xff]
  %v133 = vld [vmem:[%s0 + $0x300] sm:$0xff]
  %v134 = vld [vmem:[%s0 + $0x308] sm:$0xf]
  %v135 = vld [vmem:[%s0 + $0x30c] sm:$0xff]
  %v136 = vld [vmem:[%s0 + $0x314] sm:$0xff]
  %v137 = vld [vmem:[%s0 + $0x31c] sm:$0xf]
  %v138 = vld [vmem:[%s0 + $0x320] sm:$0xff]
  %v139 = vld [vmem:[%s0 + $0x328] sm:$0xff]
  %v140 = vld [vmem:[%s0 + $0x330] sm:$0xf]
  %v141 = vld [vmem:[%s0 + $0x334] sm:$0xff]
  %v142 = vld [vmem:[%s0 + $0x33c] sm:$0xff]
  %v143 = vld [vmem:[%s0 + $0x344] sm:$0xf]
  %v144 = vld [vmem:[%s0 + $0x348] sm:$0xff]
  %v145 = vld [vmem:[%s0 + $0x350] sm:$0xff]
  %v146 = vld [vmem:[%s0 + $0x358] sm:$0xf]
  %v147 = vld [vmem:[%s0 + $0x35c] sm:$0xff]
  %v148 = vld [vmem:[%s0 + $0x364] sm:$0xff]
  %v149 = vld [vmem:[%s0 + $0x36c] sm:$0xf]
  %v150 = vld [vmem:[%s0 + $0x370] sm:$0xff]
  %v151 = vld [vmem:[%s0 + $0x378] sm:$0xff]
  %v152 = vld [vmem:[%s0 + $0x380] sm:$0xf]
  %v153 = vld [vmem:[%s0 + $0x384] sm:$0xff]
  %v154 = vld [vmem:[%s0 + $0x38c] sm:$0xff]
  %v155 = vld [vmem:[%s0 + $0x394] sm:$0xf]
  %v156 = vld [vmem:[%s0 + $0x398] sm:$0xff]
  %v157 = vld [vmem:[%s0 + $0x3a0] sm:$0xff]
  %v158 = vld [vmem:[%s0 + $0x3a8] sm:$0xf]
  %v159 = vld [vmem:[%s0 + $0x3ac] sm:$0xff]
  %v160 = vld [vmem:[%s0 + $0x3b4] sm:$0xff]
  %v161 = vld [vmem:[%s0 + $0x3bc] sm:$0xf]
  %v162 = vld [vmem:[%s0 + $0x3c0] sm:$0xff]
  %v163 = vld [vmem:[%s0 + $0x3c8] sm:$0xff]
  %v164 = vld [vmem:[%s0 + $0x3d0] sm:$0xf]
  %v165 = vld [vmem:[%s1] sm:$0xf]
  %v166 = vld [vmem:[%s1 + $0x4] sm:$0xf]
  %v167 = vld [vmem:[%s1 + $0x8] sm:$0xf]
  %v168 = vld [vmem:[%s1 + $0xc] sm:$0xf]
  %v169 = vld [vmem:[%s1 + $0x10] sm:$0xf]
  %v170 = vld [vmem:[%s1 + $0x14] sm:$0xf]
  %v171 = vld [vmem:[%s1 + $0x18] sm:$0xf]
  %v172 = vld [vmem:[%s1 + $0x1c] sm:$0xf]
  %v173 = vld [vmem:[%s1 + $0x20] sm:$0xf]
  %v174 = vld [vmem:[%s1 + $0x24] sm:$0xf]
  %v175 = vld [vmem:[%s1 + $0x28] sm:$0xf]
  %v176 = vld [vmem:[%s1 + $0x2c] sm:$0xf]
  %v177 = vld [vmem:[%s1 + $0x30] sm:$0xf]
  %v178 = vld [vmem:[%s1 + $0x34] sm:$0xf]
  %v179 = vld [vmem:[%s1 + $0x38] sm:$0xf]
  %v180 = vld [vmem:[%s1 + $0x3c] sm:$0xf]
  %v181 = vld [vmem:[%s1 + $0x40] sm:$0xf]
  %v182 = vld [vmem:[%s1 + $0x44] sm:$0xf]
  %v183 = vld [vmem:[%s1 + $0x48] sm:$0xf]
  %v184 = vld [vmem:[%s1 + $0x4c] sm:$0xf]
  %v185 = vld [vmem:[%s1 + $0x50] sm:$0xf]
  %v186 = vld [vmem:[%s1 + $0x54] sm:$0xf]
  %v187 = vld [vmem:[%s1 + $0x58] sm:$0xf]
  %v188 = vld [vmem:[%s1 + $0x5c] sm:$0xf]
  %v189 = vld [vmem:[%s1 + $0x60] sm:$0xf]
  %v190 = vld [vmem:[%s1 + $0x64] sm:$0xf]
  %v191 = vld [vmem:[%s1 + $0x68] sm:$0xf]
  %v192 = vld [vmem:[%s1 + $0x6c] sm:$0xf]
  %v193 = vld [vmem:[%s1 + $0x70] sm:$0xf]
  %v194 = vld [vmem:[%s1 + $0x74] sm:$0xf]
  %v195 = vld [vmem:[%s1 + $0x78] sm:$0xf]
  %v196 = vld [vmem:[%s1 + $0x7c] sm:$0xf]
  %v197 = vld [vmem:[%s1 + $0x80] sm:$0xf]
  %v198 = vld [vmem:[%s1 + $0x84] sm:$0xf]
  %v199 = vld [vmem:[%s1 + $0x88] sm:$0xf]
  %v200 = vld [vmem:[%s1 + $0x8c] sm:$0xf]
  %v201 = vld [vmem:[%s1 + $0x90] sm:$0xf]
  %v202 = vld [vmem:[%s1 + $0x94] sm:$0xf]
  %v203 = vld [vmem:[%s1 + $0x98] sm:$0xf]
  %v204 = vld [vmem:[%s1 + $0x9c] sm:$0xf]
  %v205 = vld [vmem:[%s1 + $0xa0] sm:$0xf]
  %v206 = vld [vmem:[%s1 + $0xa4] sm:$0xf]
  %v207 = vld [vmem:[%s1 + $0xa8] sm:$0xf]
  %v208 = vld [vmem:[%s1 + $0xac] sm:$0xf]
  %v209 = vld [vmem:[%s1 + $0xb0] sm:$0xf]
  %v210 = vld [vmem:[%s1 + $0xb4] sm:$0xf]
  %v211 = vld [vmem:[%s1 + $0xb8] sm:$0xf]
  %v212 = vld [vmem:[%s1 + $0xbc] sm:$0xf]
  %v213 = vld [vmem:[%s1 + $0xc0] sm:$0xf]
  %v214 = vld [vmem:[%s1 + $0xc4] sm:$0xf]
  %v215 = vld [vmem:[%s1 + $0xc8] sm:$0xf]
  %v216 = vld [vmem:[%s1 + $0xcc] sm:$0xf]
  %v217 = vld [vmem:[%s1 + $0xd0] sm:$0xf]
  %v218 = vld [vmem:[%s1 + $0xd4] sm:$0xf]
  %v219 = vld [vmem:[%s1 + $0xd8] sm:$0xf]
  %v220 = vld [vmem:[%s1 + $0xdc] sm:$0xf]
  %v221 = vld [vmem:[%s1 + $0xe0] sm:$0xf]
  %v222 = vld [vmem:[%s1 + $0xe4] sm:$0xf]
  %v223 = vld [vmem:[%s1 + $0xe8] sm:$0xf]
  %v224 = vld [vmem:[%s1 + $0xec] sm:$0xf]
  %v225 = vld [vmem:[%s1 + $0xf0] sm:$0xf]
  %v226 = vld [vmem:[%s1 + $0xf4] sm:$0xf]
  %v227 = vld [vmem:[%s1 + $0xf8] sm:$0xf]
  %v228 = vld [vmem:[%s1 + $0xfc] sm:$0xf]
  %v229 = vld [vmem:[%s1 + $0x100] sm:$0xf]
  %v230 = vld [vmem:[%s1 + $0x104] sm:$0xf]
  %v231 = vld [vmem:[%s1 + $0x108] sm:$0xf]
  %v232 = vld [vmem:[%s1 + $0x10c] sm:$0xf]
  %v233 = vld [vmem:[%s1 + $0x110] sm:$0xf]
  %v234 = vld [vmem:[%s1 + $0x114] sm:$0xf]
  %v235 = vld [vmem:[%s1 + $0x118] sm:$0xf]
  %v236 = vld [vmem:[%s1 + $0x11c] sm:$0xf]
  %v384 = vunpack.c.l.b16 %v18
  %v385 = vunpack.c.h.b16 %v18
  %v386 = vunpack.c.l.b16 %v19
  %v387 = vunpack.c.h.b16 %v19
  %v388 = vunpack.c.l.b16 %v20
  %v389 = vunpack.c.l.b16 %v21
  %v390 = vunpack.c.h.b16 %v21
  %v391 = vunpack.c.l.b16 %v22
  %v392 = vunpack.c.h.b16 %v22
  %v393 = vunpack.c.l.b16 %v23
  %v394 = vunpack.c.l.b16 %v24
  %v395 = vunpack.c.h.b16 %v24
  %v396 = vunpack.c.l.b16 %v25
  %v397 = vunpack.c.h.b16 %v25
  %v398 = vunpack.c.l.b16 %v26
  %v399 = vunpack.c.l.b16 %v27
  %v400 = vunpack.c.h.b16 %v27
  %v401 = vunpack.c.l.b16 %v28
  %v402 = vunpack.c.h.b16 %v28
  %v403 = vunpack.c.l.b16 %v29
  %v404 = vunpack.c.l.b16 %v30
  %v405 = vunpack.c.h.b16 %v30
  %v406 = vunpack.c.l.b16 %v31
  %v407 = vunpack.c.h.b16 %v31
  %v408 = vunpack.c.l.b16 %v32
  %v409 = vunpack.c.l.b16 %v33
  %v410 = vunpack.c.h.b16 %v33
  %v411 = vunpack.c.l.b16 %v34
  %v412 = vunpack.c.h.b16 %v34
  %v413 = vunpack.c.l.b16 %v35
  %v414 = vunpack.c.l.b16 %v36
  %v415 = vunpack.c.h.b16 %v36
  %v416 = vunpack.c.l.b16 %v37
  %v417 = vunpack.c.h.b16 %v37
  %v418 = vunpack.c.l.b16 %v38
  %v419 = vunpack.c.l.b16 %v39
  %v420 = vunpack.c.h.b16 %v39
  %v421 = vunpack.c.l.b16 %v40
  %v422 = vunpack.c.h.b16 %v40
  %v423 = vunpack.c.l.b16 %v41
  %v424 = vunpack.c.l.b16 %v42
  %v425 = vunpack.c.h.b16 %v42
  %v426 = vunpack.c.l.b16 %v43
  %v427 = vunpack.c.h.b16 %v43
  %v428 = vunpack.c.l.b16 %v44
  %v429 = vunpack.c.l.b16 %v45
  %v430 = vunpack.c.h.b16 %v45
  %v431 = vunpack.c.l.b16 %v46
  %v432 = vunpack.c.h.b16 %v46
  %v433 = vunpack.c.l.b16 %v47
  %v434 = vunpack.c.l.b16 %v48
  %v435 = vunpack.c.h.b16 %v48
  %v436 = vunpack.c.l.b16 %v49
  %v437 = vunpack.c.h.b16 %v49
  %v438 = vunpack.c.l.b16 %v50
  %v439 = vunpack.c.l.b16 %v51
  %v440 = vunpack.c.h.b16 %v51
  %v441 = vunpack.c.l.b16 %v52
  %v442 = vunpack.c.h.b16 %v52
  %v443 = vunpack.c.l.b16 %v53
  %v444 = vunpack.c.l.b16 %v54
  %v445 = vunpack.c.h.b16 %v54
  %v446 = vunpack.c.l.b16 %v55
  %v447 = vunpack.c.h.b16 %v55
  %v448 = vunpack.c.l.b16 %v56
  %v449 = vunpack.c.l.b16 %v57
  %v450 = vunpack.c.h.b16 %v57
  %v451 = vunpack.c.l.b16 %v58
  %v452 = vunpack.c.h.b16 %v58
  %v453 = vunpack.c.l.b16 %v59
  %v454 = vunpack.c.l.b16 %v60
  %v455 = vunpack.c.h.b16 %v60
  %v456 = vunpack.c.l.b16 %v61
  %v457 = vunpack.c.h.b16 %v61
  %v458 = vunpack.c.l.b16 %v62
  %v459 = vunpack.c.l.b16 %v63
  %v460 = vunpack.c.h.b16 %v63
  %v461 = vunpack.c.l.b16 %v64
  %v462 = vunpack.c.h.b16 %v64
  %v463 = vunpack.c.l.b16 %v65
  %v464 = vunpack.c.l.b16 %v66
  %v465 = vunpack.c.h.b16 %v66
  %v466 = vunpack.c.l.b16 %v67
  %v467 = vunpack.c.h.b16 %v67
  %v468 = vunpack.c.l.b16 %v68
  %v469 = vunpack.c.l.b16 %v69
  %v470 = vunpack.c.h.b16 %v69
  %v471 = vunpack.c.l.b16 %v70
  %v472 = vunpack.c.h.b16 %v70
  %v473 = vunpack.c.l.b16 %v71
  %v474 = vunpack.c.l.b16 %v72
  %v475 = vunpack.c.h.b16 %v72
  %v476 = vunpack.c.l.b16 %v73
  %v477 = vunpack.c.h.b16 %v73
  %v478 = vunpack.c.l.b16 %v74
  %v479 = vunpack.c.l.b16 %v75
  %v480 = vunpack.c.h.b16 %v75
  %v481 = vunpack.c.l.b16 %v76
  %v482 = vunpack.c.h.b16 %v76
  %v483 = vunpack.c.l.b16 %v77
  %v484 = vunpack.c.l.b16 %v78
  %v485 = vunpack.c.h.b16 %v78
  %v486 = vunpack.c.l.b16 %v79
  %v487 = vunpack.c.h.b16 %v79
  %v488 = vunpack.c.l.b16 %v80
  %v489 = vunpack.c.l.b16 %v81
  %v490 = vunpack.c.h.b16 %v81
  %v491 = vunpack.c.l.b16 %v82
  %v492 = vunpack.c.h.b16 %v82
  %v493 = vunpack.c.l.b16 %v83
  %v494 = vunpack.c.l.b16 %v84
  %v495 = vunpack.c.h.b16 %v84
  %v496 = vunpack.c.l.b16 %v85
  %v497 = vunpack.c.h.b16 %v85
  %v498 = vunpack.c.l.b16 %v86
  %v499 = vunpack.c.l.b16 %v87
  %v500 = vunpack.c.h.b16 %v87
  %v501 = vunpack.c.l.b16 %v88
  %v502 = vunpack.c.h.b16 %v88
  %v503 = vunpack.c.l.b16 %v89
  %v504 = vunpack.c.l.b16 %v90
  %v505 = vunpack.c.h.b16 %v90
  %v506 = vunpack.c.l.b16 %v91
  %v507 = vunpack.c.h.b16 %v91
  %v508 = vunpack.c.l.b16 %v92
  %v509 = vunpack.c.l.b16 %v93
  %v510 = vunpack.c.h.b16 %v93
  %v511 = vunpack.c.l.b16 %v94
  %v512 = vunpack.c.h.b16 %v94
  %v513 = vunpack.c.l.b16 %v95
  %v514 = vunpack.c.l.b16 %v96
  %v515 = vunpack.c.h.b16 %v96
  %v516 = vunpack.c.l.b16 %v97
  %v517 = vunpack.c.h.b16 %v97
  %v518 = vunpack.c.l.b16 %v98
  %v519 = vunpack.c.l.b16 %v99
  %v520 = vunpack.c.h.b16 %v99
  %v521 = vunpack.c.l.b16 %v100
  %v522 = vunpack.c.h.b16 %v100
  %v523 = vunpack.c.l.b16 %v101
  %v524 = vunpack.c.l.b16 %v102
  %v525 = vunpack.c.h.b16 %v102
  %v526 = vunpack.c.l.b16 %v103
  %v527 = vunpack.c.h.b16 %v103
  %v528 = vunpack.c.l.b16 %v104
  %v529 = vunpack.c.l.b16 %v105
  %v530 = vunpack.c.h.b16 %v105
  %v531 = vunpack.c.l.b16 %v106
  %v532 = vunpack.c.h.b16 %v106
  %v533 = vunpack.c.l.b16 %v107
  %v534 = vunpack.c.l.b16 %v108
  %v535 = vunpack.c.h.b16 %v108
  %v536 = vunpack.c.l.b16 %v109
  %v537 = vunpack.c.h.b16 %v109
  %v538 = vunpack.c.l.b16 %v110
  %v539 = vunpack.c.l.b16 %v111
  %v540 = vunpack.c.h.b16 %v111
  %v541 = vunpack.c.l.b16 %v112
  %v542 = vunpack.c.h.b16 %v112
  %v543 = vunpack.c.l.b16 %v113
  %v544 = vunpack.c.l.b16 %v114
  %v545 = vunpack.c.h.b16 %v114
  %v546 = vunpack.c.l.b16 %v115
  %v547 = vunpack.c.h.b16 %v115
  %v548 = vunpack.c.l.b16 %v116
  %v549 = vunpack.c.l.b16 %v117
  %v550 = vunpack.c.h.b16 %v117
  %v551 = vunpack.c.l.b16 %v118
  %v552 = vunpack.c.h.b16 %v118
  %v553 = vunpack.c.l.b16 %v119
  %v554 = vunpack.c.l.b16 %v120
  %v555 = vunpack.c.h.b16 %v120
  %v556 = vunpack.c.l.b16 %v121
  %v557 = vunpack.c.h.b16 %v121
  %v558 = vunpack.c.l.b16 %v122
  %v559 = vunpack.c.l.b16 %v123
  %v560 = vunpack.c.h.b16 %v123
  %v561 = vunpack.c.l.b16 %v124
  %v562 = vunpack.c.h.b16 %v124
  %v563 = vunpack.c.l.b16 %v125
  %v564 = vunpack.c.l.b16 %v126
  %v565 = vunpack.c.h.b16 %v126
  %v566 = vunpack.c.l.b16 %v127
  %v567 = vunpack.c.h.b16 %v127
  %v568 = vunpack.c.l.b16 %v128
  %v569 = vunpack.c.l.b16 %v129
  %v570 = vunpack.c.h.b16 %v129
  %v571 = vunpack.c.l.b16 %v130
  %v572 = vunpack.c.h.b16 %v130
  %v573 = vunpack.c.l.b16 %v131
  %v574 = vunpack.c.l.b16 %v132
  %v575 = vunpack.c.h.b16 %v132
  %v576 = vunpack.c.l.b16 %v133
  %v577 = vunpack.c.h.b16 %v133
  %v578 = vunpack.c.l.b16 %v134
  %v579 = vunpack.c.l.b16 %v135
  %v580 = vunpack.c.h.b16 %v135
  %v581 = vunpack.c.l.b16 %v136
  %v582 = vunpack.c.h.b16 %v136
  %v583 = vunpack.c.l.b16 %v137
  %v584 = vunpack.c.l.b16 %v138
  %v585 = vunpack.c.h.b16 %v138
  %v586 = vunpack.c.l.b16 %v139
  %v587 = vunpack.c.h.b16 %v139
  %v588 = vunpack.c.l.b16 %v140
  %v589 = vunpack.c.l.b16 %v141
  %v590 = vunpack.c.h.b16 %v141
  %v591 = vunpack.c.l.b16 %v142
  %v592 = vunpack.c.h.b16 %v142
  %v593 = vunpack.c.l.b16 %v143
  %v594 = vunpack.c.l.b16 %v144
  %v595 = vunpack.c.h.b16 %v144
  %v596 = vunpack.c.l.b16 %v145
  %v597 = vunpack.c.h.b16 %v145
  %v598 = vunpack.c.l.b16 %v146
  %v599 = vunpack.c.l.b16 %v147
  %v600 = vunpack.c.h.b16 %v147
  %v601 = vunpack.c.l.b16 %v148
  %v602 = vunpack.c.h.b16 %v148
  %v603 = vunpack.c.l.b16 %v149
  %v604 = vunpack.c.l.b16 %v150
  %v605 = vunpack.c.h.b16 %v150
  %v606 = vunpack.c.l.b16 %v151
  %v607 = vunpack.c.h.b16 %v151
  %v608 = vunpack.c.l.b16 %v152
  %v609 = vunpack.c.l.b16 %v153
  %v610 = vunpack.c.h.b16 %v153
  %v611 = vunpack.c.l.b16 %v154
  %v612 = vunpack.c.h.b16 %v154
  %v613 = vunpack.c.l.b16 %v155
  %v614 = vunpack.c.l.b16 %v156
  %v615 = vunpack.c.h.b16 %v156
  %v616 = vunpack.c.l.b16 %v157
  %v617 = vunpack.c.h.b16 %v157
  %v618 = vunpack.c.l.b16 %v158
  %v619 = vunpack.c.l.b16 %v159
  %v620 = vunpack.c.h.b16 %v159
  %v621 = vunpack.c.l.b16 %v160
  %v622 = vunpack.c.h.b16 %v160
  %v623 = vunpack.c.l.b16 %v161
  %v624 = vunpack.c.l.b16 %v162
  %v625 = vunpack.c.h.b16 %v162
  %v626 = vunpack.c.l.b16 %v163
  %v627 = vunpack.c.h.b16 %v163
  %v628 = vunpack.c.l.b16 %v164
  %v629 = vpack.c.b16 %v389, %v384
  %v630 = vpack.c.b16 %v390, %v385
  %v631 = vpack.c.b16 %v391, %v386
  %v632 = vpack.c.b16 %v392, %v387
  %v633 = vpack.c.b16 %v393, %v388
  %v634 = vpack.c.b16 %v399, %v394
  %v635 = vpack.c.b16 %v400, %v395
  %v636 = vpack.c.b16 %v401, %v396
  %v637 = vpack.c.b16 %v402, %v397
  %v638 = vpack.c.b16 %v403, %v398
  %v639 = vpack.c.b16 %v409, %v404
  %v640 = vpack.c.b16 %v410, %v405
  %v641 = vpack.c.b16 %v411, %v406
  %v642 = vpack.c.b16 %v412, %v407
  %v643 = vpack.c.b16 %v413, %v408
  %v644 = vpack.c.b16 %v419, %v414
  %v645 = vpack.c.b16 %v420, %v415
  %v646 = vpack.c.b16 %v421, %v416
  %v647 = vpack.c.b16 %v422, %v417
  %v648 = vpack.c.b16 %v423, %v418
  %v649 = vpack.c.b16 %v429, %v424
  %v650 = vpack.c.b16 %v430, %v425
  %v651 = vpack.c.b16 %v431, %v426
  %v652 = vpack.c.b16 %v432, %v427
  %v653 = vpack.c.b16 %v433, %v428
  %v654 = vpack.c.b16 %v439, %v434
  %v655 = vpack.c.b16 %v440, %v435
  %v656 = vpack.c.b16 %v441, %v436
  %v657 = vpack.c.b16 %v442, %v437
  %v658 = vpack.c.b16 %v443, %v438
  %v659 = vpack.c.b16 %v449, %v444
  %v660 = vpack.c.b16 %v450, %v445
  %v661 = vpack.c.b16 %v451, %v446
  %v662 = vpack.c.b16 %v452, %v447
  %v663 = vpack.c.b16 %v453, %v448
  %v664 = vpack.c.b16 %v459, %v454
  %v665 = vpack.c.b16 %v460, %v455
  %v666 = vpack.c.b16 %v461, %v456
  %v667 = vpack.c.b16 %v462, %v457
  %v668 = vpack.c.b16 %v463, %v458
  %v669 = vpack.c.b16 %v469, %v464
  %v670 = vpack.c.b16 %v470, %v465
  %v671 = vpack.c.b16 %v471, %v466
  %v672 = vpack.c.b16 %v472, %v467
  %v673 = vpack.c.b16 %v473, %v468
  %v674 = vpack.c.b16 %v479, %v474
  %v675 = vpack.c.b16 %v480, %v475
  %v676 = vpack.c.b16 %v481, %v476
  %v677 = vpack.c.b16 %v482, %v477
  %v678 = vpack.c.b16 %v483, %v478
  %v679 = vpack.c.b16 %v489, %v484
  %v680 = vpack.c.b16 %v490, %v485
  %v681 = vpack.c.b16 %v491, %v486
  %v682 = vpack.c.b16 %v492, %v487
  %v683 = vpack.c.b16 %v493, %v488
  %v684 = vpack.c.b16 %v499, %v494
  %v685 = vpack.c.b16 %v500, %v495
  %v686 = vpack.c.b16 %v501, %v496
  %v687 = vpack.c.b16 %v502, %v497
  %v688 = vpack.c.b16 %v503, %v498
  %v689 = vpack.c.b16 %v509, %v504
  %v690 = vpack.c.b16 %v510, %v505
  %v691 = vpack.c.b16 %v511, %v506
  %v692 = vpack.c.b16 %v512, %v507
  %v693 = vpack.c.b16 %v513, %v508
  %v694 = vpack.c.b16 %v519, %v514
  %v695 = vpack.c.b16 %v520, %v515
  %v696 = vpack.c.b16 %v521, %v516
  %v697 = vpack.c.b16 %v522, %v517
  %v698 = vpack.c.b16 %v523, %v518
  %v699 = vpack.c.b16 %v529, %v524
  %v700 = vpack.c.b16 %v530, %v525
  %v701 = vpack.c.b16 %v531, %v526
  %v702 = vpack.c.b16 %v532, %v527
  %v703 = vpack.c.b16 %v533, %v528
  %v704 = vpack.c.b16 %v539, %v534
  %v705 = vpack.c.b16 %v540, %v535
  %v706 = vpack.c.b16 %v541, %v536
  %v707 = vpack.c.b16 %v542, %v537
  %v708 = vpack.c.b16 %v543, %v538
  %v709 = vpack.c.b16 %v549, %v544
  %v710 = vpack.c.b16 %v550, %v545
  %v711 = vpack.c.b16 %v551, %v546
  %v712 = vpack.c.b16 %v552, %v547
  %v713 = vpack.c.b16 %v553, %v548
  %v714 = vpack.c.b16 %v559, %v554
  %v715 = vpack.c.b16 %v560, %v555
  %v716 = vpack.c.b16 %v561, %v556
  %v717 = vpack.c.b16 %v562, %v557
  %v718 = vpack.c.b16 %v563, %v558
  %v719 = vpack.c.b16 %v569, %v564
  %v720 = vpack.c.b16 %v570, %v565
  %v721 = vpack.c.b16 %v571, %v566
  %v722 = vpack.c.b16 %v572, %v567
  %v723 = vpack.c.b16 %v573, %v568
  %v724 = vpack.c.b16 %v579, %v574
  %v725 = vpack.c.b16 %v580, %v575
  %v726 = vpack.c.b16 %v581, %v576
  %v727 = vpack.c.b16 %v582, %v577
  %v728 = vpack.c.b16 %v583, %v578
  %v729 = vpack.c.b16 %v589, %v584
  %v730 = vpack.c.b16 %v590, %v585
  %v731 = vpack.c.b16 %v591, %v586
  %v732 = vpack.c.b16 %v592, %v587
  %v733 = vpack.c.b16 %v593, %v588
  %v734 = vpack.c.b16 %v599, %v594
  %v735 = vpack.c.b16 %v600, %v595
  %v736 = vpack.c.b16 %v601, %v596
  %v737 = vpack.c.b16 %v602, %v597
  %v738 = vpack.c.b16 %v603, %v598
  %v739 = vpack.c.b16 %v609, %v604
  %v740 = vpack.c.b16 %v610, %v605
  %v741 = vpack.c.b16 %v611, %v606
  %v742 = vpack.c.b16 %v612, %v607
  %v743 = vpack.c.b16 %v613, %v608
  %v744 = vpack.c.b16 %v619, %v614
  %v745 = vpack.c.b16 %v620, %v615
  %v746 = vpack.c.b16 %v621, %v616
  %v747 = vpack.c.b16 %v622, %v617
  %v748 = vpack.c.b16 %v623, %v618
  %v749 = vpack.c.b16 %v624, %v624
  %v750 = vpack.c.b16 %v625, %v625
  %v751 = vpack.c.b16 %v626, %v626
  %v752 = vpack.c.b16 %v627, %v627
  %v753 = vpack.c.b16 %v628, %v628
  %v926 = vunpack.c.l.b16 %v165
  %v927 = vunpack.c.l.b16 %v166
  %v928 = vunpack.c.l.b16 %v167
  %v929 = vunpack.c.l.b16 %v168
  %v930 = vunpack.c.l.b16 %v169
  %v931 = vunpack.c.l.b16 %v170
  %v932 = vunpack.c.l.b16 %v171
  %v933 = vunpack.c.l.b16 %v172
  %v934 = vunpack.c.l.b16 %v173
  %v935 = vunpack.c.l.b16 %v174
  %v936 = vunpack.c.l.b16 %v175
  %v937 = vunpack.c.l.b16 %v176
  %v938 = vunpack.c.l.b16 %v177
  %v939 = vunpack.c.l.b16 %v178
  %v940 = vunpack.c.l.b16 %v179
  %v941 = vunpack.c.l.b16 %v180
  %v942 = vunpack.c.l.b16 %v181
  %v943 = vunpack.c.l.b16 %v182
  %v944 = vunpack.c.l.b16 %v183
  %v945 = vunpack.c.l.b16 %v184
  %v946 = vunpack.c.l.b16 %v185
  %v947 = vunpack.c.l.b16 %v186
  %v948 = vunpack.c.l.b16 %v187
  %v949 = vunpack.c.l.b16 %v188
  %v950 = vunpack.c.l.b16 %v189
  %v951 = vunpack.c.l.b16 %v190
  %v952 = vunpack.c.l.b16 %v191
  %v953 = vunpack.c.l.b16 %v192
  %v954 = vunpack.c.l.b16 %v193
  %v955 = vunpack.c.l.b16 %v194
  %v956 = vunpack.c.l.b16 %v195
  %v957 = vunpack.c.l.b16 %v196
  %v958 = vunpack.c.l.b16 %v197
  %v959 = vunpack.c.l.b16 %v198
  %v960 = vunpack.c.l.b16 %v199
  %v961 = vunpack.c.l.b16 %v200
  %v962 = vunpack.c.l.b16 %v201
  %v963 = vunpack.c.l.b16 %v202
  %v964 = vunpack.c.l.b16 %v203
  %v965 = vunpack.c.l.b16 %v204
  %v966 = vunpack.c.l.b16 %v205
  %v967 = vunpack.c.l.b16 %v206
  %v968 = vunpack.c.l.b16 %v207
  %v969 = vunpack.c.l.b16 %v208
  %v970 = vunpack.c.l.b16 %v209
  %v971 = vunpack.c.l.b16 %v210
  %v972 = vunpack.c.l.b16 %v211
  %v973 = vunpack.c.l.b16 %v212
  %v974 = vunpack.c.l.b16 %v213
  %v975 = vunpack.c.l.b16 %v214
  %v976 = vunpack.c.l.b16 %v215
  %v977 = vunpack.c.l.b16 %v216
  %v978 = vunpack.c.l.b16 %v217
  %v979 = vunpack.c.l.b16 %v218
  %v980 = vunpack.c.l.b16 %v219
  %v981 = vunpack.c.l.b16 %v220
  %v982 = vunpack.c.l.b16 %v221
  %v983 = vunpack.c.l.b16 %v222
  %v984 = vunpack.c.l.b16 %v223
  %v985 = vunpack.c.l.b16 %v224
  %v986 = vunpack.c.l.b16 %v225
  %v987 = vunpack.c.l.b16 %v226
  %v988 = vunpack.c.l.b16 %v227
  %v989 = vunpack.c.l.b16 %v228
  %v990 = vunpack.c.l.b16 %v229
  %v991 = vunpack.c.l.b16 %v230
  %v992 = vunpack.c.l.b16 %v231
  %v993 = vunpack.c.l.b16 %v232
  %v994 = vunpack.c.l.b16 %v233
  %v995 = vunpack.c.l.b16 %v234
  %v996 = vunpack.c.l.b16 %v235
  %v997 = vunpack.c.l.b16 %v236
  %v998 = vpack.c.b16 %v927, %v926
  %v999 = vpack.c.b16 %v929, %v928
  %v1000 = vpack.c.b16 %v931, %v930
  %v1001 = vpack.c.b16 %v933, %v932
  %v1002 = vpack.c.b16 %v935, %v934
  %v1003 = vpack.c.b16 %v937, %v936
  %v1004 = vpack.c.b16 %v939, %v938
  %v1005 = vpack.c.b16 %v941, %v940
  %v1006 = vpack.c.b16 %v943, %v942
  %v1007 = vpack.c.b16 %v945, %v944
  %v1008 = vpack.c.b16 %v947, %v946
  %v1009 = vpack.c.b16 %v949, %v948
  %v1010 = vpack.c.b16 %v951, %v950
  %v1011 = vpack.c.b16 %v953, %v952
  %v1012 = vpack.c.b16 %v955, %v954
  %v1013 = vpack.c.b16 %v957, %v956
  %v1014 = vpack.c.b16 %v959, %v958
  %v1015 = vpack.c.b16 %v961, %v960
  %v1016 = vpack.c.b16 %v963, %v962
  %v1017 = vpack.c.b16 %v965, %v964
  %v1018 = vpack.c.b16 %v967, %v966
  %v1019 = vpack.c.b16 %v969, %v968
  %v1020 = vpack.c.b16 %v971, %v970
  %v1021 = vpack.c.b16 %v973, %v972
  %v1022 = vpack.c.b16 %v975, %v974
  %v1023 = vpack.c.b16 %v977, %v976
  %v1024 = vpack.c.b16 %v979, %v978
  %v1025 = vpack.c.b16 %v981, %v980
  %v1026 = vpack.c.b16 %v983, %v982
  %v1027 = vpack.c.b16 %v985, %v984
  %v1028 = vpack.c.b16 %v987, %v986
  %v1029 = vpack.c.b16 %v989, %v988
  %v1030 = vpack.c.b16 %v991, %v990
  %v1031 = vpack.c.b16 %v993, %v992
  %v1032 = vpack.c.b16 %v995, %v994
  %v1033 = vpack.c.b16 %v997, %v996
  %vm1070 = vcmask 523264
  %v1072 = vsel %vm1070, %v633, 0
  %v1075 = vsel %vm1070, %v638, 0
  %v1078 = vsel %vm1070, %v643, 0
  %v1081 = vsel %vm1070, %v648, 0
  %v1084 = vsel %vm1070, %v653, 0
  %v1087 = vsel %vm1070, %v658, 0
  %v1090 = vsel %vm1070, %v663, 0
  %v1093 = vsel %vm1070, %v668, 0
  %v1096 = vsel %vm1070, %v673, 0
  %v1099 = vsel %vm1070, %v678, 0
  %v1102 = vsel %vm1070, %v683, 0
  %v1105 = vsel %vm1070, %v688, 0
  %v1108 = vsel %vm1070, %v693, 0
  %v1111 = vsel %vm1070, %v698, 0
  %v1114 = vsel %vm1070, %v703, 0
  %v1117 = vsel %vm1070, %v708, 0
  %v1120 = vsel %vm1070, %v713, 0
  %v1123 = vsel %vm1070, %v718, 0
  %v1126 = vsel %vm1070, %v723, 0
  %v1129 = vsel %vm1070, %v728, 0
  %v1132 = vsel %vm1070, %v733, 0
  %v1135 = vsel %vm1070, %v738, 0
  %v1138 = vsel %vm1070, %v743, 0
  %v1141 = vsel %vm1070, %v748, 0
  %v1144 = vsel %vm1070, %v753, 0
  %1146 = vmatprep.subr.bf16.mxu0 0
  %1147 = vmatpush1.bf16.msra.mxu0 %v998
  %1148 = vmatprep.subr.bf16.mxu0 0
  %1149 = vmatpush1.bf16.msra.mxu0 %v999
  %1150 = vmatprep.subr.bf16.mxu0 0
  %1151 = vmatpush1.bf16.msra.mxu0 %v1000
  %1152 = vmatprep.subr.bf16.mxu0 0
  %1153 = vmatpush1.bf16.msra.mxu0 %v1001
  %1154 = vmatprep.subr.bf16.mxu0 0
  %1155 = vmatpush1.bf16.msra.mxu0 %v1002
  %1156 = vmatprep.subr.bf16.mxu0 0
  %1157 = vmatpush1.bf16.msra.mxu0 %v1003
  %1158 = vmatprep.subr.bf16.mxu0 0
  %1159 = vmatpush1.bf16.msra.mxu0 %v1004
  %1160 = vmatprep.subr.bf16.mxu0 0
  %1161 = vmatpush1.bf16.msra.mxu0 %v1005
  %1162 = vmatprep.subr.bf16.mxu0 0
  %1163 = vmatpush1.bf16.msra.mxu0 %v1006
  %1164 = vmatprep.subr.bf16.mxu0 0
  %1165 = vmatpush1.bf16.msra.mxu0 %v1007
  %1166 = vmatprep.subr.bf16.mxu0 0
  %1167 = vmatpush1.bf16.msra.mxu0 %v1008
  %1168 = vmatprep.subr.bf16.mxu0 0
  %1169 = vmatpush1.bf16.msra.mxu0 %v1009
  %1170 = vmatprep.subr.bf16.mxu0 0
  %1171 = vmatpush1.bf16.msra.mxu0 %v1010
  %1172 = vmatprep.subr.bf16.mxu0 0
  %1173 = vmatpush1.bf16.msra.mxu0 %v1011
  %1174 = vmatprep.subr.bf16.mxu0 0
  %1175 = vmatpush1.bf16.msra.mxu0 %v1012
  %1176 = vmatprep.subr.bf16.mxu0 0
  %1177 = vmatpush1.bf16.msra.mxu0 %v1013
  %1178 = vmatprep.mubr.bf16.mxu0 %v630
  %1179 = vmatmul.mubr.bf16.gmra.mrb[0].mxu0 %v629
  %v1180 = vpop.f32.mrb[0].mxu0
  %v1181 = vadd.f32 0.0, %v1180
  %v1182 = vpop.f32.mrb[0].mxu0
  %v1183 = vpop.f32.mrb[0].mxu0
  %v1184 = vadd.f32 0.0, %v1183
  %v1185 = vpop.f32.mrb[0].mxu0
  %1186 = vmatprep.mubr.bf16.mxu0 %v635
  %1187 = vmatmul.mubr.bf16.gmra.mrb[0].mxu0 %v634
  %v1188 = vpop.f32.mrb[0].mxu0
  %v1189 = vadd.f32 0.0, %v1188
  %v1190 = vpop.f32.mrb[0].mxu0
  %v1191 = vpop.f32.mrb[0].mxu0
  %v1192 = vadd.f32 0.0, %v1191
  %v1193 = vpop.f32.mrb[0].mxu0
  %1194 = vmatprep.mubr.bf16.mxu0 %v640
  %1195 = vmatmul.mubr.bf16.gmra.mrb[0].mxu0 %v639
  %v1196 = vpop.f32.mrb[0].mxu0
  %v1197 = vadd.f32 0.0, %v1196
  %v1198 = vpop.f32.mrb[0].mxu0
  %v1199 = vpop.f32.mrb[0].mxu0
  %v1200 = vadd.f32 0.0, %v1199
  %v1201 = vpop.f32.mrb[0].mxu0
  %1202 = vmatprep.mubr.bf16.mxu0 %v645
  %1203 = vmatmul.mubr.bf16.gmra.mrb[0].mxu0 %v644
  %v1204 = vpop.f32.mrb[0].mxu0
  %v1205 = vadd.f32 0.0, %v1204
  %v1206 = vpop.f32.mrb[0].mxu0
  %v1207 = vpop.f32.mrb[0].mxu0
  %v1208 = vadd.f32 0.0, %v1207
  %v1209 = vpop.f32.mrb[0].mxu0
  %1210 = vmatprep.mubr.bf16.mxu0 %v650
  %1211 = vmatmul.mubr.bf16.gmra.mrb[0].mxu0 %v649
  %v1212 = vpop.f32.mrb[0].mxu0
  %v1213 = vadd.f32 0.0, %v1212
  %v1214 = vpop.f32.mrb[0].mxu0
  %v1215 = vpop.f32.mrb[0].mxu0
  %v1216 = vadd.f32 0.0, %v1215
  %v1217 = vpop.f32.mrb[0].mxu0
  %1218 = vmatprep.mubr.bf16.mxu0 %v655
  %1219 = vmatmul.mubr.bf16.gmra.mrb[0].mxu0 %v654
  %v1220 = vpop.f32.mrb[0].mxu0
  %v1221 = vadd.f32 0.0, %v1220
  %v1222 = vpop.f32.mrb[0].mxu0
  %v1223 = vpop.f32.mrb[0].mxu0
  %v1224 = vadd.f32 0.0, %v1223
  %v1225 = vpop.f32.mrb[0].mxu0
  %1226 = vmatprep.mubr.bf16.mxu0 %v660
  %1227 = vmatmul.mubr.bf16.gmra.mrb[0].mxu0 %v659
  %v1228 = vpop.f32.mrb[0].mxu0
  %v1229 = vadd.f32 0.0, %v1228
  %v1230 = vpop.f32.mrb[0].mxu0
  %v1231 = vpop.f32.mrb[0].mxu0
  %v1232 = vadd.f32 0.0, %v1231
  %v1233 = vpop.f32.mrb[0].mxu0
  %1234 = vmatprep.mubr.bf16.mxu0 %v665
  %1235 = vmatmul.mubr.bf16.gmra.mrb[0].mxu0 %v664
  %v1236 = vpop.f32.mrb[0].mxu0
  %v1237 = vadd.f32 0.0, %v1236
  %v1238 = vpop.f32.mrb[0].mxu0
  %v1239 = vpop.f32.mrb[0].mxu0
  %v1240 = vadd.f32 0.0, %v1239
  %v1241 = vpop.f32.mrb[0].mxu0
  %1242 = vmatprep.mubr.bf16.mxu0 %v670
  %1243 = vmatmul.mubr.bf16.gmra.mrb[0].mxu0 %v669
  %v1244 = vpop.f32.mrb[0].mxu0
  %v1245 = vadd.f32 0.0, %v1244
  %v1246 = vpop.f32.mrb[0].mxu0
  %v1247 = vpop.f32.mrb[0].mxu0
  %v1248 = vadd.f32 0.0, %v1247
  %v1249 = vpop.f32.mrb[0].mxu0
  %1250 = vmatprep.mubr.bf16.mxu0 %v675
  %1251 = vmatmul.mubr.bf16.gmra.mrb[0].mxu0 %v674
  %v1252 = vpop.f32.mrb[0].mxu0
  %v1253 = vadd.f32 0.0, %v1252
  %v1254 = vpop.f32.mrb[0].mxu0
  %v1255 = vpop.f32.mrb[0].mxu0
  %v1256 = vadd.f32 0.0, %v1255
  %v1257 = vpop.f32.mrb[0].mxu0
  %1258 = vmatprep.mubr.bf16.mxu0 %v680
  %1259 = vmatmul.mubr.bf16.gmra.mrb[0].mxu0 %v679
  %v1260 = vpop.f32.mrb[0].mxu0
  %v1261 = vadd.f32 0.0, %v1260
  %v1262 = vpop.f32.mrb[0].mxu0
  %v1263 = vpop.f32.mrb[0].mxu0
  %v1264 = vadd.f32 0.0, %v1263
  %v1265 = vpop.f32.mrb[0].mxu0
  %1266 = vmatprep.mubr.bf16.mxu0 %v685
  %1267 = vmatmul.mubr.bf16.gmra.mrb[0].mxu0 %v684
  %v1268 = vpop.f32.mrb[0].mxu0
  %v1269 = vadd.f32 0.0, %v1268
  %v1270 = vpop.f32.mrb[0].mxu0
  %v1271 = vpop.f32.mrb[0].mxu0
  %v1272 = vadd.f32 0.0, %v1271
  %v1273 = vpop.f32.mrb[0].mxu0
  %1274 = vmatprep.mubr.bf16.mxu0 %v690
  %1275 = vmatmul.mubr.bf16.gmra.mrb[0].mxu0 %v689
  %v1276 = vpop.f32.mrb[0].mxu0
  %v1277 = vadd.f32 0.0, %v1276
  %v1278 = vpop.f32.mrb[0].mxu0
  %v1279 = vpop.f32.mrb[0].mxu0
  %v1280 = vadd.f32 0.0, %v1279
  %v1281 = vpop.f32.mrb[0].mxu0
  %1282 = vmatprep.mubr.bf16.mxu0 %v695
  %1283 = vmatmul.mubr.bf16.gmra.mrb[0].mxu0 %v694
  %v1284 = vpop.f32.mrb[0].mxu0
  %v1285 = vadd.f32 0.0, %v1284
  %v1286 = vpop.f32.mrb[0].mxu0
  %v1287 = vpop.f32.mrb[0].mxu0
  %v1288 = vadd.f32 0.0, %v1287
  %v1289 = vpop.f32.mrb[0].mxu0
  %1290 = vmatprep.mubr.bf16.mxu0 %v700
  %1291 = vmatmul.mubr.bf16.gmra.mrb[0].mxu0 %v699
  %v1292 = vpop.f32.mrb[0].mxu0
  %v1293 = vadd.f32 0.0, %v1292
  %v1294 = vpop.f32.mrb[0].mxu0
  %v1295 = vpop.f32.mrb[0].mxu0
  %v1296 = vadd.f32 0.0, %v1295
  %v1297 = vpop.f32.mrb[0].mxu0
  %1298 = vmatprep.mubr.bf16.mxu0 %v705
  %1299 = vmatmul.mubr.bf16.gmra.mrb[0].mxu0 %v704
  %v1300 = vpop.f32.mrb[0].mxu0
  %v1301 = vadd.f32 0.0, %v1300
  %v1302 = vpop.f32.mrb[0].mxu0
  %v1303 = vpop.f32.mrb[0].mxu0
  %v1304 = vadd.f32 0.0, %v1303
  %v1305 = vpop.f32.mrb[0].mxu0
  %1306 = vmatprep.mubr.bf16.mxu0 %v710
  %1307 = vmatmul.mubr.bf16.gmra.mrb[0].mxu0 %v709
  %v1308 = vpop.f32.mrb[0].mxu0
  %v1309 = vadd.f32 0.0, %v1308
  %v1310 = vpop.f32.mrb[0].mxu0
  %v1311 = vpop.f32.mrb[0].mxu0
  %v1312 = vadd.f32 0.0, %v1311
  %v1313 = vpop.f32.mrb[0].mxu0
  %1314 = vmatprep.mubr.bf16.mxu0 %v715
  %1315 = vmatmul.mubr.bf16.gmra.mrb[0].mxu0 %v714
  %v1316 = vpop.f32.mrb[0].mxu0
  %v1317 = vadd.f32 0.0, %v1316
  %v1318 = vpop.f32.mrb[0].mxu0
  %v1319 = vpop.f32.mrb[0].mxu0
  %v1320 = vadd.f32 0.0, %v1319
  %v1321 = vpop.f32.mrb[0].mxu0
  %1322 = vmatprep.mubr.bf16.mxu0 %v720
  %1323 = vmatmul.mubr.bf16.gmra.mrb[0].mxu0 %v719
  %v1324 = vpop.f32.mrb[0].mxu0
  %v1325 = vadd.f32 0.0, %v1324
  %v1326 = vpop.f32.mrb[0].mxu0
  %v1327 = vpop.f32.mrb[0].mxu0
  %v1328 = vadd.f32 0.0, %v1327
  %v1329 = vpop.f32.mrb[0].mxu0
  %1330 = vmatprep.mubr.bf16.mxu0 %v725
  %1331 = vmatmul.mubr.bf16.gmra.mrb[0].mxu0 %v724
  %v1332 = vpop.f32.mrb[0].mxu0
  %v1333 = vadd.f32 0.0, %v1332
  %v1334 = vpop.f32.mrb[0].mxu0
  %v1335 = vpop.f32.mrb[0].mxu0
  %v1336 = vadd.f32 0.0, %v1335
  %v1337 = vpop.f32.mrb[0].mxu0
  %1338 = vmatprep.mubr.bf16.mxu0 %v730
  %1339 = vmatmul.mubr.bf16.gmra.mrb[0].mxu0 %v729
  %v1340 = vpop.f32.mrb[0].mxu0
  %v1341 = vadd.f32 0.0, %v1340
  %v1342 = vpop.f32.mrb[0].mxu0
  %v1343 = vpop.f32.mrb[0].mxu0
  %v1344 = vadd.f32 0.0, %v1343
  %v1345 = vpop.f32.mrb[0].mxu0
  %1346 = vmatprep.mubr.bf16.mxu0 %v735
  %1347 = vmatmul.mubr.bf16.gmra.mrb[0].mxu0 %v734
  %v1348 = vpop.f32.mrb[0].mxu0
  %v1349 = vadd.f32 0.0, %v1348
  %v1350 = vpop.f32.mrb[0].mxu0
  %v1351 = vpop.f32.mrb[0].mxu0
  %v1352 = vadd.f32 0.0, %v1351
  %v1353 = vpop.f32.mrb[0].mxu0
  %1354 = vmatprep.mubr.bf16.mxu0 %v740
  %1355 = vmatmul.mubr.bf16.gmra.mrb[0].mxu0 %v739
  %v1356 = vpop.f32.mrb[0].mxu0
  %v1357 = vadd.f32 0.0, %v1356
  %v1358 = vpop.f32.mrb[0].mxu0
  %v1359 = vpop.f32.mrb[0].mxu0
  %v1360 = vadd.f32 0.0, %v1359
  %v1361 = vpop.f32.mrb[0].mxu0
  %1362 = vmatprep.mubr.bf16.mxu0 %v745
  %1363 = vmatmul.mubr.bf16.gmra.mrb[0].mxu0 %v744
  %v1364 = vpop.f32.mrb[0].mxu0
  %v1365 = vadd.f32 0.0, %v1364
  %v1366 = vpop.f32.mrb[0].mxu0
  %v1367 = vpop.f32.mrb[0].mxu0
  %v1368 = vadd.f32 0.0, %v1367
  %v1369 = vpop.f32.mrb[0].mxu0
  %1370 = vmatprep.mubr.bf16.mxu0 %v750
  %1371 = vmatmul.mubr.bf16.gmra.mrb[0].mxu0 %v749
  %v1372 = vpop.f32.mrb[0].mxu0
  %v1373 = vadd.f32 0.0, %v1372
  %v1374 = vpop.f32.mrb[0].mxu0
  %v1375 = vpop.f32.mrb[0].mxu0
  %v1376 = vpop.f32.mrb[0].mxu0
  %1377 = vdwg.mxu0
  %1378 = vmatprep.subr.bf16.mxu0 0
  %1379 = vmatpush1.bf16.msra.mxu0 %v1014
  %1380 = vmatprep.subr.bf16.mxu0 0
  %1381 = vmatpush1.bf16.msra.mxu0 %v1015
  %1382 = vmatprep.subr.bf16.mxu0 0
  %1383 = vmatpush1.bf16.msra.mxu0 %v1016
  %1384 = vmatprep.subr.bf16.mxu0 0
  %1385 = vmatpush1.bf16.msra.mxu0 %v1017
  %1386 = vmatprep.subr.bf16.mxu0 0
  %1387 = vmatpush1.bf16.msra.mxu0 %v1018
  %1388 = vmatprep.subr.bf16.mxu0 0
  %1389 = vmatpush1.bf16.msra.mxu0 %v1019
  %1390 = vmatprep.subr.bf16.mxu0 0
  %1391 = vmatpush1.bf16.msra.mxu0 %v1020
  %1392 = vmatprep.subr.bf16.mxu0 0
  %1393 = vmatpush1.bf16.msra.mxu0 %v1021
  %1394 = vmatprep.subr.bf16.mxu0 0
  %1395 = vmatpush1.bf16.msra.mxu0 %v1022
  %1396 = vmatprep.subr.bf16.mxu0 0
  %1397 = vmatpush1.bf16.msra.mxu0 %v1023
  %1398 = vmatprep.subr.bf16.mxu0 0
  %1399 = vmatpush1.bf16.msra.mxu0 %v1024
  %1400 = vmatprep.subr.bf16.mxu0 0
  %1401 = vmatpush1.bf16.msra.mxu0 %v1025
  %1402 = vmatprep.subr.bf16.mxu0 0
  %1403 = vmatpush1.bf16.msra.mxu0 %v1026
  %1404 = vmatprep.subr.bf16.mxu0 0
  %1405 = vmatpush1.bf16.msra.mxu0 %v1027
  %1406 = vmatprep.subr.bf16.mxu0 0
  %1407 = vmatpush1.bf16.msra.mxu0 %v1028
  %1408 = vmatprep.subr.bf16.mxu0 0
  %1409 = vmatpush1.bf16.msra.mxu0 %v1029
  %1410 = vmatprep.mubr.bf16.mxu0 %v632
  %1411 = vmatmul.mubr.bf16.gmra.mrb[0].mxu0 %v631
  %v1412 = vpop.f32.mrb[0].mxu0
  %v1413 = vadd.f32 %v1181, %v1412
  %v1414 = vpop.f32.mrb[0].mxu0
  %v1415 = vpop.f32.mrb[0].mxu0
  %v1416 = vadd.f32 %v1184, %v1415
  %v1417 = vpop.f32.mrb[0].mxu0
  %1418 = vmatprep.mubr.bf16.mxu0 %v637
  %1419 = vmatmul.mubr.bf16.gmra.mrb[0].mxu0 %v636
  %v1420 = vpop.f32.mrb[0].mxu0
  %v1421 = vadd.f32 %v1189, %v1420
  %v1422 = vpop.f32.mrb[0].mxu0
  %v1423 = vpop.f32.mrb[0].mxu0
  %v1424 = vadd.f32 %v1192, %v1423
  %v1425 = vpop.f32.mrb[0].mxu0
  %1426 = vmatprep.mubr.bf16.mxu0 %v642
  %1427 = vmatmul.mubr.bf16.gmra.mrb[0].mxu0 %v641
  %v1428 = vpop.f32.mrb[0].mxu0
  %v1429 = vadd.f32 %v1197, %v1428
  %v1430 = vpop.f32.mrb[0].mxu0
  %v1431 = vpop.f32.mrb[0].mxu0
  %v1432 = vadd.f32 %v1200, %v1431
  %v1433 = vpop.f32.mrb[0].mxu0
  %1434 = vmatprep.mubr.bf16.mxu0 %v647
  %1435 = vmatmul.mubr.bf16.gmra.mrb[0].mxu0 %v646
  %v1436 = vpop.f32.mrb[0].mxu0
  %v1437 = vadd.f32 %v1205, %v1436
  %v1438 = vpop.f32.mrb[0].mxu0
  %v1439 = vpop.f32.mrb[0].mxu0
  %v1440 = vadd.f32 %v1208, %v1439
  %v1441 = vpop.f32.mrb[0].mxu0
  %1442 = vmatprep.mubr.bf16.mxu0 %v652
  %1443 = vmatmul.mubr.bf16.gmra.mrb[0].mxu0 %v651
  %v1444 = vpop.f32.mrb[0].mxu0
  %v1445 = vadd.f32 %v1213, %v1444
  %v1446 = vpop.f32.mrb[0].mxu0
  %v1447 = vpop.f32.mrb[0].mxu0
  %v1448 = vadd.f32 %v1216, %v1447
  %v1449 = vpop.f32.mrb[0].mxu0
  %1450 = vmatprep.mubr.bf16.mxu0 %v657
  %1451 = vmatmul.mubr.bf16.gmra.mrb[0].mxu0 %v656
  %v1452 = vpop.f32.mrb[0].mxu0
  %v1453 = vadd.f32 %v1221, %v1452
  %v1454 = vpop.f32.mrb[0].mxu0
  %v1455 = vpop.f32.mrb[0].mxu0
  %v1456 = vadd.f32 %v1224, %v1455
  %v1457 = vpop.f32.mrb[0].mxu0
  %1458 = vmatprep.mubr.bf16.mxu0 %v662
  %1459 = vmatmul.mubr.bf16.gmra.mrb[0].mxu0 %v661
  %v1460 = vpop.f32.mrb[0].mxu0
  %v1461 = vadd.f32 %v1229, %v1460
  %v1462 = vpop.f32.mrb[0].mxu0
  %v1463 = vpop.f32.mrb[0].mxu0
  %v1464 = vadd.f32 %v1232, %v1463
  %v1465 = vpop.f32.mrb[0].mxu0
  %1466 = vmatprep.mubr.bf16.mxu0 %v667
  %1467 = vmatmul.mubr.bf16.gmra.mrb[0].mxu0 %v666
  %v1468 = vpop.f32.mrb[0].mxu0
  %v1469 = vadd.f32 %v1237, %v1468
  %v1470 = vpop.f32.mrb[0].mxu0
  %v1471 = vpop.f32.mrb[0].mxu0
  %v1472 = vadd.f32 %v1240, %v1471
  %v1473 = vpop.f32.mrb[0].mxu0
  %1474 = vmatprep.mubr.bf16.mxu0 %v672
  %1475 = vmatmul.mubr.bf16.gmra.mrb[0].mxu0 %v671
  %v1476 = vpop.f32.mrb[0].mxu0
  %v1477 = vadd.f32 %v1245, %v1476
  %v1478 = vpop.f32.mrb[0].mxu0
  %v1479 = vpop.f32.mrb[0].mxu0
  %v1480 = vadd.f32 %v1248, %v1479
  %v1481 = vpop.f32.mrb[0].mxu0
  %1482 = vmatprep.mubr.bf16.mxu0 %v677
  %1483 = vmatmul.mubr.bf16.gmra.mrb[0].mxu0 %v676
  %v1484 = vpop.f32.mrb[0].mxu0
  %v1485 = vadd.f32 %v1253, %v1484
  %v1486 = vpop.f32.mrb[0].mxu0
  %v1487 = vpop.f32.mrb[0].mxu0
  %v1488 = vadd.f32 %v1256, %v1487
  %v1489 = vpop.f32.mrb[0].mxu0
  %1490 = vmatprep.mubr.bf16.mxu0 %v682
  %1491 = vmatmul.mubr.bf16.gmra.mrb[0].mxu0 %v681
  %v1492 = vpop.f32.mrb[0].mxu0
  %v1493 = vadd.f32 %v1261, %v1492
  %v1494 = vpop.f32.mrb[0].mxu0
  %v1495 = vpop.f32.mrb[0].mxu0
  %v1496 = vadd.f32 %v1264, %v1495
  %v1497 = vpop.f32.mrb[0].mxu0
  %1498 = vmatprep.mubr.bf16.mxu0 %v687
  %1499 = vmatmul.mubr.bf16.gmra.mrb[0].mxu0 %v686
  %v1500 = vpop.f32.mrb[0].mxu0
  %v1501 = vadd.f32 %v1269, %v1500
  %v1502 = vpop.f32.mrb[0].mxu0
  %v1503 = vpop.f32.mrb[0].mxu0
  %v1504 = vadd.f32 %v1272, %v1503
  %v1505 = vpop.f32.mrb[0].mxu0
  %1506 = vmatprep.mubr.bf16.mxu0 %v692
  %1507 = vmatmul.mubr.bf16.gmra.mrb[0].mxu0 %v691
  %v1508 = vpop.f32.mrb[0].mxu0
  %v1509 = vadd.f32 %v1277, %v1508
  %v1510 = vpop.f32.mrb[0].mxu0
  %v1511 = vpop.f32.mrb[0].mxu0
  %v1512 = vadd.f32 %v1280, %v1511
  %v1513 = vpop.f32.mrb[0].mxu0
  %1514 = vmatprep.mubr.bf16.mxu0 %v697
  %1515 = vmatmul.mubr.bf16.gmra.mrb[0].mxu0 %v696
  %v1516 = vpop.f32.mrb[0].mxu0
  %v1517 = vadd.f32 %v1285, %v1516
  %v1518 = vpop.f32.mrb[0].mxu0
  %v1519 = vpop.f32.mrb[0].mxu0
  %v1520 = vadd.f32 %v1288, %v1519
  %v1521 = vpop.f32.mrb[0].mxu0
  %1522 = vmatprep.mubr.bf16.mxu0 %v702
  %1523 = vmatmul.mubr.bf16.gmra.mrb[0].mxu0 %v701
  %v1524 = vpop.f32.mrb[0].mxu0
  %v1525 = vadd.f32 %v1293, %v1524
  %v1526 = vpop.f32.mrb[0].mxu0
  %v1527 = vpop.f32.mrb[0].mxu0
  %v1528 = vadd.f32 %v1296, %v1527
  %v1529 = vpop.f32.mrb[0].mxu0
  %1530 = vmatprep.mubr.bf16.mxu0 %v707
  %1531 = vmatmul.mubr.bf16.gmra.mrb[0].mxu0 %v706
  %v1532 = vpop.f32.mrb[0].mxu0
  %v1533 = vadd.f32 %v1301, %v1532
  %v1534 = vpop.f32.mrb[0].mxu0
  %v1535 = vpop.f32.mrb[0].mxu0
  %v1536 = vadd.f32 %v1304, %v1535
  %v1537 = vpop.f32.mrb[0].mxu0
  %1538 = vmatprep.mubr.bf16.mxu0 %v712
  %1539 = vmatmul.mubr.bf16.gmra.mrb[0].mxu0 %v711
  %v1540 = vpop.f32.mrb[0].mxu0
  %v1541 = vadd.f32 %v1309, %v1540
  %v1542 = vpop.f32.mrb[0].mxu0
  %v1543 = vpop.f32.mrb[0].mxu0
  %v1544 = vadd.f32 %v1312, %v1543
  %v1545 = vpop.f32.mrb[0].mxu0
  %1546 = vmatprep.mubr.bf16.mxu0 %v717
  %1547 = vmatmul.mubr.bf16.gmra.mrb[0].mxu0 %v716
  %v1548 = vpop.f32.mrb[0].mxu0
  %v1549 = vadd.f32 %v1317, %v1548
  %v1550 = vpop.f32.mrb[0].mxu0
  %v1551 = vpop.f32.mrb[0].mxu0
  %v1552 = vadd.f32 %v1320, %v1551
  %v1553 = vpop.f32.mrb[0].mxu0
  %1554 = vmatprep.mubr.bf16.mxu0 %v722
  %1555 = vmatmul.mubr.bf16.gmra.mrb[0].mxu0 %v721
  %v1556 = vpop.f32.mrb[0].mxu0
  %v1557 = vadd.f32 %v1325, %v1556
  %v1558 = vpop.f32.mrb[0].mxu0
  %v1559 = vpop.f32.mrb[0].mxu0
  %v1560 = vadd.f32 %v1328, %v1559
  %v1561 = vpop.f32.mrb[0].mxu0
  %1562 = vmatprep.mubr.bf16.mxu0 %v727
  %1563 = vmatmul.mubr.bf16.gmra.mrb[0].mxu0 %v726
  %v1564 = vpop.f32.mrb[0].mxu0
  %v1565 = vadd.f32 %v1333, %v1564
  %v1566 = vpop.f32.mrb[0].mxu0
  %v1567 = vpop.f32.mrb[0].mxu0
  %v1568 = vadd.f32 %v1336, %v1567
  %v1569 = vpop.f32.mrb[0].mxu0
  %1570 = vmatprep.mubr.bf16.mxu0 %v732
  %1571 = vmatmul.mubr.bf16.gmra.mrb[0].mxu0 %v731
  %v1572 = vpop.f32.mrb[0].mxu0
  %v1573 = vadd.f32 %v1341, %v1572
  %v1574 = vpop.f32.mrb[0].mxu0
  %v1575 = vpop.f32.mrb[0].mxu0
  %v1576 = vadd.f32 %v1344, %v1575
  %v1577 = vpop.f32.mrb[0].mxu0
  %1578 = vmatprep.mubr.bf16.mxu0 %v737
  %1579 = vmatmul.mubr.bf16.gmra.mrb[0].mxu0 %v736
  %v1580 = vpop.f32.mrb[0].mxu0
  %v1581 = vadd.f32 %v1349, %v1580
  %v1582 = vpop.f32.mrb[0].mxu0
  %v1583 = vpop.f32.mrb[0].mxu0
  %v1584 = vadd.f32 %v1352, %v1583
  %v1585 = vpop.f32.mrb[0].mxu0
  %1586 = vmatprep.mubr.bf16.mxu0 %v742
  %1587 = vmatmul.mubr.bf16.gmra.mrb[0].mxu0 %v741
  %v1588 = vpop.f32.mrb[0].mxu0
  %v1589 = vadd.f32 %v1357, %v1588
  %v1590 = vpop.f32.mrb[0].mxu0
  %v1591 = vpop.f32.mrb[0].mxu0
  %v1592 = vadd.f32 %v1360, %v1591
  %v1593 = vpop.f32.mrb[0].mxu0
  %1594 = vmatprep.mubr.bf16.mxu0 %v747
  %1595 = vmatmul.mubr.bf16.gmra.mrb[0].mxu0 %v746
  %v1596 = vpop.f32.mrb[0].mxu0
  %v1597 = vadd.f32 %v1365, %v1596
  %v1598 = vpop.f32.mrb[0].mxu0
  %v1599 = vpop.f32.mrb[0].mxu0
  %v1600 = vadd.f32 %v1368, %v1599
  %v1601 = vpop.f32.mrb[0].mxu0
  %1602 = vmatprep.mubr.bf16.mxu0 %v752
  %1603 = vmatmul.mubr.bf16.gmra.mrb[0].mxu0 %v751
  %v1604 = vpop.f32.mrb[0].mxu0
  %v1605 = vadd.f32 %v1373, %v1604
  %v1606 = vpop.f32.mrb[0].mxu0
  %v1607 = vpop.f32.mrb[0].mxu0
  %v1608 = vpop.f32.mrb[0].mxu0
  %1609 = vdwg.mxu0
  %1610 = vmatprep.subr.bf16.mxu0 0
  %1611 = vmatpush1.bf16.msra.mxu0 %v1030
  %1612 = vmatprep.subr.bf16.mxu0 0
  %1613 = vmatpush1.bf16.msra.mxu0 %v1031
  %1614 = vmatprep.subr.bf16.mxu0 0
  %1615 = vmatpush1.bf16.msra.mxu0 %v1032
  %1616 = vmatprep.subr.bf16.mxu0 0
  %1617 = vmatpush1.bf16.msra.mxu0 %v1033
  %1618 = vmatprep.subr.bf16.mxu0 0
  %1619 = vmatpush1.bf16.msra.mxu0 0
  %1620 = vmatprep.subr.bf16.mxu0 0
  %1621 = vmatpush1.bf16.msra.mxu0 0
  %1622 = vmatprep.subr.bf16.mxu0 0
  %1623 = vmatpush1.bf16.msra.mxu0 0
  %1624 = vmatprep.subr.bf16.mxu0 0
  %1625 = vmatpush1.bf16.msra.mxu0 0
  %1626 = vmatprep.subr.bf16.mxu0 0
  %1627 = vmatpush1.bf16.msra.mxu0 0
  %1628 = vmatprep.subr.bf16.mxu0 0
  %1629 = vmatpush1.bf16.msra.mxu0 0
  %1630 = vmatprep.subr.bf16.mxu0 0
  %1631 = vmatpush1.bf16.msra.mxu0 0
  %1632 = vmatprep.subr.bf16.mxu0 0
  %1633 = vmatpush1.bf16.msra.mxu0 0
  %1634 = vmatprep.subr.bf16.mxu0 0
  %1635 = vmatpush1.bf16.msra.mxu0 0
  %1636 = vmatprep.subr.bf16.mxu0 0
  %1637 = vmatpush1.bf16.msra.mxu0 0
  %1638 = vmatprep.subr.bf16.mxu0 0
  %1639 = vmatpush1.bf16.msra.mxu0 0
  %1640 = vmatprep.subr.bf16.mxu0 0
  %1641 = vmatpush1.bf16.msra.mxu0 0
  %1642 = vmatprep.mubr.bf16.mxu0 0
  %1643 = vmatmul.mubr.bf16.gmra.mrb[0].mxu0 %v1072
  %v1644 = vpop.f32.mrb[0].mxu0
  %v1645 = vadd.f32 %v1413, %v1644
  %v1646 = vpop.f32.mrb[0].mxu0
  %v1647 = vpop.f32.mrb[0].mxu0
  %v1648 = vadd.f32 %v1416, %v1647
  %v1649 = vpop.f32.mrb[0].mxu0
  %1650 = vmatprep.mubr.bf16.mxu0 0
  %1651 = vmatmul.mubr.bf16.gmra.mrb[0].mxu0 %v1075
  %v1652 = vpop.f32.mrb[0].mxu0
  %v1653 = vadd.f32 %v1421, %v1652
  %v1654 = vpop.f32.mrb[0].mxu0
  %v1655 = vpop.f32.mrb[0].mxu0
  %v1656 = vadd.f32 %v1424, %v1655
  %v1657 = vpop.f32.mrb[0].mxu0
  %1658 = vmatprep.mubr.bf16.mxu0 0
  %1659 = vmatmul.mubr.bf16.gmra.mrb[0].mxu0 %v1078
  %v1660 = vpop.f32.mrb[0].mxu0
  %v1661 = vadd.f32 %v1429, %v1660
  %v1662 = vpop.f32.mrb[0].mxu0
  %v1663 = vpop.f32.mrb[0].mxu0
  %v1664 = vadd.f32 %v1432, %v1663
  %v1665 = vpop.f32.mrb[0].mxu0
  %1666 = vmatprep.mubr.bf16.mxu0 0
  %1667 = vmatmul.mubr.bf16.gmra.mrb[0].mxu0 %v1081
  %v1668 = vpop.f32.mrb[0].mxu0
  %v1669 = vadd.f32 %v1437, %v1668
  %v1670 = vpop.f32.mrb[0].mxu0
  %v1671 = vpop.f32.mrb[0].mxu0
  %v1672 = vadd.f32 %v1440, %v1671
  %v1673 = vpop.f32.mrb[0].mxu0
  %1674 = vmatprep.mubr.bf16.mxu0 0
  %1675 = vmatmul.mubr.bf16.gmra.mrb[0].mxu0 %v1084
  %v1676 = vpop.f32.mrb[0].mxu0
  %v1677 = vadd.f32 %v1445, %v1676
  %v1678 = vpop.f32.mrb[0].mxu0
  %v1679 = vpop.f32.mrb[0].mxu0
  %v1680 = vadd.f32 %v1448, %v1679
  %v1681 = vpop.f32.mrb[0].mxu0
  %1682 = vmatprep.mubr.bf16.mxu0 0
  %1683 = vmatmul.mubr.bf16.gmra.mrb[0].mxu0 %v1087
  %v1684 = vpop.f32.mrb[0].mxu0
  %v1685 = vadd.f32 %v1453, %v1684
  %v1686 = vpop.f32.mrb[0].mxu0
  %v1687 = vpop.f32.mrb[0].mxu0
  %v1688 = vadd.f32 %v1456, %v1687
  %v1689 = vpop.f32.mrb[0].mxu0
  %1690 = vmatprep.mubr.bf16.mxu0 0
  %1691 = vmatmul.mubr.bf16.gmra.mrb[0].mxu0 %v1090
  %v1692 = vpop.f32.mrb[0].mxu0
  %v1693 = vadd.f32 %v1461, %v1692
  %v1694 = vpop.f32.mrb[0].mxu0
  %v1695 = vpop.f32.mrb[0].mxu0
  %v1696 = vadd.f32 %v1464, %v1695
  %v1697 = vpop.f32.mrb[0].mxu0
  %1698 = vmatprep.mubr.bf16.mxu0 0
  %1699 = vmatmul.mubr.bf16.gmra.mrb[0].mxu0 %v1093
  %v1700 = vpop.f32.mrb[0].mxu0
  %v1701 = vadd.f32 %v1469, %v1700
  %v1702 = vpop.f32.mrb[0].mxu0
  %v1703 = vpop.f32.mrb[0].mxu0
  %v1704 = vadd.f32 %v1472, %v1703
  %v1705 = vpop.f32.mrb[0].mxu0
  %1706 = vmatprep.mubr.bf16.mxu0 0
  %1707 = vmatmul.mubr.bf16.gmra.mrb[0].mxu0 %v1096
  %v1708 = vpop.f32.mrb[0].mxu0
  %v1709 = vadd.f32 %v1477, %v1708
  %v1710 = vpop.f32.mrb[0].mxu0
  %v1711 = vpop.f32.mrb[0].mxu0
  %v1712 = vadd.f32 %v1480, %v1711
  %v1713 = vpop.f32.mrb[0].mxu0
  %1714 = vmatprep.mubr.bf16.mxu0 0
  %1715 = vmatmul.mubr.bf16.gmra.mrb[0].mxu0 %v1099
  %v1716 = vpop.f32.mrb[0].mxu0
  %v1717 = vadd.f32 %v1485, %v1716
  %v1718 = vpop.f32.mrb[0].mxu0
  %v1719 = vpop.f32.mrb[0].mxu0
  %v1720 = vadd.f32 %v1488, %v1719
  %v1721 = vpop.f32.mrb[0].mxu0
  %1722 = vmatprep.mubr.bf16.mxu0 0
  %1723 = vmatmul.mubr.bf16.gmra.mrb[0].mxu0 %v1102
  %v1724 = vpop.f32.mrb[0].mxu0
  %v1725 = vadd.f32 %v1493, %v1724
  %v1726 = vpop.f32.mrb[0].mxu0
  %v1727 = vpop.f32.mrb[0].mxu0
  %v1728 = vadd.f32 %v1496, %v1727
  %v1729 = vpop.f32.mrb[0].mxu0
  %1730 = vmatprep.mubr.bf16.mxu0 0
  %1731 = vmatmul.mubr.bf16.gmra.mrb[0].mxu0 %v1105
  %v1732 = vpop.f32.mrb[0].mxu0
  %v1733 = vadd.f32 %v1501, %v1732
  %v1734 = vpop.f32.mrb[0].mxu0
  %v1735 = vpop.f32.mrb[0].mxu0
  %v1736 = vadd.f32 %v1504, %v1735
  %v1737 = vpop.f32.mrb[0].mxu0
  %1738 = vmatprep.mubr.bf16.mxu0 0
  %1739 = vmatmul.mubr.bf16.gmra.mrb[0].mxu0 %v1108
  %v1740 = vpop.f32.mrb[0].mxu0
  %v1741 = vadd.f32 %v1509, %v1740
  %v1742 = vpop.f32.mrb[0].mxu0
  %v1743 = vpop.f32.mrb[0].mxu0
  %v1744 = vadd.f32 %v1512, %v1743
  %v1745 = vpop.f32.mrb[0].mxu0
  %1746 = vmatprep.mubr.bf16.mxu0 0
  %1747 = vmatmul.mubr.bf16.gmra.mrb[0].mxu0 %v1111
  %v1748 = vpop.f32.mrb[0].mxu0
  %v1749 = vadd.f32 %v1517, %v1748
  %v1750 = vpop.f32.mrb[0].mxu0
  %v1751 = vpop.f32.mrb[0].mxu0
  %v1752 = vadd.f32 %v1520, %v1751
  %v1753 = vpop.f32.mrb[0].mxu0
  %1754 = vmatprep.mubr.bf16.mxu0 0
  %1755 = vmatmul.mubr.bf16.gmra.mrb[0].mxu0 %v1114
  %v1756 = vpop.f32.mrb[0].mxu0
  %v1757 = vadd.f32 %v1525, %v1756
  %v1758 = vpop.f32.mrb[0].mxu0
  %v1759 = vpop.f32.mrb[0].mxu0
  %v1760 = vadd.f32 %v1528, %v1759
  %v1761 = vpop.f32.mrb[0].mxu0
  %1762 = vmatprep.mubr.bf16.mxu0 0
  %1763 = vmatmul.mubr.bf16.gmra.mrb[0].mxu0 %v1117
  %v1764 = vpop.f32.mrb[0].mxu0
  %v1765 = vadd.f32 %v1533, %v1764
  %v1766 = vpop.f32.mrb[0].mxu0
  %v1767 = vpop.f32.mrb[0].mxu0
  %v1768 = vadd.f32 %v1536, %v1767
  %v1769 = vpop.f32.mrb[0].mxu0
  %1770 = vmatprep.mubr.bf16.mxu0 0
  %1771 = vmatmul.mubr.bf16.gmra.mrb[0].mxu0 %v1120
  %v1772 = vpop.f32.mrb[0].mxu0
  %v1773 = vadd.f32 %v1541, %v1772
  %v1774 = vpop.f32.mrb[0].mxu0
  %v1775 = vpop.f32.mrb[0].mxu0
  %v1776 = vadd.f32 %v1544, %v1775
  %v1777 = vpop.f32.mrb[0].mxu0
  %1778 = vmatprep.mubr.bf16.mxu0 0
  %1779 = vmatmul.mubr.bf16.gmra.mrb[0].mxu0 %v1123
  %v1780 = vpop.f32.mrb[0].mxu0
  %v1781 = vadd.f32 %v1549, %v1780
  %v1782 = vpop.f32.mrb[0].mxu0
  %v1783 = vpop.f32.mrb[0].mxu0
  %v1784 = vadd.f32 %v1552, %v1783
  %v1785 = vpop.f32.mrb[0].mxu0
  %1786 = vmatprep.mubr.bf16.mxu0 0
  %1787 = vmatmul.mubr.bf16.gmra.mrb[0].mxu0 %v1126
  %v1788 = vpop.f32.mrb[0].mxu0
  %v1789 = vadd.f32 %v1557, %v1788
  %v1790 = vpop.f32.mrb[0].mxu0
  %v1791 = vpop.f32.mrb[0].mxu0
  %v1792 = vadd.f32 %v1560, %v1791
  %v1793 = vpop.f32.mrb[0].mxu0
  %1794 = vmatprep.mubr.bf16.mxu0 0
  %1795 = vmatmul.mubr.bf16.gmra.mrb[0].mxu0 %v1129
  %v1796 = vpop.f32.mrb[0].mxu0
  %v1797 = vadd.f32 %v1565, %v1796
  %v1798 = vpop.f32.mrb[0].mxu0
  %v1799 = vpop.f32.mrb[0].mxu0
  %v1800 = vadd.f32 %v1568, %v1799
  %v1801 = vpop.f32.mrb[0].mxu0
  %1802 = vmatprep.mubr.bf16.mxu0 0
  %1803 = vmatmul.mubr.bf16.gmra.mrb[0].mxu0 %v1132
  %v1804 = vpop.f32.mrb[0].mxu0
  %v1805 = vadd.f32 %v1573, %v1804
  %v1806 = vpop.f32.mrb[0].mxu0
  %v1807 = vpop.f32.mrb[0].mxu0
  %v1808 = vadd.f32 %v1576, %v1807
  %v1809 = vpop.f32.mrb[0].mxu0
  %1810 = vmatprep.mubr.bf16.mxu0 0
  %1811 = vmatmul.mubr.bf16.gmra.mrb[0].mxu0 %v1135
  %v1812 = vpop.f32.mrb[0].mxu0
  %v1813 = vadd.f32 %v1581, %v1812
  %v1814 = vpop.f32.mrb[0].mxu0
  %v1815 = vpop.f32.mrb[0].mxu0
  %v1816 = vadd.f32 %v1584, %v1815
  %v1817 = vpop.f32.mrb[0].mxu0
  %1818 = vmatprep.mubr.bf16.mxu0 0
  %1819 = vmatmul.mubr.bf16.gmra.mrb[0].mxu0 %v1138
  %v1820 = vpop.f32.mrb[0].mxu0
  %v1821 = vadd.f32 %v1589, %v1820
  %v1822 = vpop.f32.mrb[0].mxu0
  %v1823 = vpop.f32.mrb[0].mxu0
  %v1824 = vadd.f32 %v1592, %v1823
  %v1825 = vpop.f32.mrb[0].mxu0
  %1826 = vmatprep.mubr.bf16.mxu0 0
  %1827 = vmatmul.mubr.bf16.gmra.mrb[0].mxu0 %v1141
  %v1828 = vpop.f32.mrb[0].mxu0
  %v1829 = vadd.f32 %v1597, %v1828
  %v1830 = vpop.f32.mrb[0].mxu0
  %v1831 = vpop.f32.mrb[0].mxu0
  %v1832 = vadd.f32 %v1600, %v1831
  %v1833 = vpop.f32.mrb[0].mxu0
  %1834 = vmatprep.mubr.bf16.mxu0 0
  %1835 = vmatmul.mubr.bf16.gmra.mrb[0].mxu0 %v1144
  %v1836 = vpop.f32.mrb[0].mxu0
  %v1837 = vadd.f32 %v1605, %v1836
  %v1838 = vpop.f32.mrb[0].mxu0
  %v1839 = vpop.f32.mrb[0].mxu0
  %v1840 = vpop.f32.mrb[0].mxu0
  %1841 = vdwg.mxu0
  %v1842 = vld [vmem:[%s2] sm:$0x1]
  %v1844 = vlaneseq
  %v1845 = vshrl.u32 %v1844, 7
  %v1846 = vsub.s32 0, %v1845
  %v1847 = vrot.slane %v1842, %v1846
  %v1849 = vmul.f32 %v1645, %v1847
  %v1850 = vmul.f32 %v1648, %v1847
  %v1851 = vmul.f32 %v1653, %v1847
  %v1852 = vmul.f32 %v1656, %v1847
  %v1853 = vmul.f32 %v1661, %v1847
  %v1854 = vmul.f32 %v1664, %v1847
  %v1855 = vmul.f32 %v1669, %v1847
  %v1856 = vmul.f32 %v1672, %v1847
  %v1857 = vmul.f32 %v1677, %v1847
  %v1858 = vmul.f32 %v1680, %v1847
  %v1859 = vmul.f32 %v1685, %v1847
  %v1860 = vmul.f32 %v1688, %v1847
  %v1861 = vmul.f32 %v1693, %v1847
  %v1862 = vmul.f32 %v1696, %v1847
  %v1863 = vmul.f32 %v1701, %v1847
  %v1864 = vmul.f32 %v1704, %v1847
  %v1865 = vmul.f32 %v1709, %v1847
  %v1866 = vmul.f32 %v1712, %v1847
  %v1867 = vmul.f32 %v1717, %v1847
  %v1868 = vmul.f32 %v1720, %v1847
  %v1869 = vmul.f32 %v1725, %v1847
  %v1870 = vmul.f32 %v1728, %v1847
  %v1871 = vmul.f32 %v1733, %v1847
  %v1872 = vmul.f32 %v1736, %v1847
  %v1873 = vmul.f32 %v1741, %v1847
  %v1874 = vmul.f32 %v1744, %v1847
  %v1875 = vmul.f32 %v1749, %v1847
  %v1876 = vmul.f32 %v1752, %v1847
  %v1877 = vmul.f32 %v1757, %v1847
  %v1878 = vmul.f32 %v1760, %v1847
  %v1879 = vmul.f32 %v1765, %v1847
  %v1880 = vmul.f32 %v1768, %v1847
  %v1881 = vmul.f32 %v1773, %v1847
  %v1882 = vmul.f32 %v1776, %v1847
  %v1883 = vmul.f32 %v1781, %v1847
  %v1884 = vmul.f32 %v1784, %v1847
  %v1885 = vmul.f32 %v1789, %v1847
  %v1886 = vmul.f32 %v1792, %v1847
  %v1887 = vmul.f32 %v1797, %v1847
  %v1888 = vmul.f32 %v1800, %v1847
  %v1889 = vmul.f32 %v1805, %v1847
  %v1890 = vmul.f32 %v1808, %v1847
  %v1891 = vmul.f32 %v1813, %v1847
  %v1892 = vmul.f32 %v1816, %v1847
  %v1893 = vmul.f32 %v1821, %v1847
  %v1894 = vmul.f32 %v1824, %v1847
  %v1895 = vmul.f32 %v1829, %v1847
  %v1896 = vmul.f32 %v1832, %v1847
  %v1897 = vmul.f32 %v1837, %v1847
  %v1898 = vld [vmem:[%s3] sm:$0x1]
  %v1900 = vlaneseq
  %v1901 = vshrl.u32 %v1900, 7
  %v1902 = vsub.s32 0, %v1901
  %v1903 = vrot.slane %v1898, %v1902
  %v1905 = vadd.f32 %v1849, %v1903
  %v1906 = vadd.f32 %v1850, %v1903
  %v1907 = vadd.f32 %v1851, %v1903
  %v1908 = vadd.f32 %v1852, %v1903
  %v1909 = vadd.f32 %v1853, %v1903
  %v1910 = vadd.f32 %v1854, %v1903
  %v1911 = vadd.f32 %v1855, %v1903
  %v1912 = vadd.f32 %v1856, %v1903
  %v1913 = vadd.f32 %v1857, %v1903
  %v1914 = vadd.f32 %v1858, %v1903
  %v1915 = vadd.f32 %v1859, %v1903
  %v1916 = vadd.f32 %v1860, %v1903
  %v1917 = vadd.f32 %v1861, %v1903
  %v1918 = vadd.f32 %v1862, %v1903
  %v1919 = vadd.f32 %v1863, %v1903
  %v1920 = vadd.f32 %v1864, %v1903
  %v1921 = vadd.f32 %v1865, %v1903
  %v1922 = vadd.f32 %v1866, %v1903
  %v1923 = vadd.f32 %v1867, %v1903
  %v1924 = vadd.f32 %v1868, %v1903
  %v1925 = vadd.f32 %v1869, %v1903
  %v1926 = vadd.f32 %v1870, %v1903
  %v1927 = vadd.f32 %v1871, %v1903
  %v1928 = vadd.f32 %v1872, %v1903
  %v1929 = vadd.f32 %v1873, %v1903
  %v1930 = vadd.f32 %v1874, %v1903
  %v1931 = vadd.f32 %v1875, %v1903
  %v1932 = vadd.f32 %v1876, %v1903
  %v1933 = vadd.f32 %v1877, %v1903
  %v1934 = vadd.f32 %v1878, %v1903
  %v1935 = vadd.f32 %v1879, %v1903
  %v1936 = vadd.f32 %v1880, %v1903
  %v1937 = vadd.f32 %v1881, %v1903
  %v1938 = vadd.f32 %v1882, %v1903
  %v1939 = vadd.f32 %v1883, %v1903
  %v1940 = vadd.f32 %v1884, %v1903
  %v1941 = vadd.f32 %v1885, %v1903
  %v1942 = vadd.f32 %v1886, %v1903
  %v1943 = vadd.f32 %v1887, %v1903
  %v1944 = vadd.f32 %v1888, %v1903
  %v1945 = vadd.f32 %v1889, %v1903
  %v1946 = vadd.f32 %v1890, %v1903
  %v1947 = vadd.f32 %v1891, %v1903
  %v1948 = vadd.f32 %v1892, %v1903
  %v1949 = vadd.f32 %v1893, %v1903
  %v1950 = vadd.f32 %v1894, %v1903
  %v1951 = vadd.f32 %v1895, %v1903
  %v1952 = vadd.f32 %v1896, %v1903
  %v1953 = vadd.f32 %v1897, %v1903
  %v1954 = vmax.f32 %v1905, 0.0
  %v1955 = vmax.f32 %v1906, 0.0
  %v1956 = vmax.f32 %v1907, 0.0
  %v1957 = vmax.f32 %v1908, 0.0
  %v1958 = vmax.f32 %v1909, 0.0
  %v1959 = vmax.f32 %v1910, 0.0
  %v1960 = vmax.f32 %v1911, 0.0
  %v1961 = vmax.f32 %v1912, 0.0
  %v1962 = vmax.f32 %v1913, 0.0
  %v1963 = vmax.f32 %v1914, 0.0
  %v1964 = vmax.f32 %v1915, 0.0
  %v1965 = vmax.f32 %v1916, 0.0
  %v1966 = vmax.f32 %v1917, 0.0
  %v1967 = vmax.f32 %v1918, 0.0
  %v1968 = vmax.f32 %v1919, 0.0
  %v1969 = vmax.f32 %v1920, 0.0
  %v1970 = vmax.f32 %v1921, 0.0
  %v1971 = vmax.f32 %v1922, 0.0
  %v1972 = vmax.f32 %v1923, 0.0
  %v1973 = vmax.f32 %v1924, 0.0
  %v1974 = vmax.f32 %v1925, 0.0
  %v1975 = vmax.f32 %v1926, 0.0
  %v1976 = vmax.f32 %v1927, 0.0
  %v1977 = vmax.f32 %v1928, 0.0
  %v1978 = vmax.f32 %v1929, 0.0
  %v1979 = vmax.f32 %v1930, 0.0
  %v1980 = vmax.f32 %v1931, 0.0
  %v1981 = vmax.f32 %v1932, 0.0
  %v1982 = vmax.f32 %v1933, 0.0
  %v1983 = vmax.f32 %v1934, 0.0
  %v1984 = vmax.f32 %v1935, 0.0
  %v1985 = vmax.f32 %v1936, 0.0
  %v1986 = vmax.f32 %v1937, 0.0
  %v1987 = vmax.f32 %v1938, 0.0
  %v1988 = vmax.f32 %v1939, 0.0
  %v1989 = vmax.f32 %v1940, 0.0
  %v1990 = vmax.f32 %v1941, 0.0
  %v1991 = vmax.f32 %v1942, 0.0
  %v1992 = vmax.f32 %v1943, 0.0
  %v1993 = vmax.f32 %v1944, 0.0
  %v1994 = vmax.f32 %v1945, 0.0
  %v1995 = vmax.f32 %v1946, 0.0
  %v1996 = vmax.f32 %v1947, 0.0
  %v1997 = vmax.f32 %v1948, 0.0
  %v1998 = vmax.f32 %v1949, 0.0
  %v1999 = vmax.f32 %v1950, 0.0
  %v2000 = vmax.f32 %v1951, 0.0
  %v2001 = vmax.f32 %v1952, 0.0
  %v2002 = vmax.f32 %v1953, 0.0
  %v2003 = vpack.c.bf16 %v1955, %v1954
  %v2004 = vpack.c.bf16 %v1957, %v1956
  %v2005 = vpack.c.bf16 %v1959, %v1958
  %v2006 = vpack.c.bf16 %v1961, %v1960
  %v2007 = vpack.c.bf16 %v1963, %v1962
  %v2008 = vpack.c.bf16 %v1965, %v1964
  %v2009 = vpack.c.bf16 %v1967, %v1966
  %v2010 = vpack.c.bf16 %v1969, %v1968
  %v2011 = vpack.c.bf16 %v1971, %v1970
  %v2012 = vpack.c.bf16 %v1973, %v1972
  %v2013 = vpack.c.bf16 %v1975, %v1974
  %v2014 = vpack.c.bf16 %v1977, %v1976
  %v2015 = vpack.c.bf16 %v1979, %v1978
  %v2016 = vpack.c.bf16 %v1981, %v1980
  %v2017 = vpack.c.bf16 %v1983, %v1982
  %v2018 = vpack.c.bf16 %v1985, %v1984
  %v2019 = vpack.c.bf16 %v1987, %v1986
  %v2020 = vpack.c.bf16 %v1989, %v1988
  %v2021 = vpack.c.bf16 %v1991, %v1990
  %v2022 = vpack.c.bf16 %v1993, %v1992
  %v2023 = vpack.c.bf16 %v1995, %v1994
  %v2024 = vpack.c.bf16 %v1997, %v1996
  %v2025 = vpack.c.bf16 %v1999, %v1998
  %v2026 = vpack.c.bf16 %v2001, %v2000
  %v2027 = vpack.c.bf16 %v2002, %v2002
  %v2053 = vunpack.c.l.b16 %v2003
  %v2054 = vunpack.c.h.b16 %v2003
  %v2055 = vunpack.c.l.b16 %v2004
  %v2056 = vunpack.c.h.b16 %v2004
  %v2057 = vunpack.c.l.b16 %v2005
  %v2058 = vunpack.c.h.b16 %v2005
  %v2059 = vunpack.c.l.b16 %v2006
  %v2060 = vunpack.c.h.b16 %v2006
  %v2061 = vunpack.c.l.b16 %v2007
  %v2062 = vunpack.c.h.b16 %v2007
  %v2063 = vunpack.c.l.b16 %v2008
  %v2064 = vunpack.c.h.b16 %v2008
  %v2065 = vunpack.c.l.b16 %v2009
  %v2066 = vunpack.c.h.b16 %v2009
  %v2067 = vunpack.c.l.b16 %v2010
  %v2068 = vunpack.c.h.b16 %v2010
  %v2069 = vunpack.c.l.b16 %v2011
  %v2070 = vunpack.c.h.b16 %v2011
  %v2071 = vunpack.c.l.b16 %v2012
  %v2072 = vunpack.c.h.b16 %v2012
  %v2073 = vunpack.c.l.b16 %v2013
  %v2074 = vunpack.c.h.b16 %v2013
  %v2075 = vunpack.c.l.b16 %v2014
  %v2076 = vunpack.c.h.b16 %v2014
  %v2077 = vunpack.c.l.b16 %v2015
  %v2078 = vunpack.c.h.b16 %v2015
  %v2079 = vunpack.c.l.b16 %v2016
  %v2080 = vunpack.c.h.b16 %v2016
  %v2081 = vunpack.c.l.b16 %v2017
  %v2082 = vunpack.c.h.b16 %v2017
  %v2083 = vunpack.c.l.b16 %v2018
  %v2084 = vunpack.c.h.b16 %v2018
  %v2085 = vunpack.c.l.b16 %v2019
  %v2086 = vunpack.c.h.b16 %v2019
  %v2087 = vunpack.c.l.b16 %v2020
  %v2088 = vunpack.c.h.b16 %v2020
  %v2089 = vunpack.c.l.b16 %v2021
  %v2090 = vunpack.c.h.b16 %v2021
  %v2091 = vunpack.c.l.b16 %v2022
  %v2092 = vunpack.c.h.b16 %v2022
  %v2093 = vunpack.c.l.b16 %v2023
  %v2094 = vunpack.c.h.b16 %v2023
  %v2095 = vunpack.c.l.b16 %v2024
  %v2096 = vunpack.c.h.b16 %v2024
  %v2097 = vunpack.c.l.b16 %v2025
  %v2098 = vunpack.c.h.b16 %v2025
  %v2099 = vunpack.c.l.b16 %v2026
  %v2100 = vunpack.c.h.b16 %v2026
  %v2101 = vunpack.c.l.b16 %v2027
  %v2102 = vpack.c.b16 %v2053, %v2053
  %v2103 = vpack.c.b16 %v2054, %v2054
  %v2104 = vpack.c.b16 %v2055, %v2055
  %v2105 = vpack.c.b16 %v2056, %v2056
  %v2106 = vpack.c.b16 %v2057, %v2057
  %v2107 = vpack.c.b16 %v2058, %v2058
  %v2108 = vpack.c.b16 %v2059, %v2059
  %v2109 = vpack.c.b16 %v2060, %v2060
  %v2110 = vpack.c.b16 %v2061, %v2061
  %v2111 = vpack.c.b16 %v2062, %v2062
  %v2112 = vpack.c.b16 %v2063, %v2063
  %v2113 = vpack.c.b16 %v2064, %v2064
  %v2114 = vpack.c.b16 %v2065, %v2065
  %v2115 = vpack.c.b16 %v2066, %v2066
  %v2116 = vpack.c.b16 %v2067, %v2067
  %v2117 = vpack.c.b16 %v2068, %v2068
  %v2118 = vpack.c.b16 %v2069, %v2069
  %v2119 = vpack.c.b16 %v2070, %v2070
  %v2120 = vpack.c.b16 %v2071, %v2071
  %v2121 = vpack.c.b16 %v2072, %v2072
  %v2122 = vpack.c.b16 %v2073, %v2073
  %v2123 = vpack.c.b16 %v2074, %v2074
  %v2124 = vpack.c.b16 %v2075, %v2075
  %v2125 = vpack.c.b16 %v2076, %v2076
  %v2126 = vpack.c.b16 %v2077, %v2077
  %v2127 = vpack.c.b16 %v2078, %v2078
  %v2128 = vpack.c.b16 %v2079, %v2079
  %v2129 = vpack.c.b16 %v2080, %v2080
  %v2130 = vpack.c.b16 %v2081, %v2081
  %v2131 = vpack.c.b16 %v2082, %v2082
  %v2132 = vpack.c.b16 %v2083, %v2083
  %v2133 = vpack.c.b16 %v2084, %v2084
  %v2134 = vpack.c.b16 %v2085, %v2085
  %v2135 = vpack.c.b16 %v2086, %v2086
  %v2136 = vpack.c.b16 %v2087, %v2087
  %v2137 = vpack.c.b16 %v2088, %v2088
  %v2138 = vpack.c.b16 %v2089, %v2089
  %v2139 = vpack.c.b16 %v2090, %v2090
  %v2140 = vpack.c.b16 %v2091, %v2091
  %v2141 = vpack.c.b16 %v2092, %v2092
  %v2142 = vpack.c.b16 %v2093, %v2093
  %v2143 = vpack.c.b16 %v2094, %v2094
  %v2144 = vpack.c.b16 %v2095, %v2095
  %v2145 = vpack.c.b16 %v2096, %v2096
  %v2146 = vpack.c.b16 %v2097, %v2097
  %v2147 = vpack.c.b16 %v2098, %v2098
  %v2148 = vpack.c.b16 %v2099, %v2099
  %v2149 = vpack.c.b16 %v2100, %v2100
  %v2150 = vpack.c.b16 %v2101, %v2101
  %vm2200 = vcmask 519168
  %2201 = vst.msk [vmem:[%s4] sm:$0xf] %vm2200, %v2102
  %2202 = vst.msk [vmem:[%s4 + $0x4] sm:$0xf] %vm2200, %v2103
  %2203 = vst.msk [vmem:[%s4 + $0x8] sm:$0xf] %vm2200, %v2104
  %2204 = vst.msk [vmem:[%s4 + $0xc] sm:$0xf] %vm2200, %v2105
  %2205 = vst.msk [vmem:[%s4 + $0x10] sm:$0xf] %vm2200, %v2106
  %2206 = vst.msk [vmem:[%s4 + $0x14] sm:$0xf] %vm2200, %v2107
  %2207 = vst.msk [vmem:[%s4 + $0x18] sm:$0xf] %vm2200, %v2108
  %2208 = vst.msk [vmem:[%s4 + $0x1c] sm:$0xf] %vm2200, %v2109
  %2209 = vst.msk [vmem:[%s4 + $0x20] sm:$0xf] %vm2200, %v2110
  %2210 = vst.msk [vmem:[%s4 + $0x24] sm:$0xf] %vm2200, %v2111
  %2211 = vst.msk [vmem:[%s4 + $0x28] sm:$0xf] %vm2200, %v2112
  %2212 = vst.msk [vmem:[%s4 + $0x2c] sm:$0xf] %vm2200, %v2113
  %2213 = vst.msk [vmem:[%s4 + $0x30] sm:$0xf] %vm2200, %v2114
  %2214 = vst.msk [vmem:[%s4 + $0x34] sm:$0xf] %vm2200, %v2115
  %2215 = vst.msk [vmem:[%s4 + $0x38] sm:$0xf] %vm2200, %v2116
  %2216 = vst.msk [vmem:[%s4 + $0x3c] sm:$0xf] %vm2200, %v2117
  %2217 = vst.msk [vmem:[%s4 + $0x40] sm:$0xf] %vm2200, %v2118
  %2218 = vst.msk [vmem:[%s4 + $0x44] sm:$0xf] %vm2200, %v2119
  %2219 = vst.msk [vmem:[%s4 + $0x48] sm:$0xf] %vm2200, %v2120
  %2220 = vst.msk [vmem:[%s4 + $0x4c] sm:$0xf] %vm2200, %v2121
  %2221 = vst.msk [vmem:[%s4 + $0x50] sm:$0xf] %vm2200, %v2122
  %2222 = vst.msk [vmem:[%s4 + $0x54] sm:$0xf] %vm2200, %v2123
  %2223 = vst.msk [vmem:[%s4 + $0x58] sm:$0xf] %vm2200, %v2124
  %2224 = vst.msk [vmem:[%s4 + $0x5c] sm:$0xf] %vm2200, %v2125
  %2225 = vst.msk [vmem:[%s4 + $0x60] sm:$0xf] %vm2200, %v2126
  %2226 = vst.msk [vmem:[%s4 + $0x64] sm:$0xf] %vm2200, %v2127
  %2227 = vst.msk [vmem:[%s4 + $0x68] sm:$0xf] %vm2200, %v2128
  %2228 = vst.msk [vmem:[%s4 + $0x6c] sm:$0xf] %vm2200, %v2129
  %2229 = vst.msk [vmem:[%s4 + $0x70] sm:$0xf] %vm2200, %v2130
  %2230 = vst.msk [vmem:[%s4 + $0x74] sm:$0xf] %vm2200, %v2131
  %2231 = vst.msk [vmem:[%s4 + $0x78] sm:$0xf] %vm2200, %v2132
  %2232 = vst.msk [vmem:[%s4 + $0x7c] sm:$0xf] %vm2200, %v2133
  %2233 = vst.msk [vmem:[%s4 + $0x80] sm:$0xf] %vm2200, %v2134
  %2234 = vst.msk [vmem:[%s4 + $0x84] sm:$0xf] %vm2200, %v2135
  %2235 = vst.msk [vmem:[%s4 + $0x88] sm:$0xf] %vm2200, %v2136
  %2236 = vst.msk [vmem:[%s4 + $0x8c] sm:$0xf] %vm2200, %v2137
  %2237 = vst.msk [vmem:[%s4 + $0x90] sm:$0xf] %vm2200, %v2138
  %2238 = vst.msk [vmem:[%s4 + $0x94] sm:$0xf] %vm2200, %v2139
  %2239 = vst.msk [vmem:[%s4 + $0x98] sm:$0xf] %vm2200, %v2140
  %2240 = vst.msk [vmem:[%s4 + $0x9c] sm:$0xf] %vm2200, %v2141
  %2241 = vst.msk [vmem:[%s4 + $0xa0] sm:$0xf] %vm2200, %v2142
  %2242 = vst.msk [vmem:[%s4 + $0xa4] sm:$0xf] %vm2200, %v2143
  %2243 = vst.msk [vmem:[%s4 + $0xa8] sm:$0xf] %vm2200, %v2144
  %2244 = vst.msk [vmem:[%s4 + $0xac] sm:$0xf] %vm2200, %v2145
  %2245 = vst.msk [vmem:[%s4 + $0xb0] sm:$0xf] %vm2200, %v2146
  %2246 = vst.msk [vmem:[%s4 + $0xb4] sm:$0xf] %vm2200, %v2147
  %2247 = vst.msk [vmem:[%s4 + $0xb8] sm:$0xf] %vm2200, %v2148
  %2248 = vst.msk [vmem:[%s4 + $0xbc] sm:$0xf] %vm2200, %v2149
  %2249 = vst.msk [vmem:[%s4 + $0xc0] sm:$0xf] %vm2200, %v2150
  // Predicated region
  $region18: #{net_forward.8} parent=0 // pred_check
    _
  $region19: #{net_forward.8} parent=0 // pred_check_branch
    %2251 = sbr.rel (0) target = $region21
  $region20: #{net_forward.8} parent=0 // pred_region
    _
  $region21: #{net_forward.8} parent=0 // pred_fallthru
    _
  // Predicated region
  $region22: #{net_forward.8} parent=0 // pred_check
    _
  $region23: #{net_forward.8} parent=0 // pred_check_branch
    %2253 = sbr.rel (0) target = $region25
  $region24: #{net_forward.8} parent=0 // pred_region
    _
  $region25: #{net_forward.8} parent=0 // pred_fallthru
    _

// kernel: net_forward.9
$region0: #{net_forward.9}
  #allocation0 [shape = 'u32[]', space=smem, size = 0x4, offset = 0x4, fixed_abs, tag = 'smem constant byte address 0x4 - core index']
  #allocation1 [shape = 'u32[144,128]{1,0:T(1,128)}', space=vmem, size = 0x12000, scoped, tag = 'internal scratch']
  %s0 = inlined_call_operand.vmem [shape: bf16[8,3136], index: 0, kind: input, shape index: {}]
  %s1 = inlined_call_operand.vmem [shape: bf16[3136,128], index: 1, kind: input, shape index: {}]
  %s2 = inlined_call_operand.vmem [shape: f32[1,128], index: 2, kind: input, shape index: {}]
  %s3 = inlined_call_operand.vmem [shape: bf16[128,128], index: 3, kind: input, shape index: {}]
  %s4 = inlined_call_operand.vmem [shape: f32[1,128], index: 4, kind: input, shape index: {}]
  %s5 = inlined_call_operand.vmem [shape: bf16[128,128], index: 5, kind: input, shape index: {}]
  %s6 = inlined_call_operand.vmem [shape: f32[1,128], index: 6, kind: input, shape index: {}]
  %s7 = inlined_call_operand.vmem [shape: f32[8,128], index: 7, kind: output, shape index: {}]
  %s8 = sld [smem:[#allocation0]]
  $region38: #{net_forward.9} parent=0
    _
  %s10 = ssub.s32 1, %s8
  %s11 = scalar_select 0, %s10, %s8
  // Predicated region
  $region2: #{net_forward.9} parent=0 // pred_check
    _
  $region3: #{net_forward.9} parent=0 // pred_check_branch
    %13 = sbr.rel (0) target = $region5
  $region4: #{net_forward.9} parent=0 // pred_region
    _
  $region5: #{net_forward.9} parent=0 // pred_fallthru
    _
  // Predicated region
  $region6: #{net_forward.9} parent=0 // pred_check
    _
  $region7: #{net_forward.9} parent=0 // pred_check_branch
    %15 = sbr.rel (0) target = $region9
  $region8: #{net_forward.9} parent=0 // pred_region
    _
  $region9: #{net_forward.9} parent=0 // pred_fallthru
    _
  // Predicated region
  $region10: #{net_forward.9} parent=0 // pred_check
    _
  $region11: #{net_forward.9} parent=0 // pred_check_branch
    %17 = sbr.rel (0) target = $region13
  $region12: #{net_forward.9} parent=0 // pred_region
    _
  $region13: #{net_forward.9} parent=0 // pred_fallthru
    _
  // Predicated region
  $region14: #{net_forward.9} parent=0 // pred_check
    _
  $region15: #{net_forward.9} parent=0 // pred_check_branch
    %19 = sbr.rel (0) target = $region17
  $region16: #{net_forward.9} parent=0 // pred_region
    _
  $region17: #{net_forward.9} parent=0 // pred_fallthru
    _
  // Predicated region
  $region18: #{net_forward.9} parent=0 // pred_check
    _
  $region19: #{net_forward.9} parent=0 // pred_check_branch
    %21 = sbr.rel (0) target = $region21
  $region20: #{net_forward.9} parent=0 // pred_region
    _
  $region21: #{net_forward.9} parent=0 // pred_fallthru
    _
  // Predicated region
  $region22: #{net_forward.9} parent=0 // pred_check
    _
  $region23: #{net_forward.9} parent=0 // pred_check_branch
    %23 = sbr.rel (0) target = $region25
  $region24: #{net_forward.9} parent=0 // pred_region
    _
  $region25: #{net_forward.9} parent=0 // pred_fallthru
    _
  // Predicated region
  $region26: #{net_forward.9} parent=0 // pred_check
    _
  $region27: #{net_forward.9} parent=0 // pred_check_branch
    %25 = sbr.rel (0) target = $region29
  $region28: #{net_forward.9} parent=0 // pred_region
    _
  $region29: #{net_forward.9} parent=0 // pred_fallthru
    _
  %v27 = vld [vmem:[%s0] sm:$0xff]
  %v28 = vld [vmem:[%s0 + $0x8] sm:$0xff]
  %v29 = vld [vmem:[%s0 + $0x10] sm:$0xff]
  %v30 = vld [vmem:[%s0 + $0x18] sm:$0xff]
  %v31 = vld [vmem:[%s0 + $0x20] sm:$0xff]
  %v32 = vld [vmem:[%s0 + $0x28] sm:$0xff]
  %v33 = vld [vmem:[%s0 + $0x30] sm:$0xff]
  %v34 = vld [vmem:[%s0 + $0x38] sm:$0xff]
  %v35 = vld [vmem:[%s0 + $0x40] sm:$0xff]
  %v36 = vld [vmem:[%s0 + $0x48] sm:$0xff]
  %v37 = vld [vmem:[%s0 + $0x50] sm:$0xff]
  %v38 = vld [vmem:[%s0 + $0x58] sm:$0xff]
  %v39 = vld [vmem:[%s0 + $0x60] sm:$0xf]
  %v40 = vld [vmem:[%s1] sm:$0xf]
  %v41 = vld [vmem:[%s1 + $0x4] sm:$0xf]
  %v42 = vld [vmem:[%s1 + $0x8] sm:$0xf]
  %v43 = vld [vmem:[%s1 + $0xc] sm:$0xf]
  %v44 = vld [vmem:[%s1 + $0x10] sm:$0xf]
  %v45 = vld [vmem:[%s1 + $0x14] sm:$0xf]
  %v46 = vld [vmem:[%s1 + $0x18] sm:$0xf]
  %v47 = vld [vmem:[%s1 + $0x1c] sm:$0xf]
  %v48 = vld [vmem:[%s1 + $0x20] sm:$0xf]
  %v49 = vld [vmem:[%s1 + $0x24] sm:$0xf]
  %v50 = vld [vmem:[%s1 + $0x28] sm:$0xf]
  %v51 = vld [vmem:[%s1 + $0x2c] sm:$0xf]
  %v52 = vld [vmem:[%s1 + $0x30] sm:$0xf]
  %v53 = vld [vmem:[%s1 + $0x34] sm:$0xf]
  %v54 = vld [vmem:[%s1 + $0x38] sm:$0xf]
  %v55 = vld [vmem:[%s1 + $0x3c] sm:$0xf]
  %v56 = vld [vmem:[%s1 + $0x40] sm:$0xf]
  %v57 = vld [vmem:[%s1 + $0x44] sm:$0xf]
  %v58 = vld [vmem:[%s1 + $0x48] sm:$0xf]
  %v59 = vld [vmem:[%s1 + $0x4c] sm:$0xf]
  %v60 = vld [vmem:[%s1 + $0x50] sm:$0xf]
  %v61 = vld [vmem:[%s1 + $0x54] sm:$0xf]
  %v62 = vld [vmem:[%s1 + $0x58] sm:$0xf]
  %v63 = vld [vmem:[%s1 + $0x5c] sm:$0xf]
  %v64 = vld [vmem:[%s1 + $0x60] sm:$0xf]
  %v65 = vld [vmem:[%s1 + $0x64] sm:$0xf]
  %v66 = vld [vmem:[%s1 + $0x68] sm:$0xf]
  %v67 = vld [vmem:[%s1 + $0x6c] sm:$0xf]
  %v68 = vld [vmem:[%s1 + $0x70] sm:$0xf]
  %v69 = vld [vmem:[%s1 + $0x74] sm:$0xf]
  %v70 = vld [vmem:[%s1 + $0x78] sm:$0xf]
  %v71 = vld [vmem:[%s1 + $0x7c] sm:$0xf]
  %v72 = vld [vmem:[%s1 + $0x80] sm:$0xf]
  %v73 = vld [vmem:[%s1 + $0x84] sm:$0xf]
  %v74 = vld [vmem:[%s1 + $0x88] sm:$0xf]
  %v75 = vld [vmem:[%s1 + $0x8c] sm:$0xf]
  %v76 = vld [vmem:[%s1 + $0x90] sm:$0xf]
  %v77 = vld [vmem:[%s1 + $0x94] sm:$0xf]
  %v78 = vld [vmem:[%s1 + $0x98] sm:$0xf]
  %v79 = vld [vmem:[%s1 + $0x9c] sm:$0xf]
  %v80 = vld [vmem:[%s1 + $0xa0] sm:$0xf]
  %v81 = vld [vmem:[%s1 + $0xa4] sm:$0xf]
  %v82 = vld [vmem:[%s1 + $0xa8] sm:$0xf]
  %v83 = vld [vmem:[%s1 + $0xac] sm:$0xf]
  %v84 = vld [vmem:[%s1 + $0xb0] sm:$0xf]
  %v85 = vld [vmem:[%s1 + $0xb4] sm:$0xf]
  %v86 = vld [vmem:[%s1 + $0xb8] sm:$0xf]
  %v87 = vld [vmem:[%s1 + $0xbc] sm:$0xf]
  %v88 = vld [vmem:[%s1 + $0xc0] sm:$0xf]
  %v89 = vld [vmem:[%s1 + $0xc4] sm:$0xf]
  %v90 = vld [vmem:[%s1 + $0xc8] sm:$0xf]
  %v91 = vld [vmem:[%s1 + $0xcc] sm:$0xf]
  %v92 = vld [vmem:[%s1 + $0xd0] sm:$0xf]
  %v93 = vld [vmem:[%s1 + $0xd4] sm:$0xf]
  %v94 = vld [vmem:[%s1 + $0xd8] sm:$0xf]
  %v95 = vld [vmem:[%s1 + $0xdc] sm:$0xf]
  %v96 = vld [vmem:[%s1 + $0xe0] sm:$0xf]
  %v97 = vld [vmem:[%s1 + $0xe4] sm:$0xf]
  %v98 = vld [vmem:[%s1 + $0xe8] sm:$0xf]
  %v99 = vld [vmem:[%s1 + $0xec] sm:$0xf]
  %v100 = vld [vmem:[%s1 + $0xf0] sm:$0xf]
  %v101 = vld [vmem:[%s1 + $0xf4] sm:$0xf]
  %v102 = vld [vmem:[%s1 + $0xf8] sm:$0xf]
  %v103 = vld [vmem:[%s1 + $0xfc] sm:$0xf]
  %v104 = vld [vmem:[%s1 + $0x100] sm:$0xf]
  %v105 = vld [vmem:[%s1 + $0x104] sm:$0xf]
  %v106 = vld [vmem:[%s1 + $0x108] sm:$0xf]
  %v107 = vld [vmem:[%s1 + $0x10c] sm:$0xf]
  %v108 = vld [vmem:[%s1 + $0x110] sm:$0xf]
  %v109 = vld [vmem:[%s1 + $0x114] sm:$0xf]
  %v110 = vld [vmem:[%s1 + $0x118] sm:$0xf]
  %v111 = vld [vmem:[%s1 + $0x11c] sm:$0xf]
  %v112 = vld [vmem:[%s1 + $0x120] sm:$0xf]
  %v113 = vld [vmem:[%s1 + $0x124] sm:$0xf]
  %v114 = vld [vmem:[%s1 + $0x128] sm:$0xf]
  %v115 = vld [vmem:[%s1 + $0x12c] sm:$0xf]
  %v116 = vld [vmem:[%s1 + $0x130] sm:$0xf]
  %v117 = vld [vmem:[%s1 + $0x134] sm:$0xf]
  %v118 = vld [vmem:[%s1 + $0x138] sm:$0xf]
  %v119 = vld [vmem:[%s1 + $0x13c] sm:$0xf]
  %v120 = vld [vmem:[%s1 + $0x140] sm:$0xf]
  %v121 = vld [vmem:[%s1 + $0x144] sm:$0xf]
  %v122 = vld [vmem:[%s1 + $0x148] sm:$0xf]
  %v123 = vld [vmem:[%s1 + $0x14c] sm:$0xf]
  %v124 = vld [vmem:[%s1 + $0x150] sm:$0xf]
  %v125 = vld [vmem:[%s1 + $0x154] sm:$0xf]
  %v126 = vld [vmem:[%s1 + $0x158] sm:$0xf]
  %v127 = vld [vmem:[%s1 + $0x15c] sm:$0xf]
  %v128 = vld [vmem:[%s1 + $0x160] sm:$0xf]
  %v129 = vld [vmem:[%s1 + $0x164] sm:$0xf]
  %v130 = vld [vmem:[%s1 + $0x168] sm:$0xf]
  %v131 = vld [vmem:[%s1 + $0x16c] sm:$0xf]
  %v132 = vld [vmem:[%s1 + $0x170] sm:$0xf]
  %v133 = vld [vmem:[%s1 + $0x174] sm:$0xf]
  %v134 = vld [vmem:[%s1 + $0x178] sm:$0xf]
  %v135 = vld [vmem:[%s1 + $0x17c] sm:$0xf]
  %v136 = vld [vmem:[%s1 + $0x180] sm:$0xf]
  %v137 = vld [vmem:[%s1 + $0x184] sm:$0xf]
  %v138 = vld [vmem:[%s1 + $0x188] sm:$0xf]
  %v139 = vld [vmem:[%s1 + $0x18c] sm:$0xf]
  %v140 = vld [vmem:[%s1 + $0x190] sm:$0xf]
  %v141 = vld [vmem:[%s1 + $0x194] sm:$0xf]
  %v142 = vld [vmem:[%s1 + $0x198] sm:$0xf]
  %v143 = vld [vmem:[%s1 + $0x19c] sm:$0xf]
  %v144 = vld [vmem:[%s1 + $0x1a0] sm:$0xf]
  %v145 = vld [vmem:[%s1 + $0x1a4] sm:$0xf]
  %v146 = vld [vmem:[%s1 + $0x1a8] sm:$0xf]
  %v147 = vld [vmem:[%s1 + $0x1ac] sm:$0xf]
  %v148 = vld [vmem:[%s1 + $0x1b0] sm:$0xf]
  %v149 = vld [vmem:[%s1 + $0x1b4] sm:$0xf]
  %v150 = vld [vmem:[%s1 + $0x1b8] sm:$0xf]
  %v151 = vld [vmem:[%s1 + $0x1bc] sm:$0xf]
  %v152 = vld [vmem:[%s1 + $0x1c0] sm:$0xf]
  %v153 = vld [vmem:[%s1 + $0x1c4] sm:$0xf]
  %v154 = vld [vmem:[%s1 + $0x1c8] sm:$0xf]
  %v155 = vld [vmem:[%s1 + $0x1cc] sm:$0xf]
  %v156 = vld [vmem:[%s1 + $0x1d0] sm:$0xf]
  %v157 = vld [vmem:[%s1 + $0x1d4] sm:$0xf]
  %v158 = vld [vmem:[%s1 + $0x1d8] sm:$0xf]
  %v159 = vld [vmem:[%s1 + $0x1dc] sm:$0xf]
  %v160 = vld [vmem:[%s1 + $0x1e0] sm:$0xf]
  %v161 = vld [vmem:[%s1 + $0x1e4] sm:$0xf]
  %v162 = vld [vmem:[%s1 + $0x1e8] sm:$0xf]
  %v163 = vld [vmem:[%s1 + $0x1ec] sm:$0xf]
  %v164 = vld [vmem:[%s1 + $0x1f0] sm:$0xf]
  %v165 = vld [vmem:[%s1 + $0x1f4] sm:$0xf]
  %v166 = vld [vmem:[%s1 + $0x1f8] sm:$0xf]
  %v167 = vld [vmem:[%s1 + $0x1fc] sm:$0xf]
  %v168 = vld [vmem:[%s1 + $0x200] sm:$0xf]
  %v169 = vld [vmem:[%s1 + $0x204] sm:$0xf]
  %v170 = vld [vmem:[%s1 + $0x208] sm:$0xf]
  %v171 = vld [vmem:[%s1 + $0x20c] sm:$0xf]
  %v172 = vld [vmem:[%s1 + $0x210] sm:$0xf]
  %v173 = vld [vmem:[%s1 + $0x214] sm:$0xf]
  %v174 = vld [vmem:[%s1 + $0x218] sm:$0xf]
  %v175 = vld [vmem:[%s1 + $0x21c] sm:$0xf]
  %v176 = vld [vmem:[%s1 + $0x220] sm:$0xf]
  %v177 = vld [vmem:[%s1 + $0x224] sm:$0xf]
  %v178 = vld [vmem:[%s1 + $0x228] sm:$0xf]
  %v179 = vld [vmem:[%s1 + $0x22c] sm:$0xf]
  %v180 = vld [vmem:[%s1 + $0x230] sm:$0xf]
  %v181 = vld [vmem:[%s1 + $0x234] sm:$0xf]
  %v182 = vld [vmem:[%s1 + $0x238] sm:$0xf]
  %v183 = vld [vmem:[%s1 + $0x23c] sm:$0xf]
  %v184 = vld [vmem:[%s1 + $0x240] sm:$0xf]
  %v185 = vld [vmem:[%s1 + $0x244] sm:$0xf]
  %v186 = vld [vmem:[%s1 + $0x248] sm:$0xf]
  %v187 = vld [vmem:[%s1 + $0x24c] sm:$0xf]
  %v188 = vld [vmem:[%s1 + $0x250] sm:$0xf]
  %v189 = vld [vmem:[%s1 + $0x254] sm:$0xf]
  %v190 = vld [vmem:[%s1 + $0x258] sm:$0xf]
  %v191 = vld [vmem:[%s1 + $0x25c] sm:$0xf]
  %v192 = vld [vmem:[%s1 + $0x260] sm:$0xf]
  %v193 = vld [vmem:[%s1 + $0x264] sm:$0xf]
  %v194 = vld [vmem:[%s1 + $0x268] sm:$0xf]
  %v195 = vld [vmem:[%s1 + $0x26c] sm:$0xf]
  %v196 = vld [vmem:[%s1 + $0x270] sm:$0xf]
  %v197 = vld [vmem:[%s1 + $0x274] sm:$0xf]
  %v198 = vld [vmem:[%s1 + $0x278] sm:$0xf]
  %v199 = vld [vmem:[%s1 + $0x27c] sm:$0xf]
  %v200 = vld [vmem:[%s1 + $0x280] sm:$0xf]
  %v201 = vld [vmem:[%s1 + $0x284] sm:$0xf]
  %v202 = vld [vmem:[%s1 + $0x288] sm:$0xf]
  %v203 = vld [vmem:[%s1 + $0x28c] sm:$0xf]
  %v204 = vld [vmem:[%s1 + $0x290] sm:$0xf]
  %v205 = vld [vmem:[%s1 + $0x294] sm:$0xf]
  %v206 = vld [vmem:[%s1 + $0x298] sm:$0xf]
  %v207 = vld [vmem:[%s1 + $0x29c] sm:$0xf]
  %v208 = vld [vmem:[%s1 + $0x2a0] sm:$0xf]
  %v209 = vld [vmem:[%s1 + $0x2a4] sm:$0xf]
  %v210 = vld [vmem:[%s1 + $0x2a8] sm:$0xf]
  %v211 = vld [vmem:[%s1 + $0x2ac] sm:$0xf]
  %v212 = vld [vmem:[%s1 + $0x2b0] sm:$0xf]
  %v213 = vld [vmem:[%s1 + $0x2b4] sm:$0xf]
  %v214 = vld [vmem:[%s1 + $0x2b8] sm:$0xf]
  %v215 = vld [vmem:[%s1 + $0x2bc] sm:$0xf]
  %v216 = vld [vmem:[%s1 + $0x2c0] sm:$0xf]
  %v217 = vld [vmem:[%s1 + $0x2c4] sm:$0xf]
  %v218 = vld [vmem:[%s1 + $0x2c8] sm:$0xf]
  %v219 = vld [vmem:[%s1 + $0x2cc] sm:$0xf]
  %v220 = vld [vmem:[%s1 + $0x2d0] sm:$0xf]
  %v221 = vld [vmem:[%s1 + $0x2d4] sm:$0xf]
  %v222 = vld [vmem:[%s1 + $0x2d8] sm:$0xf]
  %v223 = vld [vmem:[%s1 + $0x2dc] sm:$0xf]
  %v224 = vld [vmem:[%s1 + $0x2e0] sm:$0xf]
  %v225 = vld [vmem:[%s1 + $0x2e4] sm:$0xf]
  %v226 = vld [vmem:[%s1 + $0x2e8] sm:$0xf]
  %v227 = vld [vmem:[%s1 + $0x2ec] sm:$0xf]
  %v228 = vld [vmem:[%s1 + $0x2f0] sm:$0xf]
  %v229 = vld [vmem:[%s1 + $0x2f4] sm:$0xf]
  %v230 = vld [vmem:[%s1 + $0x2f8] sm:$0xf]
  %v231 = vld [vmem:[%s1 + $0x2fc] sm:$0xf]
  %v232 = vld [vmem:[%s1 + $0x300] sm:$0xf]
  %v233 = vld [vmem:[%s1 + $0x304] sm:$0xf]
  %v234 = vld [vmem:[%s1 + $0x308] sm:$0xf]
  %v235 = vld [vmem:[%s1 + $0x30c] sm:$0xf]
  %v236 = vld [vmem:[%s1 + $0x310] sm:$0xf]
  %v237 = vld [vmem:[%s1 + $0x314] sm:$0xf]
  %v238 = vld [vmem:[%s1 + $0x318] sm:$0xf]
  %v239 = vld [vmem:[%s1 + $0x31c] sm:$0xf]
  %v240 = vld [vmem:[%s1 + $0x320] sm:$0xf]
  %v241 = vld [vmem:[%s1 + $0x324] sm:$0xf]
  %v242 = vld [vmem:[%s1 + $0x328] sm:$0xf]
  %v243 = vld [vmem:[%s1 + $0x32c] sm:$0xf]
  %v244 = vld [vmem:[%s1 + $0x330] sm:$0xf]
  %v245 = vld [vmem:[%s1 + $0x334] sm:$0xf]
  %v246 = vld [vmem:[%s1 + $0x338] sm:$0xf]
  %v247 = vld [vmem:[%s1 + $0x33c] sm:$0xf]
  %v248 = vld [vmem:[%s1 + $0x340] sm:$0xf]
  %v249 = vld [vmem:[%s1 + $0x344] sm:$0xf]
  %v250 = vld [vmem:[%s1 + $0x348] sm:$0xf]
  %v251 = vld [vmem:[%s1 + $0x34c] sm:$0xf]
  %v252 = vld [vmem:[%s1 + $0x350] sm:$0xf]
  %v253 = vld [vmem:[%s1 + $0x354] sm:$0xf]
  %v254 = vld [vmem:[%s1 + $0x358] sm:$0xf]
  %v255 = vld [vmem:[%s1 + $0x35c] sm:$0xf]
  %v256 = vld [vmem:[%s1 + $0x360] sm:$0xf]
  %v257 = vld [vmem:[%s1 + $0x364] sm:$0xf]
  %v258 = vld [vmem:[%s1 + $0x368] sm:$0xf]
  %v259 = vld [vmem:[%s1 + $0x36c] sm:$0xf]
  %v260 = vld [vmem:[%s1 + $0x370] sm:$0xf]
  %v261 = vld [vmem:[%s1 + $0x374] sm:$0xf]
  %v262 = vld [vmem:[%s1 + $0x378] sm:$0xf]
  %v263 = vld [vmem:[%s1 + $0x37c] sm:$0xf]
  %v264 = vld [vmem:[%s1 + $0x380] sm:$0xf]
  %v265 = vld [vmem:[%s1 + $0x384] sm:$0xf]
  %v266 = vld [vmem:[%s1 + $0x388] sm:$0xf]
  %v267 = vld [vmem:[%s1 + $0x38c] sm:$0xf]
  %v268 = vld [vmem:[%s1 + $0x390] sm:$0xf]
  %v269 = vld [vmem:[%s1 + $0x394] sm:$0xf]
  %v270 = vld [vmem:[%s1 + $0x398] sm:$0xf]
  %v271 = vld [vmem:[%s1 + $0x39c] sm:$0xf]
  %v272 = vld [vmem:[%s1 + $0x3a0] sm:$0xf]
  %v273 = vld [vmem:[%s1 + $0x3a4] sm:$0xf]
  %v274 = vld [vmem:[%s1 + $0x3a8] sm:$0xf]
  %v275 = vld [vmem:[%s1 + $0x3ac] sm:$0xf]
  %v276 = vld [vmem:[%s1 + $0x3b0] sm:$0xf]
  %v277 = vld [vmem:[%s1 + $0x3b4] sm:$0xf]
  %v278 = vld [vmem:[%s1 + $0x3b8] sm:$0xf]
  %v279 = vld [vmem:[%s1 + $0x3bc] sm:$0xf]
  %v280 = vld [vmem:[%s1 + $0x3c0] sm:$0xf]
  %v281 = vld [vmem:[%s1 + $0x3c4] sm:$0xf]
  %v282 = vld [vmem:[%s1 + $0x3c8] sm:$0xf]
  %v283 = vld [vmem:[%s1 + $0x3cc] sm:$0xf]
  %v284 = vld [vmem:[%s1 + $0x3d0] sm:$0xf]
  %v285 = vld [vmem:[%s1 + $0x3d4] sm:$0xf]
  %v286 = vld [vmem:[%s1 + $0x3d8] sm:$0xf]
  %v287 = vld [vmem:[%s1 + $0x3dc] sm:$0xf]
  %v288 = vld [vmem:[%s1 + $0x3e0] sm:$0xf]
  %v289 = vld [vmem:[%s1 + $0x3e4] sm:$0xf]
  %v290 = vld [vmem:[%s1 + $0x3e8] sm:$0xf]
  %v291 = vld [vmem:[%s1 + $0x3ec] sm:$0xf]
  %v292 = vld [vmem:[%s1 + $0x3f0] sm:$0xf]
  %v293 = vld [vmem:[%s1 + $0x3f4] sm:$0xf]
  %v294 = vld [vmem:[%s1 + $0x3f8] sm:$0xf]
  %v295 = vld [vmem:[%s1 + $0x3fc] sm:$0xf]
  %v296 = vld [vmem:[%s1 + $0x400] sm:$0xf]
  %v297 = vld [vmem:[%s1 + $0x404] sm:$0xf]
  %v298 = vld [vmem:[%s1 + $0x408] sm:$0xf]
  %v299 = vld [vmem:[%s1 + $0x40c] sm:$0xf]
  %v300 = vld [vmem:[%s1 + $0x410] sm:$0xf]
  %v301 = vld [vmem:[%s1 + $0x414] sm:$0xf]
  %v302 = vld [vmem:[%s1 + $0x418] sm:$0xf]
  %v303 = vld [vmem:[%s1 + $0x41c] sm:$0xf]
  %v304 = vld [vmem:[%s1 + $0x420] sm:$0xf]
  %v305 = vld [vmem:[%s1 + $0x424] sm:$0xf]
  %v306 = vld [vmem:[%s1 + $0x428] sm:$0xf]
  %v307 = vld [vmem:[%s1 + $0x42c] sm:$0xf]
  %v308 = vld [vmem:[%s1 + $0x430] sm:$0xf]
  %v309 = vld [vmem:[%s1 + $0x434] sm:$0xf]
  %v310 = vld [vmem:[%s1 + $0x438] sm:$0xf]
  %v311 = vld [vmem:[%s1 + $0x43c] sm:$0xf]
  %v312 = vld [vmem:[%s1 + $0x440] sm:$0xf]
  %v313 = vld [vmem:[%s1 + $0x444] sm:$0xf]
  %v314 = vld [vmem:[%s1 + $0x448] sm:$0xf]
  %v315 = vld [vmem:[%s1 + $0x44c] sm:$0xf]
  %v316 = vld [vmem:[%s1 + $0x450] sm:$0xf]
  %v317 = vld [vmem:[%s1 + $0x454] sm:$0xf]
  %v318 = vld [vmem:[%s1 + $0x458] sm:$0xf]
  %v319 = vld [vmem:[%s1 + $0x45c] sm:$0xf]
  %v320 = vld [vmem:[%s1 + $0x460] sm:$0xf]
  %v321 = vld [vmem:[%s1 + $0x464] sm:$0xf]
  %v322 = vld [vmem:[%s1 + $0x468] sm:$0xf]
  %v323 = vld [vmem:[%s1 + $0x46c] sm:$0xf]
  %v324 = vld [vmem:[%s1 + $0x470] sm:$0xf]
  %v325 = vld [vmem:[%s1 + $0x474] sm:$0xf]
  %v326 = vld [vmem:[%s1 + $0x478] sm:$0xf]
  %v327 = vld [vmem:[%s1 + $0x47c] sm:$0xf]
  %v328 = vld [vmem:[%s1 + $0x480] sm:$0xf]
  %v329 = vld [vmem:[%s1 + $0x484] sm:$0xf]
  %v330 = vld [vmem:[%s1 + $0x488] sm:$0xf]
  %v331 = vld [vmem:[%s1 + $0x48c] sm:$0xf]
  %v332 = vld [vmem:[%s1 + $0x490] sm:$0xf]
  %v333 = vld [vmem:[%s1 + $0x494] sm:$0xf]
  %v334 = vld [vmem:[%s1 + $0x498] sm:$0xf]
  %v335 = vld [vmem:[%s1 + $0x49c] sm:$0xf]
  %v336 = vld [vmem:[%s1 + $0x4a0] sm:$0xf]
  %v337 = vld [vmem:[%s1 + $0x4a4] sm:$0xf]
  %v338 = vld [vmem:[%s1 + $0x4a8] sm:$0xf]
  %v339 = vld [vmem:[%s1 + $0x4ac] sm:$0xf]
  %v340 = vld [vmem:[%s1 + $0x4b0] sm:$0xf]
  %v341 = vld [vmem:[%s1 + $0x4b4] sm:$0xf]
  %v342 = vld [vmem:[%s1 + $0x4b8] sm:$0xf]
  %v343 = vld [vmem:[%s1 + $0x4bc] sm:$0xf]
  %v344 = vld [vmem:[%s1 + $0x4c0] sm:$0xf]
  %v345 = vld [vmem:[%s1 + $0x4c4] sm:$0xf]
  %v346 = vld [vmem:[%s1 + $0x4c8] sm:$0xf]
  %v347 = vld [vmem:[%s1 + $0x4cc] sm:$0xf]
  %v348 = vld [vmem:[%s1 + $0x4d0] sm:$0xf]
  %v349 = vld [vmem:[%s1 + $0x4d4] sm:$0xf]
  %v350 = vld [vmem:[%s1 + $0x4d8] sm:$0xf]
  %v351 = vld [vmem:[%s1 + $0x4dc] sm:$0xf]
  %v352 = vld [vmem:[%s1 + $0x4e0] sm:$0xf]
  %v353 = vld [vmem:[%s1 + $0x4e4] sm:$0xf]
  %v354 = vld [vmem:[%s1 + $0x4e8] sm:$0xf]
  %v355 = vld [vmem:[%s1 + $0x4ec] sm:$0xf]
  %v356 = vld [vmem:[%s1 + $0x4f0] sm:$0xf]
  %v357 = vld [vmem:[%s1 + $0x4f4] sm:$0xf]
  %v358 = vld [vmem:[%s1 + $0x4f8] sm:$0xf]
  %v359 = vld [vmem:[%s1 + $0x4fc] sm:$0xf]
  %v360 = vld [vmem:[%s1 + $0x500] sm:$0xf]
  %v361 = vld [vmem:[%s1 + $0x504] sm:$0xf]
  %v362 = vld [vmem:[%s1 + $0x508] sm:$0xf]
  %v363 = vld [vmem:[%s1 + $0x50c] sm:$0xf]
  %v364 = vld [vmem:[%s1 + $0x510] sm:$0xf]
  %v365 = vld [vmem:[%s1 + $0x514] sm:$0xf]
  %v366 = vld [vmem:[%s1 + $0x518] sm:$0xf]
  %v367 = vld [vmem:[%s1 + $0x51c] sm:$0xf]
  %v368 = vld [vmem:[%s1 + $0x520] sm:$0xf]
  %v369 = vld [vmem:[%s1 + $0x524] sm:$0xf]
  %v370 = vld [vmem:[%s1 + $0x528] sm:$0xf]
  %v371 = vld [vmem:[%s1 + $0x52c] sm:$0xf]
  %v372 = vld [vmem:[%s1 + $0x530] sm:$0xf]
  %v373 = vld [vmem:[%s1 + $0x534] sm:$0xf]
  %v374 = vld [vmem:[%s1 + $0x538] sm:$0xf]
  %v375 = vld [vmem:[%s1 + $0x53c] sm:$0xf]
  %v376 = vld [vmem:[%s1 + $0x540] sm:$0xf]
  %v377 = vld [vmem:[%s1 + $0x544] sm:$0xf]
  %v378 = vld [vmem:[%s1 + $0x548] sm:$0xf]
  %v379 = vld [vmem:[%s1 + $0x54c] sm:$0xf]
  %v380 = vld [vmem:[%s1 + $0x550] sm:$0xf]
  %v381 = vld [vmem:[%s1 + $0x554] sm:$0xf]
  %v382 = vld [vmem:[%s1 + $0x558] sm:$0xf]
  %v383 = vld [vmem:[%s1 + $0x55c] sm:$0xf]
  %v384 = vld [vmem:[%s1 + $0x560] sm:$0xf]
  %v385 = vld [vmem:[%s1 + $0x564] sm:$0xf]
  %v386 = vld [vmem:[%s1 + $0x568] sm:$0xf]
  %v387 = vld [vmem:[%s1 + $0x56c] sm:$0xf]
  %v388 = vld [vmem:[%s1 + $0x570] sm:$0xf]
  %v389 = vld [vmem:[%s1 + $0x574] sm:$0xf]
  %v390 = vld [vmem:[%s1 + $0x578] sm:$0xf]
  %v391 = vld [vmem:[%s1 + $0x57c] sm:$0xf]
  %v392 = vld [vmem:[%s1 + $0x580] sm:$0xf]
  %v393 = vld [vmem:[%s1 + $0x584] sm:$0xf]
  %v394 = vld [vmem:[%s1 + $0x588] sm:$0xf]
  %v395 = vld [vmem:[%s1 + $0x58c] sm:$0xf]
  %v396 = vld [vmem:[%s1 + $0x590] sm:$0xf]
  %v397 = vld [vmem:[%s1 + $0x594] sm:$0xf]
  %v398 = vld [vmem:[%s1 + $0x598] sm:$0xf]
  %v399 = vld [vmem:[%s1 + $0x59c] sm:$0xf]
  %v400 = vld [vmem:[%s1 + $0x5a0] sm:$0xf]
  %v401 = vld [vmem:[%s1 + $0x5a4] sm:$0xf]
  %v402 = vld [vmem:[%s1 + $0x5a8] sm:$0xf]
  %v403 = vld [vmem:[%s1 + $0x5ac] sm:$0xf]
  %v404 = vld [vmem:[%s1 + $0x5b0] sm:$0xf]
  %v405 = vld [vmem:[%s1 + $0x5b4] sm:$0xf]
  %v406 = vld [vmem:[%s1 + $0x5b8] sm:$0xf]
  %v407 = vld [vmem:[%s1 + $0x5bc] sm:$0xf]
  %v408 = vld [vmem:[%s1 + $0x5c0] sm:$0xf]
  %v409 = vld [vmem:[%s1 + $0x5c4] sm:$0xf]
  %v410 = vld [vmem:[%s1 + $0x5c8] sm:$0xf]
  %v411 = vld [vmem:[%s1 + $0x5cc] sm:$0xf]
  %v412 = vld [vmem:[%s1 + $0x5d0] sm:$0xf]
  %v413 = vld [vmem:[%s1 + $0x5d4] sm:$0xf]
  %v414 = vld [vmem:[%s1 + $0x5d8] sm:$0xf]
  %v415 = vld [vmem:[%s1 + $0x5dc] sm:$0xf]
  %v416 = vld [vmem:[%s1 + $0x5e0] sm:$0xf]
  %v417 = vld [vmem:[%s1 + $0x5e4] sm:$0xf]
  %v418 = vld [vmem:[%s1 + $0x5e8] sm:$0xf]
  %v419 = vld [vmem:[%s1 + $0x5ec] sm:$0xf]
  %v420 = vld [vmem:[%s1 + $0x5f0] sm:$0xf]
  %v421 = vld [vmem:[%s1 + $0x5f4] sm:$0xf]
  %v422 = vld [vmem:[%s1 + $0x5f8] sm:$0xf]
  %v423 = vld [vmem:[%s1 + $0x5fc] sm:$0xf]
  %v424 = vld [vmem:[%s1 + $0x600] sm:$0xf]
  %v425 = vld [vmem:[%s1 + $0x604] sm:$0xf]
  %v426 = vld [vmem:[%s1 + $0x608] sm:$0xf]
  %v427 = vld [vmem:[%s1 + $0x60c] sm:$0xf]
  %v428 = vld [vmem:[%s1 + $0x610] sm:$0xf]
  %v429 = vld [vmem:[%s1 + $0x614] sm:$0xf]
  %v430 = vld [vmem:[%s1 + $0x618] sm:$0xf]
  %v431 = vld [vmem:[%s1 + $0x61c] sm:$0xf]
  %v432 = vld [vmem:[%s2] sm:$0x1]
  %v434 = vlaneseq
  %v435 = vshrl.u32 %v434, 7
  %v436 = vsub.s32 0, %v435
  %v437 = vrot.slane %v432, %v436
  %v452 = vunpack.c.l.b16 %v27
  %v453 = vunpack.c.h.b16 %v27
  %v454 = vunpack.c.l.b16 %v28
  %v455 = vunpack.c.h.b16 %v28
  %v456 = vunpack.c.l.b16 %v29
  %v457 = vunpack.c.h.b16 %v29
  %v458 = vunpack.c.l.b16 %v30
  %v459 = vunpack.c.h.b16 %v30
  %v460 = vunpack.c.l.b16 %v31
  %v461 = vunpack.c.h.b16 %v31
  %v462 = vunpack.c.l.b16 %v32
  %v463 = vunpack.c.h.b16 %v32
  %v464 = vunpack.c.l.b16 %v33
  %v465 = vunpack.c.h.b16 %v33
  %v466 = vunpack.c.l.b16 %v34
  %v467 = vunpack.c.h.b16 %v34
  %v468 = vunpack.c.l.b16 %v35
  %v469 = vunpack.c.h.b16 %v35
  %v470 = vunpack.c.l.b16 %v36
  %v471 = vunpack.c.h.b16 %v36
  %v472 = vunpack.c.l.b16 %v37
  %v473 = vunpack.c.h.b16 %v37
  %v474 = vunpack.c.l.b16 %v38
  %v475 = vunpack.c.h.b16 %v38
  %v476 = vunpack.c.l.b16 %v39
  %v477 = vpack.c.b16 %v452, %v452
  %v478 = vpack.c.b16 %v453, %v453
  %v479 = vpack.c.b16 %v454, %v454
  %v480 = vpack.c.b16 %v455, %v455
  %v481 = vpack.c.b16 %v456, %v456
  %v482 = vpack.c.b16 %v457, %v457
  %v483 = vpack.c.b16 %v458, %v458
  %v484 = vpack.c.b16 %v459, %v459
  %v485 = vpack.c.b16 %v460, %v460
  %v486 = vpack.c.b16 %v461, %v461
  %v487 = vpack.c.b16 %v462, %v462
  %v488 = vpack.c.b16 %v463, %v463
  %v489 = vpack.c.b16 %v464, %v464
  %v490 = vpack.c.b16 %v465, %v465
  %v491 = vpack.c.b16 %v466, %v466
  %v492 = vpack.c.b16 %v467, %v467
  %v493 = vpack.c.b16 %v468, %v468
  %v494 = vpack.c.b16 %v469, %v469
  %v495 = vpack.c.b16 %v470, %v470
  %v496 = vpack.c.b16 %v471, %v471
  %v497 = vpack.c.b16 %v472, %v472
  %v498 = vpack.c.b16 %v473, %v473
  %v499 = vpack.c.b16 %v474, %v474
  %v500 = vpack.c.b16 %v475, %v475
  %v501 = vpack.c.b16 %v476, %v476
  %v918 = vunpack.c.l.b16 %v40
  %v919 = vunpack.c.l.b16 %v41
  %v920 = vunpack.c.l.b16 %v42
  %v921 = vunpack.c.l.b16 %v43
  %v922 = vunpack.c.l.b16 %v44
  %v923 = vunpack.c.l.b16 %v45
  %v924 = vunpack.c.l.b16 %v46
  %v925 = vunpack.c.l.b16 %v47
  %v926 = vunpack.c.l.b16 %v48
  %v927 = vunpack.c.l.b16 %v49
  %v928 = vunpack.c.l.b16 %v50
  %v929 = vunpack.c.l.b16 %v51
  %v930 = vunpack.c.l.b16 %v52
  %v931 = vunpack.c.l.b16 %v53
  %v932 = vunpack.c.l.b16 %v54
  %v933 = vunpack.c.l.b16 %v55
  %v934 = vunpack.c.l.b16 %v56
  %v935 = vunpack.c.l.b16 %v57
  %v936 = vunpack.c.l.b16 %v58
  %v937 = vunpack.c.l.b16 %v59
  %v938 = vunpack.c.l.b16 %v60
  %v939 = vunpack.c.l.b16 %v61
  %v940 = vunpack.c.l.b16 %v62
  %v941 = vunpack.c.l.b16 %v63
  %v942 = vunpack.c.l.b16 %v64
  %v943 = vunpack.c.l.b16 %v65
  %v944 = vunpack.c.l.b16 %v66
  %v945 = vunpack.c.l.b16 %v67
  %v946 = vunpack.c.l.b16 %v68
  %v947 = vunpack.c.l.b16 %v69
  %v948 = vunpack.c.l.b16 %v70
  %v949 = vunpack.c.l.b16 %v71
  %v950 = vunpack.c.l.b16 %v72
  %v951 = vunpack.c.l.b16 %v73
  %v952 = vunpack.c.l.b16 %v74
  %v953 = vunpack.c.l.b16 %v75
  %v954 = vunpack.c.l.b16 %v76
  %v955 = vunpack.c.l.b16 %v77
  %v956 = vunpack.c.l.b16 %v78
  %v957 = vunpack.c.l.b16 %v79
  %v958 = vunpack.c.l.b16 %v80
  %v959 = vunpack.c.l.b16 %v81
  %v960 = vunpack.c.l.b16 %v82
  %v961 = vunpack.c.l.b16 %v83
  %v962 = vunpack.c.l.b16 %v84
  %v963 = vunpack.c.l.b16 %v85
  %v964 = vunpack.c.l.b16 %v86
  %v965 = vunpack.c.l.b16 %v87
  %v966 = vunpack.c.l.b16 %v88
  %v967 = vunpack.c.l.b16 %v89
  %v968 = vunpack.c.l.b16 %v90
  %v969 = vunpack.c.l.b16 %v91
  %v970 = vunpack.c.l.b16 %v92
  %v971 = vunpack.c.l.b16 %v93
  %v972 = vunpack.c.l.b16 %v94
  %v973 = vunpack.c.l.b16 %v95
  %v974 = vunpack.c.l.b16 %v96
  %v975 = vunpack.c.l.b16 %v97
  %v976 = vunpack.c.l.b16 %v98
  %v977 = vunpack.c.l.b16 %v99
  %v978 = vunpack.c.l.b16 %v100
  %v979 = vunpack.c.l.b16 %v101
  %v980 = vunpack.c.l.b16 %v102
  %v981 = vunpack.c.l.b16 %v103
  %v982 = vunpack.c.l.b16 %v104
  %v983 = vunpack.c.l.b16 %v105
  %v984 = vunpack.c.l.b16 %v106
  %v985 = vunpack.c.l.b16 %v107
  %v986 = vunpack.c.l.b16 %v108
  %v987 = vunpack.c.l.b16 %v109
  %v988 = vunpack.c.l.b16 %v110
  %v989 = vunpack.c.l.b16 %v111
  %v990 = vunpack.c.l.b16 %v112
  %v991 = vunpack.c.l.b16 %v113
  %v992 = vunpack.c.l.b16 %v114
  %v993 = vunpack.c.l.b16 %v115
  %v994 = vunpack.c.l.b16 %v116
  %v995 = vunpack.c.l.b16 %v117
  %v996 = vunpack.c.l.b16 %v118
  %v997 = vunpack.c.l.b16 %v119
  %v998 = vunpack.c.l.b16 %v120
  %v999 = vunpack.c.l.b16 %v121
  %v1000 = vunpack.c.l.b16 %v122
  %v1001 = vunpack.c.l.b16 %v123
  %v1002 = vunpack.c.l.b16 %v124
  %v1003 = vunpack.c.l.b16 %v125
  %v1004 = vunpack.c.l.b16 %v126
  %v1005 = vunpack.c.l.b16 %v127
  %v1006 = vunpack.c.l.b16 %v128
  %v1007 = vunpack.c.l.b16 %v129
  %v1008 = vunpack.c.l.b16 %v130
  %v1009 = vunpack.c.l.b16 %v131
  %v1010 = vunpack.c.l.b16 %v132
  %v1011 = vunpack.c.l.b16 %v133
  %v1012 = vunpack.c.l.b16 %v134
  %v1013 = vunpack.c.l.b16 %v135
  %v1014 = vunpack.c.l.b16 %v136
  %v1015 = vunpack.c.l.b16 %v137
  %v1016 = vunpack.c.l.b16 %v138
  %v1017 = vunpack.c.l.b16 %v139
  %v1018 = vunpack.c.l.b16 %v140
  %v1019 = vunpack.c.l.b16 %v141
  %v1020 = vunpack.c.l.b16 %v142
  %v1021 = vunpack.c.l.b16 %v143
  %v1022 = vunpack.c.l.b16 %v144
  %v1023 = vunpack.c.l.b16 %v145
  %v1024 = vunpack.c.l.b16 %v146
  %v1025 = vunpack.c.l.b16 %v147
  %v1026 = vunpack.c.l.b16 %v148
  %v1027 = vunpack.c.l.b16 %v149
  %v1028 = vunpack.c.l.b16 %v150
  %v1029 = vunpack.c.l.b16 %v151
  %v1030 = vunpack.c.l.b16 %v152
  %v1031 = vunpack.c.l.b16 %v153
  %v1032 = vunpack.c.l.b16 %v154
  %v1033 = vunpack.c.l.b16 %v155
  %v1034 = vunpack.c.l.b16 %v156
  %v1035 = vunpack.c.l.b16 %v157
  %v1036 = vunpack.c.l.b16 %v158
  %v1037 = vunpack.c.l.b16 %v159
  %v1038 = vunpack.c.l.b16 %v160
  %v1039 = vunpack.c.l.b16 %v161
  %v1040 = vunpack.c.l.b16 %v162
  %v1041 = vunpack.c.l.b16 %v163
  %v1042 = vunpack.c.l.b16 %v164
  %v1043 = vunpack.c.l.b16 %v165
  %v1044 = vunpack.c.l.b16 %v166
  %v1045 = vunpack.c.l.b16 %v167
  %v1046 = vunpack.c.l.b16 %v168
  %v1047 = vunpack.c.l.b16 %v169
  %v1048 = vunpack.c.l.b16 %v170
  %v1049 = vunpack.c.l.b16 %v171
  %v1050 = vunpack.c.l.b16 %v172
  %v1051 = vunpack.c.l.b16 %v173
  %v1052 = vunpack.c.l.b16 %v174
  %v1053 = vunpack.c.l.b16 %v175
  %v1054 = vunpack.c.l.b16 %v176
  %v1055 = vunpack.c.l.b16 %v177
  %v1056 = vunpack.c.l.b16 %v178
  %v1057 = vunpack.c.l.b16 %v179
  %v1058 = vunpack.c.l.b16 %v180
  %v1059 = vunpack.c.l.b16 %v181
  %v1060 = vunpack.c.l.b16 %v182
  %v1061 = vunpack.c.l.b16 %v183
  %v1062 = vunpack.c.l.b16 %v184
  %v1063 = vunpack.c.l.b16 %v185
  %v1064 = vunpack.c.l.b16 %v186
  %v1065 = vunpack.c.l.b16 %v187
  %v1066 = vunpack.c.l.b16 %v188
  %v1067 = vunpack.c.l.b16 %v189
  %v1068 = vunpack.c.l.b16 %v190
  %v1069 = vunpack.c.l.b16 %v191
  %v1070 = vunpack.c.l.b16 %v192
  %v1071 = vunpack.c.l.b16 %v193
  %v1072 = vunpack.c.l.b16 %v194
  %v1073 = vunpack.c.l.b16 %v195
  %v1074 = vunpack.c.l.b16 %v196
  %v1075 = vunpack.c.l.b16 %v197
  %v1076 = vunpack.c.l.b16 %v198
  %v1077 = vunpack.c.l.b16 %v199
  %v1078 = vunpack.c.l.b16 %v200
  %v1079 = vunpack.c.l.b16 %v201
  %v1080 = vunpack.c.l.b16 %v202
  %v1081 = vunpack.c.l.b16 %v203
  %v1082 = vunpack.c.l.b16 %v204
  %v1083 = vunpack.c.l.b16 %v205
  %v1084 = vunpack.c.l.b16 %v206
  %v1085 = vunpack.c.l.b16 %v207
  %v1086 = vunpack.c.l.b16 %v208
  %v1087 = vunpack.c.l.b16 %v209
  %v1088 = vunpack.c.l.b16 %v210
  %v1089 = vunpack.c.l.b16 %v211
  %v1090 = vunpack.c.l.b16 %v212
  %v1091 = vunpack.c.l.b16 %v213
  %v1092 = vunpack.c.l.b16 %v214
  %v1093 = vunpack.c.l.b16 %v215
  %v1094 = vunpack.c.l.b16 %v216
  %v1095 = vunpack.c.l.b16 %v217
  %v1096 = vunpack.c.l.b16 %v218
  %v1097 = vunpack.c.l.b16 %v219
  %v1098 = vunpack.c.l.b16 %v220
  %v1099 = vunpack.c.l.b16 %v221
  %v1100 = vunpack.c.l.b16 %v222
  %v1101 = vunpack.c.l.b16 %v223
  %v1102 = vunpack.c.l.b16 %v224
  %v1103 = vunpack.c.l.b16 %v225
  %v1104 = vunpack.c.l.b16 %v226
  %v1105 = vunpack.c.l.b16 %v227
  %v1106 = vunpack.c.l.b16 %v228
  %v1107 = vunpack.c.l.b16 %v229
  %v1108 = vunpack.c.l.b16 %v230
  %v1109 = vunpack.c.l.b16 %v231
  %v1110 = vunpack.c.l.b16 %v232
  %v1111 = vunpack.c.l.b16 %v233
  %v1112 = vunpack.c.l.b16 %v234
  %v1113 = vunpack.c.l.b16 %v235
  %v1114 = vunpack.c.l.b16 %v236
  %v1115 = vunpack.c.l.b16 %v237
  %v1116 = vunpack.c.l.b16 %v238
  %v1117 = vunpack.c.l.b16 %v239
  %v1118 = vunpack.c.l.b16 %v240
  %v1119 = vunpack.c.l.b16 %v241
  %v1120 = vunpack.c.l.b16 %v242
  %v1121 = vunpack.c.l.b16 %v243
  %v1122 = vunpack.c.l.b16 %v244
  %v1123 = vunpack.c.l.b16 %v245
  %v1124 = vunpack.c.l.b16 %v246
  %v1125 = vunpack.c.l.b16 %v247
  %v1126 = vunpack.c.l.b16 %v248
  %v1127 = vunpack.c.l.b16 %v249
  %v1128 = vunpack.c.l.b16 %v250
  %v1129 = vunpack.c.l.b16 %v251
  %v1130 = vunpack.c.l.b16 %v252
  %v1131 = vunpack.c.l.b16 %v253
  %v1132 = vunpack.c.l.b16 %v254
  %v1133 = vunpack.c.l.b16 %v255
  %v1134 = vunpack.c.l.b16 %v256
  %v1135 = vunpack.c.l.b16 %v257
  %v1136 = vunpack.c.l.b16 %v258
  %v1137 = vunpack.c.l.b16 %v259
  %v1138 = vunpack.c.l.b16 %v260
  %v1139 = vunpack.c.l.b16 %v261
  %v1140 = vunpack.c.l.b16 %v262
  %v1141 = vunpack.c.l.b16 %v263
  %v1142 = vunpack.c.l.b16 %v264
  %v1143 = vunpack.c.l.b16 %v265
  %v1144 = vunpack.c.l.b16 %v266
  %v1145 = vunpack.c.l.b16 %v267
  %v1146 = vunpack.c.l.b16 %v268
  %v1147 = vunpack.c.l.b16 %v269
  %v1148 = vunpack.c.l.b16 %v270
  %v1149 = vunpack.c.l.b16 %v271
  %v1150 = vunpack.c.l.b16 %v272
  %v1151 = vunpack.c.l.b16 %v273
  %v1152 = vunpack.c.l.b16 %v274
  %v1153 = vunpack.c.l.b16 %v275
  %v1154 = vunpack.c.l.b16 %v276
  %v1155 = vunpack.c.l.b16 %v277
  %v1156 = vunpack.c.l.b16 %v278
  %v1157 = vunpack.c.l.b16 %v279
  %v1158 = vunpack.c.l.b16 %v280
  %v1159 = vunpack.c.l.b16 %v281
  %v1160 = vunpack.c.l.b16 %v282
  %v1161 = vunpack.c.l.b16 %v283
  %v1162 = vunpack.c.l.b16 %v284
  %v1163 = vunpack.c.l.b16 %v285
  %v1164 = vunpack.c.l.b16 %v286
  %v1165 = vunpack.c.l.b16 %v287
  %v1166 = vunpack.c.l.b16 %v288
  %v1167 = vunpack.c.l.b16 %v289
  %v1168 = vunpack.c.l.b16 %v290
  %v1169 = vunpack.c.l.b16 %v291
  %v1170 = vunpack.c.l.b16 %v292
  %v1171 = vunpack.c.l.b16 %v293
  %v1172 = vunpack.c.l.b16 %v294
  %v1173 = vunpack.c.l.b16 %v295
  %v1174 = vunpack.c.l.b16 %v296
  %v1175 = vunpack.c.l.b16 %v297
  %v1176 = vunpack.c.l.b16 %v298
  %v1177 = vunpack.c.l.b16 %v299
  %v1178 = vunpack.c.l.b16 %v300
  %v1179 = vunpack.c.l.b16 %v301
  %v1180 = vunpack.c.l.b16 %v302
  %v1181 = vunpack.c.l.b16 %v303
  %v1182 = vunpack.c.l.b16 %v304
  %v1183 = vunpack.c.l.b16 %v305
  %v1184 = vunpack.c.l.b16 %v306
  %v1185 = vunpack.c.l.b16 %v307
  %v1186 = vunpack.c.l.b16 %v308
  %v1187 = vunpack.c.l.b16 %v309
  %v1188 = vunpack.c.l.b16 %v310
  %v1189 = vunpack.c.l.b16 %v311
  %v1190 = vunpack.c.l.b16 %v312
  %v1191 = vunpack.c.l.b16 %v313
  %v1192 = vunpack.c.l.b16 %v314
  %v1193 = vunpack.c.l.b16 %v315
  %v1194 = vunpack.c.l.b16 %v316
  %v1195 = vunpack.c.l.b16 %v317
  %v1196 = vunpack.c.l.b16 %v318
  %v1197 = vunpack.c.l.b16 %v319
  %v1198 = vunpack.c.l.b16 %v320
  %v1199 = vunpack.c.l.b16 %v321
  %v1200 = vunpack.c.l.b16 %v322
  %v1201 = vunpack.c.l.b16 %v323
  %v1202 = vunpack.c.l.b16 %v324
  %v1203 = vunpack.c.l.b16 %v325
  %v1204 = vunpack.c.l.b16 %v326
  %v1205 = vunpack.c.l.b16 %v327
  %v1206 = vunpack.c.l.b16 %v328
  %v1207 = vunpack.c.l.b16 %v329
  %v1208 = vunpack.c.l.b16 %v330
  %v1209 = vunpack.c.l.b16 %v331
  %v1210 = vunpack.c.l.b16 %v332
  %v1211 = vunpack.c.l.b16 %v333
  %v1212 = vunpack.c.l.b16 %v334
  %v1213 = vunpack.c.l.b16 %v335
  %v1214 = vunpack.c.l.b16 %v336
  %v1215 = vunpack.c.l.b16 %v337
  %v1216 = vunpack.c.l.b16 %v338
  %v1217 = vunpack.c.l.b16 %v339
  %v1218 = vunpack.c.l.b16 %v340
  %v1219 = vunpack.c.l.b16 %v341
  %v1220 = vunpack.c.l.b16 %v342
  %v1221 = vunpack.c.l.b16 %v343
  %v1222 = vunpack.c.l.b16 %v344
  %v1223 = vunpack.c.l.b16 %v345
  %v1224 = vunpack.c.l.b16 %v346
  %v1225 = vunpack.c.l.b16 %v347
  %v1226 = vunpack.c.l.b16 %v348
  %v1227 = vunpack.c.l.b16 %v349
  %v1228 = vunpack.c.l.b16 %v350
  %v1229 = vunpack.c.l.b16 %v351
  %v1230 = vunpack.c.l.b16 %v352
  %v1231 = vunpack.c.l.b16 %v353
  %v1232 = vunpack.c.l.b16 %v354
  %v1233 = vunpack.c.l.b16 %v355
  %v1234 = vunpack.c.l.b16 %v356
  %v1235 = vunpack.c.l.b16 %v357
  %v1236 = vunpack.c.l.b16 %v358
  %v1237 = vunpack.c.l.b16 %v359
  %v1238 = vunpack.c.l.b16 %v360
  %v1239 = vunpack.c.l.b16 %v361
  %v1240 = vunpack.c.l.b16 %v362
  %v1241 = vunpack.c.l.b16 %v363
  %v1242 = vunpack.c.l.b16 %v364
  %v1243 = vunpack.c.l.b16 %v365
  %v1244 = vunpack.c.l.b16 %v366
  %v1245 = vunpack.c.l.b16 %v367
  %v1246 = vunpack.c.l.b16 %v368
  %v1247 = vunpack.c.l.b16 %v369
  %v1248 = vunpack.c.l.b16 %v370
  %v1249 = vunpack.c.l.b16 %v371
  %v1250 = vunpack.c.l.b16 %v372
  %v1251 = vunpack.c.l.b16 %v373
  %v1252 = vunpack.c.l.b16 %v374
  %v1253 = vunpack.c.l.b16 %v375
  %v1254 = vunpack.c.l.b16 %v376
  %v1255 = vunpack.c.l.b16 %v377
  %v1256 = vunpack.c.l.b16 %v378
  %v1257 = vunpack.c.l.b16 %v379
  %v1258 = vunpack.c.l.b16 %v380
  %v1259 = vunpack.c.l.b16 %v381
  %v1260 = vunpack.c.l.b16 %v382
  %v1261 = vunpack.c.l.b16 %v383
  %v1262 = vunpack.c.l.b16 %v384
  %v1263 = vunpack.c.l.b16 %v385
  %v1264 = vunpack.c.l.b16 %v386
  %v1265 = vunpack.c.l.b16 %v387
  %v1266 = vunpack.c.l.b16 %v388
  %v1267 = vunpack.c.l.b16 %v389
  %v1268 = vunpack.c.l.b16 %v390
  %v1269 = vunpack.c.l.b16 %v391
  %v1270 = vunpack.c.l.b16 %v392
  %v1271 = vunpack.c.l.b16 %v393
  %v1272 = vunpack.c.l.b16 %v394
  %v1273 = vunpack.c.l.b16 %v395
  %v1274 = vunpack.c.l.b16 %v396
  %v1275 = vunpack.c.l.b16 %v397
  %v1276 = vunpack.c.l.b16 %v398
  %v1277 = vunpack.c.l.b16 %v399
  %v1278 = vunpack.c.l.b16 %v400
  %v1279 = vunpack.c.l.b16 %v401
  %v1280 = vunpack.c.l.b16 %v402
  %v1281 = vunpack.c.l.b16 %v403
  %v1282 = vunpack.c.l.b16 %v404
  %v1283 = vunpack.c.l.b16 %v405
  %v1284 = vunpack.c.l.b16 %v406
  %v1285 = vunpack.c.l.b16 %v407
  %v1286 = vunpack.c.l.b16 %v408
  %v1287 = vunpack.c.l.b16 %v409
  %v1288 = vunpack.c.l.b16 %v410
  %v1289 = vunpack.c.l.b16 %v411
  %v1290 = vunpack.c.l.b16 %v412
  %v1291 = vunpack.c.l.b16 %v413
  %v1292 = vunpack.c.l.b16 %v414
  %v1293 = vunpack.c.l.b16 %v415
  %v1294 = vunpack.c.l.b16 %v416
  %v1295 = vunpack.c.l.b16 %v417
  %v1296 = vunpack.c.l.b16 %v418
  %v1297 = vunpack.c.l.b16 %v419
  %v1298 = vunpack.c.l.b16 %v420
  %v1299 = vunpack.c.l.b16 %v421
  %v1300 = vunpack.c.l.b16 %v422
  %v1301 = vunpack.c.l.b16 %v423
  %v1302 = vunpack.c.l.b16 %v424
  %v1303 = vunpack.c.l.b16 %v425
  %v1304 = vunpack.c.l.b16 %v426
  %v1305 = vunpack.c.l.b16 %v427
  %v1306 = vunpack.c.l.b16 %v428
  %v1307 = vunpack.c.l.b16 %v429
  %v1308 = vunpack.c.l.b16 %v430
  %v1309 = vunpack.c.l.b16 %v431
  %v1310 = vpack.c.b16 %v919, %v918
  %v1311 = vpack.c.b16 %v921, %v920
  %v1312 = vpack.c.b16 %v923, %v922
  %v1313 = vpack.c.b16 %v925, %v924
  %v1314 = vpack.c.b16 %v927, %v926
  %v1315 = vpack.c.b16 %v929, %v928
  %v1316 = vpack.c.b16 %v931, %v930
  %v1317 = vpack.c.b16 %v933, %v932
  %v1318 = vpack.c.b16 %v935, %v934
  %v1319 = vpack.c.b16 %v937, %v936
  %v1320 = vpack.c.b16 %v939, %v938
  %v1321 = vpack.c.b16 %v941, %v940
  %v1322 = vpack.c.b16 %v943, %v942
  %v1323 = vpack.c.b16 %v945, %v944
  %v1324 = vpack.c.b16 %v947, %v946
  %v1325 = vpack.c.b16 %v949, %v948
  %v1326 = vpack.c.b16 %v951, %v950
  %v1327 = vpack.c.b16 %v953, %v952
  %v1328 = vpack.c.b16 %v955, %v954
  %v1329 = vpack.c.b16 %v957, %v956
  %v1330 = vpack.c.b16 %v959, %v958
  %v1331 = vpack.c.b16 %v961, %v960
  %v1332 = vpack.c.b16 %v963, %v962
  %v1333 = vpack.c.b16 %v965, %v964
  %v1334 = vpack.c.b16 %v967, %v966
  %v1335 = vpack.c.b16 %v969, %v968
  %v1336 = vpack.c.b16 %v971, %v970
  %v1337 = vpack.c.b16 %v973, %v972
  %v1338 = vpack.c.b16 %v975, %v974
  %v1339 = vpack.c.b16 %v977, %v976
  %v1340 = vpack.c.b16 %v979, %v978
  %v1341 = vpack.c.b16 %v981, %v980
  %v1342 = vpack.c.b16 %v983, %v982
  %v1343 = vpack.c.b16 %v985, %v984
  %v1344 = vpack.c.b16 %v987, %v986
  %v1345 = vpack.c.b16 %v989, %v988
  %v1346 = vpack.c.b16 %v991, %v990
  %v1347 = vpack.c.b16 %v993, %v992
  %v1348 = vpack.c.b16 %v995, %v994
  %v1349 = vpack.c.b16 %v997, %v996
  %v1350 = vpack.c.b16 %v999, %v998
  %v1351 = vpack.c.b16 %v1001, %v1000
  %v1352 = vpack.c.b16 %v1003, %v1002
  %v1353 = vpack.c.b16 %v1005, %v1004
  %v1354 = vpack.c.b16 %v1007, %v1006
  %v1355 = vpack.c.b16 %v1009, %v1008
  %v1356 = vpack.c.b16 %v1011, %v1010
  %v1357 = vpack.c.b16 %v1013, %v1012
  %v1358 = vpack.c.b16 %v1015, %v1014
  %v1359 = vpack.c.b16 %v1017, %v1016
  %v1360 = vpack.c.b16 %v1019, %v1018
  %v1361 = vpack.c.b16 %v1021, %v1020
  %v1362 = vpack.c.b16 %v1023, %v1022
  %v1363 = vpack.c.b16 %v1025, %v1024
  %v1364 = vpack.c.b16 %v1027, %v1026
  %v1365 = vpack.c.b16 %v1029, %v1028
  %v1366 = vpack.c.b16 %v1031, %v1030
  %v1367 = vpack.c.b16 %v1033, %v1032
  %v1368 = vpack.c.b16 %v1035, %v1034
  %v1369 = vpack.c.b16 %v1037, %v1036
  %v1370 = vpack.c.b16 %v1039, %v1038
  %v1371 = vpack.c.b16 %v1041, %v1040
  %v1372 = vpack.c.b16 %v1043, %v1042
  %v1373 = vpack.c.b16 %v1045, %v1044
  %v1374 = vpack.c.b16 %v1047, %v1046
  %v1375 = vpack.c.b16 %v1049, %v1048
  %v1376 = vpack.c.b16 %v1051, %v1050
  %v1377 = vpack.c.b16 %v1053, %v1052
  %v1378 = vpack.c.b16 %v1055, %v1054
  %v1379 = vpack.c.b16 %v1057, %v1056
  %v1380 = vpack.c.b16 %v1059, %v1058
  %v1381 = vpack.c.b16 %v1061, %v1060
  %v1382 = vpack.c.b16 %v1063, %v1062
  %v1383 = vpack.c.b16 %v1065, %v1064
  %v1384 = vpack.c.b16 %v1067, %v1066
  %v1385 = vpack.c.b16 %v1069, %v1068
  %v1386 = vpack.c.b16 %v1071, %v1070
  %v1387 = vpack.c.b16 %v1073, %v1072
  %v1388 = vpack.c.b16 %v1075, %v1074
  %v1389 = vpack.c.b16 %v1077, %v1076
  %v1390 = vpack.c.b16 %v1079, %v1078
  %v1391 = vpack.c.b16 %v1081, %v1080
  %v1392 = vpack.c.b16 %v1083, %v1082
  %v1393 = vpack.c.b16 %v1085, %v1084
  %v1394 = vpack.c.b16 %v1087, %v1086
  %v1395 = vpack.c.b16 %v1089, %v1088
  %v1396 = vpack.c.b16 %v1091, %v1090
  %v1397 = vpack.c.b16 %v1093, %v1092
  %v1398 = vpack.c.b16 %v1095, %v1094
  %v1399 = vpack.c.b16 %v1097, %v1096
  %v1400 = vpack.c.b16 %v1099, %v1098
  %v1401 = vpack.c.b16 %v1101, %v1100
  %v1402 = vpack.c.b16 %v1103, %v1102
  %v1403 = vpack.c.b16 %v1105, %v1104
  %v1404 = vpack.c.b16 %v1107, %v1106
  %v1405 = vpack.c.b16 %v1109, %v1108
  %v1406 = vpack.c.b16 %v1111, %v1110
  %v1407 = vpack.c.b16 %v1113, %v1112
  %v1408 = vpack.c.b16 %v1115, %v1114
  %v1409 = vpack.c.b16 %v1117, %v1116
  %v1410 = vpack.c.b16 %v1119, %v1118
  %v1411 = vpack.c.b16 %v1121, %v1120
  %v1412 = vpack.c.b16 %v1123, %v1122
  %v1413 = vpack.c.b16 %v1125, %v1124
  %v1414 = vpack.c.b16 %v1127, %v1126
  %v1415 = vpack.c.b16 %v1129, %v1128
  %v1416 = vpack.c.b16 %v1131, %v1130
  %v1417 = vpack.c.b16 %v1133, %v1132
  %v1418 = vpack.c.b16 %v1135, %v1134
  %v1419 = vpack.c.b16 %v1137, %v1136
  %v1420 = vpack.c.b16 %v1139, %v1138
  %v1421 = vpack.c.b16 %v1141, %v1140
  %v1422 = vpack.c.b16 %v1143, %v1142
  %v1423 = vpack.c.b16 %v1145, %v1144
  %v1424 = vpack.c.b16 %v1147, %v1146
  %v1425 = vpack.c.b16 %v1149, %v1148
  %v1426 = vpack.c.b16 %v1151, %v1150
  %v1427 = vpack.c.b16 %v1153, %v1152
  %v1428 = vpack.c.b16 %v1155, %v1154
  %v1429 = vpack.c.b16 %v1157, %v1156
  %v1430 = vpack.c.b16 %v1159, %v1158
  %v1431 = vpack.c.b16 %v1161, %v1160
  %v1432 = vpack.c.b16 %v1163, %v1162
  %v1433 = vpack.c.b16 %v1165, %v1164
  %v1434 = vpack.c.b16 %v1167, %v1166
  %v1435 = vpack.c.b16 %v1169, %v1168
  %v1436 = vpack.c.b16 %v1171, %v1170
  %v1437 = vpack.c.b16 %v1173, %v1172
  %v1438 = vpack.c.b16 %v1175, %v1174
  %v1439 = vpack.c.b16 %v1177, %v1176
  %v1440 = vpack.c.b16 %v1179, %v1178
  %v1441 = vpack.c.b16 %v1181, %v1180
  %v1442 = vpack.c.b16 %v1183, %v1182
  %v1443 = vpack.c.b16 %v1185, %v1184
  %v1444 = vpack.c.b16 %v1187, %v1186
  %v1445 = vpack.c.b16 %v1189, %v1188
  %v1446 = vpack.c.b16 %v1191, %v1190
  %v1447 = vpack.c.b16 %v1193, %v1192
  %v1448 = vpack.c.b16 %v1195, %v1194
  %v1449 = vpack.c.b16 %v1197, %v1196
  %v1450 = vpack.c.b16 %v1199, %v1198
  %v1451 = vpack.c.b16 %v1201, %v1200
  %v1452 = vpack.c.b16 %v1203, %v1202
  %v1453 = vpack.c.b16 %v1205, %v1204
  %v1454 = vpack.c.b16 %v1207, %v1206
  %v1455 = vpack.c.b16 %v1209, %v1208
  %v1456 = vpack.c.b16 %v1211, %v1210
  %v1457 = vpack.c.b16 %v1213, %v1212
  %v1458 = vpack.c.b16 %v1215, %v1214
  %v1459 = vpack.c.b16 %v1217, %v1216
  %v1460 = vpack.c.b16 %v1219, %v1218
  %v1461 = vpack.c.b16 %v1221, %v1220
  %v1462 = vpack.c.b16 %v1223, %v1222
  %v1463 = vpack.c.b16 %v1225, %v1224
  %v1464 = vpack.c.b16 %v1227, %v1226
  %v1465 = vpack.c.b16 %v1229, %v1228
  %v1466 = vpack.c.b16 %v1231, %v1230
  %v1467 = vpack.c.b16 %v1233, %v1232
  %v1468 = vpack.c.b16 %v1235, %v1234
  %v1469 = vpack.c.b16 %v1237, %v1236
  %v1470 = vpack.c.b16 %v1239, %v1238
  %v1471 = vpack.c.b16 %v1241, %v1240
  %v1472 = vpack.c.b16 %v1243, %v1242
  %v1473 = vpack.c.b16 %v1245, %v1244
  %v1474 = vpack.c.b16 %v1247, %v1246
  %v1475 = vpack.c.b16 %v1249, %v1248
  %v1476 = vpack.c.b16 %v1251, %v1250
  %v1477 = vpack.c.b16 %v1253, %v1252
  %v1478 = vpack.c.b16 %v1255, %v1254
  %v1479 = vpack.c.b16 %v1257, %v1256
  %v1480 = vpack.c.b16 %v1259, %v1258
  %v1481 = vpack.c.b16 %v1261, %v1260
  %v1482 = vpack.c.b16 %v1263, %v1262
  %v1483 = vpack.c.b16 %v1265, %v1264
  %v1484 = vpack.c.b16 %v1267, %v1266
  %v1485 = vpack.c.b16 %v1269, %v1268
  %v1486 = vpack.c.b16 %v1271, %v1270
  %v1487 = vpack.c.b16 %v1273, %v1272
  %v1488 = vpack.c.b16 %v1275, %v1274
  %v1489 = vpack.c.b16 %v1277, %v1276
  %v1490 = vpack.c.b16 %v1279, %v1278
  %v1491 = vpack.c.b16 %v1281, %v1280
  %v1492 = vpack.c.b16 %v1283, %v1282
  %v1493 = vpack.c.b16 %v1285, %v1284
  %v1494 = vpack.c.b16 %v1287, %v1286
  %v1495 = vpack.c.b16 %v1289, %v1288
  %v1496 = vpack.c.b16 %v1291, %v1290
  %v1497 = vpack.c.b16 %v1293, %v1292
  %v1498 = vpack.c.b16 %v1295, %v1294
  %v1499 = vpack.c.b16 %v1297, %v1296
  %v1500 = vpack.c.b16 %v1299, %v1298
  %v1501 = vpack.c.b16 %v1301, %v1300
  %v1502 = vpack.c.b16 %v1303, %v1302
  %v1503 = vpack.c.b16 %v1305, %v1304
  %v1504 = vpack.c.b16 %v1307, %v1306
  %v1505 = vpack.c.b16 %v1309, %v1308
  %vm1702 = vcmask 523264
  %v1704 = vsel %vm1702, %v501, 0
  %1706 = vmatprep.subr.bf16.mxu0 0
  %1707 = vmatpush1.bf16.msra.mxu0 %v1310
  %1708 = vmatprep.subr.bf16.mxu0 0
  %1709 = vmatpush1.bf16.msra.mxu0 %v1311
  %1710 = vmatprep.subr.bf16.mxu0 0
  %1711 = vmatpush1.bf16.msra.mxu0 %v1312
  %1712 = vmatprep.subr.bf16.mxu0 0
  %1713 = vmatpush1.bf16.msra.mxu0 %v1313
  %1714 = vmatprep.subr.bf16.mxu0 0
  %1715 = vmatpush1.bf16.msra.mxu0 %v1314
  %1716 = vmatprep.subr.bf16.mxu0 0
  %1717 = vmatpush1.bf16.msra.mxu0 %v1315
  %1718 = vmatprep.subr.bf16.mxu0 0
  %1719 = vmatpush1.bf16.msra.mxu0 %v1316
  %1720 = vmatprep.subr.bf16.mxu0 0
  %1721 = vmatpush1.bf16.msra.mxu0 %v1317
  %1722 = vmatprep.subr.bf16.mxu0 0
  %1723 = vmatpush1.bf16.msra.mxu0 %v1318
  %1724 = vmatprep.subr.bf16.mxu0 0
  %1725 = vmatpush1.bf16.msra.mxu0 %v1319
  %1726 = vmatprep.subr.bf16.mxu0 0
  %1727 = vmatpush1.bf16.msra.mxu0 %v1320
  %1728 = vmatprep.subr.bf16.mxu0 0
  %1729 = vmatpush1.bf16.msra.mxu0 %v1321
  %1730 = vmatprep.subr.bf16.mxu0 0
  %1731 = vmatpush1.bf16.msra.mxu0 %v1322
  %1732 = vmatprep.subr.bf16.mxu0 0
  %1733 = vmatpush1.bf16.msra.mxu0 %v1323
  %1734 = vmatprep.subr.bf16.mxu0 0
  %1735 = vmatpush1.bf16.msra.mxu0 %v1324
  %1736 = vmatprep.subr.bf16.mxu0 0
  %1737 = vmatpush1.bf16.msra.mxu0 %v1325
  %1738 = vmatprep.mubr.bf16.mxu0 %v478
  %1739 = vmatmul.mubr.bf16.gmra.mrb[0].mxu0 %v477
  %v1740 = vpop.f32.mrb[0].mxu0
  %v1741 = vadd.f32 %v437, %v1740
  %v1742 = vpop.f32.mrb[0].mxu0
  %v1743 = vpop.f32.mrb[0].mxu0
  %v1744 = vpop.f32.mrb[0].mxu0
  %1745 = vdwg.mxu0
  %1746 = vmatprep.subr.bf16.mxu0 0
  %1747 = vmatpush1.bf16.msra.mxu0 %v1326
  %1748 = vmatprep.subr.bf16.mxu0 0
  %1749 = vmatpush1.bf16.msra.mxu0 %v1327
  %1750 = vmatprep.subr.bf16.mxu0 0
  %1751 = vmatpush1.bf16.msra.mxu0 %v1328
  %1752 = vmatprep.subr.bf16.mxu0 0
  %1753 = vmatpush1.bf16.msra.mxu0 %v1329
  %1754 = vmatprep.subr.bf16.mxu0 0
  %1755 = vmatpush1.bf16.msra.mxu0 %v1330
  %1756 = vmatprep.subr.bf16.mxu0 0
  %1757 = vmatpush1.bf16.msra.mxu0 %v1331
  %1758 = vmatprep.subr.bf16.mxu0 0
  %1759 = vmatpush1.bf16.msra.mxu0 %v1332
  %1760 = vmatprep.subr.bf16.mxu0 0
  %1761 = vmatpush1.bf16.msra.mxu0 %v1333
  %1762 = vmatprep.subr.bf16.mxu0 0
  %1763 = vmatpush1.bf16.msra.mxu0 %v1334
  %1764 = vmatprep.subr.bf16.mxu0 0
  %1765 = vmatpush1.bf16.msra.mxu0 %v1335
  %1766 = vmatprep.subr.bf16.mxu0 0
  %1767 = vmatpush1.bf16.msra.mxu0 %v1336
  %1768 = vmatprep.subr.bf16.mxu0 0
  %1769 = vmatpush1.bf16.msra.mxu0 %v1337
  %1770 = vmatprep.subr.bf16.mxu0 0
  %1771 = vmatpush1.bf16.msra.mxu0 %v1338
  %1772 = vmatprep.subr.bf16.mxu0 0
  %1773 = vmatpush1.bf16.msra.mxu0 %v1339
  %1774 = vmatprep.subr.bf16.mxu0 0
  %1775 = vmatpush1.bf16.msra.mxu0 %v1340
  %1776 = vmatprep.subr.bf16.mxu0 0
  %1777 = vmatpush1.bf16.msra.mxu0 %v1341
  %1778 = vmatprep.mubr.bf16.mxu0 %v480
  %1779 = vmatmul.mubr.bf16.gmra.mrb[0].mxu0 %v479
  %v1780 = vpop.f32.mrb[0].mxu0
  %v1781 = vadd.f32 %v1741, %v1780
  %v1782 = vpop.f32.mrb[0].mxu0
  %v1783 = vpop.f32.mrb[0].mxu0
  %v1784 = vpop.f32.mrb[0].mxu0
  %1785 = vdwg.mxu0
  %1786 = vmatprep.subr.bf16.mxu0 0
  %1787 = vmatpush1.bf16.msra.mxu0 %v1342
  %1788 = vmatprep.subr.bf16.mxu0 0
  %1789 = vmatpush1.bf16.msra.mxu0 %v1343
  %1790 = vmatprep.subr.bf16.mxu0 0
  %1791 = vmatpush1.bf16.msra.mxu0 %v1344
  %1792 = vmatprep.subr.bf16.mxu0 0
  %1793 = vmatpush1.bf16.msra.mxu0 %v1345
  %1794 = vmatprep.subr.bf16.mxu0 0
  %1795 = vmatpush1.bf16.msra.mxu0 %v1346
  %1796 = vmatprep.subr.bf16.mxu0 0
  %1797 = vmatpush1.bf16.msra.mxu0 %v1347
  %1798 = vmatprep.subr.bf16.mxu0 0
  %1799 = vmatpush1.bf16.msra.mxu0 %v1348
  %1800 = vmatprep.subr.bf16.mxu0 0
  %1801 = vmatpush1.bf16.msra.mxu0 %v1349
  %1802 = vmatprep.subr.bf16.mxu0 0
  %1803 = vmatpush1.bf16.msra.mxu0 %v1350
  %1804 = vmatprep.subr.bf16.mxu0 0
  %1805 = vmatpush1.bf16.msra.mxu0 %v1351
  %1806 = vmatprep.subr.bf16.mxu0 0
  %1807 = vmatpush1.bf16.msra.mxu0 %v1352
  %1808 = vmatprep.subr.bf16.mxu0 0
  %1809 = vmatpush1.bf16.msra.mxu0 %v1353
  %1810 = vmatprep.subr.bf16.mxu0 0
  %1811 = vmatpush1.bf16.msra.mxu0 %v1354
  %1812 = vmatprep.subr.bf16.mxu0 0
  %1813 = vmatpush1.bf16.msra.mxu0 %v1355
  %1814 = vmatprep.subr.bf16.mxu0 0
  %1815 = vmatpush1.bf16.msra.mxu0 %v1356
  %1816 = vmatprep.subr.bf16.mxu0 0
  %1817 = vmatpush1.bf16.msra.mxu0 %v1357
  %1818 = vmatprep.mubr.bf16.mxu0 %v482
  %1819 = vmatmul.mubr.bf16.gmra.mrb[0].mxu0 %v481
  %v1820 = vpop.f32.mrb[0].mxu0
  %v1821 = vadd.f32 %v1781, %v1820
  %v1822 = vpop.f32.mrb[0].mxu0
  %v1823 = vpop.f32.mrb[0].mxu0
  %v1824 = vpop.f32.mrb[0].mxu0
  %1825 = vdwg.mxu0
  %1826 = vmatprep.subr.bf16.mxu0 0
  %1827 = vmatpush1.bf16.msra.mxu0 %v1358
  %1828 = vmatprep.subr.bf16.mxu0 0
  %1829 = vmatpush1.bf16.msra.mxu0 %v1359
  %1830 = vmatprep.subr.bf16.mxu0 0
  %1831 = vmatpush1.bf16.msra.mxu0 %v1360
  %1832 = vmatprep.subr.bf16.mxu0 0
  %1833 = vmatpush1.bf16.msra.mxu0 %v1361
  %1834 = vmatprep.subr.bf16.mxu0 0
  %1835 = vmatpush1.bf16.msra.mxu0 %v1362
  %1836 = vmatprep.subr.bf16.mxu0 0
  %1837 = vmatpush1.bf16.msra.mxu0 %v1363
  %1838 = vmatprep.subr.bf16.mxu0 0
  %1839 = vmatpush1.bf16.msra.mxu0 %v1364
  %1840 = vmatprep.subr.bf16.mxu0 0
  %1841 = vmatpush1.bf16.msra.mxu0 %v1365
  %1842 = vmatprep.subr.bf16.mxu0 0
  %1843 = vmatpush1.bf16.msra.mxu0 %v1366
  %1844 = vmatprep.subr.bf16.mxu0 0
  %1845 = vmatpush1.bf16.msra.mxu0 %v1367
  %1846 = vmatprep.subr.bf16.mxu0 0
  %1847 = vmatpush1.bf16.msra.mxu0 %v1368
  %1848 = vmatprep.subr.bf16.mxu0 0
  %1849 = vmatpush1.bf16.msra.mxu0 %v1369
  %1850 = vmatprep.subr.bf16.mxu0 0
  %1851 = vmatpush1.bf16.msra.mxu0 %v1370
  %1852 = vmatprep.subr.bf16.mxu0 0
  %1853 = vmatpush1.bf16.msra.mxu0 %v1371
  %1854 = vmatprep.subr.bf16.mxu0 0
  %1855 = vmatpush1.bf16.msra.mxu0 %v1372
  %1856 = vmatprep.subr.bf16.mxu0 0
  %1857 = vmatpush1.bf16.msra.mxu0 %v1373
  %1858 = vmatprep.mubr.bf16.mxu0 %v484
  %1859 = vmatmul.mubr.bf16.gmra.mrb[0].mxu0 %v483
  %v1860 = vpop.f32.mrb[0].mxu0
  %v1861 = vadd.f32 %v1821, %v1860
  %v1862 = vpop.f32.mrb[0].mxu0
  %v1863 = vpop.f32.mrb[0].mxu0
  %v1864 = vpop.f32.mrb[0].mxu0
  %1865 = vdwg.mxu0
  %1866 = vmatprep.subr.bf16.mxu0 0
  %1867 = vmatpush1.bf16.msra.mxu0 %v1374
  %1868 = vmatprep.subr.bf16.mxu0 0
  %1869 = vmatpush1.bf16.msra.mxu0 %v1375
  %1870 = vmatprep.subr.bf16.mxu0 0
  %1871 = vmatpush1.bf16.msra.mxu0 %v1376
  %1872 = vmatprep.subr.bf16.mxu0 0
  %1873 = vmatpush1.bf16.msra.mxu0 %v1377
  %1874 = vmatprep.subr.bf16.mxu0 0
  %1875 = vmatpush1.bf16.msra.mxu0 %v1378
  %1876 = vmatprep.subr.bf16.mxu0 0
  %1877 = vmatpush1.bf16.msra.mxu0 %v1379
  %1878 = vmatprep.subr.bf16.mxu0 0
  %1879 = vmatpush1.bf16.msra.mxu0 %v1380
  %1880 = vmatprep.subr.bf16.mxu0 0
  %1881 = vmatpush1.bf16.msra.mxu0 %v1381
  %1882 = vmatprep.subr.bf16.mxu0 0
  %1883 = vmatpush1.bf16.msra.mxu0 %v1382
  %1884 = vmatprep.subr.bf16.mxu0 0
  %1885 = vmatpush1.bf16.msra.mxu0 %v1383
  %1886 = vmatprep.subr.bf16.mxu0 0
  %1887 = vmatpush1.bf16.msra.mxu0 %v1384
  %1888 = vmatprep.subr.bf16.mxu0 0
  %1889 = vmatpush1.bf16.msra.mxu0 %v1385
  %1890 = vmatprep.subr.bf16.mxu0 0
  %1891 = vmatpush1.bf16.msra.mxu0 %v1386
  %1892 = vmatprep.subr.bf16.mxu0 0
  %1893 = vmatpush1.bf16.msra.mxu0 %v1387
  %1894 = vmatprep.subr.bf16.mxu0 0
  %1895 = vmatpush1.bf16.msra.mxu0 %v1388
  %1896 = vmatprep.subr.bf16.mxu0 0
  %1897 = vmatpush1.bf16.msra.mxu0 %v1389
  %1898 = vmatprep.mubr.bf16.mxu0 %v486
  %1899 = vmatmul.mubr.bf16.gmra.mrb[0].mxu0 %v485
  %v1900 = vpop.f32.mrb[0].mxu0
  %v1901 = vadd.f32 %v1861, %v1900
  %v1902 = vpop.f32.mrb[0].mxu0
  %v1903 = vpop.f32.mrb[0].mxu0
  %v1904 = vpop.f32.mrb[0].mxu0
  %1905 = vdwg.mxu0
  %1906 = vmatprep.subr.bf16.mxu0 0
  %1907 = vmatpush1.bf16.msra.mxu0 %v1390
  %1908 = vmatprep.subr.bf16.mxu0 0
  %1909 = vmatpush1.bf16.msra.mxu0 %v1391
  %1910 = vmatprep.subr.bf16.mxu0 0
  %1911 = vmatpush1.bf16.msra.mxu0 %v1392
  %1912 = vmatprep.subr.bf16.mxu0 0
  %1913 = vmatpush1.bf16.msra.mxu0 %v1393
  %1914 = vmatprep.subr.bf16.mxu0 0
  %1915 = vmatpush1.bf16.msra.mxu0 %v1394
  %1916 = vmatprep.subr.bf16.mxu0 0
  %1917 = vmatpush1.bf16.msra.mxu0 %v1395
  %1918 = vmatprep.subr.bf16.mxu0 0
  %1919 = vmatpush1.bf16.msra.mxu0 %v1396
  %1920 = vmatprep.subr.bf16.mxu0 0
  %1921 = vmatpush1.bf16.msra.mxu0 %v1397
  %1922 = vmatprep.subr.bf16.mxu0 0
  %1923 = vmatpush1.bf16.msra.mxu0 %v1398
  %1924 = vmatprep.subr.bf16.mxu0 0
  %1925 = vmatpush1.bf16.msra.mxu0 %v1399
  %1926 = vmatprep.subr.bf16.mxu0 0
  %1927 = vmatpush1.bf16.msra.mxu0 %v1400
  %1928 = vmatprep.subr.bf16.mxu0 0
  %1929 = vmatpush1.bf16.msra.mxu0 %v1401
  %1930 = vmatprep.subr.bf16.mxu0 0
  %1931 = vmatpush1.bf16.msra.mxu0 %v1402
  %1932 = vmatprep.subr.bf16.mxu0 0
  %1933 = vmatpush1.bf16.msra.mxu0 %v1403
  %1934 = vmatprep.subr.bf16.mxu0 0
  %1935 = vmatpush1.bf16.msra.mxu0 %v1404
  %1936 = vmatprep.subr.bf16.mxu0 0
  %1937 = vmatpush1.bf16.msra.mxu0 %v1405
  %1938 = vmatprep.mubr.bf16.mxu0 %v488
  %1939 = vmatmul.mubr.bf16.gmra.mrb[0].mxu0 %v487
  %v1940 = vpop.f32.mrb[0].mxu0
  %v1941 = vadd.f32 %v1901, %v1940
  %v1942 = vpop.f32.mrb[0].mxu0
  %v1943 = vpop.f32.mrb[0].mxu0
  %v1944 = vpop.f32.mrb[0].mxu0
  %1945 = vdwg.mxu0
  %1946 = vmatprep.subr.bf16.mxu0 0
  %1947 = vmatpush1.bf16.msra.mxu0 %v1406
  %1948 = vmatprep.subr.bf16.mxu0 0
  %1949 = vmatpush1.bf16.msra.mxu0 %v1407
  %1950 = vmatprep.subr.bf16.mxu0 0
  %1951 = vmatpush1.bf16.msra.mxu0 %v1408
  %1952 = vmatprep.subr.bf16.mxu0 0
  %1953 = vmatpush1.bf16.msra.mxu0 %v1409
  %1954 = vmatprep.subr.bf16.mxu0 0
  %1955 = vmatpush1.bf16.msra.mxu0 %v1410
  %1956 = vmatprep.subr.bf16.mxu0 0
  %1957 = vmatpush1.bf16.msra.mxu0 %v1411
  %1958 = vmatprep.subr.bf16.mxu0 0
  %1959 = vmatpush1.bf16.msra.mxu0 %v1412
  %1960 = vmatprep.subr.bf16.mxu0 0
  %1961 = vmatpush1.bf16.msra.mxu0 %v1413
  %1962 = vmatprep.subr.bf16.mxu0 0
  %1963 = vmatpush1.bf16.msra.mxu0 %v1414
  %1964 = vmatprep.subr.bf16.mxu0 0
  %1965 = vmatpush1.bf16.msra.mxu0 %v1415
  %1966 = vmatprep.subr.bf16.mxu0 0
  %1967 = vmatpush1.bf16.msra.mxu0 %v1416
  %1968 = vmatprep.subr.bf16.mxu0 0
  %1969 = vmatpush1.bf16.msra.mxu0 %v1417
  %1970 = vmatprep.subr.bf16.mxu0 0
  %1971 = vmatpush1.bf16.msra.mxu0 %v1418
  %1972 = vmatprep.subr.bf16.mxu0 0
  %1973 = vmatpush1.bf16.msra.mxu0 %v1419
  %1974 = vmatprep.subr.bf16.mxu0 0
  %1975 = vmatpush1.bf16.msra.mxu0 %v1420
  %1976 = vmatprep.subr.bf16.mxu0 0
  %1977 = vmatpush1.bf16.msra.mxu0 %v1421
  %1978 = vmatprep.mubr.bf16.mxu0 %v490
  %1979 = vmatmul.mubr.bf16.gmra.mrb[0].mxu0 %v489
  %v1980 = vpop.f32.mrb[0].mxu0
  %v1981 = vadd.f32 %v1941, %v1980
  %v1982 = vpop.f32.mrb[0].mxu0
  %v1983 = vpop.f32.mrb[0].mxu0
  %v1984 = vpop.f32.mrb[0].mxu0
  %1985 = vdwg.mxu0
  %1986 = vmatprep.subr.bf16.mxu0 0
  %1987 = vmatpush1.bf16.msra.mxu0 %v1422
  %1988 = vmatprep.subr.bf16.mxu0 0
  %1989 = vmatpush1.bf16.msra.mxu0 %v1423
  %1990 = vmatprep.subr.bf16.mxu0 0
  %1991 = vmatpush1.bf16.msra.mxu0 %v1424
  %1992 = vmatprep.subr.bf16.mxu0 0
  %1993 = vmatpush1.bf16.msra.mxu0 %v1425
  %1994 = vmatprep.subr.bf16.mxu0 0
  %1995 = vmatpush1.bf16.msra.mxu0 %v1426
  %1996 = vmatprep.subr.bf16.mxu0 0
  %1997 = vmatpush1.bf16.msra.mxu0 %v1427
  %1998 = vmatprep.subr.bf16.mxu0 0
  %1999 = vmatpush1.bf16.msra.mxu0 %v1428
  %2000 = vmatprep.subr.bf16.mxu0 0
  %2001 = vmatpush1.bf16.msra.mxu0 %v1429
  %2002 = vmatprep.subr.bf16.mxu0 0
  %2003 = vmatpush1.bf16.msra.mxu0 %v1430
  %2004 = vmatprep.subr.bf16.mxu0 0
  %2005 = vmatpush1.bf16.msra.mxu0 %v1431
  %2006 = vmatprep.subr.bf16.mxu0 0
  %2007 = vmatpush1.bf16.msra.mxu0 %v1432
  %2008 = vmatprep.subr.bf16.mxu0 0
  %2009 = vmatpush1.bf16.msra.mxu0 %v1433
  %2010 = vmatprep.subr.bf16.mxu0 0
  %2011 = vmatpush1.bf16.msra.mxu0 %v1434
  %2012 = vmatprep.subr.bf16.mxu0 0
  %2013 = vmatpush1.bf16.msra.mxu0 %v1435
  %2014 = vmatprep.subr.bf16.mxu0 0
  %2015 = vmatpush1.bf16.msra.mxu0 %v1436
  %2016 = vmatprep.subr.bf16.mxu0 0
  %2017 = vmatpush1.bf16.msra.mxu0 %v1437
  %2018 = vmatprep.mubr.bf16.mxu0 %v492
  %2019 = vmatmul.mubr.bf16.gmra.mrb[0].mxu0 %v491
  %v2020 = vpop.f32.mrb[0].mxu0
  %v2021 = vadd.f32 %v1981, %v2020
  %v2022 = vpop.f32.mrb[0].mxu0
  %v2023 = vpop.f32.mrb[0].mxu0
  %v2024 = vpop.f32.mrb[0].mxu0
  %2025 = vdwg.mxu0
  %2026 = vmatprep.subr.bf16.mxu0 0
  %2027 = vmatpush1.bf16.msra.mxu0 %v1438
  %2028 = vmatprep.subr.bf16.mxu0 0
  %2029 = vmatpush1.bf16.msra.mxu0 %v1439
  %2030 = vmatprep.subr.bf16.mxu0 0
  %2031 = vmatpush1.bf16.msra.mxu0 %v1440
  %2032 = vmatprep.subr.bf16.mxu0 0
  %2033 = vmatpush1.bf16.msra.mxu0 %v1441
  %2034 = vmatprep.subr.bf16.mxu0 0
  %2035 = vmatpush1.bf16.msra.mxu0 %v1442
  %2036 = vmatprep.subr.bf16.mxu0 0
  %2037 = vmatpush1.bf16.msra.mxu0 %v1443
  %2038 = vmatprep.subr.bf16.mxu0 0
  %2039 = vmatpush1.bf16.msra.mxu0 %v1444
  %2040 = vmatprep.subr.bf16.mxu0 0
  %2041 = vmatpush1.bf16.msra.mxu0 %v1445
  %2042 = vmatprep.subr.bf16.mxu0 0
  %2043 = vmatpush1.bf16.msra.mxu0 %v1446
  %2044 = vmatprep.subr.bf16.mxu0 0
  %2045 = vmatpush1.bf16.msra.mxu0 %v1447
  %2046 = vmatprep.subr.bf16.mxu0 0
  %2047 = vmatpush1.bf16.msra.mxu0 %v1448
  %2048 = vmatprep.subr.bf16.mxu0 0
  %2049 = vmatpush1.bf16.msra.mxu0 %v1449
  %2050 = vmatprep.subr.bf16.mxu0 0
  %2051 = vmatpush1.bf16.msra.mxu0 %v1450
  %2052 = vmatprep.subr.bf16.mxu0 0
  %2053 = vmatpush1.bf16.msra.mxu0 %v1451
  %2054 = vmatprep.subr.bf16.mxu0 0
  %2055 = vmatpush1.bf16.msra.mxu0 %v1452
  %2056 = vmatprep.subr.bf16.mxu0 0
  %2057 = vmatpush1.bf16.msra.mxu0 %v1453
  %2058 = vmatprep.mubr.bf16.mxu0 %v494
  %2059 = vmatmul.mubr.bf16.gmra.mrb[0].mxu0 %v493
  %v2060 = vpop.f32.mrb[0].mxu0
  %v2061 = vadd.f32 %v2021, %v2060
  %v2062 = vpop.f32.mrb[0].mxu0
  %v2063 = vpop.f32.mrb[0].mxu0
  %v2064 = vpop.f32.mrb[0].mxu0
  %2065 = vdwg.mxu0
  %2066 = vmatprep.subr.bf16.mxu0 0
  %2067 = vmatpush1.bf16.msra.mxu0 %v1454
  %2068 = vmatprep.subr.bf16.mxu0 0
  %2069 = vmatpush1.bf16.msra.mxu0 %v1455
  %2070 = vmatprep.subr.bf16.mxu0 0
  %2071 = vmatpush1.bf16.msra.mxu0 %v1456
  %2072 = vmatprep.subr.bf16.mxu0 0
  %2073 = vmatpush1.bf16.msra.mxu0 %v1457
  %2074 = vmatprep.subr.bf16.mxu0 0
  %2075 = vmatpush1.bf16.msra.mxu0 %v1458
  %2076 = vmatprep.subr.bf16.mxu0 0
  %2077 = vmatpush1.bf16.msra.mxu0 %v1459
  %2078 = vmatprep.subr.bf16.mxu0 0
  %2079 = vmatpush1.bf16.msra.mxu0 %v1460
  %2080 = vmatprep.subr.bf16.mxu0 0
  %2081 = vmatpush1.bf16.msra.mxu0 %v1461
  %2082 = vmatprep.subr.bf16.mxu0 0
  %2083 = vmatpush1.bf16.msra.mxu0 %v1462
  %2084 = vmatprep.subr.bf16.mxu0 0
  %2085 = vmatpush1.bf16.msra.mxu0 %v1463
  %2086 = vmatprep.subr.bf16.mxu0 0
  %2087 = vmatpush1.bf16.msra.mxu0 %v1464
  %2088 = vmatprep.subr.bf16.mxu0 0
  %2089 = vmatpush1.bf16.msra.mxu0 %v1465
  %2090 = vmatprep.subr.bf16.mxu0 0
  %2091 = vmatpush1.bf16.msra.mxu0 %v1466
  %2092 = vmatprep.subr.bf16.mxu0 0
  %2093 = vmatpush1.bf16.msra.mxu0 %v1467
  %2094 = vmatprep.subr.bf16.mxu0 0
  %2095 = vmatpush1.bf16.msra.mxu0 %v1468
  %2096 = vmatprep.subr.bf16.mxu0 0
  %2097 = vmatpush1.bf16.msra.mxu0 %v1469
  %2098 = vmatprep.mubr.bf16.mxu0 %v496
  %2099 = vmatmul.mubr.bf16.gmra.mrb[0].mxu0 %v495
  %v2100 = vpop.f32.mrb[0].mxu0
  %v2101 = vadd.f32 %v2061, %v2100
  %v2102 = vpop.f32.mrb[0].mxu0
  %v2103 = vpop.f32.mrb[0].mxu0
  %v2104 = vpop.f32.mrb[0].mxu0
  %2105 = vdwg.mxu0
  %2106 = vmatprep.subr.bf16.mxu0 0
  %2107 = vmatpush1.bf16.msra.mxu0 %v1470
  %2108 = vmatprep.subr.bf16.mxu0 0
  %2109 = vmatpush1.bf16.msra.mxu0 %v1471
  %2110 = vmatprep.subr.bf16.mxu0 0
  %2111 = vmatpush1.bf16.msra.mxu0 %v1472
  %2112 = vmatprep.subr.bf16.mxu0 0
  %2113 = vmatpush1.bf16.msra.mxu0 %v1473
  %2114 = vmatprep.subr.bf16.mxu0 0
  %2115 = vmatpush1.bf16.msra.mxu0 %v1474
  %2116 = vmatprep.subr.bf16.mxu0 0
  %2117 = vmatpush1.bf16.msra.mxu0 %v1475
  %2118 = vmatprep.subr.bf16.mxu0 0
  %2119 = vmatpush1.bf16.msra.mxu0 %v1476
  %2120 = vmatprep.subr.bf16.mxu0 0
  %2121 = vmatpush1.bf16.msra.mxu0 %v1477
  %2122 = vmatprep.subr.bf16.mxu0 0
  %2123 = vmatpush1.bf16.msra.mxu0 %v1478
  %2124 = vmatprep.subr.bf16.mxu0 0
  %2125 = vmatpush1.bf16.msra.mxu0 %v1479
  %2126 = vmatprep.subr.bf16.mxu0 0
  %2127 = vmatpush1.bf16.msra.mxu0 %v1480
  %2128 = vmatprep.subr.bf16.mxu0 0
  %2129 = vmatpush1.bf16.msra.mxu0 %v1481
  %2130 = vmatprep.subr.bf16.mxu0 0
  %2131 = vmatpush1.bf16.msra.mxu0 %v1482
  %2132 = vmatprep.subr.bf16.mxu0 0
  %2133 = vmatpush1.bf16.msra.mxu0 %v1483
  %2134 = vmatprep.subr.bf16.mxu0 0
  %2135 = vmatpush1.bf16.msra.mxu0 %v1484
  %2136 = vmatprep.subr.bf16.mxu0 0
  %2137 = vmatpush1.bf16.msra.mxu0 %v1485
  %2138 = vmatprep.mubr.bf16.mxu0 %v498
  %2139 = vmatmul.mubr.bf16.gmra.mrb[0].mxu0 %v497
  %v2140 = vpop.f32.mrb[0].mxu0
  %v2141 = vadd.f32 %v2101, %v2140
  %v2142 = vpop.f32.mrb[0].mxu0
  %v2143 = vpop.f32.mrb[0].mxu0
  %v2144 = vpop.f32.mrb[0].mxu0
  %2145 = vdwg.mxu0
  %2146 = vmatprep.subr.bf16.mxu0 0
  %2147 = vmatpush1.bf16.msra.mxu0 %v1486
  %2148 = vmatprep.subr.bf16.mxu0 0
  %2149 = vmatpush1.bf16.msra.mxu0 %v1487
  %2150 = vmatprep.subr.bf16.mxu0 0
  %2151 = vmatpush1.bf16.msra.mxu0 %v1488
  %2152 = vmatprep.subr.bf16.mxu0 0
  %2153 = vmatpush1.bf16.msra.mxu0 %v1489
  %2154 = vmatprep.subr.bf16.mxu0 0
  %2155 = vmatpush1.bf16.msra.mxu0 %v1490
  %2156 = vmatprep.subr.bf16.mxu0 0
  %2157 = vmatpush1.bf16.msra.mxu0 %v1491
  %2158 = vmatprep.subr.bf16.mxu0 0
  %2159 = vmatpush1.bf16.msra.mxu0 %v1492
  %2160 = vmatprep.subr.bf16.mxu0 0
  %2161 = vmatpush1.bf16.msra.mxu0 %v1493
  %2162 = vmatprep.subr.bf16.mxu0 0
  %2163 = vmatpush1.bf16.msra.mxu0 %v1494
  %2164 = vmatprep.subr.bf16.mxu0 0
  %2165 = vmatpush1.bf16.msra.mxu0 %v1495
  %2166 = vmatprep.subr.bf16.mxu0 0
  %2167 = vmatpush1.bf16.msra.mxu0 %v1496
  %2168 = vmatprep.subr.bf16.mxu0 0
  %2169 = vmatpush1.bf16.msra.mxu0 %v1497
  %2170 = vmatprep.subr.bf16.mxu0 0
  %2171 = vmatpush1.bf16.msra.mxu0 %v1498
  %2172 = vmatprep.subr.bf16.mxu0 0
  %2173 = vmatpush1.bf16.msra.mxu0 %v1499
  %2174 = vmatprep.subr.bf16.mxu0 0
  %2175 = vmatpush1.bf16.msra.mxu0 %v1500
  %2176 = vmatprep.subr.bf16.mxu0 0
  %2177 = vmatpush1.bf16.msra.mxu0 %v1501
  %2178 = vmatprep.mubr.bf16.mxu0 %v500
  %2179 = vmatmul.mubr.bf16.gmra.mrb[0].mxu0 %v499
  %v2180 = vpop.f32.mrb[0].mxu0
  %v2181 = vadd.f32 %v2141, %v2180
  %v2182 = vpop.f32.mrb[0].mxu0
  %v2183 = vpop.f32.mrb[0].mxu0
  %v2184 = vpop.f32.mrb[0].mxu0
  %2185 = vdwg.mxu0
  %2186 = vmatprep.subr.bf16.mxu0 0
  %2187 = vmatpush1.bf16.msra.mxu0 %v1502
  %2188 = vmatprep.subr.bf16.mxu0 0
  %2189 = vmatpush1.bf16.msra.mxu0 %v1503
  %2190 = vmatprep.subr.bf16.mxu0 0
  %2191 = vmatpush1.bf16.msra.mxu0 %v1504
  %2192 = vmatprep.subr.bf16.mxu0 0
  %2193 = vmatpush1.bf16.msra.mxu0 %v1505
  %2194 = vmatprep.subr.bf16.mxu0 0
  %2195 = vmatpush1.bf16.msra.mxu0 0
  %2196 = vmatprep.subr.bf16.mxu0 0
  %2197 = vmatpush1.bf16.msra.mxu0 0
  %2198 = vmatprep.subr.bf16.mxu0 0
  %2199 = vmatpush1.bf16.msra.mxu0 0
  %2200 = vmatprep.subr.bf16.mxu0 0
  %2201 = vmatpush1.bf16.msra.mxu0 0
  %2202 = vmatprep.subr.bf16.mxu0 0
  %2203 = vmatpush1.bf16.msra.mxu0 0
  %2204 = vmatprep.subr.bf16.mxu0 0
  %2205 = vmatpush1.bf16.msra.mxu0 0
  %2206 = vmatprep.subr.bf16.mxu0 0
  %2207 = vmatpush1.bf16.msra.mxu0 0
  %2208 = vmatprep.subr.bf16.mxu0 0
  %2209 = vmatpush1.bf16.msra.mxu0 0
  %2210 = vmatprep.subr.bf16.mxu0 0
  %2211 = vmatpush1.bf16.msra.mxu0 0
  %2212 = vmatprep.subr.bf16.mxu0 0
  %2213 = vmatpush1.bf16.msra.mxu0 0
  %2214 = vmatprep.subr.bf16.mxu0 0
  %2215 = vmatpush1.bf16.msra.mxu0 0
  %2216 = vmatprep.subr.bf16.mxu0 0
  %2217 = vmatpush1.bf16.msra.mxu0 0
  %2218 = vmatprep.mubr.bf16.mxu0 0
  %2219 = vmatmul.mubr.bf16.gmra.mrb[0].mxu0 %v1704
  %v2220 = vpop.f32.mrb[0].mxu0
  %v2221 = vadd.f32 %v2181, %v2220
  %v2222 = vpop.f32.mrb[0].mxu0
  %v2223 = vpop.f32.mrb[0].mxu0
  %v2224 = vpop.f32.mrb[0].mxu0
  %2225 = vdwg.mxu0
  %v2226 = vmax.f32 %v2221, 0.0
  %v2227 = vpack.c.bf16 %v2226, %v2226
  %v2228 = vld [vmem:[%s3] sm:$0xf]
  %v2229 = vld [vmem:[%s3 + $0x4] sm:$0xf]
  %v2230 = vld [vmem:[%s3 + $0x8] sm:$0xf]
  %v2231 = vld [vmem:[%s3 + $0xc] sm:$0xf]
  %v2232 = vld [vmem:[%s3 + $0x10] sm:$0xf]
  %v2233 = vld [vmem:[%s3 + $0x14] sm:$0xf]
  %v2234 = vld [vmem:[%s3 + $0x18] sm:$0xf]
  %v2235 = vld [vmem:[%s3 + $0x1c] sm:$0xf]
  %v2236 = vld [vmem:[%s3 + $0x20] sm:$0xf]
  %v2237 = vld [vmem:[%s3 + $0x24] sm:$0xf]
  %v2238 = vld [vmem:[%s3 + $0x28] sm:$0xf]
  %v2239 = vld [vmem:[%s3 + $0x2c] sm:$0xf]
  %v2240 = vld [vmem:[%s3 + $0x30] sm:$0xf]
  %v2241 = vld [vmem:[%s3 + $0x34] sm:$0xf]
  %v2242 = vld [vmem:[%s3 + $0x38] sm:$0xf]
  %v2243 = vld [vmem:[%s3 + $0x3c] sm:$0xf]
  %v2244 = vld [vmem:[%s4] sm:$0x1]
  %v2246 = vlaneseq
  %v2247 = vshrl.u32 %v2246, 7
  %v2248 = vsub.s32 0, %v2247
  %v2249 = vrot.slane %v2244, %v2248
  %v2267 = vunpack.c.l.b16 %v2228
  %v2268 = vunpack.c.l.b16 %v2229
  %v2269 = vunpack.c.l.b16 %v2230
  %v2270 = vunpack.c.l.b16 %v2231
  %v2271 = vunpack.c.l.b16 %v2232
  %v2272 = vunpack.c.l.b16 %v2233
  %v2273 = vunpack.c.l.b16 %v2234
  %v2274 = vunpack.c.l.b16 %v2235
  %v2275 = vunpack.c.l.b16 %v2236
  %v2276 = vunpack.c.l.b16 %v2237
  %v2277 = vunpack.c.l.b16 %v2238
  %v2278 = vunpack.c.l.b16 %v2239
  %v2279 = vunpack.c.l.b16 %v2240
  %v2280 = vunpack.c.l.b16 %v2241
  %v2281 = vunpack.c.l.b16 %v2242
  %v2282 = vunpack.c.l.b16 %v2243
  %v2283 = vpack.c.b16 %v2268, %v2267
  %v2284 = vpack.c.b16 %v2270, %v2269
  %v2285 = vpack.c.b16 %v2272, %v2271
  %v2286 = vpack.c.b16 %v2274, %v2273
  %v2287 = vpack.c.b16 %v2276, %v2275
  %v2288 = vpack.c.b16 %v2278, %v2277
  %v2289 = vpack.c.b16 %v2280, %v2279
  %v2290 = vpack.c.b16 %v2282, %v2281
  %2299 = vmatprep.subr.bf16.mxu0 0
  %2300 = vmatpush1.bf16.msra.mxu0 %v2283
  %2301 = vmatprep.subr.bf16.mxu0 0
  %2302 = vmatpush1.bf16.msra.mxu0 %v2284
  %2303 = vmatprep.subr.bf16.mxu0 0
  %2304 = vmatpush1.bf16.msra.mxu0 %v2285
  %2305 = vmatprep.subr.bf16.mxu0 0
  %2306 = vmatpush1.bf16.msra.mxu0 %v2286
  %2307 = vmatprep.subr.bf16.mxu0 0
  %2308 = vmatpush1.bf16.msra.mxu0 %v2287
  %2309 = vmatprep.subr.bf16.mxu0 0
  %2310 = vmatpush1.bf16.msra.mxu0 %v2288
  %2311 = vmatprep.subr.bf16.mxu0 0
  %2312 = vmatpush1.bf16.msra.mxu0 %v2289
  %2313 = vmatprep.subr.bf16.mxu0 0
  %2314 = vmatpush1.bf16.msra.mxu0 %v2290
  %2315 = vmatprep.subr.bf16.mxu0 0
  %2316 = vmatpush1.bf16.msra.mxu0 0
  %2317 = vmatprep.subr.bf16.mxu0 0
  %2318 = vmatpush1.bf16.msra.mxu0 0
  %2319 = vmatprep.subr.bf16.mxu0 0
  %2320 = vmatpush1.bf16.msra.mxu0 0
  %2321 = vmatprep.subr.bf16.mxu0 0
  %2322 = vmatpush1.bf16.msra.mxu0 0
  %2323 = vmatprep.subr.bf16.mxu0 0
  %2324 = vmatpush1.bf16.msra.mxu0 0
  %2325 = vmatprep.subr.bf16.mxu0 0
  %2326 = vmatpush1.bf16.msra.mxu0 0
  %2327 = vmatprep.subr.bf16.mxu0 0
  %2328 = vmatpush1.bf16.msra.mxu0 0
  %2329 = vmatprep.subr.bf16.mxu0 0
  %2330 = vmatpush1.bf16.msra.mxu0 0
  %2331 = vmatprep.mubr.bf16.mxu0 0
  %2332 = vmatmul.mubr.bf16.gmra.mrb[0].mxu0 %v2227
  %v2333 = vpop.f32.mrb[0].mxu0
  %v2334 = vadd.f32 %v2249, %v2333
  %v2335 = vpop.f32.mrb[0].mxu0
  %v2336 = vpop.f32.mrb[0].mxu0
  %v2337 = vpop.f32.mrb[0].mxu0
  %2338 = vdwg.mxu0
  %v2339 = vmax.f32 %v2334, 0.0
  %v2340 = vpack.c.bf16 %v2339, %v2339
  %v2341 = vld [vmem:[%s5] sm:$0xf]
  %v2342 = vld [vmem:[%s5 + $0x4] sm:$0xf]
  %v2343 = vld [vmem:[%s5 + $0x8] sm:$0xf]
  %v2344 = vld [vmem:[%s5 + $0xc] sm:$0xf]
  %v2345 = vld [vmem:[%s5 + $0x10] sm:$0xf]
  %v2346 = vld [vmem:[%s5 + $0x14] sm:$0xf]
  %v2347 = vld [vmem:[%s5 + $0x18] sm:$0xf]
  %v2348 = vld [vmem:[%s5 + $0x1c] sm:$0xf]
  %v2349 = vld [vmem:[%s5 + $0x20] sm:$0xf]
  %v2350 = vld [vmem:[%s5 + $0x24] sm:$0xf]
  %v2351 = vld [vmem:[%s5 + $0x28] sm:$0xf]
  %v2352 = vld [vmem:[%s5 + $0x2c] sm:$0xf]
  %v2353 = vld [vmem:[%s5 + $0x30] sm:$0xf]
  %v2354 = vld [vmem:[%s5 + $0x34] sm:$0xf]
  %v2355 = vld [vmem:[%s5 + $0x38] sm:$0xf]
  %v2356 = vld [vmem:[%s5 + $0x3c] sm:$0xf]
  %v2357 = vld [vmem:[%s6] sm:$0x1]
  %v2359 = vlaneseq
  %v2360 = vshrl.u32 %v2359, 7
  %v2361 = vsub.s32 0, %v2360
  %v2362 = vrot.slane %v2357, %v2361
  %v2380 = vunpack.c.l.b16 %v2341
  %v2381 = vunpack.c.l.b16 %v2342
  %v2382 = vunpack.c.l.b16 %v2343
  %v2383 = vunpack.c.l.b16 %v2344
  %v2384 = vunpack.c.l.b16 %v2345
  %v2385 = vunpack.c.l.b16 %v2346
  %v2386 = vunpack.c.l.b16 %v2347
  %v2387 = vunpack.c.l.b16 %v2348
  %v2388 = vunpack.c.l.b16 %v2349
  %v2389 = vunpack.c.l.b16 %v2350
  %v2390 = vunpack.c.l.b16 %v2351
  %v2391 = vunpack.c.l.b16 %v2352
  %v2392 = vunpack.c.l.b16 %v2353
  %v2393 = vunpack.c.l.b16 %v2354
  %v2394 = vunpack.c.l.b16 %v2355
  %v2395 = vunpack.c.l.b16 %v2356
  %v2396 = vpack.c.b16 %v2381, %v2380
  %v2397 = vpack.c.b16 %v2383, %v2382
  %v2398 = vpack.c.b16 %v2385, %v2384
  %v2399 = vpack.c.b16 %v2387, %v2386
  %v2400 = vpack.c.b16 %v2389, %v2388
  %v2401 = vpack.c.b16 %v2391, %v2390
  %v2402 = vpack.c.b16 %v2393, %v2392
  %v2403 = vpack.c.b16 %v2395, %v2394
  %2412 = vmatprep.subr.bf16.mxu0 0
  %2413 = vmatpush1.bf16.msra.mxu0 %v2396
  %2414 = vmatprep.subr.bf16.mxu0 0
  %2415 = vmatpush1.bf16.msra.mxu0 %v2397
  %2416 = vmatprep.subr.bf16.mxu0 0
  %2417 = vmatpush1.bf16.msra.mxu0 %v2398
  %2418 = vmatprep.subr.bf16.mxu0 0
  %2419 = vmatpush1.bf16.msra.mxu0 %v2399
  %2420 = vmatprep.subr.bf16.mxu0 0
  %2421 = vmatpush1.bf16.msra.mxu0 %v2400
  %2422 = vmatprep.subr.bf16.mxu0 0
  %2423 = vmatpush1.bf16.msra.mxu0 %v2401
  %2424 = vmatprep.subr.bf16.mxu0 0
  %2425 = vmatpush1.bf16.msra.mxu0 %v2402
  %2426 = vmatprep.subr.bf16.mxu0 0
  %2427 = vmatpush1.bf16.msra.mxu0 %v2403
  %2428 = vmatprep.subr.bf16.mxu0 0
  %2429 = vmatpush1.bf16.msra.mxu0 0
  %2430 = vmatprep.subr.bf16.mxu0 0
  %2431 = vmatpush1.bf16.msra.mxu0 0
  %2432 = vmatprep.subr.bf16.mxu0 0
  %2433 = vmatpush1.bf16.msra.mxu0 0
  %2434 = vmatprep.subr.bf16.mxu0 0
  %2435 = vmatpush1.bf16.msra.mxu0 0
  %2436 = vmatprep.subr.bf16.mxu0 0
  %2437 = vmatpush1.bf16.msra.mxu0 0
  %2438 = vmatprep.subr.bf16.mxu0 0
  %2439 = vmatpush1.bf16.msra.mxu0 0
  %2440 = vmatprep.subr.bf16.mxu0 0
  %2441 = vmatpush1.bf16.msra.mxu0 0
  %2442 = vmatprep.subr.bf16.mxu0 0
  %2443 = vmatpush1.bf16.msra.mxu0 0
  %2444 = vmatprep.mubr.bf16.mxu0 0
  %2445 = vmatmul.mubr.bf16.gmra.mrb[0].mxu0 %v2340
  %v2446 = vpop.f32.mrb[0].mxu0
  %v2447 = vadd.f32 %v2362, %v2446
  %v2448 = vpop.f32.mrb[0].mxu0
  %v2449 = vpop.f32.mrb[0].mxu0
  %v2450 = vpop.f32.mrb[0].mxu0
  %2451 = vdwg.mxu0
  %2452 = vmax.xlane.f32.xlu0 %v2447
  %v2453 = vpop.xlane.xlu0 %2452
  %v2454 = vsub.f32 %v2447, %v2453
  %v2455 = vmul.f32 %v2454, 1.442695
  %v2456 = vpow.pop %v2455
  %2457 = vadd.xlane.f32.xlu0 %v2456
  %v2458 = vpop.xlane.xlu0 %2457
  %v2459 = vrcp.pop %v2458
  %v2460 = vmul.f32 %v2456, %v2459
  %2461 = vst [vmem:[%s7] sm:$0xff] %v2460
  // Predicated region
  $region30: #{net_forward.9} parent=0 // pred_check
    _
  $region31: #{net_forward.9} parent=0 // pred_check_branch
    %2463 = sbr.rel (0) target = $region33
  $region32: #{net_forward.9} parent=0 // pred_region
    _
  $region33: #{net_forward.9} parent=0 // pred_fallthru
    _
  // Predicated region
  $region34: #{net_forward.9} parent=0 // pred_check
    _
  $region35: #{net_forward.9} parent=0 // pred_check_branch
    %2465 = sbr.rel (0) target = $region37
  $region36: #{net_forward.9} parent=0 // pred_region
    _
  $region37: #{net_forward.9} parent=0 // pred_fallthru
    _

</llo_original>
